<compile_context>
chip_gen: v6e
topology: v6e:2x2x1
jax: 0.10.0
libtpu: 0.0.40
codegen_flags: <defaults>
</compile_context>

<pallas_src>
import jax
import jax.numpy as jnp
import numpy as np
from jax.experimental import pallas as pl
from jax.experimental.pallas import tpu as pltpu

_SUBLANE = 8


# -----------------------------------------------------------------------------
# Fused Pallas kernel: encoder + decoder_1 + decoder_2 + fc_out
# -----------------------------------------------------------------------------
def _make_s2s2s_kernel(n_layers, hidden, b_pad, t_hist, t_dec1, t_dec2):
    L, H = n_layers, hidden
    G4 = 4 * H
    n_w_per_stage = 3 + 2 * (L - 1)
    bf16, f32 = jnp.bfloat16, jnp.float32

    def cell(gates, c_prev):
        # Full-vreg activations: tanh-form sigmoid (1 EUP push) + tanh (1 push)
        # + tanh(c) (1 push).  i/f/g/o blocks are cheap lane slices.
        s_all = jnp.tanh(gates * 0.5) * 0.5 + 0.5     # sigmoid(gates)
        t_all = jnp.tanh(gates)
        i_g = s_all[:, 0 * H:1 * H]
        f_g = s_all[:, 1 * H:2 * H]
        g_g = t_all[:, 2 * H:3 * H]
        o_g = s_all[:, 3 * H:4 * H]
        c_new = f_g * c_prev + i_g * g_g
        h_new = o_g * jnp.tanh(c_new)
        return h_new, c_new

    def kernel(*refs):
        x_refs = refs[0:3]                              # (T_s*B_pad, F_pad)
        w_refs = refs[3:3 + 3 * n_w_per_stage]
        w_fc_ref = refs[3 + 3 * n_w_per_stage]          # (1, 1, H)
        b_fc_ref = refs[3 + 3 * n_w_per_stage + 1]      # (1, 1)
        out_ref = refs[3 + 3 * n_w_per_stage + 2]       # (T_total, B_pad)
        gates0_sc = refs[3 + 3 * n_w_per_stage + 3]     # VMEM (T_max*B_pad, 4H)
        hs_sc = refs[3 + 3 * n_w_per_stage + 4]         # VMEM (T_total, B_pad, H)

        h = [jnp.zeros((b_pad, H), f32) for _ in range(L)]
        c = [jnp.zeros((b_pad, H), f32) for _ in range(L)]

        stage_T = (t_hist, t_dec1, t_dec2)
        stage_off = (None, 0, t_dec1)                   # encoder output unused

        for s in range(3):
            T_s = stage_T[s]
            base = n_w_per_stage * s

            # --- off-critical-path: layer-0 ih projection for ALL steps ------
            w_ih0 = w_refs[base][...]                   # (F_pad, 4H) bf16
            w_hh0 = w_refs[base + 1][...]               # (H, 4H)    bf16
            g0_all = (jnp.dot(x_refs[s][...].astype(bf16), w_ih0,
                              preferred_element_type=f32)
                      + w_refs[base + 2][...])          # + bias0 (1, 4H)
            gates0_sc[pl.ds(0, T_s * b_pad), :] = g0_all

            # Hoisted fused weights / broadcast biases for layers >= 1.
            wb = []
            for l in range(1, L):
                w_cat = w_refs[base + 3 + 2 * (l - 1)][...]        # (2H, 4H) bf16
                b_l = jnp.broadcast_to(
                    w_refs[base + 3 + 2 * (l - 1) + 1][...], (b_pad, G4))
                wb.append((w_cat, b_l))

            # --- serial recurrence: 2 MXU ops / step for L=2 -----------------
            for t in range(T_s):
                gates = (gates0_sc[pl.ds(t * b_pad, b_pad), :]
                         + jnp.dot(h[0].astype(bf16), w_hh0,
                                   preferred_element_type=f32))
                h[0], c[0] = cell(gates, c[0])
                inp = h[0]
                for l in range(1, L):
                    w_cat, b_l = wb[l - 1]
                    a = jnp.concatenate([inp, h[l]], axis=1).astype(bf16)
                    gates = jnp.dot(a, w_cat,
                                    preferred_element_type=f32) + b_l
                    h[l], c[l] = cell(gates, c[l])
                    inp = h[l]
                if stage_off[s] is not None:
                    hs_sc[stage_off[s] + t] = inp        # top-layer h_t

        # fc_out (hidden -> 1): fused multiply + lane reduction, one store.
        hs = hs_sc[...]                                  # (T_total, B, H)
        out_ref[...] = jnp.sum(hs * w_fc_ref[...], axis=-1) + b_fc_ref[...]

    return kernel


# -----------------------------------------------------------------------------
# Host-side weight packing
# -----------------------------------------------------------------------------
def _pack_stage(layer_params, f_pad):
    """Per stage returns:
       layer 0 : W_ih0 (f_pad, 4H) bf16, W_hh0 (H, 4H) bf16, bias0 (1, 4H) f32
       layer>=1: W_cat = [W_ih; W_hh] (2H, 4H) bf16, bias (1, 4H) f32
       Gate order i, f, g, o (PyTorch)."""
    packed = []
    for l, (w_ih, w_hh, bias) in enumerate(layer_params):
        w_ih_f = jnp.concatenate([w_ih[k] for k in range(4)], axis=1)   # (I, 4H)
        w_hh_f = jnp.concatenate([w_hh[k] for k in range(4)], axis=1)   # (H, 4H)
        b_f = jnp.concatenate([bias[k] for k in range(4)], axis=1)      # (1, 4H)
        if l == 0:
            if w_ih_f.shape[0] < f_pad:
                w_ih_f = jnp.pad(w_ih_f,
                                 ((0, f_pad - w_ih_f.shape[0]), (0, 0)))
            packed += [w_ih_f.astype(jnp.bfloat16),
                       w_hh_f.astype(jnp.bfloat16),
                       b_f.astype(jnp.float32)]
        else:
            w_cat = jnp.concatenate([w_ih_f, w_hh_f], axis=0)           # (2H, 4H)
            packed += [w_cat.astype(jnp.bfloat16), b_f.astype(jnp.float32)]
    return packed


def _full_spec(a):
    nd = a.ndim
    return pl.BlockSpec(tuple(int(d) for d in a.shape),
                        lambda i, _nd=nd: (0,) * _nd)


# -----------------------------------------------------------------------------
# Seq2Seq2Seq forward (Pallas-backed)
# -----------------------------------------------------------------------------
def seq2seq2seq_forward(params, X, horizon_dim):
    historic = X["historic"].astype(jnp.float32)   # (B, T_hist, 4)
    future_1 = X["future_1"].astype(jnp.float32)   # (B, >=14, 3)
    future_2 = X["future_2"].astype(jnp.float32)   # (B, horizon-14, 1)

    B = historic.shape[0]
    L = len(params["encoder"])
    H = params["fc_w"].shape[0]

    t_hist = historic.shape[1]
    t_dec1 = 14
    t_dec2 = future_2.shape[1]
    T_total = t_dec1 + t_dec2
    T_max = max(t_hist, t_dec1, t_dec2)

    b_pad = max(_SUBLANE, ((B + _SUBLANE - 1) // _SUBLANE) * _SUBLANE)
    feat_max = max(historic.shape[2], future_1.shape[2], future_2.shape[2])
    f_pad = max(_SUBLANE, ((feat_max + _SUBLANE - 1) // _SUBLANE) * _SUBLANE)

    def prep_x(x_btf):
        # (B, T, F) -> time-major, batch/feature zero-padded, flattened to
        # (T*b_pad, f_pad) so the in-kernel layer-0 projection is ONE matmul.
        x = jnp.transpose(x_btf, (1, 0, 2))
        t, b, f = x.shape
        x = jnp.pad(x, ((0, 0), (0, b_pad - b), (0, f_pad - f)))
        return x.reshape(t * b_pad, f_pad)

    x_hist = prep_x(historic)
    x_d1 = prep_x(future_1[:, :t_dec1, :])
    x_d2 = prep_x(future_2)

    flat_w = []
    for stage in ("encoder", "decoder_1", "decoder_2"):
        flat_w.extend(_pack_stage(params[stage], f_pad))

    w_fc = params["fc_w"].reshape(1, 1, H).astype(jnp.float32)   # (1, 1, H)
    b_fc = params["fc_b"].astype(jnp.float32)                    # (1, 1)

    inputs = [x_hist, x_d1, x_d2, *flat_w, w_fc, b_fc]
    in_specs = [_full_spec(a) for a in inputs]

    kernel = _make_s2s2s_kernel(L, H, b_pad, t_hist, t_dec1, t_dec2)
    out_tb = pl.pallas_call(
        kernel,
        out_shape=jax.ShapeDtypeStruct((T_total, b_pad), jnp.float32),
        grid_spec=pltpu.PrefetchScalarGridSpec(
            num_scalar_prefetch=0,
            grid=(1,),
            in_specs=in_specs,
            out_specs=pl.BlockSpec((T_total, b_pad), lambda i: (0, 0)),
            scratch_shapes=[pltpu.VMEM((T_max * b_pad, 4 * H), jnp.float32),
                            pltpu.VMEM((T_total, b_pad, H), jnp.float32)],
        ),
        compiler_params=pltpu.CompilerParams(
            dimension_semantics=("arbitrary",)),
    )(*inputs)

    return jnp.transpose(out_tb)[:B, :]          # (B, horizon_dim)


# -----------------------------------------------------------------------------
# Pure-JAX reference (for correctness check)
# -----------------------------------------------------------------------------
def _lstm_seq_ref(x_btf, h0, c0, layer_params):
    B, T, _ = x_btf.shape
    L = len(layer_params)
    h = [h0[l] for l in range(L)]
    c = [c0[l] for l in range(L)]
    ys = []
    for t in range(T):
        inp = x_btf[:, t, :]
        for l in range(L):
            w_ih, w_hh, bias = layer_params[l]
            gates = [inp @ w_ih[k] + h[l] @ w_hh[k] + bias[k] for k in range(4)]
            i_g = jax.nn.sigmoid(gates[0])
            f_g = jax.nn.sigmoid(gates[1])
            g_g = jnp.tanh(gates[2])
            o_g = jax.nn.sigmoid(gates[3])
            c[l] = f_g * c[l] + i_g * g_g
            h[l] = o_g * jnp.tanh(c[l])
            inp = h[l]
        ys.append(inp)
    return jnp.stack(ys, axis=1), jnp.stack(h), jnp.stack(c)


def seq2seq2seq_forward_ref(params, X, horizon_dim):
    historic = X["historic"].astype(jnp.float32)
    future_1 = X["future_1"].astype(jnp.float32)
    future_2 = X["future_2"].astype(jnp.float32)
    B = historic.shape[0]
    L = len(params["encoder"])
    H = params["fc_w"].shape[0]
    h0 = jnp.zeros((L, B, H), jnp.float32)
    c0 = jnp.zeros((L, B, H), jnp.float32)

    _, h, c = _lstm_seq_ref(historic, h0, c0, params["encoder"])
    y1, h, c = _lstm_seq_ref(future_1[:, :14, :], h, c, params["decoder_1"])
    y2, _, _ = _lstm_seq_ref(future_2, h, c, params["decoder_2"])

    def fc(y):  # (B, T, H) -> (B, T)
        return (jnp.einsum("bth,ho->bto", y, params["fc_w"]) + params["fc_b"])[:, :, 0]

    return jnp.concatenate([fc(y1), fc(y2)], axis=1)


# -----------------------------------------------------------------------------
# Deterministic parameter init (mirrors PyTorch uniform(-1/sqrt(H), 1/sqrt(H)))
# -----------------------------------------------------------------------------
def init_lstm_params(key, inp_dim, hidden_dim, n_layers):
    stdv = 1.0 / np.sqrt(hidden_dim)
    params = []
    for layer in range(n_layers):
        i_dim = inp_dim if layer == 0 else hidden_dim
        key, k1, k2, k3, k4 = jax.random.split(key, 5)
        w_ih = jax.random.uniform(k1, (4, i_dim, hidden_dim), jnp.float32, -stdv, stdv)
        w_hh = jax.random.uniform(k2, (4, hidden_dim, hidden_dim), jnp.float32, -stdv, stdv)
        b_ih = jax.random.uniform(k3, (4, 1, hidden_dim), jnp.float32, -stdv, stdv)
        b_hh = jax.random.uniform(k4, (4, 1, hidden_dim), jnp.float32, -stdv, stdv)
        params.append((w_ih, w_hh, b_ih + b_hh))
    return key, params


def init_all_params(key, hidden_dim, n_layers):
    key, enc = init_lstm_params(key, 4, hidden_dim, n_layers)
    key, dec1 = init_lstm_params(key, 3, hidden_dim, n_layers)
    key, dec2 = init_lstm_params(key, 1, hidden_dim, n_layers)
    stdv = 1.0 / np.sqrt(hidden_dim)
    key, kw, kb = jax.random.split(key, 3)
    fc_w = jax.random.uniform(kw, (hidden_dim, 1), jnp.float32, -stdv, stdv)
    fc_b = jax.random.uniform(kb, (1, 1), jnp.float32, -stdv, stdv)
    return {"encoder": enc, "decoder_1": dec1, "decoder_2": dec2,
            "fc_w": fc_w, "fc_b": fc_b}


# -----------------------------------------------------------------------------
if __name__ == "__main__":
    batch = 2
    hidden_dim = 32
    n_layers = 2
    horizon_dim = 20          # 14 steps from decoder_1 + 6 from decoder_2
    hist_len = 8

    key = jax.random.PRNGKey(0)
    params = init_all_params(key, hidden_dim, n_layers)

    key_h, key_f1, key_f2 = jax.random.split(jax.random.PRNGKey(42), 3)
    X = {
        "historic": jax.random.normal(key_h, (batch, hist_len, 4), jnp.float32),
        "future_1": jax.random.normal(key_f1, (batch, 14, 3), jnp.float32),
        "future_2": jax.random.normal(key_f2, (batch, horizon_dim - 14, 1), jnp.float32),
    }

    out = seq2seq2seq_forward(params, X, horizon_dim)
    out = jax.block_until_ready(out)
    assert out.shape == (batch, horizon_dim), out.shape

    ref = jax.block_until_ready(seq2seq2seq_forward_ref(params, X, horizon_dim))
    np.testing.assert_allclose(np.asarray(out), np.asarray(ref), rtol=1e-2, atol=1e-2)

    print("KERNEL_OK")
</pallas_src>

<mosaic_0001>
module attributes {stable_mosaic.version = 11 : i64} {
  func.func @kernel(%arg0: i32, %arg1: memref<64x8xf32, #tpu.memory_space<vmem>>, %arg2: memref<112x8xf32, #tpu.memory_space<vmem>>, %arg3: memref<48x8xf32, #tpu.memory_space<vmem>>, %arg4: memref<8x128xbf16, #tpu.memory_space<vmem>>, %arg5: memref<32x128xbf16, #tpu.memory_space<vmem>>, %arg6: memref<1x128xf32, #tpu.memory_space<vmem>>, %arg7: memref<64x128xbf16, #tpu.memory_space<vmem>>, %arg8: memref<1x128xf32, #tpu.memory_space<vmem>>, %arg9: memref<8x128xbf16, #tpu.memory_space<vmem>>, %arg10: memref<32x128xbf16, #tpu.memory_space<vmem>>, %arg11: memref<1x128xf32, #tpu.memory_space<vmem>>, %arg12: memref<64x128xbf16, #tpu.memory_space<vmem>>, %arg13: memref<1x128xf32, #tpu.memory_space<vmem>>, %arg14: memref<8x128xbf16, #tpu.memory_space<vmem>>, %arg15: memref<32x128xbf16, #tpu.memory_space<vmem>>, %arg16: memref<1x128xf32, #tpu.memory_space<vmem>>, %arg17: memref<64x128xbf16, #tpu.memory_space<vmem>>, %arg18: memref<1x128xf32, #tpu.memory_space<vmem>>, %arg19: memref<1x1x32xf32, #tpu.memory_space<vmem>>, %arg20: memref<1x1xf32, #tpu.memory_space<vmem>>, %arg21: memref<20x8xf32, #tpu.memory_space<vmem>>, %arg22: memref<112x128xf32, #tpu.memory_space<vmem>>, %arg23: memref<20x8x32xf32, #tpu.memory_space<vmem>>) attributes {dimension_semantics = [#tpu.dimension_semantics<arbitrary>], iteration_bounds = array<i64: 1>, scalar_prefetch = 0 : i64, scratch_operands = 2 : i64, tpu.core_type = #tpu.core_type<tc>, window_params = [{pipeline_mode = #tpu.pipeline_mode<synchronous>, transform_indices = @transform_0, window_bounds = array<i64: 64, 8>}, {pipeline_mode = #tpu.pipeline_mode<synchronous>, transform_indices = @transform_1, window_bounds = array<i64: 112, 8>}, {pipeline_mode = #tpu.pipeline_mode<synchronous>, transform_indices = @transform_2, window_bounds = array<i64: 48, 8>}, {pipeline_mode = #tpu.pipeline_mode<synchronous>, transform_indices = @transform_3, window_bounds = array<i64: 8, 128>}, {pipeline_mode = #tpu.pipeline_mode<synchronous>, transform_indices = @transform_4, window_bounds = array<i64: 32, 128>}, {pipeline_mode = #tpu.pipeline_mode<synchronous>, transform_indices = @transform_5, window_bounds = array<i64: 1, 128>}, {pipeline_mode = #tpu.pipeline_mode<synchronous>, transform_indices = @transform_6, window_bounds = array<i64: 64, 128>}, {pipeline_mode = #tpu.pipeline_mode<synchronous>, transform_indices = @transform_7, window_bounds = array<i64: 1, 128>}, {pipeline_mode = #tpu.pipeline_mode<synchronous>, transform_indices = @transform_8, window_bounds = array<i64: 8, 128>}, {pipeline_mode = #tpu.pipeline_mode<synchronous>, transform_indices = @transform_9, window_bounds = array<i64: 32, 128>}, {pipeline_mode = #tpu.pipeline_mode<synchronous>, transform_indices = @transform_10, window_bounds = array<i64: 1, 128>}, {pipeline_mode = #tpu.pipeline_mode<synchronous>, transform_indices = @transform_11, window_bounds = array<i64: 64, 128>}, {pipeline_mode = #tpu.pipeline_mode<synchronous>, transform_indices = @transform_12, window_bounds = array<i64: 1, 128>}, {pipeline_mode = #tpu.pipeline_mode<synchronous>, transform_indices = @transform_13, window_bounds = array<i64: 8, 128>}, {pipeline_mode = #tpu.pipeline_mode<synchronous>, transform_indices = @transform_14, window_bounds = array<i64: 32, 128>}, {pipeline_mode = #tpu.pipeline_mode<synchronous>, transform_indices = @transform_15, window_bounds = array<i64: 1, 128>}, {pipeline_mode = #tpu.pipeline_mode<synchronous>, transform_indices = @transform_16, window_bounds = array<i64: 64, 128>}, {pipeline_mode = #tpu.pipeline_mode<synchronous>, transform_indices = @transform_17, window_bounds = array<i64: 1, 128>}, {pipeline_mode = #tpu.pipeline_mode<synchronous>, transform_indices = @transform_18, window_bounds = array<i64: 1, 1, 32>}, {pipeline_mode = #tpu.pipeline_mode<synchronous>, transform_indices = @transform_19, window_bounds = array<i64: 1, 1>}, {pipeline_mode = #tpu.pipeline_mode<synchronous>, transform_indices = @transform_20, window_bounds = array<i64: 20, 8>}]} {
    %cst = arith.constant 0.000000e+00 : f32
    %0 = vector.broadcast %cst : f32 to vector<8x32xf32>
    %cst_0 = arith.constant 0.000000e+00 : f32
    %1 = vector.broadcast %cst_0 : f32 to vector<8x32xf32>
    %cst_1 = arith.constant 0.000000e+00 : f32
    %2 = vector.broadcast %cst_1 : f32 to vector<8x32xf32>
    %cst_2 = arith.constant 0.000000e+00 : f32
    %3 = vector.broadcast %cst_2 : f32 to vector<8x32xf32>
    %c0 = arith.constant 0 : index
    %c0_3 = arith.constant 0 : index
    %4 = vector.load %arg4[%c0, %c0_3] : memref<8x128xbf16, #tpu.memory_space<vmem>>, vector<8x128xbf16>
    %c0_4 = arith.constant 0 : index
    %c0_5 = arith.constant 0 : index
    %5 = vector.load %arg5[%c0_4, %c0_5] : memref<32x128xbf16, #tpu.memory_space<vmem>>, vector<32x128xbf16>
    %c0_6 = arith.constant 0 : index
    %c0_7 = arith.constant 0 : index
    %6 = vector.load %arg1[%c0_6, %c0_7] : memref<64x8xf32, #tpu.memory_space<vmem>>, vector<64x8xf32>
    %7 = arith.truncf %6 : vector<64x8xf32> to vector<64x8xbf16>
    %cst_8 = arith.constant dense<0.000000e+00> : vector<64x128xf32>
    %8 = tpu.matmul %7, %4, %cst_8 {dimension_numbers = #tpu.dot_dimension_numbers<[1], [0], [0], [1], [0, 0, 1, 1], [], []>} : vector<64x8xbf16>, vector<8x128xbf16>, vector<64x128xf32> -> vector<64x128xf32>
    %c0_9 = arith.constant 0 : index
    %c0_10 = arith.constant 0 : index
    %9 = vector.load %arg6[%c0_9, %c0_10] : memref<1x128xf32, #tpu.memory_space<vmem>>, vector<1x128xf32>
    %10 = vector.broadcast %9 : vector<1x128xf32> to vector<64x128xf32>
    %11 = arith.addf %8, %10 : vector<64x128xf32>
    %c0_11 = arith.constant 0 : index
    %c0_12 = arith.constant 0 : index
    %12 = vector.load %arg22[%c0_11, %c0_12] : memref<112x128xf32, #tpu.memory_space<vmem>>, vector<64x128xf32>
    tpu.vector_store %arg22[%c0_11, %c0_12], %11 {strides = array<i32>} : memref<112x128xf32, #tpu.memory_space<vmem>>, vector<64x128xf32>,
    %c0_13 = arith.constant 0 : index
    %c0_14 = arith.constant 0 : index
    %13 = vector.load %arg7[%c0_13, %c0_14] : memref<64x128xbf16, #tpu.memory_space<vmem>>, vector<64x128xbf16>
    %c0_15 = arith.constant 0 : index
    %c0_16 = arith.constant 0 : index
    %14 = vector.load %arg8[%c0_15, %c0_16] : memref<1x128xf32, #tpu.memory_space<vmem>>, vector<1x128xf32>
    %15 = vector.shape_cast %14 : vector<1x128xf32> to vector<1x128xf32>
    %16 = vector.broadcast %15 : vector<1x128xf32> to vector<8x128xf32>
    %c0_17 = arith.constant 0 : index
    %c0_18 = arith.constant 0 : index
    %17 = vector.load %arg22[%c0_17, %c0_18] : memref<112x128xf32, #tpu.memory_space<vmem>>, vector<8x128xf32>
    %18 = arith.truncf %0 : vector<8x32xf32> to vector<8x32xbf16>
    %cst_19 = arith.constant dense<0.000000e+00> : vector<8x128xf32>
    %19 = tpu.matmul %18, %5, %cst_19 {dimension_numbers = #tpu.dot_dimension_numbers<[1], [0], [0], [1], [0, 0, 1, 1], [], []>} : vector<8x32xbf16>, vector<32x128xbf16>, vector<8x128xf32> -> vector<8x128xf32>
    %20 = arith.addf %17, %19 : vector<8x128xf32>
    %cst_20 = arith.constant 5.000000e-01 : f32
    %21 = vector.broadcast %cst_20 : f32 to vector<8x128xf32>
    %22 = arith.mulf %20, %21 : vector<8x128xf32>
    %23 = math.tanh %22 : vector<8x128xf32>
    %cst_21 = arith.constant 5.000000e-01 : f32
    %24 = vector.broadcast %cst_21 : f32 to vector<8x128xf32>
    %25 = arith.mulf %23, %24 : vector<8x128xf32>
    %cst_22 = arith.constant 5.000000e-01 : f32
    %26 = vector.broadcast %cst_22 : f32 to vector<8x128xf32>
    %27 = arith.addf %25, %26 : vector<8x128xf32>
    %28 = math.tanh %20 : vector<8x128xf32>
    %29 = vector.extract_strided_slice %27 {offsets = [0, 0], sizes = [8, 32], strides = [1, 1]} : vector<8x128xf32> to vector<8x32xf32>
    %30 = vector.extract_strided_slice %27 {offsets = [0, 32], sizes = [8, 32], strides = [1, 1]} : vector<8x128xf32> to vector<8x32xf32>
    %31 = vector.extract_strided_slice %28 {offsets = [0, 64], sizes = [8, 32], strides = [1, 1]} : vector<8x128xf32> to vector<8x32xf32>
    %32 = vector.extract_strided_slice %27 {offsets = [0, 96], sizes = [8, 32], strides = [1, 1]} : vector<8x128xf32> to vector<8x32xf32>
    %33 = arith.mulf %30, %2 : vector<8x32xf32>
    %34 = arith.mulf %29, %31 : vector<8x32xf32>
    %35 = arith.addf %33, %34 : vector<8x32xf32>
    %36 = math.tanh %35 : vector<8x32xf32>
    %37 = arith.mulf %32, %36 : vector<8x32xf32>
    %38 = tpu.concatenate %37, %1 in 1 : vector<8x32xf32>, vector<8x32xf32> -> vector<8x64xf32>
    %39 = arith.truncf %38 : vector<8x64xf32> to vector<8x64xbf16>
    %cst_23 = arith.constant dense<0.000000e+00> : vector<8x128xf32>
    %40 = tpu.matmul %39, %13, %cst_23 {dimension_numbers = #tpu.dot_dimension_numbers<[1], [0], [0], [1], [0, 0, 1, 1], [], []>} : vector<8x64xbf16>, vector<64x128xbf16>, vector<8x128xf32> -> vector<8x128xf32>
    %41 = arith.addf %40, %16 : vector<8x128xf32>
    %cst_24 = arith.constant 5.000000e-01 : f32
    %42 = vector.broadcast %cst_24 : f32 to vector<8x128xf32>
    %43 = arith.mulf %41, %42 : vector<8x128xf32>
    %44 = math.tanh %43 : vector<8x128xf32>
    %cst_25 = arith.constant 5.000000e-01 : f32
    %45 = vector.broadcast %cst_25 : f32 to vector<8x128xf32>
    %46 = arith.mulf %44, %45 : vector<8x128xf32>
    %cst_26 = arith.constant 5.000000e-01 : f32
    %47 = vector.broadcast %cst_26 : f32 to vector<8x128xf32>
    %48 = arith.addf %46, %47 : vector<8x128xf32>
    %49 = math.tanh %41 : vector<8x128xf32>
    %50 = vector.extract_strided_slice %48 {offsets = [0, 0], sizes = [8, 32], strides = [1, 1]} : vector<8x128xf32> to vector<8x32xf32>
    %51 = vector.extract_strided_slice %48 {offsets = [0, 32], sizes = [8, 32], strides = [1, 1]} : vector<8x128xf32> to vector<8x32xf32>
    %52 = vector.extract_strided_slice %49 {offsets = [0, 64], sizes = [8, 32], strides = [1, 1]} : vector<8x128xf32> to vector<8x32xf32>
    %53 = vector.extract_strided_slice %48 {offsets = [0, 96], sizes = [8, 32], strides = [1, 1]} : vector<8x128xf32> to vector<8x32xf32>
    %54 = arith.mulf %51, %3 : vector<8x32xf32>
    %55 = arith.mulf %50, %52 : vector<8x32xf32>
    %56 = arith.addf %54, %55 : vector<8x32xf32>
    %57 = math.tanh %56 : vector<8x32xf32>
    %58 = arith.mulf %53, %57 : vector<8x32xf32>
    %c8 = arith.constant 8 : index
    %c0_27 = arith.constant 0 : index
    %59 = vector.load %arg22[%c8, %c0_27] : memref<112x128xf32, #tpu.memory_space<vmem>>, vector<8x128xf32>
    %60 = arith.truncf %37 : vector<8x32xf32> to vector<8x32xbf16>
    %cst_28 = arith.constant dense<0.000000e+00> : vector<8x128xf32>
    %61 = tpu.matmul %60, %5, %cst_28 {dimension_numbers = #tpu.dot_dimension_numbers<[1], [0], [0], [1], [0, 0, 1, 1], [], []>} : vector<8x32xbf16>, vector<32x128xbf16>, vector<8x128xf32> -> vector<8x128xf32>
    %62 = arith.addf %59, %61 : vector<8x128xf32>
    %cst_29 = arith.constant 5.000000e-01 : f32
    %63 = vector.broadcast %cst_29 : f32 to vector<8x128xf32>
    %64 = arith.mulf %62, %63 : vector<8x128xf32>
    %65 = math.tanh %64 : vector<8x128xf32>
    %cst_30 = arith.constant 5.000000e-01 : f32
    %66 = vector.broadcast %cst_30 : f32 to vector<8x128xf32>
    %67 = arith.mulf %65, %66 : vector<8x128xf32>
    %cst_31 = arith.constant 5.000000e-01 : f32
    %68 = vector.broadcast %cst_31 : f32 to vector<8x128xf32>
    %69 = arith.addf %67, %68 : vector<8x128xf32>
    %70 = math.tanh %62 : vector<8x128xf32>
    %71 = vector.extract_strided_slice %69 {offsets = [0, 0], sizes = [8, 32], strides = [1, 1]} : vector<8x128xf32> to vector<8x32xf32>
    %72 = vector.extract_strided_slice %69 {offsets = [0, 32], sizes = [8, 32], strides = [1, 1]} : vector<8x128xf32> to vector<8x32xf32>
    %73 = vector.extract_strided_slice %70 {offsets = [0, 64], sizes = [8, 32], strides = [1, 1]} : vector<8x128xf32> to vector<8x32xf32>
    %74 = vector.extract_strided_slice %69 {offsets = [0, 96], sizes = [8, 32], strides = [1, 1]} : vector<8x128xf32> to vector<8x32xf32>
    %75 = arith.mulf %72, %35 : vector<8x32xf32>
    %76 = arith.mulf %71, %73 : vector<8x32xf32>
    %77 = arith.addf %75, %76 : vector<8x32xf32>
    %78 = math.tanh %77 : vector<8x32xf32>
    %79 = arith.mulf %74, %78 : vector<8x32xf32>
    %80 = tpu.concatenate %79, %58 in 1 : vector<8x32xf32>, vector<8x32xf32> -> vector<8x64xf32>
    %81 = arith.truncf %80 : vector<8x64xf32> to vector<8x64xbf16>
    %cst_32 = arith.constant dense<0.000000e+00> : vector<8x128xf32>
    %82 = tpu.matmul %81, %13, %cst_32 {dimension_numbers = #tpu.dot_dimension_numbers<[1], [0], [0], [1], [0, 0, 1, 1], [], []>} : vector<8x64xbf16>, vector<64x128xbf16>, vector<8x128xf32> -> vector<8x128xf32>
    %83 = arith.addf %82, %16 : vector<8x128xf32>
    %cst_33 = arith.constant 5.000000e-01 : f32
    %84 = vector.broadcast %cst_33 : f32 to vector<8x128xf32>
    %85 = arith.mulf %83, %84 : vector<8x128xf32>
    %86 = math.tanh %85 : vector<8x128xf32>
    %cst_34 = arith.constant 5.000000e-01 : f32
    %87 = vector.broadcast %cst_34 : f32 to vector<8x128xf32>
    %88 = arith.mulf %86, %87 : vector<8x128xf32>
    %cst_35 = arith.constant 5.000000e-01 : f32
    %89 = vector.broadcast %cst_35 : f32 to vector<8x128xf32>
    %90 = arith.addf %88, %89 : vector<8x128xf32>
    %91 = math.tanh %83 : vector<8x128xf32>
    %92 = vector.extract_strided_slice %90 {offsets = [0, 0], sizes = [8, 32], strides = [1, 1]} : vector<8x128xf32> to vector<8x32xf32>
    %93 = vector.extract_strided_slice %90 {offsets = [0, 32], sizes = [8, 32], strides = [1, 1]} : vector<8x128xf32> to vector<8x32xf32>
    %94 = vector.extract_strided_slice %91 {offsets = [0, 64], sizes = [8, 32], strides = [1, 1]} : vector<8x128xf32> to vector<8x32xf32>
    %95 = vector.extract_strided_slice %90 {offsets = [0, 96], sizes = [8, 32], strides = [1, 1]} : vector<8x128xf32> to vector<8x32xf32>
    %96 = arith.mulf %93, %56 : vector<8x32xf32>
    %97 = arith.mulf %92, %94 : vector<8x32xf32>
    %98 = arith.addf %96, %97 : vector<8x32xf32>
    %99 = math.tanh %98 : vector<8x32xf32>
    %100 = arith.mulf %95, %99 : vector<8x32xf32>
    %c16 = arith.constant 16 : index
    %c0_36 = arith.constant 0 : index
    %101 = vector.load %arg22[%c16, %c0_36] : memref<112x128xf32, #tpu.memory_space<vmem>>, vector<8x128xf32>
    %102 = arith.truncf %79 : vector<8x32xf32> to vector<8x32xbf16>
    %cst_37 = arith.constant dense<0.000000e+00> : vector<8x128xf32>
    %103 = tpu.matmul %102, %5, %cst_37 {dimension_numbers = #tpu.dot_dimension_numbers<[1], [0], [0], [1], [0, 0, 1, 1], [], []>} : vector<8x32xbf16>, vector<32x128xbf16>, vector<8x128xf32> -> vector<8x128xf32>
    %104 = arith.addf %101, %103 : vector<8x128xf32>
    %cst_38 = arith.constant 5.000000e-01 : f32
    %105 = vector.broadcast %cst_38 : f32 to vector<8x128xf32>
    %106 = arith.mulf %104, %105 : vector<8x128xf32>
    %107 = math.tanh %106 : vector<8x128xf32>
    %cst_39 = arith.constant 5.000000e-01 : f32
    %108 = vector.broadcast %cst_39 : f32 to vector<8x128xf32>
    %109 = arith.mulf %107, %108 : vector<8x128xf32>
    %cst_40 = arith.constant 5.000000e-01 : f32
    %110 = vector.broadcast %cst_40 : f32 to vector<8x128xf32>
    %111 = arith.addf %109, %110 : vector<8x128xf32>
    %112 = math.tanh %104 : vector<8x128xf32>
    %113 = vector.extract_strided_slice %111 {offsets = [0, 0], sizes = [8, 32], strides = [1, 1]} : vector<8x128xf32> to vector<8x32xf32>
    %114 = vector.extract_strided_slice %111 {offsets = [0, 32], sizes = [8, 32], strides = [1, 1]} : vector<8x128xf32> to vector<8x32xf32>
    %115 = vector.extract_strided_slice %112 {offsets = [0, 64], sizes = [8, 32], strides = [1, 1]} : vector<8x128xf32> to vector<8x32xf32>
    %116 = vector.extract_strided_slice %111 {offsets = [0, 96], sizes = [8, 32], strides = [1, 1]} : vector<8x128xf32> to vector<8x32xf32>
    %117 = arith.mulf %114, %77 : vector<8x32xf32>
    %118 = arith.mulf %113, %115 : vector<8x32xf32>
    %119 = arith.addf %117, %118 : vector<8x32xf32>
    %120 = math.tanh %119 : vector<8x32xf32>
    %121 = arith.mulf %116, %120 : vector<8x32xf32>
    %122 = tpu.concatenate %121, %100 in 1 : vector<8x32xf32>, vector<8x32xf32> -> vector<8x64xf32>
    %123 = arith.truncf %122 : vector<8x64xf32> to vector<8x64xbf16>
    %cst_41 = arith.constant dense<0.000000e+00> : vector<8x128xf32>
    %124 = tpu.matmul %123, %13, %cst_41 {dimension_numbers = #tpu.dot_dimension_numbers<[1], [0], [0], [1], [0, 0, 1, 1], [], []>} : vector<8x64xbf16>, vector<64x128xbf16>, vector<8x128xf32> -> vector<8x128xf32>
    %125 = arith.addf %124, %16 : vector<8x128xf32>
    %cst_42 = arith.constant 5.000000e-01 : f32
    %126 = vector.broadcast %cst_42 : f32 to vector<8x128xf32>
    %127 = arith.mulf %125, %126 : vector<8x128xf32>
    %128 = math.tanh %127 : vector<8x128xf32>
    %cst_43 = arith.constant 5.000000e-01 : f32
    %129 = vector.broadcast %cst_43 : f32 to vector<8x128xf32>
    %130 = arith.mulf %128, %129 : vector<8x128xf32>
    %cst_44 = arith.constant 5.000000e-01 : f32
    %131 = vector.broadcast %cst_44 : f32 to vector<8x128xf32>
    %132 = arith.addf %130, %131 : vector<8x128xf32>
    %133 = math.tanh %125 : vector<8x128xf32>
    %134 = vector.extract_strided_slice %132 {offsets = [0, 0], sizes = [8, 32], strides = [1, 1]} : vector<8x128xf32> to vector<8x32xf32>
    %135 = vector.extract_strided_slice %132 {offsets = [0, 32], sizes = [8, 32], strides = [1, 1]} : vector<8x128xf32> to vector<8x32xf32>
    %136 = vector.extract_strided_slice %133 {offsets = [0, 64], sizes = [8, 32], strides = [1, 1]} : vector<8x128xf32> to vector<8x32xf32>
    %137 = vector.extract_strided_slice %132 {offsets = [0, 96], sizes = [8, 32], strides = [1, 1]} : vector<8x128xf32> to vector<8x32xf32>
    %138 = arith.mulf %135, %98 : vector<8x32xf32>
    %139 = arith.mulf %134, %136 : vector<8x32xf32>
    %140 = arith.addf %138, %139 : vector<8x32xf32>
    %141 = math.tanh %140 : vector<8x32xf32>
    %142 = arith.mulf %137, %141 : vector<8x32xf32>
    %c24 = arith.constant 24 : index
    %c0_45 = arith.constant 0 : index
    %143 = vector.load %arg22[%c24, %c0_45] : memref<112x128xf32, #tpu.memory_space<vmem>>, vector<8x128xf32>
    %144 = arith.truncf %121 : vector<8x32xf32> to vector<8x32xbf16>
    %cst_46 = arith.constant dense<0.000000e+00> : vector<8x128xf32>
    %145 = tpu.matmul %144, %5, %cst_46 {dimension_numbers = #tpu.dot_dimension_numbers<[1], [0], [0], [1], [0, 0, 1, 1], [], []>} : vector<8x32xbf16>, vector<32x128xbf16>, vector<8x128xf32> -> vector<8x128xf32>
    %146 = arith.addf %143, %145 : vector<8x128xf32>
    %cst_47 = arith.constant 5.000000e-01 : f32
    %147 = vector.broadcast %cst_47 : f32 to vector<8x128xf32>
    %148 = arith.mulf %146, %147 : vector<8x128xf32>
    %149 = math.tanh %148 : vector<8x128xf32>
    %cst_48 = arith.constant 5.000000e-01 : f32
    %150 = vector.broadcast %cst_48 : f32 to vector<8x128xf32>
    %151 = arith.mulf %149, %150 : vector<8x128xf32>
    %cst_49 = arith.constant 5.000000e-01 : f32
    %152 = vector.broadcast %cst_49 : f32 to vector<8x128xf32>
    %153 = arith.addf %151, %152 : vector<8x128xf32>
    %154 = math.tanh %146 : vector<8x128xf32>
    %155 = vector.extract_strided_slice %153 {offsets = [0, 0], sizes = [8, 32], strides = [1, 1]} : vector<8x128xf32> to vector<8x32xf32>
    %156 = vector.extract_strided_slice %153 {offsets = [0, 32], sizes = [8, 32], strides = [1, 1]} : vector<8x128xf32> to vector<8x32xf32>
    %157 = vector.extract_strided_slice %154 {offsets = [0, 64], sizes = [8, 32], strides = [1, 1]} : vector<8x128xf32> to vector<8x32xf32>
    %158 = vector.extract_strided_slice %153 {offsets = [0, 96], sizes = [8, 32], strides = [1, 1]} : vector<8x128xf32> to vector<8x32xf32>
    %159 = arith.mulf %156, %119 : vector<8x32xf32>
    %160 = arith.mulf %155, %157 : vector<8x32xf32>
    %161 = arith.addf %159, %160 : vector<8x32xf32>
    %162 = math.tanh %161 : vector<8x32xf32>
    %163 = arith.mulf %158, %162 : vector<8x32xf32>
    %164 = tpu.concatenate %163, %142 in 1 : vector<8x32xf32>, vector<8x32xf32> -> vector<8x64xf32>
    %165 = arith.truncf %164 : vector<8x64xf32> to vector<8x64xbf16>
    %cst_50 = arith.constant dense<0.000000e+00> : vector<8x128xf32>
    %166 = tpu.matmul %165, %13, %cst_50 {dimension_numbers = #tpu.dot_dimension_numbers<[1], [0], [0], [1], [0, 0, 1, 1], [], []>} : vector<8x64xbf16>, vector<64x128xbf16>, vector<8x128xf32> -> vector<8x128xf32>
    %167 = arith.addf %166, %16 : vector<8x128xf32>
    %cst_51 = arith.constant 5.000000e-01 : f32
    %168 = vector.broadcast %cst_51 : f32 to vector<8x128xf32>
    %169 = arith.mulf %167, %168 : vector<8x128xf32>
    %170 = math.tanh %169 : vector<8x128xf32>
    %cst_52 = arith.constant 5.000000e-01 : f32
    %171 = vector.broadcast %cst_52 : f32 to vector<8x128xf32>
    %172 = arith.mulf %170, %171 : vector<8x128xf32>
    %cst_53 = arith.constant 5.000000e-01 : f32
    %173 = vector.broadcast %cst_53 : f32 to vector<8x128xf32>
    %174 = arith.addf %172, %173 : vector<8x128xf32>
    %175 = math.tanh %167 : vector<8x128xf32>
    %176 = vector.extract_strided_slice %174 {offsets = [0, 0], sizes = [8, 32], strides = [1, 1]} : vector<8x128xf32> to vector<8x32xf32>
    %177 = vector.extract_strided_slice %174 {offsets = [0, 32], sizes = [8, 32], strides = [1, 1]} : vector<8x128xf32> to vector<8x32xf32>
    %178 = vector.extract_strided_slice %175 {offsets = [0, 64], sizes = [8, 32], strides = [1, 1]} : vector<8x128xf32> to vector<8x32xf32>
    %179 = vector.extract_strided_slice %174 {offsets = [0, 96], sizes = [8, 32], strides = [1, 1]} : vector<8x128xf32> to vector<8x32xf32>
    %180 = arith.mulf %177, %140 : vector<8x32xf32>
    %181 = arith.mulf %176, %178 : vector<8x32xf32>
    %182 = arith.addf %180, %181 : vector<8x32xf32>
    %183 = math.tanh %182 : vector<8x32xf32>
    %184 = arith.mulf %179, %183 : vector<8x32xf32>
    %c32 = arith.constant 32 : index
    %c0_54 = arith.constant 0 : index
    %185 = vector.load %arg22[%c32, %c0_54] : memref<112x128xf32, #tpu.memory_space<vmem>>, vector<8x128xf32>
    %186 = arith.truncf %163 : vector<8x32xf32> to vector<8x32xbf16>
    %cst_55 = arith.constant dense<0.000000e+00> : vector<8x128xf32>
    %187 = tpu.matmul %186, %5, %cst_55 {dimension_numbers = #tpu.dot_dimension_numbers<[1], [0], [0], [1], [0, 0, 1, 1], [], []>} : vector<8x32xbf16>, vector<32x128xbf16>, vector<8x128xf32> -> vector<8x128xf32>
    %188 = arith.addf %185, %187 : vector<8x128xf32>
    %cst_56 = arith.constant 5.000000e-01 : f32
    %189 = vector.broadcast %cst_56 : f32 to vector<8x128xf32>
    %190 = arith.mulf %188, %189 : vector<8x128xf32>
    %191 = math.tanh %190 : vector<8x128xf32>
    %cst_57 = arith.constant 5.000000e-01 : f32
    %192 = vector.broadcast %cst_57 : f32 to vector<8x128xf32>
    %193 = arith.mulf %191, %192 : vector<8x128xf32>
    %cst_58 = arith.constant 5.000000e-01 : f32
    %194 = vector.broadcast %cst_58 : f32 to vector<8x128xf32>
    %195 = arith.addf %193, %194 : vector<8x128xf32>
    %196 = math.tanh %188 : vector<8x128xf32>
    %197 = vector.extract_strided_slice %195 {offsets = [0, 0], sizes = [8, 32], strides = [1, 1]} : vector<8x128xf32> to vector<8x32xf32>
    %198 = vector.extract_strided_slice %195 {offsets = [0, 32], sizes = [8, 32], strides = [1, 1]} : vector<8x128xf32> to vector<8x32xf32>
    %199 = vector.extract_strided_slice %196 {offsets = [0, 64], sizes = [8, 32], strides = [1, 1]} : vector<8x128xf32> to vector<8x32xf32>
    %200 = vector.extract_strided_slice %195 {offsets = [0, 96], sizes = [8, 32], strides = [1, 1]} : vector<8x128xf32> to vector<8x32xf32>
    %201 = arith.mulf %198, %161 : vector<8x32xf32>
    %202 = arith.mulf %197, %199 : vector<8x32xf32>
    %203 = arith.addf %201, %202 : vector<8x32xf32>
    %204 = math.tanh %203 : vector<8x32xf32>
    %205 = arith.mulf %200, %204 : vector<8x32xf32>
    %206 = tpu.concatenate %205, %184 in 1 : vector<8x32xf32>, vector<8x32xf32> -> vector<8x64xf32>
    %207 = arith.truncf %206 : vector<8x64xf32> to vector<8x64xbf16>
    %cst_59 = arith.constant dense<0.000000e+00> : vector<8x128xf32>
    %208 = tpu.matmul %207, %13, %cst_59 {dimension_numbers = #tpu.dot_dimension_numbers<[1], [0], [0], [1], [0, 0, 1, 1], [], []>} : vector<8x64xbf16>, vector<64x128xbf16>, vector<8x128xf32> -> vector<8x128xf32>
    %209 = arith.addf %208, %16 : vector<8x128xf32>
    %cst_60 = arith.constant 5.000000e-01 : f32
    %210 = vector.broadcast %cst_60 : f32 to vector<8x128xf32>
    %211 = arith.mulf %209, %210 : vector<8x128xf32>
    %212 = math.tanh %211 : vector<8x128xf32>
    %cst_61 = arith.constant 5.000000e-01 : f32
    %213 = vector.broadcast %cst_61 : f32 to vector<8x128xf32>
    %214 = arith.mulf %212, %213 : vector<8x128xf32>
    %cst_62 = arith.constant 5.000000e-01 : f32
    %215 = vector.broadcast %cst_62 : f32 to vector<8x128xf32>
    %216 = arith.addf %214, %215 : vector<8x128xf32>
    %217 = math.tanh %209 : vector<8x128xf32>
    %218 = vector.extract_strided_slice %216 {offsets = [0, 0], sizes = [8, 32], strides = [1, 1]} : vector<8x128xf32> to vector<8x32xf32>
    %219 = vector.extract_strided_slice %216 {offsets = [0, 32], sizes = [8, 32], strides = [1, 1]} : vector<8x128xf32> to vector<8x32xf32>
    %220 = vector.extract_strided_slice %217 {offsets = [0, 64], sizes = [8, 32], strides = [1, 1]} : vector<8x128xf32> to vector<8x32xf32>
    %221 = vector.extract_strided_slice %216 {offsets = [0, 96], sizes = [8, 32], strides = [1, 1]} : vector<8x128xf32> to vector<8x32xf32>
    %222 = arith.mulf %219, %182 : vector<8x32xf32>
    %223 = arith.mulf %218, %220 : vector<8x32xf32>
    %224 = arith.addf %222, %223 : vector<8x32xf32>
    %225 = math.tanh %224 : vector<8x32xf32>
    %226 = arith.mulf %221, %225 : vector<8x32xf32>
    %c40 = arith.constant 40 : index
    %c0_63 = arith.constant 0 : index
    %227 = vector.load %arg22[%c40, %c0_63] : memref<112x128xf32, #tpu.memory_space<vmem>>, vector<8x128xf32>
    %228 = arith.truncf %205 : vector<8x32xf32> to vector<8x32xbf16>
    %cst_64 = arith.constant dense<0.000000e+00> : vector<8x128xf32>
    %229 = tpu.matmul %228, %5, %cst_64 {dimension_numbers = #tpu.dot_dimension_numbers<[1], [0], [0], [1], [0, 0, 1, 1], [], []>} : vector<8x32xbf16>, vector<32x128xbf16>, vector<8x128xf32> -> vector<8x128xf32>
    %230 = arith.addf %227, %229 : vector<8x128xf32>
    %cst_65 = arith.constant 5.000000e-01 : f32
    %231 = vector.broadcast %cst_65 : f32 to vector<8x128xf32>
    %232 = arith.mulf %230, %231 : vector<8x128xf32>
    %233 = math.tanh %232 : vector<8x128xf32>
    %cst_66 = arith.constant 5.000000e-01 : f32
    %234 = vector.broadcast %cst_66 : f32 to vector<8x128xf32>
    %235 = arith.mulf %233, %234 : vector<8x128xf32>
    %cst_67 = arith.constant 5.000000e-01 : f32
    %236 = vector.broadcast %cst_67 : f32 to vector<8x128xf32>
    %237 = arith.addf %235, %236 : vector<8x128xf32>
    %238 = math.tanh %230 : vector<8x128xf32>
    %239 = vector.extract_strided_slice %237 {offsets = [0, 0], sizes = [8, 32], strides = [1, 1]} : vector<8x128xf32> to vector<8x32xf32>
    %240 = vector.extract_strided_slice %237 {offsets = [0, 32], sizes = [8, 32], strides = [1, 1]} : vector<8x128xf32> to vector<8x32xf32>
    %241 = vector.extract_strided_slice %238 {offsets = [0, 64], sizes = [8, 32], strides = [1, 1]} : vector<8x128xf32> to vector<8x32xf32>
    %242 = vector.extract_strided_slice %237 {offsets = [0, 96], sizes = [8, 32], strides = [1, 1]} : vector<8x128xf32> to vector<8x32xf32>
    %243 = arith.mulf %240, %203 : vector<8x32xf32>
    %244 = arith.mulf %239, %241 : vector<8x32xf32>
    %245 = arith.addf %243, %244 : vector<8x32xf32>
    %246 = math.tanh %245 : vector<8x32xf32>
    %247 = arith.mulf %242, %246 : vector<8x32xf32>
    %248 = tpu.concatenate %247, %226 in 1 : vector<8x32xf32>, vector<8x32xf32> -> vector<8x64xf32>
    %249 = arith.truncf %248 : vector<8x64xf32> to vector<8x64xbf16>
    %cst_68 = arith.constant dense<0.000000e+00> : vector<8x128xf32>
    %250 = tpu.matmul %249, %13, %cst_68 {dimension_numbers = #tpu.dot_dimension_numbers<[1], [0], [0], [1], [0, 0, 1, 1], [], []>} : vector<8x64xbf16>, vector<64x128xbf16>, vector<8x128xf32> -> vector<8x128xf32>
    %251 = arith.addf %250, %16 : vector<8x128xf32>
    %cst_69 = arith.constant 5.000000e-01 : f32
    %252 = vector.broadcast %cst_69 : f32 to vector<8x128xf32>
    %253 = arith.mulf %251, %252 : vector<8x128xf32>
    %254 = math.tanh %253 : vector<8x128xf32>
    %cst_70 = arith.constant 5.000000e-01 : f32
    %255 = vector.broadcast %cst_70 : f32 to vector<8x128xf32>
    %256 = arith.mulf %254, %255 : vector<8x128xf32>
    %cst_71 = arith.constant 5.000000e-01 : f32
    %257 = vector.broadcast %cst_71 : f32 to vector<8x128xf32>
    %258 = arith.addf %256, %257 : vector<8x128xf32>
    %259 = math.tanh %251 : vector<8x128xf32>
    %260 = vector.extract_strided_slice %258 {offsets = [0, 0], sizes = [8, 32], strides = [1, 1]} : vector<8x128xf32> to vector<8x32xf32>
    %261 = vector.extract_strided_slice %258 {offsets = [0, 32], sizes = [8, 32], strides = [1, 1]} : vector<8x128xf32> to vector<8x32xf32>
    %262 = vector.extract_strided_slice %259 {offsets = [0, 64], sizes = [8, 32], strides = [1, 1]} : vector<8x128xf32> to vector<8x32xf32>
    %263 = vector.extract_strided_slice %258 {offsets = [0, 96], sizes = [8, 32], strides = [1, 1]} : vector<8x128xf32> to vector<8x32xf32>
    %264 = arith.mulf %261, %224 : vector<8x32xf32>
    %265 = arith.mulf %260, %262 : vector<8x32xf32>
    %266 = arith.addf %264, %265 : vector<8x32xf32>
    %267 = math.tanh %266 : vector<8x32xf32>
    %268 = arith.mulf %263, %267 : vector<8x32xf32>
    %c48 = arith.constant 48 : index
    %c0_72 = arith.constant 0 : index
    %269 = vector.load %arg22[%c48, %c0_72] : memref<112x128xf32, #tpu.memory_space<vmem>>, vector<8x128xf32>
    %270 = arith.truncf %247 : vector<8x32xf32> to vector<8x32xbf16>
    %cst_73 = arith.constant dense<0.000000e+00> : vector<8x128xf32>
    %271 = tpu.matmul %270, %5, %cst_73 {dimension_numbers = #tpu.dot_dimension_numbers<[1], [0], [0], [1], [0, 0, 1, 1], [], []>} : vector<8x32xbf16>, vector<32x128xbf16>, vector<8x128xf32> -> vector<8x128xf32>
    %272 = arith.addf %269, %271 : vector<8x128xf32>
    %cst_74 = arith.constant 5.000000e-01 : f32
    %273 = vector.broadcast %cst_74 : f32 to vector<8x128xf32>
    %274 = arith.mulf %272, %273 : vector<8x128xf32>
    %275 = math.tanh %274 : vector<8x128xf32>
    %cst_75 = arith.constant 5.000000e-01 : f32
    %276 = vector.broadcast %cst_75 : f32 to vector<8x128xf32>
    %277 = arith.mulf %275, %276 : vector<8x128xf32>
    %cst_76 = arith.constant 5.000000e-01 : f32
    %278 = vector.broadcast %cst_76 : f32 to vector<8x128xf32>
    %279 = arith.addf %277, %278 : vector<8x128xf32>
    %280 = math.tanh %272 : vector<8x128xf32>
    %281 = vector.extract_strided_slice %279 {offsets = [0, 0], sizes = [8, 32], strides = [1, 1]} : vector<8x128xf32> to vector<8x32xf32>
    %282 = vector.extract_strided_slice %279 {offsets = [0, 32], sizes = [8, 32], strides = [1, 1]} : vector<8x128xf32> to vector<8x32xf32>
    %283 = vector.extract_strided_slice %280 {offsets = [0, 64], sizes = [8, 32], strides = [1, 1]} : vector<8x128xf32> to vector<8x32xf32>
    %284 = vector.extract_strided_slice %279 {offsets = [0, 96], sizes = [8, 32], strides = [1, 1]} : vector<8x128xf32> to vector<8x32xf32>
    %285 = arith.mulf %282, %245 : vector<8x32xf32>
    %286 = arith.mulf %281, %283 : vector<8x32xf32>
    %287 = arith.addf %285, %286 : vector<8x32xf32>
    %288 = math.tanh %287 : vector<8x32xf32>
    %289 = arith.mulf %284, %288 : vector<8x32xf32>
    %290 = tpu.concatenate %289, %268 in 1 : vector<8x32xf32>, vector<8x32xf32> -> vector<8x64xf32>
    %291 = arith.truncf %290 : vector<8x64xf32> to vector<8x64xbf16>
    %cst_77 = arith.constant dense<0.000000e+00> : vector<8x128xf32>
    %292 = tpu.matmul %291, %13, %cst_77 {dimension_numbers = #tpu.dot_dimension_numbers<[1], [0], [0], [1], [0, 0, 1, 1], [], []>} : vector<8x64xbf16>, vector<64x128xbf16>, vector<8x128xf32> -> vector<8x128xf32>
    %293 = arith.addf %292, %16 : vector<8x128xf32>
    %cst_78 = arith.constant 5.000000e-01 : f32
    %294 = vector.broadcast %cst_78 : f32 to vector<8x128xf32>
    %295 = arith.mulf %293, %294 : vector<8x128xf32>
    %296 = math.tanh %295 : vector<8x128xf32>
    %cst_79 = arith.constant 5.000000e-01 : f32
    %297 = vector.broadcast %cst_79 : f32 to vector<8x128xf32>
    %298 = arith.mulf %296, %297 : vector<8x128xf32>
    %cst_80 = arith.constant 5.000000e-01 : f32
    %299 = vector.broadcast %cst_80 : f32 to vector<8x128xf32>
    %300 = arith.addf %298, %299 : vector<8x128xf32>
    %301 = math.tanh %293 : vector<8x128xf32>
    %302 = vector.extract_strided_slice %300 {offsets = [0, 0], sizes = [8, 32], strides = [1, 1]} : vector<8x128xf32> to vector<8x32xf32>
    %303 = vector.extract_strided_slice %300 {offsets = [0, 32], sizes = [8, 32], strides = [1, 1]} : vector<8x128xf32> to vector<8x32xf32>
    %304 = vector.extract_strided_slice %301 {offsets = [0, 64], sizes = [8, 32], strides = [1, 1]} : vector<8x128xf32> to vector<8x32xf32>
    %305 = vector.extract_strided_slice %300 {offsets = [0, 96], sizes = [8, 32], strides = [1, 1]} : vector<8x128xf32> to vector<8x32xf32>
    %306 = arith.mulf %303, %266 : vector<8x32xf32>
    %307 = arith.mulf %302, %304 : vector<8x32xf32>
    %308 = arith.addf %306, %307 : vector<8x32xf32>
    %309 = math.tanh %308 : vector<8x32xf32>
    %310 = arith.mulf %305, %309 : vector<8x32xf32>
    %c56 = arith.constant 56 : index
    %c0_81 = arith.constant 0 : index
    %311 = vector.load %arg22[%c56, %c0_81] : memref<112x128xf32, #tpu.memory_space<vmem>>, vector<8x128xf32>
    %312 = arith.truncf %289 : vector<8x32xf32> to vector<8x32xbf16>
    %cst_82 = arith.constant dense<0.000000e+00> : vector<8x128xf32>
    %313 = tpu.matmul %312, %5, %cst_82 {dimension_numbers = #tpu.dot_dimension_numbers<[1], [0], [0], [1], [0, 0, 1, 1], [], []>} : vector<8x32xbf16>, vector<32x128xbf16>, vector<8x128xf32> -> vector<8x128xf32>
    %314 = arith.addf %311, %313 : vector<8x128xf32>
    %cst_83 = arith.constant 5.000000e-01 : f32
    %315 = vector.broadcast %cst_83 : f32 to vector<8x128xf32>
    %316 = arith.mulf %314, %315 : vector<8x128xf32>
    %317 = math.tanh %316 : vector<8x128xf32>
    %cst_84 = arith.constant 5.000000e-01 : f32
    %318 = vector.broadcast %cst_84 : f32 to vector<8x128xf32>
    %319 = arith.mulf %317, %318 : vector<8x128xf32>
    %cst_85 = arith.constant 5.000000e-01 : f32
    %320 = vector.broadcast %cst_85 : f32 to vector<8x128xf32>
    %321 = arith.addf %319, %320 : vector<8x128xf32>
    %322 = math.tanh %314 : vector<8x128xf32>
    %323 = vector.extract_strided_slice %321 {offsets = [0, 0], sizes = [8, 32], strides = [1, 1]} : vector<8x128xf32> to vector<8x32xf32>
    %324 = vector.extract_strided_slice %321 {offsets = [0, 32], sizes = [8, 32], strides = [1, 1]} : vector<8x128xf32> to vector<8x32xf32>
    %325 = vector.extract_strided_slice %322 {offsets = [0, 64], sizes = [8, 32], strides = [1, 1]} : vector<8x128xf32> to vector<8x32xf32>
    %326 = vector.extract_strided_slice %321 {offsets = [0, 96], sizes = [8, 32], strides = [1, 1]} : vector<8x128xf32> to vector<8x32xf32>
    %327 = arith.mulf %324, %287 : vector<8x32xf32>
    %328 = arith.mulf %323, %325 : vector<8x32xf32>
    %329 = arith.addf %327, %328 : vector<8x32xf32>
    %330 = math.tanh %329 : vector<8x32xf32>
    %331 = arith.mulf %326, %330 : vector<8x32xf32>
    %332 = tpu.concatenate %331, %310 in 1 : vector<8x32xf32>, vector<8x32xf32> -> vector<8x64xf32>
    %333 = arith.truncf %332 : vector<8x64xf32> to vector<8x64xbf16>
    %cst_86 = arith.constant dense<0.000000e+00> : vector<8x128xf32>
    %334 = tpu.matmul %333, %13, %cst_86 {dimension_numbers = #tpu.dot_dimension_numbers<[1], [0], [0], [1], [0, 0, 1, 1], [], []>} : vector<8x64xbf16>, vector<64x128xbf16>, vector<8x128xf32> -> vector<8x128xf32>
    %335 = arith.addf %334, %16 : vector<8x128xf32>
    %cst_87 = arith.constant 5.000000e-01 : f32
    %336 = vector.broadcast %cst_87 : f32 to vector<8x128xf32>
    %337 = arith.mulf %335, %336 : vector<8x128xf32>
    %338 = math.tanh %337 : vector<8x128xf32>
    %cst_88 = arith.constant 5.000000e-01 : f32
    %339 = vector.broadcast %cst_88 : f32 to vector<8x128xf32>
    %340 = arith.mulf %338, %339 : vector<8x128xf32>
    %cst_89 = arith.constant 5.000000e-01 : f32
    %341 = vector.broadcast %cst_89 : f32 to vector<8x128xf32>
    %342 = arith.addf %340, %341 : vector<8x128xf32>
    %343 = math.tanh %335 : vector<8x128xf32>
    %344 = vector.extract_strided_slice %342 {offsets = [0, 0], sizes = [8, 32], strides = [1, 1]} : vector<8x128xf32> to vector<8x32xf32>
    %345 = vector.extract_strided_slice %342 {offsets = [0, 32], sizes = [8, 32], strides = [1, 1]} : vector<8x128xf32> to vector<8x32xf32>
    %346 = vector.extract_strided_slice %343 {offsets = [0, 64], sizes = [8, 32], strides = [1, 1]} : vector<8x128xf32> to vector<8x32xf32>
    %347 = vector.extract_strided_slice %342 {offsets = [0, 96], sizes = [8, 32], strides = [1, 1]} : vector<8x128xf32> to vector<8x32xf32>
    %348 = arith.mulf %345, %308 : vector<8x32xf32>
    %349 = arith.mulf %344, %346 : vector<8x32xf32>
    %350 = arith.addf %348, %349 : vector<8x32xf32>
    %351 = math.tanh %350 : vector<8x32xf32>
    %352 = arith.mulf %347, %351 : vector<8x32xf32>
    %c0_90 = arith.constant 0 : index
    %c0_91 = arith.constant 0 : index
    %353 = vector.load %arg9[%c0_90, %c0_91] : memref<8x128xbf16, #tpu.memory_space<vmem>>, vector<8x128xbf16>
    %c0_92 = arith.constant 0 : index
    %c0_93 = arith.constant 0 : index
    %354 = vector.load %arg10[%c0_92, %c0_93] : memref<32x128xbf16, #tpu.memory_space<vmem>>, vector<32x128xbf16>
    %c0_94 = arith.constant 0 : index
    %c0_95 = arith.constant 0 : index
    %355 = vector.load %arg2[%c0_94, %c0_95] : memref<112x8xf32, #tpu.memory_space<vmem>>, vector<112x8xf32>
    %356 = arith.truncf %355 : vector<112x8xf32> to vector<112x8xbf16>
    %cst_96 = arith.constant dense<0.000000e+00> : vector<112x128xf32>
    %357 = tpu.matmul %356, %353, %cst_96 {dimension_numbers = #tpu.dot_dimension_numbers<[1], [0], [0], [1], [0, 0, 1, 1], [], []>} : vector<112x8xbf16>, vector<8x128xbf16>, vector<112x128xf32> -> vector<112x128xf32>
    %c0_97 = arith.constant 0 : index
    %c0_98 = arith.constant 0 : index
    %358 = vector.load %arg11[%c0_97, %c0_98] : memref<1x128xf32, #tpu.memory_space<vmem>>, vector<1x128xf32>
    %359 = vector.broadcast %358 : vector<1x128xf32> to vector<112x128xf32>
    %360 = arith.addf %357, %359 : vector<112x128xf32>
    %c0_99 = arith.constant 0 : index
    %c0_100 = arith.constant 0 : index
    %361 = vector.load %arg22[%c0_99, %c0_100] : memref<112x128xf32, #tpu.memory_space<vmem>>, vector<112x128xf32>
    tpu.vector_store %arg22[%c0_99, %c0_100], %360 {strides = array<i32>} : memref<112x128xf32, #tpu.memory_space<vmem>>, vector<112x128xf32>,
    %c0_101 = arith.constant 0 : index
    %c0_102 = arith.constant 0 : index
    %362 = vector.load %arg12[%c0_101, %c0_102] : memref<64x128xbf16, #tpu.memory_space<vmem>>, vector<64x128xbf16>
    %c0_103 = arith.constant 0 : index
    %c0_104 = arith.constant 0 : index
    %363 = vector.load %arg13[%c0_103, %c0_104] : memref<1x128xf32, #tpu.memory_space<vmem>>, vector<1x128xf32>
    %364 = vector.shape_cast %363 : vector<1x128xf32> to vector<1x128xf32>
    %365 = vector.broadcast %364 : vector<1x128xf32> to vector<8x128xf32>
    %c0_105 = arith.constant 0 : index
    %c0_106 = arith.constant 0 : index
    %366 = vector.load %arg22[%c0_105, %c0_106] : memref<112x128xf32, #tpu.memory_space<vmem>>, vector<8x128xf32>
    %367 = arith.truncf %331 : vector<8x32xf32> to vector<8x32xbf16>
    %cst_107 = arith.constant dense<0.000000e+00> : vector<8x128xf32>
    %368 = tpu.matmul %367, %354, %cst_107 {dimension_numbers = #tpu.dot_dimension_numbers<[1], [0], [0], [1], [0, 0, 1, 1], [], []>} : vector<8x32xbf16>, vector<32x128xbf16>, vector<8x128xf32> -> vector<8x128xf32>
    %369 = arith.addf %366, %368 : vector<8x128xf32>
    %cst_108 = arith.constant 5.000000e-01 : f32
    %370 = vector.broadcast %cst_108 : f32 to vector<8x128xf32>
    %371 = arith.mulf %369, %370 : vector<8x128xf32>
    %372 = math.tanh %371 : vector<8x128xf32>
    %cst_109 = arith.constant 5.000000e-01 : f32
    %373 = vector.broadcast %cst_109 : f32 to vector<8x128xf32>
    %374 = arith.mulf %372, %373 : vector<8x128xf32>
    %cst_110 = arith.constant 5.000000e-01 : f32
    %375 = vector.broadcast %cst_110 : f32 to vector<8x128xf32>
    %376 = arith.addf %374, %375 : vector<8x128xf32>
    %377 = math.tanh %369 : vector<8x128xf32>
    %378 = vector.extract_strided_slice %376 {offsets = [0, 0], sizes = [8, 32], strides = [1, 1]} : vector<8x128xf32> to vector<8x32xf32>
    %379 = vector.extract_strided_slice %376 {offsets = [0, 32], sizes = [8, 32], strides = [1, 1]} : vector<8x128xf32> to vector<8x32xf32>
    %380 = vector.extract_strided_slice %377 {offsets = [0, 64], sizes = [8, 32], strides = [1, 1]} : vector<8x128xf32> to vector<8x32xf32>
    %381 = vector.extract_strided_slice %376 {offsets = [0, 96], sizes = [8, 32], strides = [1, 1]} : vector<8x128xf32> to vector<8x32xf32>
    %382 = arith.mulf %379, %329 : vector<8x32xf32>
    %383 = arith.mulf %378, %380 : vector<8x32xf32>
    %384 = arith.addf %382, %383 : vector<8x32xf32>
    %385 = math.tanh %384 : vector<8x32xf32>
    %386 = arith.mulf %381, %385 : vector<8x32xf32>
    %387 = tpu.concatenate %386, %352 in 1 : vector<8x32xf32>, vector<8x32xf32> -> vector<8x64xf32>
    %388 = arith.truncf %387 : vector<8x64xf32> to vector<8x64xbf16>
    %cst_111 = arith.constant dense<0.000000e+00> : vector<8x128xf32>
    %389 = tpu.matmul %388, %362, %cst_111 {dimension_numbers = #tpu.dot_dimension_numbers<[1], [0], [0], [1], [0, 0, 1, 1], [], []>} : vector<8x64xbf16>, vector<64x128xbf16>, vector<8x128xf32> -> vector<8x128xf32>
    %390 = arith.addf %389, %365 : vector<8x128xf32>
    %cst_112 = arith.constant 5.000000e-01 : f32
    %391 = vector.broadcast %cst_112 : f32 to vector<8x128xf32>
    %392 = arith.mulf %390, %391 : vector<8x128xf32>
    %393 = math.tanh %392 : vector<8x128xf32>
    %cst_113 = arith.constant 5.000000e-01 : f32
    %394 = vector.broadcast %cst_113 : f32 to vector<8x128xf32>
    %395 = arith.mulf %393, %394 : vector<8x128xf32>
    %cst_114 = arith.constant 5.000000e-01 : f32
    %396 = vector.broadcast %cst_114 : f32 to vector<8x128xf32>
    %397 = arith.addf %395, %396 : vector<8x128xf32>
    %398 = math.tanh %390 : vector<8x128xf32>
    %399 = vector.extract_strided_slice %397 {offsets = [0, 0], sizes = [8, 32], strides = [1, 1]} : vector<8x128xf32> to vector<8x32xf32>
    %400 = vector.extract_strided_slice %397 {offsets = [0, 32], sizes = [8, 32], strides = [1, 1]} : vector<8x128xf32> to vector<8x32xf32>
    %401 = vector.extract_strided_slice %398 {offsets = [0, 64], sizes = [8, 32], strides = [1, 1]} : vector<8x128xf32> to vector<8x32xf32>
    %402 = vector.extract_strided_slice %397 {offsets = [0, 96], sizes = [8, 32], strides = [1, 1]} : vector<8x128xf32> to vector<8x32xf32>
    %403 = arith.mulf %400, %350 : vector<8x32xf32>
    %404 = arith.mulf %399, %401 : vector<8x32xf32>
    %405 = arith.addf %403, %404 : vector<8x32xf32>
    %406 = math.tanh %405 : vector<8x32xf32>
    %407 = arith.mulf %402, %406 : vector<8x32xf32>
    %c0_115 = arith.constant 0 : index
    %c0_116 = arith.constant 0 : index
    %c0_117 = arith.constant 0 : index
    %408 = vector.load %arg23[%c0_115, %c0_116, %c0_117] : memref<20x8x32xf32, #tpu.memory_space<vmem>>, vector<1x8x32xf32>
    %409 = vector.shape_cast %408 : vector<1x8x32xf32> to vector<8x32xf32>
    %410 = vector.shape_cast %407 : vector<8x32xf32> to vector<1x8x32xf32>
    tpu.vector_store %arg23[%c0_115, %c0_116, %c0_117], %410 {strides = array<i32>} : memref<20x8x32xf32, #tpu.memory_space<vmem>>, vector<1x8x32xf32>,
    %c8_118 = arith.constant 8 : index
    %c0_119 = arith.constant 0 : index
    %411 = vector.load %arg22[%c8_118, %c0_119] : memref<112x128xf32, #tpu.memory_space<vmem>>, vector<8x128xf32>
    %412 = arith.truncf %386 : vector<8x32xf32> to vector<8x32xbf16>
    %cst_120 = arith.constant dense<0.000000e+00> : vector<8x128xf32>
    %413 = tpu.matmul %412, %354, %cst_120 {dimension_numbers = #tpu.dot_dimension_numbers<[1], [0], [0], [1], [0, 0, 1, 1], [], []>} : vector<8x32xbf16>, vector<32x128xbf16>, vector<8x128xf32> -> vector<8x128xf32>
    %414 = arith.addf %411, %413 : vector<8x128xf32>
    %cst_121 = arith.constant 5.000000e-01 : f32
    %415 = vector.broadcast %cst_121 : f32 to vector<8x128xf32>
    %416 = arith.mulf %414, %415 : vector<8x128xf32>
    %417 = math.tanh %416 : vector<8x128xf32>
    %cst_122 = arith.constant 5.000000e-01 : f32
    %418 = vector.broadcast %cst_122 : f32 to vector<8x128xf32>
    %419 = arith.mulf %417, %418 : vector<8x128xf32>
    %cst_123 = arith.constant 5.000000e-01 : f32
    %420 = vector.broadcast %cst_123 : f32 to vector<8x128xf32>
    %421 = arith.addf %419, %420 : vector<8x128xf32>
    %422 = math.tanh %414 : vector<8x128xf32>
    %423 = vector.extract_strided_slice %421 {offsets = [0, 0], sizes = [8, 32], strides = [1, 1]} : vector<8x128xf32> to vector<8x32xf32>
    %424 = vector.extract_strided_slice %421 {offsets = [0, 32], sizes = [8, 32], strides = [1, 1]} : vector<8x128xf32> to vector<8x32xf32>
    %425 = vector.extract_strided_slice %422 {offsets = [0, 64], sizes = [8, 32], strides = [1, 1]} : vector<8x128xf32> to vector<8x32xf32>
    %426 = vector.extract_strided_slice %421 {offsets = [0, 96], sizes = [8, 32], strides = [1, 1]} : vector<8x128xf32> to vector<8x32xf32>
    %427 = arith.mulf %424, %384 : vector<8x32xf32>
    %428 = arith.mulf %423, %425 : vector<8x32xf32>
    %429 = arith.addf %427, %428 : vector<8x32xf32>
    %430 = math.tanh %429 : vector<8x32xf32>
    %431 = arith.mulf %426, %430 : vector<8x32xf32>
    %432 = tpu.concatenate %431, %407 in 1 : vector<8x32xf32>, vector<8x32xf32> -> vector<8x64xf32>
    %433 = arith.truncf %432 : vector<8x64xf32> to vector<8x64xbf16>
    %cst_124 = arith.constant dense<0.000000e+00> : vector<8x128xf32>
    %434 = tpu.matmul %433, %362, %cst_124 {dimension_numbers = #tpu.dot_dimension_numbers<[1], [0], [0], [1], [0, 0, 1, 1], [], []>} : vector<8x64xbf16>, vector<64x128xbf16>, vector<8x128xf32> -> vector<8x128xf32>
    %435 = arith.addf %434, %365 : vector<8x128xf32>
    %cst_125 = arith.constant 5.000000e-01 : f32
    %436 = vector.broadcast %cst_125 : f32 to vector<8x128xf32>
    %437 = arith.mulf %435, %436 : vector<8x128xf32>
    %438 = math.tanh %437 : vector<8x128xf32>
    %cst_126 = arith.constant 5.000000e-01 : f32
    %439 = vector.broadcast %cst_126 : f32 to vector<8x128xf32>
    %440 = arith.mulf %438, %439 : vector<8x128xf32>
    %cst_127 = arith.constant 5.000000e-01 : f32
    %441 = vector.broadcast %cst_127 : f32 to vector<8x128xf32>
    %442 = arith.addf %440, %441 : vector<8x128xf32>
    %443 = math.tanh %435 : vector<8x128xf32>
    %444 = vector.extract_strided_slice %442 {offsets = [0, 0], sizes = [8, 32], strides = [1, 1]} : vector<8x128xf32> to vector<8x32xf32>
    %445 = vector.extract_strided_slice %442 {offsets = [0, 32], sizes = [8, 32], strides = [1, 1]} : vector<8x128xf32> to vector<8x32xf32>
    %446 = vector.extract_strided_slice %443 {offsets = [0, 64], sizes = [8, 32], strides = [1, 1]} : vector<8x128xf32> to vector<8x32xf32>
    %447 = vector.extract_strided_slice %442 {offsets = [0, 96], sizes = [8, 32], strides = [1, 1]} : vector<8x128xf32> to vector<8x32xf32>
    %448 = arith.mulf %445, %405 : vector<8x32xf32>
    %449 = arith.mulf %444, %446 : vector<8x32xf32>
    %450 = arith.addf %448, %449 : vector<8x32xf32>
    %451 = math.tanh %450 : vector<8x32xf32>
    %452 = arith.mulf %447, %451 : vector<8x32xf32>
    %c1 = arith.constant 1 : index
    %c0_128 = arith.constant 0 : index
    %c0_129 = arith.constant 0 : index
    %453 = vector.load %arg23[%c1, %c0_128, %c0_129] : memref<20x8x32xf32, #tpu.memory_space<vmem>>, vector<1x8x32xf32>
    %454 = vector.shape_cast %453 : vector<1x8x32xf32> to vector<8x32xf32>
    %455 = vector.shape_cast %452 : vector<8x32xf32> to vector<1x8x32xf32>
    tpu.vector_store %arg23[%c1, %c0_128, %c0_129], %455 {strides = array<i32>} : memref<20x8x32xf32, #tpu.memory_space<vmem>>, vector<1x8x32xf32>,
    %c16_130 = arith.constant 16 : index
    %c0_131 = arith.constant 0 : index
    %456 = vector.load %arg22[%c16_130, %c0_131] : memref<112x128xf32, #tpu.memory_space<vmem>>, vector<8x128xf32>
    %457 = arith.truncf %431 : vector<8x32xf32> to vector<8x32xbf16>
    %cst_132 = arith.constant dense<0.000000e+00> : vector<8x128xf32>
    %458 = tpu.matmul %457, %354, %cst_132 {dimension_numbers = #tpu.dot_dimension_numbers<[1], [0], [0], [1], [0, 0, 1, 1], [], []>} : vector<8x32xbf16>, vector<32x128xbf16>, vector<8x128xf32> -> vector<8x128xf32>
    %459 = arith.addf %456, %458 : vector<8x128xf32>
    %cst_133 = arith.constant 5.000000e-01 : f32
    %460 = vector.broadcast %cst_133 : f32 to vector<8x128xf32>
    %461 = arith.mulf %459, %460 : vector<8x128xf32>
    %462 = math.tanh %461 : vector<8x128xf32>
    %cst_134 = arith.constant 5.000000e-01 : f32
    %463 = vector.broadcast %cst_134 : f32 to vector<8x128xf32>
    %464 = arith.mulf %462, %463 : vector<8x128xf32>
    %cst_135 = arith.constant 5.000000e-01 : f32
    %465 = vector.broadcast %cst_135 : f32 to vector<8x128xf32>
    %466 = arith.addf %464, %465 : vector<8x128xf32>
    %467 = math.tanh %459 : vector<8x128xf32>
    %468 = vector.extract_strided_slice %466 {offsets = [0, 0], sizes = [8, 32], strides = [1, 1]} : vector<8x128xf32> to vector<8x32xf32>
    %469 = vector.extract_strided_slice %466 {offsets = [0, 32], sizes = [8, 32], strides = [1, 1]} : vector<8x128xf32> to vector<8x32xf32>
    %470 = vector.extract_strided_slice %467 {offsets = [0, 64], sizes = [8, 32], strides = [1, 1]} : vector<8x128xf32> to vector<8x32xf32>
    %471 = vector.extract_strided_slice %466 {offsets = [0, 96], sizes = [8, 32], strides = [1, 1]} : vector<8x128xf32> to vector<8x32xf32>
    %472 = arith.mulf %469, %429 : vector<8x32xf32>
    %473 = arith.mulf %468, %470 : vector<8x32xf32>
    %474 = arith.addf %472, %473 : vector<8x32xf32>
    %475 = math.tanh %474 : vector<8x32xf32>
    %476 = arith.mulf %471, %475 : vector<8x32xf32>
    %477 = tpu.concatenate %476, %452 in 1 : vector<8x32xf32>, vector<8x32xf32> -> vector<8x64xf32>
    %478 = arith.truncf %477 : vector<8x64xf32> to vector<8x64xbf16>
    %cst_136 = arith.constant dense<0.000000e+00> : vector<8x128xf32>
    %479 = tpu.matmul %478, %362, %cst_136 {dimension_numbers = #tpu.dot_dimension_numbers<[1], [0], [0], [1], [0, 0, 1, 1], [], []>} : vector<8x64xbf16>, vector<64x128xbf16>, vector<8x128xf32> -> vector<8x128xf32>
    %480 = arith.addf %479, %365 : vector<8x128xf32>
    %cst_137 = arith.constant 5.000000e-01 : f32
    %481 = vector.broadcast %cst_137 : f32 to vector<8x128xf32>
    %482 = arith.mulf %480, %481 : vector<8x128xf32>
    %483 = math.tanh %482 : vector<8x128xf32>
    %cst_138 = arith.constant 5.000000e-01 : f32
    %484 = vector.broadcast %cst_138 : f32 to vector<8x128xf32>
    %485 = arith.mulf %483, %484 : vector<8x128xf32>
    %cst_139 = arith.constant 5.000000e-01 : f32
    %486 = vector.broadcast %cst_139 : f32 to vector<8x128xf32>
    %487 = arith.addf %485, %486 : vector<8x128xf32>
    %488 = math.tanh %480 : vector<8x128xf32>
    %489 = vector.extract_strided_slice %487 {offsets = [0, 0], sizes = [8, 32], strides = [1, 1]} : vector<8x128xf32> to vector<8x32xf32>
    %490 = vector.extract_strided_slice %487 {offsets = [0, 32], sizes = [8, 32], strides = [1, 1]} : vector<8x128xf32> to vector<8x32xf32>
    %491 = vector.extract_strided_slice %488 {offsets = [0, 64], sizes = [8, 32], strides = [1, 1]} : vector<8x128xf32> to vector<8x32xf32>
    %492 = vector.extract_strided_slice %487 {offsets = [0, 96], sizes = [8, 32], strides = [1, 1]} : vector<8x128xf32> to vector<8x32xf32>
    %493 = arith.mulf %490, %450 : vector<8x32xf32>
    %494 = arith.mulf %489, %491 : vector<8x32xf32>
    %495 = arith.addf %493, %494 : vector<8x32xf32>
    %496 = math.tanh %495 : vector<8x32xf32>
    %497 = arith.mulf %492, %496 : vector<8x32xf32>
    %c2 = arith.constant 2 : index
    %c0_140 = arith.constant 0 : index
    %c0_141 = arith.constant 0 : index
    %498 = vector.load %arg23[%c2, %c0_140, %c0_141] : memref<20x8x32xf32, #tpu.memory_space<vmem>>, vector<1x8x32xf32>
    %499 = vector.shape_cast %498 : vector<1x8x32xf32> to vector<8x32xf32>
    %500 = vector.shape_cast %497 : vector<8x32xf32> to vector<1x8x32xf32>
    tpu.vector_store %arg23[%c2, %c0_140, %c0_141], %500 {strides = array<i32>} : memref<20x8x32xf32, #tpu.memory_space<vmem>>, vector<1x8x32xf32>,
    %c24_142 = arith.constant 24 : index
    %c0_143 = arith.constant 0 : index
    %501 = vector.load %arg22[%c24_142, %c0_143] : memref<112x128xf32, #tpu.memory_space<vmem>>, vector<8x128xf32>
    %502 = arith.truncf %476 : vector<8x32xf32> to vector<8x32xbf16>
    %cst_144 = arith.constant dense<0.000000e+00> : vector<8x128xf32>
    %503 = tpu.matmul %502, %354, %cst_144 {dimension_numbers = #tpu.dot_dimension_numbers<[1], [0], [0], [1], [0, 0, 1, 1], [], []>} : vector<8x32xbf16>, vector<32x128xbf16>, vector<8x128xf32> -> vector<8x128xf32>
    %504 = arith.addf %501, %503 : vector<8x128xf32>
    %cst_145 = arith.constant 5.000000e-01 : f32
    %505 = vector.broadcast %cst_145 : f32 to vector<8x128xf32>
    %506 = arith.mulf %504, %505 : vector<8x128xf32>
    %507 = math.tanh %506 : vector<8x128xf32>
    %cst_146 = arith.constant 5.000000e-01 : f32
    %508 = vector.broadcast %cst_146 : f32 to vector<8x128xf32>
    %509 = arith.mulf %507, %508 : vector<8x128xf32>
    %cst_147 = arith.constant 5.000000e-01 : f32
    %510 = vector.broadcast %cst_147 : f32 to vector<8x128xf32>
    %511 = arith.addf %509, %510 : vector<8x128xf32>
    %512 = math.tanh %504 : vector<8x128xf32>
    %513 = vector.extract_strided_slice %511 {offsets = [0, 0], sizes = [8, 32], strides = [1, 1]} : vector<8x128xf32> to vector<8x32xf32>
    %514 = vector.extract_strided_slice %511 {offsets = [0, 32], sizes = [8, 32], strides = [1, 1]} : vector<8x128xf32> to vector<8x32xf32>
    %515 = vector.extract_strided_slice %512 {offsets = [0, 64], sizes = [8, 32], strides = [1, 1]} : vector<8x128xf32> to vector<8x32xf32>
    %516 = vector.extract_strided_slice %511 {offsets = [0, 96], sizes = [8, 32], strides = [1, 1]} : vector<8x128xf32> to vector<8x32xf32>
    %517 = arith.mulf %514, %474 : vector<8x32xf32>
    %518 = arith.mulf %513, %515 : vector<8x32xf32>
    %519 = arith.addf %517, %518 : vector<8x32xf32>
    %520 = math.tanh %519 : vector<8x32xf32>
    %521 = arith.mulf %516, %520 : vector<8x32xf32>
    %522 = tpu.concatenate %521, %497 in 1 : vector<8x32xf32>, vector<8x32xf32> -> vector<8x64xf32>
    %523 = arith.truncf %522 : vector<8x64xf32> to vector<8x64xbf16>
    %cst_148 = arith.constant dense<0.000000e+00> : vector<8x128xf32>
    %524 = tpu.matmul %523, %362, %cst_148 {dimension_numbers = #tpu.dot_dimension_numbers<[1], [0], [0], [1], [0, 0, 1, 1], [], []>} : vector<8x64xbf16>, vector<64x128xbf16>, vector<8x128xf32> -> vector<8x128xf32>
    %525 = arith.addf %524, %365 : vector<8x128xf32>
    %cst_149 = arith.constant 5.000000e-01 : f32
    %526 = vector.broadcast %cst_149 : f32 to vector<8x128xf32>
    %527 = arith.mulf %525, %526 : vector<8x128xf32>
    %528 = math.tanh %527 : vector<8x128xf32>
    %cst_150 = arith.constant 5.000000e-01 : f32
    %529 = vector.broadcast %cst_150 : f32 to vector<8x128xf32>
    %530 = arith.mulf %528, %529 : vector<8x128xf32>
    %cst_151 = arith.constant 5.000000e-01 : f32
    %531 = vector.broadcast %cst_151 : f32 to vector<8x128xf32>
    %532 = arith.addf %530, %531 : vector<8x128xf32>
    %533 = math.tanh %525 : vector<8x128xf32>
    %534 = vector.extract_strided_slice %532 {offsets = [0, 0], sizes = [8, 32], strides = [1, 1]} : vector<8x128xf32> to vector<8x32xf32>
    %535 = vector.extract_strided_slice %532 {offsets = [0, 32], sizes = [8, 32], strides = [1, 1]} : vector<8x128xf32> to vector<8x32xf32>
    %536 = vector.extract_strided_slice %533 {offsets = [0, 64], sizes = [8, 32], strides = [1, 1]} : vector<8x128xf32> to vector<8x32xf32>
    %537 = vector.extract_strided_slice %532 {offsets = [0, 96], sizes = [8, 32], strides = [1, 1]} : vector<8x128xf32> to vector<8x32xf32>
    %538 = arith.mulf %535, %495 : vector<8x32xf32>
    %539 = arith.mulf %534, %536 : vector<8x32xf32>
    %540 = arith.addf %538, %539 : vector<8x32xf32>
    %541 = math.tanh %540 : vector<8x32xf32>
    %542 = arith.mulf %537, %541 : vector<8x32xf32>
    %c3 = arith.constant 3 : index
    %c0_152 = arith.constant 0 : index
    %c0_153 = arith.constant 0 : index
    %543 = vector.load %arg23[%c3, %c0_152, %c0_153] : memref<20x8x32xf32, #tpu.memory_space<vmem>>, vector<1x8x32xf32>
    %544 = vector.shape_cast %543 : vector<1x8x32xf32> to vector<8x32xf32>
    %545 = vector.shape_cast %542 : vector<8x32xf32> to vector<1x8x32xf32>
    tpu.vector_store %arg23[%c3, %c0_152, %c0_153], %545 {strides = array<i32>} : memref<20x8x32xf32, #tpu.memory_space<vmem>>, vector<1x8x32xf32>,
    %c32_154 = arith.constant 32 : index
    %c0_155 = arith.constant 0 : index
    %546 = vector.load %arg22[%c32_154, %c0_155] : memref<112x128xf32, #tpu.memory_space<vmem>>, vector<8x128xf32>
    %547 = arith.truncf %521 : vector<8x32xf32> to vector<8x32xbf16>
    %cst_156 = arith.constant dense<0.000000e+00> : vector<8x128xf32>
    %548 = tpu.matmul %547, %354, %cst_156 {dimension_numbers = #tpu.dot_dimension_numbers<[1], [0], [0], [1], [0, 0, 1, 1], [], []>} : vector<8x32xbf16>, vector<32x128xbf16>, vector<8x128xf32> -> vector<8x128xf32>
    %549 = arith.addf %546, %548 : vector<8x128xf32>
    %cst_157 = arith.constant 5.000000e-01 : f32
    %550 = vector.broadcast %cst_157 : f32 to vector<8x128xf32>
    %551 = arith.mulf %549, %550 : vector<8x128xf32>
    %552 = math.tanh %551 : vector<8x128xf32>
    %cst_158 = arith.constant 5.000000e-01 : f32
    %553 = vector.broadcast %cst_158 : f32 to vector<8x128xf32>
    %554 = arith.mulf %552, %553 : vector<8x128xf32>
    %cst_159 = arith.constant 5.000000e-01 : f32
    %555 = vector.broadcast %cst_159 : f32 to vector<8x128xf32>
    %556 = arith.addf %554, %555 : vector<8x128xf32>
    %557 = math.tanh %549 : vector<8x128xf32>
    %558 = vector.extract_strided_slice %556 {offsets = [0, 0], sizes = [8, 32], strides = [1, 1]} : vector<8x128xf32> to vector<8x32xf32>
    %559 = vector.extract_strided_slice %556 {offsets = [0, 32], sizes = [8, 32], strides = [1, 1]} : vector<8x128xf32> to vector<8x32xf32>
    %560 = vector.extract_strided_slice %557 {offsets = [0, 64], sizes = [8, 32], strides = [1, 1]} : vector<8x128xf32> to vector<8x32xf32>
    %561 = vector.extract_strided_slice %556 {offsets = [0, 96], sizes = [8, 32], strides = [1, 1]} : vector<8x128xf32> to vector<8x32xf32>
    %562 = arith.mulf %559, %519 : vector<8x32xf32>
    %563 = arith.mulf %558, %560 : vector<8x32xf32>
    %564 = arith.addf %562, %563 : vector<8x32xf32>
    %565 = math.tanh %564 : vector<8x32xf32>
    %566 = arith.mulf %561, %565 : vector<8x32xf32>
    %567 = tpu.concatenate %566, %542 in 1 : vector<8x32xf32>, vector<8x32xf32> -> vector<8x64xf32>
    %568 = arith.truncf %567 : vector<8x64xf32> to vector<8x64xbf16>
    %cst_160 = arith.constant dense<0.000000e+00> : vector<8x128xf32>
    %569 = tpu.matmul %568, %362, %cst_160 {dimension_numbers = #tpu.dot_dimension_numbers<[1], [0], [0], [1], [0, 0, 1, 1], [], []>} : vector<8x64xbf16>, vector<64x128xbf16>, vector<8x128xf32> -> vector<8x128xf32>
    %570 = arith.addf %569, %365 : vector<8x128xf32>
    %cst_161 = arith.constant 5.000000e-01 : f32
    %571 = vector.broadcast %cst_161 : f32 to vector<8x128xf32>
    %572 = arith.mulf %570, %571 : vector<8x128xf32>
    %573 = math.tanh %572 : vector<8x128xf32>
    %cst_162 = arith.constant 5.000000e-01 : f32
    %574 = vector.broadcast %cst_162 : f32 to vector<8x128xf32>
    %575 = arith.mulf %573, %574 : vector<8x128xf32>
    %cst_163 = arith.constant 5.000000e-01 : f32
    %576 = vector.broadcast %cst_163 : f32 to vector<8x128xf32>
    %577 = arith.addf %575, %576 : vector<8x128xf32>
    %578 = math.tanh %570 : vector<8x128xf32>
    %579 = vector.extract_strided_slice %577 {offsets = [0, 0], sizes = [8, 32], strides = [1, 1]} : vector<8x128xf32> to vector<8x32xf32>
    %580 = vector.extract_strided_slice %577 {offsets = [0, 32], sizes = [8, 32], strides = [1, 1]} : vector<8x128xf32> to vector<8x32xf32>
    %581 = vector.extract_strided_slice %578 {offsets = [0, 64], sizes = [8, 32], strides = [1, 1]} : vector<8x128xf32> to vector<8x32xf32>
    %582 = vector.extract_strided_slice %577 {offsets = [0, 96], sizes = [8, 32], strides = [1, 1]} : vector<8x128xf32> to vector<8x32xf32>
    %583 = arith.mulf %580, %540 : vector<8x32xf32>
    %584 = arith.mulf %579, %581 : vector<8x32xf32>
    %585 = arith.addf %583, %584 : vector<8x32xf32>
    %586 = math.tanh %585 : vector<8x32xf32>
    %587 = arith.mulf %582, %586 : vector<8x32xf32>
    %c4 = arith.constant 4 : index
    %c0_164 = arith.constant 0 : index
    %c0_165 = arith.constant 0 : index
    %588 = vector.load %arg23[%c4, %c0_164, %c0_165] : memref<20x8x32xf32, #tpu.memory_space<vmem>>, vector<1x8x32xf32>
    %589 = vector.shape_cast %588 : vector<1x8x32xf32> to vector<8x32xf32>
    %590 = vector.shape_cast %587 : vector<8x32xf32> to vector<1x8x32xf32>
    tpu.vector_store %arg23[%c4, %c0_164, %c0_165], %590 {strides = array<i32>} : memref<20x8x32xf32, #tpu.memory_space<vmem>>, vector<1x8x32xf32>,
    %c40_166 = arith.constant 40 : index
    %c0_167 = arith.constant 0 : index
    %591 = vector.load %arg22[%c40_166, %c0_167] : memref<112x128xf32, #tpu.memory_space<vmem>>, vector<8x128xf32>
    %592 = arith.truncf %566 : vector<8x32xf32> to vector<8x32xbf16>
    %cst_168 = arith.constant dense<0.000000e+00> : vector<8x128xf32>
    %593 = tpu.matmul %592, %354, %cst_168 {dimension_numbers = #tpu.dot_dimension_numbers<[1], [0], [0], [1], [0, 0, 1, 1], [], []>} : vector<8x32xbf16>, vector<32x128xbf16>, vector<8x128xf32> -> vector<8x128xf32>
    %594 = arith.addf %591, %593 : vector<8x128xf32>
    %cst_169 = arith.constant 5.000000e-01 : f32
    %595 = vector.broadcast %cst_169 : f32 to vector<8x128xf32>
    %596 = arith.mulf %594, %595 : vector<8x128xf32>
    %597 = math.tanh %596 : vector<8x128xf32>
    %cst_170 = arith.constant 5.000000e-01 : f32
    %598 = vector.broadcast %cst_170 : f32 to vector<8x128xf32>
    %599 = arith.mulf %597, %598 : vector<8x128xf32>
    %cst_171 = arith.constant 5.000000e-01 : f32
    %600 = vector.broadcast %cst_171 : f32 to vector<8x128xf32>
    %601 = arith.addf %599, %600 : vector<8x128xf32>
    %602 = math.tanh %594 : vector<8x128xf32>
    %603 = vector.extract_strided_slice %601 {offsets = [0, 0], sizes = [8, 32], strides = [1, 1]} : vector<8x128xf32> to vector<8x32xf32>
    %604 = vector.extract_strided_slice %601 {offsets = [0, 32], sizes = [8, 32], strides = [1, 1]} : vector<8x128xf32> to vector<8x32xf32>
    %605 = vector.extract_strided_slice %602 {offsets = [0, 64], sizes = [8, 32], strides = [1, 1]} : vector<8x128xf32> to vector<8x32xf32>
    %606 = vector.extract_strided_slice %601 {offsets = [0, 96], sizes = [8, 32], strides = [1, 1]} : vector<8x128xf32> to vector<8x32xf32>
    %607 = arith.mulf %604, %564 : vector<8x32xf32>
    %608 = arith.mulf %603, %605 : vector<8x32xf32>
    %609 = arith.addf %607, %608 : vector<8x32xf32>
    %610 = math.tanh %609 : vector<8x32xf32>
    %611 = arith.mulf %606, %610 : vector<8x32xf32>
    %612 = tpu.concatenate %611, %587 in 1 : vector<8x32xf32>, vector<8x32xf32> -> vector<8x64xf32>
    %613 = arith.truncf %612 : vector<8x64xf32> to vector<8x64xbf16>
    %cst_172 = arith.constant dense<0.000000e+00> : vector<8x128xf32>
    %614 = tpu.matmul %613, %362, %cst_172 {dimension_numbers = #tpu.dot_dimension_numbers<[1], [0], [0], [1], [0, 0, 1, 1], [], []>} : vector<8x64xbf16>, vector<64x128xbf16>, vector<8x128xf32> -> vector<8x128xf32>
    %615 = arith.addf %614, %365 : vector<8x128xf32>
    %cst_173 = arith.constant 5.000000e-01 : f32
    %616 = vector.broadcast %cst_173 : f32 to vector<8x128xf32>
    %617 = arith.mulf %615, %616 : vector<8x128xf32>
    %618 = math.tanh %617 : vector<8x128xf32>
    %cst_174 = arith.constant 5.000000e-01 : f32
    %619 = vector.broadcast %cst_174 : f32 to vector<8x128xf32>
    %620 = arith.mulf %618, %619 : vector<8x128xf32>
    %cst_175 = arith.constant 5.000000e-01 : f32
    %621 = vector.broadcast %cst_175 : f32 to vector<8x128xf32>
    %622 = arith.addf %620, %621 : vector<8x128xf32>
    %623 = math.tanh %615 : vector<8x128xf32>
    %624 = vector.extract_strided_slice %622 {offsets = [0, 0], sizes = [8, 32], strides = [1, 1]} : vector<8x128xf32> to vector<8x32xf32>
    %625 = vector.extract_strided_slice %622 {offsets = [0, 32], sizes = [8, 32], strides = [1, 1]} : vector<8x128xf32> to vector<8x32xf32>
    %626 = vector.extract_strided_slice %623 {offsets = [0, 64], sizes = [8, 32], strides = [1, 1]} : vector<8x128xf32> to vector<8x32xf32>
    %627 = vector.extract_strided_slice %622 {offsets = [0, 96], sizes = [8, 32], strides = [1, 1]} : vector<8x128xf32> to vector<8x32xf32>
    %628 = arith.mulf %625, %585 : vector<8x32xf32>
    %629 = arith.mulf %624, %626 : vector<8x32xf32>
    %630 = arith.addf %628, %629 : vector<8x32xf32>
    %631 = math.tanh %630 : vector<8x32xf32>
    %632 = arith.mulf %627, %631 : vector<8x32xf32>
    %c5 = arith.constant 5 : index
    %c0_176 = arith.constant 0 : index
    %c0_177 = arith.constant 0 : index
    %633 = vector.load %arg23[%c5, %c0_176, %c0_177] : memref<20x8x32xf32, #tpu.memory_space<vmem>>, vector<1x8x32xf32>
    %634 = vector.shape_cast %633 : vector<1x8x32xf32> to vector<8x32xf32>
    %635 = vector.shape_cast %632 : vector<8x32xf32> to vector<1x8x32xf32>
    tpu.vector_store %arg23[%c5, %c0_176, %c0_177], %635 {strides = array<i32>} : memref<20x8x32xf32, #tpu.memory_space<vmem>>, vector<1x8x32xf32>,
    %c48_178 = arith.constant 48 : index
    %c0_179 = arith.constant 0 : index
    %636 = vector.load %arg22[%c48_178, %c0_179] : memref<112x128xf32, #tpu.memory_space<vmem>>, vector<8x128xf32>
    %637 = arith.truncf %611 : vector<8x32xf32> to vector<8x32xbf16>
    %cst_180 = arith.constant dense<0.000000e+00> : vector<8x128xf32>
    %638 = tpu.matmul %637, %354, %cst_180 {dimension_numbers = #tpu.dot_dimension_numbers<[1], [0], [0], [1], [0, 0, 1, 1], [], []>} : vector<8x32xbf16>, vector<32x128xbf16>, vector<8x128xf32> -> vector<8x128xf32>
    %639 = arith.addf %636, %638 : vector<8x128xf32>
    %cst_181 = arith.constant 5.000000e-01 : f32
    %640 = vector.broadcast %cst_181 : f32 to vector<8x128xf32>
    %641 = arith.mulf %639, %640 : vector<8x128xf32>
    %642 = math.tanh %641 : vector<8x128xf32>
    %cst_182 = arith.constant 5.000000e-01 : f32
    %643 = vector.broadcast %cst_182 : f32 to vector<8x128xf32>
    %644 = arith.mulf %642, %643 : vector<8x128xf32>
    %cst_183 = arith.constant 5.000000e-01 : f32
    %645 = vector.broadcast %cst_183 : f32 to vector<8x128xf32>
    %646 = arith.addf %644, %645 : vector<8x128xf32>
    %647 = math.tanh %639 : vector<8x128xf32>
    %648 = vector.extract_strided_slice %646 {offsets = [0, 0], sizes = [8, 32], strides = [1, 1]} : vector<8x128xf32> to vector<8x32xf32>
    %649 = vector.extract_strided_slice %646 {offsets = [0, 32], sizes = [8, 32], strides = [1, 1]} : vector<8x128xf32> to vector<8x32xf32>
    %650 = vector.extract_strided_slice %647 {offsets = [0, 64], sizes = [8, 32], strides = [1, 1]} : vector<8x128xf32> to vector<8x32xf32>
    %651 = vector.extract_strided_slice %646 {offsets = [0, 96], sizes = [8, 32], strides = [1, 1]} : vector<8x128xf32> to vector<8x32xf32>
    %652 = arith.mulf %649, %609 : vector<8x32xf32>
    %653 = arith.mulf %648, %650 : vector<8x32xf32>
    %654 = arith.addf %652, %653 : vector<8x32xf32>
    %655 = math.tanh %654 : vector<8x32xf32>
    %656 = arith.mulf %651, %655 : vector<8x32xf32>
    %657 = tpu.concatenate %656, %632 in 1 : vector<8x32xf32>, vector<8x32xf32> -> vector<8x64xf32>
    %658 = arith.truncf %657 : vector<8x64xf32> to vector<8x64xbf16>
    %cst_184 = arith.constant dense<0.000000e+00> : vector<8x128xf32>
    %659 = tpu.matmul %658, %362, %cst_184 {dimension_numbers = #tpu.dot_dimension_numbers<[1], [0], [0], [1], [0, 0, 1, 1], [], []>} : vector<8x64xbf16>, vector<64x128xbf16>, vector<8x128xf32> -> vector<8x128xf32>
    %660 = arith.addf %659, %365 : vector<8x128xf32>
    %cst_185 = arith.constant 5.000000e-01 : f32
    %661 = vector.broadcast %cst_185 : f32 to vector<8x128xf32>
    %662 = arith.mulf %660, %661 : vector<8x128xf32>
    %663 = math.tanh %662 : vector<8x128xf32>
    %cst_186 = arith.constant 5.000000e-01 : f32
    %664 = vector.broadcast %cst_186 : f32 to vector<8x128xf32>
    %665 = arith.mulf %663, %664 : vector<8x128xf32>
    %cst_187 = arith.constant 5.000000e-01 : f32
    %666 = vector.broadcast %cst_187 : f32 to vector<8x128xf32>
    %667 = arith.addf %665, %666 : vector<8x128xf32>
    %668 = math.tanh %660 : vector<8x128xf32>
    %669 = vector.extract_strided_slice %667 {offsets = [0, 0], sizes = [8, 32], strides = [1, 1]} : vector<8x128xf32> to vector<8x32xf32>
    %670 = vector.extract_strided_slice %667 {offsets = [0, 32], sizes = [8, 32], strides = [1, 1]} : vector<8x128xf32> to vector<8x32xf32>
    %671 = vector.extract_strided_slice %668 {offsets = [0, 64], sizes = [8, 32], strides = [1, 1]} : vector<8x128xf32> to vector<8x32xf32>
    %672 = vector.extract_strided_slice %667 {offsets = [0, 96], sizes = [8, 32], strides = [1, 1]} : vector<8x128xf32> to vector<8x32xf32>
    %673 = arith.mulf %670, %630 : vector<8x32xf32>
    %674 = arith.mulf %669, %671 : vector<8x32xf32>
    %675 = arith.addf %673, %674 : vector<8x32xf32>
    %676 = math.tanh %675 : vector<8x32xf32>
    %677 = arith.mulf %672, %676 : vector<8x32xf32>
    %c6 = arith.constant 6 : index
    %c0_188 = arith.constant 0 : index
    %c0_189 = arith.constant 0 : index
    %678 = vector.load %arg23[%c6, %c0_188, %c0_189] : memref<20x8x32xf32, #tpu.memory_space<vmem>>, vector<1x8x32xf32>
    %679 = vector.shape_cast %678 : vector<1x8x32xf32> to vector<8x32xf32>
    %680 = vector.shape_cast %677 : vector<8x32xf32> to vector<1x8x32xf32>
    tpu.vector_store %arg23[%c6, %c0_188, %c0_189], %680 {strides = array<i32>} : memref<20x8x32xf32, #tpu.memory_space<vmem>>, vector<1x8x32xf32>,
    %c56_190 = arith.constant 56 : index
    %c0_191 = arith.constant 0 : index
    %681 = vector.load %arg22[%c56_190, %c0_191] : memref<112x128xf32, #tpu.memory_space<vmem>>, vector<8x128xf32>
    %682 = arith.truncf %656 : vector<8x32xf32> to vector<8x32xbf16>
    %cst_192 = arith.constant dense<0.000000e+00> : vector<8x128xf32>
    %683 = tpu.matmul %682, %354, %cst_192 {dimension_numbers = #tpu.dot_dimension_numbers<[1], [0], [0], [1], [0, 0, 1, 1], [], []>} : vector<8x32xbf16>, vector<32x128xbf16>, vector<8x128xf32> -> vector<8x128xf32>
    %684 = arith.addf %681, %683 : vector<8x128xf32>
    %cst_193 = arith.constant 5.000000e-01 : f32
    %685 = vector.broadcast %cst_193 : f32 to vector<8x128xf32>
    %686 = arith.mulf %684, %685 : vector<8x128xf32>
    %687 = math.tanh %686 : vector<8x128xf32>
    %cst_194 = arith.constant 5.000000e-01 : f32
    %688 = vector.broadcast %cst_194 : f32 to vector<8x128xf32>
    %689 = arith.mulf %687, %688 : vector<8x128xf32>
    %cst_195 = arith.constant 5.000000e-01 : f32
    %690 = vector.broadcast %cst_195 : f32 to vector<8x128xf32>
    %691 = arith.addf %689, %690 : vector<8x128xf32>
    %692 = math.tanh %684 : vector<8x128xf32>
    %693 = vector.extract_strided_slice %691 {offsets = [0, 0], sizes = [8, 32], strides = [1, 1]} : vector<8x128xf32> to vector<8x32xf32>
    %694 = vector.extract_strided_slice %691 {offsets = [0, 32], sizes = [8, 32], strides = [1, 1]} : vector<8x128xf32> to vector<8x32xf32>
    %695 = vector.extract_strided_slice %692 {offsets = [0, 64], sizes = [8, 32], strides = [1, 1]} : vector<8x128xf32> to vector<8x32xf32>
    %696 = vector.extract_strided_slice %691 {offsets = [0, 96], sizes = [8, 32], strides = [1, 1]} : vector<8x128xf32> to vector<8x32xf32>
    %697 = arith.mulf %694, %654 : vector<8x32xf32>
    %698 = arith.mulf %693, %695 : vector<8x32xf32>
    %699 = arith.addf %697, %698 : vector<8x32xf32>
    %700 = math.tanh %699 : vector<8x32xf32>
    %701 = arith.mulf %696, %700 : vector<8x32xf32>
    %702 = tpu.concatenate %701, %677 in 1 : vector<8x32xf32>, vector<8x32xf32> -> vector<8x64xf32>
    %703 = arith.truncf %702 : vector<8x64xf32> to vector<8x64xbf16>
    %cst_196 = arith.constant dense<0.000000e+00> : vector<8x128xf32>
    %704 = tpu.matmul %703, %362, %cst_196 {dimension_numbers = #tpu.dot_dimension_numbers<[1], [0], [0], [1], [0, 0, 1, 1], [], []>} : vector<8x64xbf16>, vector<64x128xbf16>, vector<8x128xf32> -> vector<8x128xf32>
    %705 = arith.addf %704, %365 : vector<8x128xf32>
    %cst_197 = arith.constant 5.000000e-01 : f32
    %706 = vector.broadcast %cst_197 : f32 to vector<8x128xf32>
    %707 = arith.mulf %705, %706 : vector<8x128xf32>
    %708 = math.tanh %707 : vector<8x128xf32>
    %cst_198 = arith.constant 5.000000e-01 : f32
    %709 = vector.broadcast %cst_198 : f32 to vector<8x128xf32>
    %710 = arith.mulf %708, %709 : vector<8x128xf32>
    %cst_199 = arith.constant 5.000000e-01 : f32
    %711 = vector.broadcast %cst_199 : f32 to vector<8x128xf32>
    %712 = arith.addf %710, %711 : vector<8x128xf32>
    %713 = math.tanh %705 : vector<8x128xf32>
    %714 = vector.extract_strided_slice %712 {offsets = [0, 0], sizes = [8, 32], strides = [1, 1]} : vector<8x128xf32> to vector<8x32xf32>
    %715 = vector.extract_strided_slice %712 {offsets = [0, 32], sizes = [8, 32], strides = [1, 1]} : vector<8x128xf32> to vector<8x32xf32>
    %716 = vector.extract_strided_slice %713 {offsets = [0, 64], sizes = [8, 32], strides = [1, 1]} : vector<8x128xf32> to vector<8x32xf32>
    %717 = vector.extract_strided_slice %712 {offsets = [0, 96], sizes = [8, 32], strides = [1, 1]} : vector<8x128xf32> to vector<8x32xf32>
    %718 = arith.mulf %715, %675 : vector<8x32xf32>
    %719 = arith.mulf %714, %716 : vector<8x32xf32>
    %720 = arith.addf %718, %719 : vector<8x32xf32>
    %721 = math.tanh %720 : vector<8x32xf32>
    %722 = arith.mulf %717, %721 : vector<8x32xf32>
    %c7 = arith.constant 7 : index
    %c0_200 = arith.constant 0 : index
    %c0_201 = arith.constant 0 : index
    %723 = vector.load %arg23[%c7, %c0_200, %c0_201] : memref<20x8x32xf32, #tpu.memory_space<vmem>>, vector<1x8x32xf32>
    %724 = vector.shape_cast %723 : vector<1x8x32xf32> to vector<8x32xf32>
    %725 = vector.shape_cast %722 : vector<8x32xf32> to vector<1x8x32xf32>
    tpu.vector_store %arg23[%c7, %c0_200, %c0_201], %725 {strides = array<i32>} : memref<20x8x32xf32, #tpu.memory_space<vmem>>, vector<1x8x32xf32>,
    %c64 = arith.constant 64 : index
    %c0_202 = arith.constant 0 : index
    %726 = vector.load %arg22[%c64, %c0_202] : memref<112x128xf32, #tpu.memory_space<vmem>>, vector<8x128xf32>
    %727 = arith.truncf %701 : vector<8x32xf32> to vector<8x32xbf16>
    %cst_203 = arith.constant dense<0.000000e+00> : vector<8x128xf32>
    %728 = tpu.matmul %727, %354, %cst_203 {dimension_numbers = #tpu.dot_dimension_numbers<[1], [0], [0], [1], [0, 0, 1, 1], [], []>} : vector<8x32xbf16>, vector<32x128xbf16>, vector<8x128xf32> -> vector<8x128xf32>
    %729 = arith.addf %726, %728 : vector<8x128xf32>
    %cst_204 = arith.constant 5.000000e-01 : f32
    %730 = vector.broadcast %cst_204 : f32 to vector<8x128xf32>
    %731 = arith.mulf %729, %730 : vector<8x128xf32>
    %732 = math.tanh %731 : vector<8x128xf32>
    %cst_205 = arith.constant 5.000000e-01 : f32
    %733 = vector.broadcast %cst_205 : f32 to vector<8x128xf32>
    %734 = arith.mulf %732, %733 : vector<8x128xf32>
    %cst_206 = arith.constant 5.000000e-01 : f32
    %735 = vector.broadcast %cst_206 : f32 to vector<8x128xf32>
    %736 = arith.addf %734, %735 : vector<8x128xf32>
    %737 = math.tanh %729 : vector<8x128xf32>
    %738 = vector.extract_strided_slice %736 {offsets = [0, 0], sizes = [8, 32], strides = [1, 1]} : vector<8x128xf32> to vector<8x32xf32>
    %739 = vector.extract_strided_slice %736 {offsets = [0, 32], sizes = [8, 32], strides = [1, 1]} : vector<8x128xf32> to vector<8x32xf32>
    %740 = vector.extract_strided_slice %737 {offsets = [0, 64], sizes = [8, 32], strides = [1, 1]} : vector<8x128xf32> to vector<8x32xf32>
    %741 = vector.extract_strided_slice %736 {offsets = [0, 96], sizes = [8, 32], strides = [1, 1]} : vector<8x128xf32> to vector<8x32xf32>
    %742 = arith.mulf %739, %699 : vector<8x32xf32>
    %743 = arith.mulf %738, %740 : vector<8x32xf32>
    %744 = arith.addf %742, %743 : vector<8x32xf32>
    %745 = math.tanh %744 : vector<8x32xf32>
    %746 = arith.mulf %741, %745 : vector<8x32xf32>
    %747 = tpu.concatenate %746, %722 in 1 : vector<8x32xf32>, vector<8x32xf32> -> vector<8x64xf32>
    %748 = arith.truncf %747 : vector<8x64xf32> to vector<8x64xbf16>
    %cst_207 = arith.constant dense<0.000000e+00> : vector<8x128xf32>
    %749 = tpu.matmul %748, %362, %cst_207 {dimension_numbers = #tpu.dot_dimension_numbers<[1], [0], [0], [1], [0, 0, 1, 1], [], []>} : vector<8x64xbf16>, vector<64x128xbf16>, vector<8x128xf32> -> vector<8x128xf32>
    %750 = arith.addf %749, %365 : vector<8x128xf32>
    %cst_208 = arith.constant 5.000000e-01 : f32
    %751 = vector.broadcast %cst_208 : f32 to vector<8x128xf32>
    %752 = arith.mulf %750, %751 : vector<8x128xf32>
    %753 = math.tanh %752 : vector<8x128xf32>
    %cst_209 = arith.constant 5.000000e-01 : f32
    %754 = vector.broadcast %cst_209 : f32 to vector<8x128xf32>
    %755 = arith.mulf %753, %754 : vector<8x128xf32>
    %cst_210 = arith.constant 5.000000e-01 : f32
    %756 = vector.broadcast %cst_210 : f32 to vector<8x128xf32>
    %757 = arith.addf %755, %756 : vector<8x128xf32>
    %758 = math.tanh %750 : vector<8x128xf32>
    %759 = vector.extract_strided_slice %757 {offsets = [0, 0], sizes = [8, 32], strides = [1, 1]} : vector<8x128xf32> to vector<8x32xf32>
    %760 = vector.extract_strided_slice %757 {offsets = [0, 32], sizes = [8, 32], strides = [1, 1]} : vector<8x128xf32> to vector<8x32xf32>
    %761 = vector.extract_strided_slice %758 {offsets = [0, 64], sizes = [8, 32], strides = [1, 1]} : vector<8x128xf32> to vector<8x32xf32>
    %762 = vector.extract_strided_slice %757 {offsets = [0, 96], sizes = [8, 32], strides = [1, 1]} : vector<8x128xf32> to vector<8x32xf32>
    %763 = arith.mulf %760, %720 : vector<8x32xf32>
    %764 = arith.mulf %759, %761 : vector<8x32xf32>
    %765 = arith.addf %763, %764 : vector<8x32xf32>
    %766 = math.tanh %765 : vector<8x32xf32>
    %767 = arith.mulf %762, %766 : vector<8x32xf32>
    %c8_211 = arith.constant 8 : index
    %c0_212 = arith.constant 0 : index
    %c0_213 = arith.constant 0 : index
    %768 = vector.load %arg23[%c8_211, %c0_212, %c0_213] : memref<20x8x32xf32, #tpu.memory_space<vmem>>, vector<1x8x32xf32>
    %769 = vector.shape_cast %768 : vector<1x8x32xf32> to vector<8x32xf32>
    %770 = vector.shape_cast %767 : vector<8x32xf32> to vector<1x8x32xf32>
    tpu.vector_store %arg23[%c8_211, %c0_212, %c0_213], %770 {strides = array<i32>} : memref<20x8x32xf32, #tpu.memory_space<vmem>>, vector<1x8x32xf32>,
    %c72 = arith.constant 72 : index
    %c0_214 = arith.constant 0 : index
    %771 = vector.load %arg22[%c72, %c0_214] : memref<112x128xf32, #tpu.memory_space<vmem>>, vector<8x128xf32>
    %772 = arith.truncf %746 : vector<8x32xf32> to vector<8x32xbf16>
    %cst_215 = arith.constant dense<0.000000e+00> : vector<8x128xf32>
    %773 = tpu.matmul %772, %354, %cst_215 {dimension_numbers = #tpu.dot_dimension_numbers<[1], [0], [0], [1], [0, 0, 1, 1], [], []>} : vector<8x32xbf16>, vector<32x128xbf16>, vector<8x128xf32> -> vector<8x128xf32>
    %774 = arith.addf %771, %773 : vector<8x128xf32>
    %cst_216 = arith.constant 5.000000e-01 : f32
    %775 = vector.broadcast %cst_216 : f32 to vector<8x128xf32>
    %776 = arith.mulf %774, %775 : vector<8x128xf32>
    %777 = math.tanh %776 : vector<8x128xf32>
    %cst_217 = arith.constant 5.000000e-01 : f32
    %778 = vector.broadcast %cst_217 : f32 to vector<8x128xf32>
    %779 = arith.mulf %777, %778 : vector<8x128xf32>
    %cst_218 = arith.constant 5.000000e-01 : f32
    %780 = vector.broadcast %cst_218 : f32 to vector<8x128xf32>
    %781 = arith.addf %779, %780 : vector<8x128xf32>
    %782 = math.tanh %774 : vector<8x128xf32>
    %783 = vector.extract_strided_slice %781 {offsets = [0, 0], sizes = [8, 32], strides = [1, 1]} : vector<8x128xf32> to vector<8x32xf32>
    %784 = vector.extract_strided_slice %781 {offsets = [0, 32], sizes = [8, 32], strides = [1, 1]} : vector<8x128xf32> to vector<8x32xf32>
    %785 = vector.extract_strided_slice %782 {offsets = [0, 64], sizes = [8, 32], strides = [1, 1]} : vector<8x128xf32> to vector<8x32xf32>
    %786 = vector.extract_strided_slice %781 {offsets = [0, 96], sizes = [8, 32], strides = [1, 1]} : vector<8x128xf32> to vector<8x32xf32>
    %787 = arith.mulf %784, %744 : vector<8x32xf32>
    %788 = arith.mulf %783, %785 : vector<8x32xf32>
    %789 = arith.addf %787, %788 : vector<8x32xf32>
    %790 = math.tanh %789 : vector<8x32xf32>
    %791 = arith.mulf %786, %790 : vector<8x32xf32>
    %792 = tpu.concatenate %791, %767 in 1 : vector<8x32xf32>, vector<8x32xf32> -> vector<8x64xf32>
    %793 = arith.truncf %792 : vector<8x64xf32> to vector<8x64xbf16>
    %cst_219 = arith.constant dense<0.000000e+00> : vector<8x128xf32>
    %794 = tpu.matmul %793, %362, %cst_219 {dimension_numbers = #tpu.dot_dimension_numbers<[1], [0], [0], [1], [0, 0, 1, 1], [], []>} : vector<8x64xbf16>, vector<64x128xbf16>, vector<8x128xf32> -> vector<8x128xf32>
    %795 = arith.addf %794, %365 : vector<8x128xf32>
    %cst_220 = arith.constant 5.000000e-01 : f32
    %796 = vector.broadcast %cst_220 : f32 to vector<8x128xf32>
    %797 = arith.mulf %795, %796 : vector<8x128xf32>
    %798 = math.tanh %797 : vector<8x128xf32>
    %cst_221 = arith.constant 5.000000e-01 : f32
    %799 = vector.broadcast %cst_221 : f32 to vector<8x128xf32>
    %800 = arith.mulf %798, %799 : vector<8x128xf32>
    %cst_222 = arith.constant 5.000000e-01 : f32
    %801 = vector.broadcast %cst_222 : f32 to vector<8x128xf32>
    %802 = arith.addf %800, %801 : vector<8x128xf32>
    %803 = math.tanh %795 : vector<8x128xf32>
    %804 = vector.extract_strided_slice %802 {offsets = [0, 0], sizes = [8, 32], strides = [1, 1]} : vector<8x128xf32> to vector<8x32xf32>
    %805 = vector.extract_strided_slice %802 {offsets = [0, 32], sizes = [8, 32], strides = [1, 1]} : vector<8x128xf32> to vector<8x32xf32>
    %806 = vector.extract_strided_slice %803 {offsets = [0, 64], sizes = [8, 32], strides = [1, 1]} : vector<8x128xf32> to vector<8x32xf32>
    %807 = vector.extract_strided_slice %802 {offsets = [0, 96], sizes = [8, 32], strides = [1, 1]} : vector<8x128xf32> to vector<8x32xf32>
    %808 = arith.mulf %805, %765 : vector<8x32xf32>
    %809 = arith.mulf %804, %806 : vector<8x32xf32>
    %810 = arith.addf %808, %809 : vector<8x32xf32>
    %811 = math.tanh %810 : vector<8x32xf32>
    %812 = arith.mulf %807, %811 : vector<8x32xf32>
    %c9 = arith.constant 9 : index
    %c0_223 = arith.constant 0 : index
    %c0_224 = arith.constant 0 : index
    %813 = vector.load %arg23[%c9, %c0_223, %c0_224] : memref<20x8x32xf32, #tpu.memory_space<vmem>>, vector<1x8x32xf32>
    %814 = vector.shape_cast %813 : vector<1x8x32xf32> to vector<8x32xf32>
    %815 = vector.shape_cast %812 : vector<8x32xf32> to vector<1x8x32xf32>
    tpu.vector_store %arg23[%c9, %c0_223, %c0_224], %815 {strides = array<i32>} : memref<20x8x32xf32, #tpu.memory_space<vmem>>, vector<1x8x32xf32>,
    %c80 = arith.constant 80 : index
    %c0_225 = arith.constant 0 : index
    %816 = vector.load %arg22[%c80, %c0_225] : memref<112x128xf32, #tpu.memory_space<vmem>>, vector<8x128xf32>
    %817 = arith.truncf %791 : vector<8x32xf32> to vector<8x32xbf16>
    %cst_226 = arith.constant dense<0.000000e+00> : vector<8x128xf32>
    %818 = tpu.matmul %817, %354, %cst_226 {dimension_numbers = #tpu.dot_dimension_numbers<[1], [0], [0], [1], [0, 0, 1, 1], [], []>} : vector<8x32xbf16>, vector<32x128xbf16>, vector<8x128xf32> -> vector<8x128xf32>
    %819 = arith.addf %816, %818 : vector<8x128xf32>
    %cst_227 = arith.constant 5.000000e-01 : f32
    %820 = vector.broadcast %cst_227 : f32 to vector<8x128xf32>
    %821 = arith.mulf %819, %820 : vector<8x128xf32>
    %822 = math.tanh %821 : vector<8x128xf32>
    %cst_228 = arith.constant 5.000000e-01 : f32
    %823 = vector.broadcast %cst_228 : f32 to vector<8x128xf32>
    %824 = arith.mulf %822, %823 : vector<8x128xf32>
    %cst_229 = arith.constant 5.000000e-01 : f32
    %825 = vector.broadcast %cst_229 : f32 to vector<8x128xf32>
    %826 = arith.addf %824, %825 : vector<8x128xf32>
    %827 = math.tanh %819 : vector<8x128xf32>
    %828 = vector.extract_strided_slice %826 {offsets = [0, 0], sizes = [8, 32], strides = [1, 1]} : vector<8x128xf32> to vector<8x32xf32>
    %829 = vector.extract_strided_slice %826 {offsets = [0, 32], sizes = [8, 32], strides = [1, 1]} : vector<8x128xf32> to vector<8x32xf32>
    %830 = vector.extract_strided_slice %827 {offsets = [0, 64], sizes = [8, 32], strides = [1, 1]} : vector<8x128xf32> to vector<8x32xf32>
    %831 = vector.extract_strided_slice %826 {offsets = [0, 96], sizes = [8, 32], strides = [1, 1]} : vector<8x128xf32> to vector<8x32xf32>
    %832 = arith.mulf %829, %789 : vector<8x32xf32>
    %833 = arith.mulf %828, %830 : vector<8x32xf32>
    %834 = arith.addf %832, %833 : vector<8x32xf32>
    %835 = math.tanh %834 : vector<8x32xf32>
    %836 = arith.mulf %831, %835 : vector<8x32xf32>
    %837 = tpu.concatenate %836, %812 in 1 : vector<8x32xf32>, vector<8x32xf32> -> vector<8x64xf32>
    %838 = arith.truncf %837 : vector<8x64xf32> to vector<8x64xbf16>
    %cst_230 = arith.constant dense<0.000000e+00> : vector<8x128xf32>
    %839 = tpu.matmul %838, %362, %cst_230 {dimension_numbers = #tpu.dot_dimension_numbers<[1], [0], [0], [1], [0, 0, 1, 1], [], []>} : vector<8x64xbf16>, vector<64x128xbf16>, vector<8x128xf32> -> vector<8x128xf32>
    %840 = arith.addf %839, %365 : vector<8x128xf32>
    %cst_231 = arith.constant 5.000000e-01 : f32
    %841 = vector.broadcast %cst_231 : f32 to vector<8x128xf32>
    %842 = arith.mulf %840, %841 : vector<8x128xf32>
    %843 = math.tanh %842 : vector<8x128xf32>
    %cst_232 = arith.constant 5.000000e-01 : f32
    %844 = vector.broadcast %cst_232 : f32 to vector<8x128xf32>
    %845 = arith.mulf %843, %844 : vector<8x128xf32>
    %cst_233 = arith.constant 5.000000e-01 : f32
    %846 = vector.broadcast %cst_233 : f32 to vector<8x128xf32>
    %847 = arith.addf %845, %846 : vector<8x128xf32>
    %848 = math.tanh %840 : vector<8x128xf32>
    %849 = vector.extract_strided_slice %847 {offsets = [0, 0], sizes = [8, 32], strides = [1, 1]} : vector<8x128xf32> to vector<8x32xf32>
    %850 = vector.extract_strided_slice %847 {offsets = [0, 32], sizes = [8, 32], strides = [1, 1]} : vector<8x128xf32> to vector<8x32xf32>
    %851 = vector.extract_strided_slice %848 {offsets = [0, 64], sizes = [8, 32], strides = [1, 1]} : vector<8x128xf32> to vector<8x32xf32>
    %852 = vector.extract_strided_slice %847 {offsets = [0, 96], sizes = [8, 32], strides = [1, 1]} : vector<8x128xf32> to vector<8x32xf32>
    %853 = arith.mulf %850, %810 : vector<8x32xf32>
    %854 = arith.mulf %849, %851 : vector<8x32xf32>
    %855 = arith.addf %853, %854 : vector<8x32xf32>
    %856 = math.tanh %855 : vector<8x32xf32>
    %857 = arith.mulf %852, %856 : vector<8x32xf32>
    %c10 = arith.constant 10 : index
    %c0_234 = arith.constant 0 : index
    %c0_235 = arith.constant 0 : index
    %858 = vector.load %arg23[%c10, %c0_234, %c0_235] : memref<20x8x32xf32, #tpu.memory_space<vmem>>, vector<1x8x32xf32>
    %859 = vector.shape_cast %858 : vector<1x8x32xf32> to vector<8x32xf32>
    %860 = vector.shape_cast %857 : vector<8x32xf32> to vector<1x8x32xf32>
    tpu.vector_store %arg23[%c10, %c0_234, %c0_235], %860 {strides = array<i32>} : memref<20x8x32xf32, #tpu.memory_space<vmem>>, vector<1x8x32xf32>,
    %c88 = arith.constant 88 : index
    %c0_236 = arith.constant 0 : index
    %861 = vector.load %arg22[%c88, %c0_236] : memref<112x128xf32, #tpu.memory_space<vmem>>, vector<8x128xf32>
    %862 = arith.truncf %836 : vector<8x32xf32> to vector<8x32xbf16>
    %cst_237 = arith.constant dense<0.000000e+00> : vector<8x128xf32>
    %863 = tpu.matmul %862, %354, %cst_237 {dimension_numbers = #tpu.dot_dimension_numbers<[1], [0], [0], [1], [0, 0, 1, 1], [], []>} : vector<8x32xbf16>, vector<32x128xbf16>, vector<8x128xf32> -> vector<8x128xf32>
    %864 = arith.addf %861, %863 : vector<8x128xf32>
    %cst_238 = arith.constant 5.000000e-01 : f32
    %865 = vector.broadcast %cst_238 : f32 to vector<8x128xf32>
    %866 = arith.mulf %864, %865 : vector<8x128xf32>
    %867 = math.tanh %866 : vector<8x128xf32>
    %cst_239 = arith.constant 5.000000e-01 : f32
    %868 = vector.broadcast %cst_239 : f32 to vector<8x128xf32>
    %869 = arith.mulf %867, %868 : vector<8x128xf32>
    %cst_240 = arith.constant 5.000000e-01 : f32
    %870 = vector.broadcast %cst_240 : f32 to vector<8x128xf32>
    %871 = arith.addf %869, %870 : vector<8x128xf32>
    %872 = math.tanh %864 : vector<8x128xf32>
    %873 = vector.extract_strided_slice %871 {offsets = [0, 0], sizes = [8, 32], strides = [1, 1]} : vector<8x128xf32> to vector<8x32xf32>
    %874 = vector.extract_strided_slice %871 {offsets = [0, 32], sizes = [8, 32], strides = [1, 1]} : vector<8x128xf32> to vector<8x32xf32>
    %875 = vector.extract_strided_slice %872 {offsets = [0, 64], sizes = [8, 32], strides = [1, 1]} : vector<8x128xf32> to vector<8x32xf32>
    %876 = vector.extract_strided_slice %871 {offsets = [0, 96], sizes = [8, 32], strides = [1, 1]} : vector<8x128xf32> to vector<8x32xf32>
    %877 = arith.mulf %874, %834 : vector<8x32xf32>
    %878 = arith.mulf %873, %875 : vector<8x32xf32>
    %879 = arith.addf %877, %878 : vector<8x32xf32>
    %880 = math.tanh %879 : vector<8x32xf32>
    %881 = arith.mulf %876, %880 : vector<8x32xf32>
    %882 = tpu.concatenate %881, %857 in 1 : vector<8x32xf32>, vector<8x32xf32> -> vector<8x64xf32>
    %883 = arith.truncf %882 : vector<8x64xf32> to vector<8x64xbf16>
    %cst_241 = arith.constant dense<0.000000e+00> : vector<8x128xf32>
    %884 = tpu.matmul %883, %362, %cst_241 {dimension_numbers = #tpu.dot_dimension_numbers<[1], [0], [0], [1], [0, 0, 1, 1], [], []>} : vector<8x64xbf16>, vector<64x128xbf16>, vector<8x128xf32> -> vector<8x128xf32>
    %885 = arith.addf %884, %365 : vector<8x128xf32>
    %cst_242 = arith.constant 5.000000e-01 : f32
    %886 = vector.broadcast %cst_242 : f32 to vector<8x128xf32>
    %887 = arith.mulf %885, %886 : vector<8x128xf32>
    %888 = math.tanh %887 : vector<8x128xf32>
    %cst_243 = arith.constant 5.000000e-01 : f32
    %889 = vector.broadcast %cst_243 : f32 to vector<8x128xf32>
    %890 = arith.mulf %888, %889 : vector<8x128xf32>
    %cst_244 = arith.constant 5.000000e-01 : f32
    %891 = vector.broadcast %cst_244 : f32 to vector<8x128xf32>
    %892 = arith.addf %890, %891 : vector<8x128xf32>
    %893 = math.tanh %885 : vector<8x128xf32>
    %894 = vector.extract_strided_slice %892 {offsets = [0, 0], sizes = [8, 32], strides = [1, 1]} : vector<8x128xf32> to vector<8x32xf32>
    %895 = vector.extract_strided_slice %892 {offsets = [0, 32], sizes = [8, 32], strides = [1, 1]} : vector<8x128xf32> to vector<8x32xf32>
    %896 = vector.extract_strided_slice %893 {offsets = [0, 64], sizes = [8, 32], strides = [1, 1]} : vector<8x128xf32> to vector<8x32xf32>
    %897 = vector.extract_strided_slice %892 {offsets = [0, 96], sizes = [8, 32], strides = [1, 1]} : vector<8x128xf32> to vector<8x32xf32>
    %898 = arith.mulf %895, %855 : vector<8x32xf32>
    %899 = arith.mulf %894, %896 : vector<8x32xf32>
    %900 = arith.addf %898, %899 : vector<8x32xf32>
    %901 = math.tanh %900 : vector<8x32xf32>
    %902 = arith.mulf %897, %901 : vector<8x32xf32>
    %c11 = arith.constant 11 : index
    %c0_245 = arith.constant 0 : index
    %c0_246 = arith.constant 0 : index
    %903 = vector.load %arg23[%c11, %c0_245, %c0_246] : memref<20x8x32xf32, #tpu.memory_space<vmem>>, vector<1x8x32xf32>
    %904 = vector.shape_cast %903 : vector<1x8x32xf32> to vector<8x32xf32>
    %905 = vector.shape_cast %902 : vector<8x32xf32> to vector<1x8x32xf32>
    tpu.vector_store %arg23[%c11, %c0_245, %c0_246], %905 {strides = array<i32>} : memref<20x8x32xf32, #tpu.memory_space<vmem>>, vector<1x8x32xf32>,
    %c96 = arith.constant 96 : index
    %c0_247 = arith.constant 0 : index
    %906 = vector.load %arg22[%c96, %c0_247] : memref<112x128xf32, #tpu.memory_space<vmem>>, vector<8x128xf32>
    %907 = arith.truncf %881 : vector<8x32xf32> to vector<8x32xbf16>
    %cst_248 = arith.constant dense<0.000000e+00> : vector<8x128xf32>
    %908 = tpu.matmul %907, %354, %cst_248 {dimension_numbers = #tpu.dot_dimension_numbers<[1], [0], [0], [1], [0, 0, 1, 1], [], []>} : vector<8x32xbf16>, vector<32x128xbf16>, vector<8x128xf32> -> vector<8x128xf32>
    %909 = arith.addf %906, %908 : vector<8x128xf32>
    %cst_249 = arith.constant 5.000000e-01 : f32
    %910 = vector.broadcast %cst_249 : f32 to vector<8x128xf32>
    %911 = arith.mulf %909, %910 : vector<8x128xf32>
    %912 = math.tanh %911 : vector<8x128xf32>
    %cst_250 = arith.constant 5.000000e-01 : f32
    %913 = vector.broadcast %cst_250 : f32 to vector<8x128xf32>
    %914 = arith.mulf %912, %913 : vector<8x128xf32>
    %cst_251 = arith.constant 5.000000e-01 : f32
    %915 = vector.broadcast %cst_251 : f32 to vector<8x128xf32>
    %916 = arith.addf %914, %915 : vector<8x128xf32>
    %917 = math.tanh %909 : vector<8x128xf32>
    %918 = vector.extract_strided_slice %916 {offsets = [0, 0], sizes = [8, 32], strides = [1, 1]} : vector<8x128xf32> to vector<8x32xf32>
    %919 = vector.extract_strided_slice %916 {offsets = [0, 32], sizes = [8, 32], strides = [1, 1]} : vector<8x128xf32> to vector<8x32xf32>
    %920 = vector.extract_strided_slice %917 {offsets = [0, 64], sizes = [8, 32], strides = [1, 1]} : vector<8x128xf32> to vector<8x32xf32>
    %921 = vector.extract_strided_slice %916 {offsets = [0, 96], sizes = [8, 32], strides = [1, 1]} : vector<8x128xf32> to vector<8x32xf32>
    %922 = arith.mulf %919, %879 : vector<8x32xf32>
    %923 = arith.mulf %918, %920 : vector<8x32xf32>
    %924 = arith.addf %922, %923 : vector<8x32xf32>
    %925 = math.tanh %924 : vector<8x32xf32>
    %926 = arith.mulf %921, %925 : vector<8x32xf32>
    %927 = tpu.concatenate %926, %902 in 1 : vector<8x32xf32>, vector<8x32xf32> -> vector<8x64xf32>
    %928 = arith.truncf %927 : vector<8x64xf32> to vector<8x64xbf16>
    %cst_252 = arith.constant dense<0.000000e+00> : vector<8x128xf32>
    %929 = tpu.matmul %928, %362, %cst_252 {dimension_numbers = #tpu.dot_dimension_numbers<[1], [0], [0], [1], [0, 0, 1, 1], [], []>} : vector<8x64xbf16>, vector<64x128xbf16>, vector<8x128xf32> -> vector<8x128xf32>
    %930 = arith.addf %929, %365 : vector<8x128xf32>
    %cst_253 = arith.constant 5.000000e-01 : f32
    %931 = vector.broadcast %cst_253 : f32 to vector<8x128xf32>
    %932 = arith.mulf %930, %931 : vector<8x128xf32>
    %933 = math.tanh %932 : vector<8x128xf32>
    %cst_254 = arith.constant 5.000000e-01 : f32
    %934 = vector.broadcast %cst_254 : f32 to vector<8x128xf32>
    %935 = arith.mulf %933, %934 : vector<8x128xf32>
    %cst_255 = arith.constant 5.000000e-01 : f32
    %936 = vector.broadcast %cst_255 : f32 to vector<8x128xf32>
    %937 = arith.addf %935, %936 : vector<8x128xf32>
    %938 = math.tanh %930 : vector<8x128xf32>
    %939 = vector.extract_strided_slice %937 {offsets = [0, 0], sizes = [8, 32], strides = [1, 1]} : vector<8x128xf32> to vector<8x32xf32>
    %940 = vector.extract_strided_slice %937 {offsets = [0, 32], sizes = [8, 32], strides = [1, 1]} : vector<8x128xf32> to vector<8x32xf32>
    %941 = vector.extract_strided_slice %938 {offsets = [0, 64], sizes = [8, 32], strides = [1, 1]} : vector<8x128xf32> to vector<8x32xf32>
    %942 = vector.extract_strided_slice %937 {offsets = [0, 96], sizes = [8, 32], strides = [1, 1]} : vector<8x128xf32> to vector<8x32xf32>
    %943 = arith.mulf %940, %900 : vector<8x32xf32>
    %944 = arith.mulf %939, %941 : vector<8x32xf32>
    %945 = arith.addf %943, %944 : vector<8x32xf32>
    %946 = math.tanh %945 : vector<8x32xf32>
    %947 = arith.mulf %942, %946 : vector<8x32xf32>
    %c12 = arith.constant 12 : index
    %c0_256 = arith.constant 0 : index
    %c0_257 = arith.constant 0 : index
    %948 = vector.load %arg23[%c12, %c0_256, %c0_257] : memref<20x8x32xf32, #tpu.memory_space<vmem>>, vector<1x8x32xf32>
    %949 = vector.shape_cast %948 : vector<1x8x32xf32> to vector<8x32xf32>
    %950 = vector.shape_cast %947 : vector<8x32xf32> to vector<1x8x32xf32>
    tpu.vector_store %arg23[%c12, %c0_256, %c0_257], %950 {strides = array<i32>} : memref<20x8x32xf32, #tpu.memory_space<vmem>>, vector<1x8x32xf32>,
    %c104 = arith.constant 104 : index
    %c0_258 = arith.constant 0 : index
    %951 = vector.load %arg22[%c104, %c0_258] : memref<112x128xf32, #tpu.memory_space<vmem>>, vector<8x128xf32>
    %952 = arith.truncf %926 : vector<8x32xf32> to vector<8x32xbf16>
    %cst_259 = arith.constant dense<0.000000e+00> : vector<8x128xf32>
    %953 = tpu.matmul %952, %354, %cst_259 {dimension_numbers = #tpu.dot_dimension_numbers<[1], [0], [0], [1], [0, 0, 1, 1], [], []>} : vector<8x32xbf16>, vector<32x128xbf16>, vector<8x128xf32> -> vector<8x128xf32>
    %954 = arith.addf %951, %953 : vector<8x128xf32>
    %cst_260 = arith.constant 5.000000e-01 : f32
    %955 = vector.broadcast %cst_260 : f32 to vector<8x128xf32>
    %956 = arith.mulf %954, %955 : vector<8x128xf32>
    %957 = math.tanh %956 : vector<8x128xf32>
    %cst_261 = arith.constant 5.000000e-01 : f32
    %958 = vector.broadcast %cst_261 : f32 to vector<8x128xf32>
    %959 = arith.mulf %957, %958 : vector<8x128xf32>
    %cst_262 = arith.constant 5.000000e-01 : f32
    %960 = vector.broadcast %cst_262 : f32 to vector<8x128xf32>
    %961 = arith.addf %959, %960 : vector<8x128xf32>
    %962 = math.tanh %954 : vector<8x128xf32>
    %963 = vector.extract_strided_slice %961 {offsets = [0, 0], sizes = [8, 32], strides = [1, 1]} : vector<8x128xf32> to vector<8x32xf32>
    %964 = vector.extract_strided_slice %961 {offsets = [0, 32], sizes = [8, 32], strides = [1, 1]} : vector<8x128xf32> to vector<8x32xf32>
    %965 = vector.extract_strided_slice %962 {offsets = [0, 64], sizes = [8, 32], strides = [1, 1]} : vector<8x128xf32> to vector<8x32xf32>
    %966 = vector.extract_strided_slice %961 {offsets = [0, 96], sizes = [8, 32], strides = [1, 1]} : vector<8x128xf32> to vector<8x32xf32>
    %967 = arith.mulf %964, %924 : vector<8x32xf32>
    %968 = arith.mulf %963, %965 : vector<8x32xf32>
    %969 = arith.addf %967, %968 : vector<8x32xf32>
    %970 = math.tanh %969 : vector<8x32xf32>
    %971 = arith.mulf %966, %970 : vector<8x32xf32>
    %972 = tpu.concatenate %971, %947 in 1 : vector<8x32xf32>, vector<8x32xf32> -> vector<8x64xf32>
    %973 = arith.truncf %972 : vector<8x64xf32> to vector<8x64xbf16>
    %cst_263 = arith.constant dense<0.000000e+00> : vector<8x128xf32>
    %974 = tpu.matmul %973, %362, %cst_263 {dimension_numbers = #tpu.dot_dimension_numbers<[1], [0], [0], [1], [0, 0, 1, 1], [], []>} : vector<8x64xbf16>, vector<64x128xbf16>, vector<8x128xf32> -> vector<8x128xf32>
    %975 = arith.addf %974, %365 : vector<8x128xf32>
    %cst_264 = arith.constant 5.000000e-01 : f32
    %976 = vector.broadcast %cst_264 : f32 to vector<8x128xf32>
    %977 = arith.mulf %975, %976 : vector<8x128xf32>
    %978 = math.tanh %977 : vector<8x128xf32>
    %cst_265 = arith.constant 5.000000e-01 : f32
    %979 = vector.broadcast %cst_265 : f32 to vector<8x128xf32>
    %980 = arith.mulf %978, %979 : vector<8x128xf32>
    %cst_266 = arith.constant 5.000000e-01 : f32
    %981 = vector.broadcast %cst_266 : f32 to vector<8x128xf32>
    %982 = arith.addf %980, %981 : vector<8x128xf32>
    %983 = math.tanh %975 : vector<8x128xf32>
    %984 = vector.extract_strided_slice %982 {offsets = [0, 0], sizes = [8, 32], strides = [1, 1]} : vector<8x128xf32> to vector<8x32xf32>
    %985 = vector.extract_strided_slice %982 {offsets = [0, 32], sizes = [8, 32], strides = [1, 1]} : vector<8x128xf32> to vector<8x32xf32>
    %986 = vector.extract_strided_slice %983 {offsets = [0, 64], sizes = [8, 32], strides = [1, 1]} : vector<8x128xf32> to vector<8x32xf32>
    %987 = vector.extract_strided_slice %982 {offsets = [0, 96], sizes = [8, 32], strides = [1, 1]} : vector<8x128xf32> to vector<8x32xf32>
    %988 = arith.mulf %985, %945 : vector<8x32xf32>
    %989 = arith.mulf %984, %986 : vector<8x32xf32>
    %990 = arith.addf %988, %989 : vector<8x32xf32>
    %991 = math.tanh %990 : vector<8x32xf32>
    %992 = arith.mulf %987, %991 : vector<8x32xf32>
    %c13 = arith.constant 13 : index
    %c0_267 = arith.constant 0 : index
    %c0_268 = arith.constant 0 : index
    %993 = vector.load %arg23[%c13, %c0_267, %c0_268] : memref<20x8x32xf32, #tpu.memory_space<vmem>>, vector<1x8x32xf32>
    %994 = vector.shape_cast %993 : vector<1x8x32xf32> to vector<8x32xf32>
    %995 = vector.shape_cast %992 : vector<8x32xf32> to vector<1x8x32xf32>
    tpu.vector_store %arg23[%c13, %c0_267, %c0_268], %995 {strides = array<i32>} : memref<20x8x32xf32, #tpu.memory_space<vmem>>, vector<1x8x32xf32>,
    %c0_269 = arith.constant 0 : index
    %c0_270 = arith.constant 0 : index
    %996 = vector.load %arg14[%c0_269, %c0_270] : memref<8x128xbf16, #tpu.memory_space<vmem>>, vector<8x128xbf16>
    %c0_271 = arith.constant 0 : index
    %c0_272 = arith.constant 0 : index
    %997 = vector.load %arg15[%c0_271, %c0_272] : memref<32x128xbf16, #tpu.memory_space<vmem>>, vector<32x128xbf16>
    %c0_273 = arith.constant 0 : index
    %c0_274 = arith.constant 0 : index
    %998 = vector.load %arg3[%c0_273, %c0_274] : memref<48x8xf32, #tpu.memory_space<vmem>>, vector<48x8xf32>
    %999 = arith.truncf %998 : vector<48x8xf32> to vector<48x8xbf16>
    %cst_275 = arith.constant dense<0.000000e+00> : vector<48x128xf32>
    %1000 = tpu.matmul %999, %996, %cst_275 {dimension_numbers = #tpu.dot_dimension_numbers<[1], [0], [0], [1], [0, 0, 1, 1], [], []>} : vector<48x8xbf16>, vector<8x128xbf16>, vector<48x128xf32> -> vector<48x128xf32>
    %c0_276 = arith.constant 0 : index
    %c0_277 = arith.constant 0 : index
    %1001 = vector.load %arg16[%c0_276, %c0_277] : memref<1x128xf32, #tpu.memory_space<vmem>>, vector<1x128xf32>
    %1002 = vector.broadcast %1001 : vector<1x128xf32> to vector<48x128xf32>
    %1003 = arith.addf %1000, %1002 : vector<48x128xf32>
    %c0_278 = arith.constant 0 : index
    %c0_279 = arith.constant 0 : index
    %1004 = vector.load %arg22[%c0_278, %c0_279] : memref<112x128xf32, #tpu.memory_space<vmem>>, vector<48x128xf32>
    tpu.vector_store %arg22[%c0_278, %c0_279], %1003 {strides = array<i32>} : memref<112x128xf32, #tpu.memory_space<vmem>>, vector<48x128xf32>,
    %c0_280 = arith.constant 0 : index
    %c0_281 = arith.constant 0 : index
    %1005 = vector.load %arg17[%c0_280, %c0_281] : memref<64x128xbf16, #tpu.memory_space<vmem>>, vector<64x128xbf16>
    %c0_282 = arith.constant 0 : index
    %c0_283 = arith.constant 0 : index
    %1006 = vector.load %arg18[%c0_282, %c0_283] : memref<1x128xf32, #tpu.memory_space<vmem>>, vector<1x128xf32>
    %1007 = vector.shape_cast %1006 : vector<1x128xf32> to vector<1x128xf32>
    %1008 = vector.broadcast %1007 : vector<1x128xf32> to vector<8x128xf32>
    %c0_284 = arith.constant 0 : index
    %c0_285 = arith.constant 0 : index
    %1009 = vector.load %arg22[%c0_284, %c0_285] : memref<112x128xf32, #tpu.memory_space<vmem>>, vector<8x128xf32>
    %1010 = arith.truncf %971 : vector<8x32xf32> to vector<8x32xbf16>
    %cst_286 = arith.constant dense<0.000000e+00> : vector<8x128xf32>
    %1011 = tpu.matmul %1010, %997, %cst_286 {dimension_numbers = #tpu.dot_dimension_numbers<[1], [0], [0], [1], [0, 0, 1, 1], [], []>} : vector<8x32xbf16>, vector<32x128xbf16>, vector<8x128xf32> -> vector<8x128xf32>
    %1012 = arith.addf %1009, %1011 : vector<8x128xf32>
    %cst_287 = arith.constant 5.000000e-01 : f32
    %1013 = vector.broadcast %cst_287 : f32 to vector<8x128xf32>
    %1014 = arith.mulf %1012, %1013 : vector<8x128xf32>
    %1015 = math.tanh %1014 : vector<8x128xf32>
    %cst_288 = arith.constant 5.000000e-01 : f32
    %1016 = vector.broadcast %cst_288 : f32 to vector<8x128xf32>
    %1017 = arith.mulf %1015, %1016 : vector<8x128xf32>
    %cst_289 = arith.constant 5.000000e-01 : f32
    %1018 = vector.broadcast %cst_289 : f32 to vector<8x128xf32>
    %1019 = arith.addf %1017, %1018 : vector<8x128xf32>
    %1020 = math.tanh %1012 : vector<8x128xf32>
    %1021 = vector.extract_strided_slice %1019 {offsets = [0, 0], sizes = [8, 32], strides = [1, 1]} : vector<8x128xf32> to vector<8x32xf32>
    %1022 = vector.extract_strided_slice %1019 {offsets = [0, 32], sizes = [8, 32], strides = [1, 1]} : vector<8x128xf32> to vector<8x32xf32>
    %1023 = vector.extract_strided_slice %1020 {offsets = [0, 64], sizes = [8, 32], strides = [1, 1]} : vector<8x128xf32> to vector<8x32xf32>
    %1024 = vector.extract_strided_slice %1019 {offsets = [0, 96], sizes = [8, 32], strides = [1, 1]} : vector<8x128xf32> to vector<8x32xf32>
    %1025 = arith.mulf %1022, %969 : vector<8x32xf32>
    %1026 = arith.mulf %1021, %1023 : vector<8x32xf32>
    %1027 = arith.addf %1025, %1026 : vector<8x32xf32>
    %1028 = math.tanh %1027 : vector<8x32xf32>
    %1029 = arith.mulf %1024, %1028 : vector<8x32xf32>
    %1030 = tpu.concatenate %1029, %992 in 1 : vector<8x32xf32>, vector<8x32xf32> -> vector<8x64xf32>
    %1031 = arith.truncf %1030 : vector<8x64xf32> to vector<8x64xbf16>
    %cst_290 = arith.constant dense<0.000000e+00> : vector<8x128xf32>
    %1032 = tpu.matmul %1031, %1005, %cst_290 {dimension_numbers = #tpu.dot_dimension_numbers<[1], [0], [0], [1], [0, 0, 1, 1], [], []>} : vector<8x64xbf16>, vector<64x128xbf16>, vector<8x128xf32> -> vector<8x128xf32>
    %1033 = arith.addf %1032, %1008 : vector<8x128xf32>
    %cst_291 = arith.constant 5.000000e-01 : f32
    %1034 = vector.broadcast %cst_291 : f32 to vector<8x128xf32>
    %1035 = arith.mulf %1033, %1034 : vector<8x128xf32>
    %1036 = math.tanh %1035 : vector<8x128xf32>
    %cst_292 = arith.constant 5.000000e-01 : f32
    %1037 = vector.broadcast %cst_292 : f32 to vector<8x128xf32>
    %1038 = arith.mulf %1036, %1037 : vector<8x128xf32>
    %cst_293 = arith.constant 5.000000e-01 : f32
    %1039 = vector.broadcast %cst_293 : f32 to vector<8x128xf32>
    %1040 = arith.addf %1038, %1039 : vector<8x128xf32>
    %1041 = math.tanh %1033 : vector<8x128xf32>
    %1042 = vector.extract_strided_slice %1040 {offsets = [0, 0], sizes = [8, 32], strides = [1, 1]} : vector<8x128xf32> to vector<8x32xf32>
    %1043 = vector.extract_strided_slice %1040 {offsets = [0, 32], sizes = [8, 32], strides = [1, 1]} : vector<8x128xf32> to vector<8x32xf32>
    %1044 = vector.extract_strided_slice %1041 {offsets = [0, 64], sizes = [8, 32], strides = [1, 1]} : vector<8x128xf32> to vector<8x32xf32>
    %1045 = vector.extract_strided_slice %1040 {offsets = [0, 96], sizes = [8, 32], strides = [1, 1]} : vector<8x128xf32> to vector<8x32xf32>
    %1046 = arith.mulf %1043, %990 : vector<8x32xf32>
    %1047 = arith.mulf %1042, %1044 : vector<8x32xf32>
    %1048 = arith.addf %1046, %1047 : vector<8x32xf32>
    %1049 = math.tanh %1048 : vector<8x32xf32>
    %1050 = arith.mulf %1045, %1049 : vector<8x32xf32>
    %c14 = arith.constant 14 : index
    %c0_294 = arith.constant 0 : index
    %c0_295 = arith.constant 0 : index
    %1051 = vector.load %arg23[%c14, %c0_294, %c0_295] : memref<20x8x32xf32, #tpu.memory_space<vmem>>, vector<1x8x32xf32>
    %1052 = vector.shape_cast %1051 : vector<1x8x32xf32> to vector<8x32xf32>
    %1053 = vector.shape_cast %1050 : vector<8x32xf32> to vector<1x8x32xf32>
    tpu.vector_store %arg23[%c14, %c0_294, %c0_295], %1053 {strides = array<i32>} : memref<20x8x32xf32, #tpu.memory_space<vmem>>, vector<1x8x32xf32>,
    %c8_296 = arith.constant 8 : index
    %c0_297 = arith.constant 0 : index
    %1054 = vector.load %arg22[%c8_296, %c0_297] : memref<112x128xf32, #tpu.memory_space<vmem>>, vector<8x128xf32>
    %1055 = arith.truncf %1029 : vector<8x32xf32> to vector<8x32xbf16>
    %cst_298 = arith.constant dense<0.000000e+00> : vector<8x128xf32>
    %1056 = tpu.matmul %1055, %997, %cst_298 {dimension_numbers = #tpu.dot_dimension_numbers<[1], [0], [0], [1], [0, 0, 1, 1], [], []>} : vector<8x32xbf16>, vector<32x128xbf16>, vector<8x128xf32> -> vector<8x128xf32>
    %1057 = arith.addf %1054, %1056 : vector<8x128xf32>
    %cst_299 = arith.constant 5.000000e-01 : f32
    %1058 = vector.broadcast %cst_299 : f32 to vector<8x128xf32>
    %1059 = arith.mulf %1057, %1058 : vector<8x128xf32>
    %1060 = math.tanh %1059 : vector<8x128xf32>
    %cst_300 = arith.constant 5.000000e-01 : f32
    %1061 = vector.broadcast %cst_300 : f32 to vector<8x128xf32>
    %1062 = arith.mulf %1060, %1061 : vector<8x128xf32>
    %cst_301 = arith.constant 5.000000e-01 : f32
    %1063 = vector.broadcast %cst_301 : f32 to vector<8x128xf32>
    %1064 = arith.addf %1062, %1063 : vector<8x128xf32>
    %1065 = math.tanh %1057 : vector<8x128xf32>
    %1066 = vector.extract_strided_slice %1064 {offsets = [0, 0], sizes = [8, 32], strides = [1, 1]} : vector<8x128xf32> to vector<8x32xf32>
    %1067 = vector.extract_strided_slice %1064 {offsets = [0, 32], sizes = [8, 32], strides = [1, 1]} : vector<8x128xf32> to vector<8x32xf32>
    %1068 = vector.extract_strided_slice %1065 {offsets = [0, 64], sizes = [8, 32], strides = [1, 1]} : vector<8x128xf32> to vector<8x32xf32>
    %1069 = vector.extract_strided_slice %1064 {offsets = [0, 96], sizes = [8, 32], strides = [1, 1]} : vector<8x128xf32> to vector<8x32xf32>
    %1070 = arith.mulf %1067, %1027 : vector<8x32xf32>
    %1071 = arith.mulf %1066, %1068 : vector<8x32xf32>
    %1072 = arith.addf %1070, %1071 : vector<8x32xf32>
    %1073 = math.tanh %1072 : vector<8x32xf32>
    %1074 = arith.mulf %1069, %1073 : vector<8x32xf32>
    %1075 = tpu.concatenate %1074, %1050 in 1 : vector<8x32xf32>, vector<8x32xf32> -> vector<8x64xf32>
    %1076 = arith.truncf %1075 : vector<8x64xf32> to vector<8x64xbf16>
    %cst_302 = arith.constant dense<0.000000e+00> : vector<8x128xf32>
    %1077 = tpu.matmul %1076, %1005, %cst_302 {dimension_numbers = #tpu.dot_dimension_numbers<[1], [0], [0], [1], [0, 0, 1, 1], [], []>} : vector<8x64xbf16>, vector<64x128xbf16>, vector<8x128xf32> -> vector<8x128xf32>
    %1078 = arith.addf %1077, %1008 : vector<8x128xf32>
    %cst_303 = arith.constant 5.000000e-01 : f32
    %1079 = vector.broadcast %cst_303 : f32 to vector<8x128xf32>
    %1080 = arith.mulf %1078, %1079 : vector<8x128xf32>
    %1081 = math.tanh %1080 : vector<8x128xf32>
    %cst_304 = arith.constant 5.000000e-01 : f32
    %1082 = vector.broadcast %cst_304 : f32 to vector<8x128xf32>
    %1083 = arith.mulf %1081, %1082 : vector<8x128xf32>
    %cst_305 = arith.constant 5.000000e-01 : f32
    %1084 = vector.broadcast %cst_305 : f32 to vector<8x128xf32>
    %1085 = arith.addf %1083, %1084 : vector<8x128xf32>
    %1086 = math.tanh %1078 : vector<8x128xf32>
    %1087 = vector.extract_strided_slice %1085 {offsets = [0, 0], sizes = [8, 32], strides = [1, 1]} : vector<8x128xf32> to vector<8x32xf32>
    %1088 = vector.extract_strided_slice %1085 {offsets = [0, 32], sizes = [8, 32], strides = [1, 1]} : vector<8x128xf32> to vector<8x32xf32>
    %1089 = vector.extract_strided_slice %1086 {offsets = [0, 64], sizes = [8, 32], strides = [1, 1]} : vector<8x128xf32> to vector<8x32xf32>
    %1090 = vector.extract_strided_slice %1085 {offsets = [0, 96], sizes = [8, 32], strides = [1, 1]} : vector<8x128xf32> to vector<8x32xf32>
    %1091 = arith.mulf %1088, %1048 : vector<8x32xf32>
    %1092 = arith.mulf %1087, %1089 : vector<8x32xf32>
    %1093 = arith.addf %1091, %1092 : vector<8x32xf32>
    %1094 = math.tanh %1093 : vector<8x32xf32>
    %1095 = arith.mulf %1090, %1094 : vector<8x32xf32>
    %c15 = arith.constant 15 : index
    %c0_306 = arith.constant 0 : index
    %c0_307 = arith.constant 0 : index
    %1096 = vector.load %arg23[%c15, %c0_306, %c0_307] : memref<20x8x32xf32, #tpu.memory_space<vmem>>, vector<1x8x32xf32>
    %1097 = vector.shape_cast %1096 : vector<1x8x32xf32> to vector<8x32xf32>
    %1098 = vector.shape_cast %1095 : vector<8x32xf32> to vector<1x8x32xf32>
    tpu.vector_store %arg23[%c15, %c0_306, %c0_307], %1098 {strides = array<i32>} : memref<20x8x32xf32, #tpu.memory_space<vmem>>, vector<1x8x32xf32>,
    %c16_308 = arith.constant 16 : index
    %c0_309 = arith.constant 0 : index
    %1099 = vector.load %arg22[%c16_308, %c0_309] : memref<112x128xf32, #tpu.memory_space<vmem>>, vector<8x128xf32>
    %1100 = arith.truncf %1074 : vector<8x32xf32> to vector<8x32xbf16>
    %cst_310 = arith.constant dense<0.000000e+00> : vector<8x128xf32>
    %1101 = tpu.matmul %1100, %997, %cst_310 {dimension_numbers = #tpu.dot_dimension_numbers<[1], [0], [0], [1], [0, 0, 1, 1], [], []>} : vector<8x32xbf16>, vector<32x128xbf16>, vector<8x128xf32> -> vector<8x128xf32>
    %1102 = arith.addf %1099, %1101 : vector<8x128xf32>
    %cst_311 = arith.constant 5.000000e-01 : f32
    %1103 = vector.broadcast %cst_311 : f32 to vector<8x128xf32>
    %1104 = arith.mulf %1102, %1103 : vector<8x128xf32>
    %1105 = math.tanh %1104 : vector<8x128xf32>
    %cst_312 = arith.constant 5.000000e-01 : f32
    %1106 = vector.broadcast %cst_312 : f32 to vector<8x128xf32>
    %1107 = arith.mulf %1105, %1106 : vector<8x128xf32>
    %cst_313 = arith.constant 5.000000e-01 : f32
    %1108 = vector.broadcast %cst_313 : f32 to vector<8x128xf32>
    %1109 = arith.addf %1107, %1108 : vector<8x128xf32>
    %1110 = math.tanh %1102 : vector<8x128xf32>
    %1111 = vector.extract_strided_slice %1109 {offsets = [0, 0], sizes = [8, 32], strides = [1, 1]} : vector<8x128xf32> to vector<8x32xf32>
    %1112 = vector.extract_strided_slice %1109 {offsets = [0, 32], sizes = [8, 32], strides = [1, 1]} : vector<8x128xf32> to vector<8x32xf32>
    %1113 = vector.extract_strided_slice %1110 {offsets = [0, 64], sizes = [8, 32], strides = [1, 1]} : vector<8x128xf32> to vector<8x32xf32>
    %1114 = vector.extract_strided_slice %1109 {offsets = [0, 96], sizes = [8, 32], strides = [1, 1]} : vector<8x128xf32> to vector<8x32xf32>
    %1115 = arith.mulf %1112, %1072 : vector<8x32xf32>
    %1116 = arith.mulf %1111, %1113 : vector<8x32xf32>
    %1117 = arith.addf %1115, %1116 : vector<8x32xf32>
    %1118 = math.tanh %1117 : vector<8x32xf32>
    %1119 = arith.mulf %1114, %1118 : vector<8x32xf32>
    %1120 = tpu.concatenate %1119, %1095 in 1 : vector<8x32xf32>, vector<8x32xf32> -> vector<8x64xf32>
    %1121 = arith.truncf %1120 : vector<8x64xf32> to vector<8x64xbf16>
    %cst_314 = arith.constant dense<0.000000e+00> : vector<8x128xf32>
    %1122 = tpu.matmul %1121, %1005, %cst_314 {dimension_numbers = #tpu.dot_dimension_numbers<[1], [0], [0], [1], [0, 0, 1, 1], [], []>} : vector<8x64xbf16>, vector<64x128xbf16>, vector<8x128xf32> -> vector<8x128xf32>
    %1123 = arith.addf %1122, %1008 : vector<8x128xf32>
    %cst_315 = arith.constant 5.000000e-01 : f32
    %1124 = vector.broadcast %cst_315 : f32 to vector<8x128xf32>
    %1125 = arith.mulf %1123, %1124 : vector<8x128xf32>
    %1126 = math.tanh %1125 : vector<8x128xf32>
    %cst_316 = arith.constant 5.000000e-01 : f32
    %1127 = vector.broadcast %cst_316 : f32 to vector<8x128xf32>
    %1128 = arith.mulf %1126, %1127 : vector<8x128xf32>
    %cst_317 = arith.constant 5.000000e-01 : f32
    %1129 = vector.broadcast %cst_317 : f32 to vector<8x128xf32>
    %1130 = arith.addf %1128, %1129 : vector<8x128xf32>
    %1131 = math.tanh %1123 : vector<8x128xf32>
    %1132 = vector.extract_strided_slice %1130 {offsets = [0, 0], sizes = [8, 32], strides = [1, 1]} : vector<8x128xf32> to vector<8x32xf32>
    %1133 = vector.extract_strided_slice %1130 {offsets = [0, 32], sizes = [8, 32], strides = [1, 1]} : vector<8x128xf32> to vector<8x32xf32>
    %1134 = vector.extract_strided_slice %1131 {offsets = [0, 64], sizes = [8, 32], strides = [1, 1]} : vector<8x128xf32> to vector<8x32xf32>
    %1135 = vector.extract_strided_slice %1130 {offsets = [0, 96], sizes = [8, 32], strides = [1, 1]} : vector<8x128xf32> to vector<8x32xf32>
    %1136 = arith.mulf %1133, %1093 : vector<8x32xf32>
    %1137 = arith.mulf %1132, %1134 : vector<8x32xf32>
    %1138 = arith.addf %1136, %1137 : vector<8x32xf32>
    %1139 = math.tanh %1138 : vector<8x32xf32>
    %1140 = arith.mulf %1135, %1139 : vector<8x32xf32>
    %c16_318 = arith.constant 16 : index
    %c0_319 = arith.constant 0 : index
    %c0_320 = arith.constant 0 : index
    %1141 = vector.load %arg23[%c16_318, %c0_319, %c0_320] : memref<20x8x32xf32, #tpu.memory_space<vmem>>, vector<1x8x32xf32>
    %1142 = vector.shape_cast %1141 : vector<1x8x32xf32> to vector<8x32xf32>
    %1143 = vector.shape_cast %1140 : vector<8x32xf32> to vector<1x8x32xf32>
    tpu.vector_store %arg23[%c16_318, %c0_319, %c0_320], %1143 {strides = array<i32>} : memref<20x8x32xf32, #tpu.memory_space<vmem>>, vector<1x8x32xf32>,
    %c24_321 = arith.constant 24 : index
    %c0_322 = arith.constant 0 : index
    %1144 = vector.load %arg22[%c24_321, %c0_322] : memref<112x128xf32, #tpu.memory_space<vmem>>, vector<8x128xf32>
    %1145 = arith.truncf %1119 : vector<8x32xf32> to vector<8x32xbf16>
    %cst_323 = arith.constant dense<0.000000e+00> : vector<8x128xf32>
    %1146 = tpu.matmul %1145, %997, %cst_323 {dimension_numbers = #tpu.dot_dimension_numbers<[1], [0], [0], [1], [0, 0, 1, 1], [], []>} : vector<8x32xbf16>, vector<32x128xbf16>, vector<8x128xf32> -> vector<8x128xf32>
    %1147 = arith.addf %1144, %1146 : vector<8x128xf32>
    %cst_324 = arith.constant 5.000000e-01 : f32
    %1148 = vector.broadcast %cst_324 : f32 to vector<8x128xf32>
    %1149 = arith.mulf %1147, %1148 : vector<8x128xf32>
    %1150 = math.tanh %1149 : vector<8x128xf32>
    %cst_325 = arith.constant 5.000000e-01 : f32
    %1151 = vector.broadcast %cst_325 : f32 to vector<8x128xf32>
    %1152 = arith.mulf %1150, %1151 : vector<8x128xf32>
    %cst_326 = arith.constant 5.000000e-01 : f32
    %1153 = vector.broadcast %cst_326 : f32 to vector<8x128xf32>
    %1154 = arith.addf %1152, %1153 : vector<8x128xf32>
    %1155 = math.tanh %1147 : vector<8x128xf32>
    %1156 = vector.extract_strided_slice %1154 {offsets = [0, 0], sizes = [8, 32], strides = [1, 1]} : vector<8x128xf32> to vector<8x32xf32>
    %1157 = vector.extract_strided_slice %1154 {offsets = [0, 32], sizes = [8, 32], strides = [1, 1]} : vector<8x128xf32> to vector<8x32xf32>
    %1158 = vector.extract_strided_slice %1155 {offsets = [0, 64], sizes = [8, 32], strides = [1, 1]} : vector<8x128xf32> to vector<8x32xf32>
    %1159 = vector.extract_strided_slice %1154 {offsets = [0, 96], sizes = [8, 32], strides = [1, 1]} : vector<8x128xf32> to vector<8x32xf32>
    %1160 = arith.mulf %1157, %1117 : vector<8x32xf32>
    %1161 = arith.mulf %1156, %1158 : vector<8x32xf32>
    %1162 = arith.addf %1160, %1161 : vector<8x32xf32>
    %1163 = math.tanh %1162 : vector<8x32xf32>
    %1164 = arith.mulf %1159, %1163 : vector<8x32xf32>
    %1165 = tpu.concatenate %1164, %1140 in 1 : vector<8x32xf32>, vector<8x32xf32> -> vector<8x64xf32>
    %1166 = arith.truncf %1165 : vector<8x64xf32> to vector<8x64xbf16>
    %cst_327 = arith.constant dense<0.000000e+00> : vector<8x128xf32>
    %1167 = tpu.matmul %1166, %1005, %cst_327 {dimension_numbers = #tpu.dot_dimension_numbers<[1], [0], [0], [1], [0, 0, 1, 1], [], []>} : vector<8x64xbf16>, vector<64x128xbf16>, vector<8x128xf32> -> vector<8x128xf32>
    %1168 = arith.addf %1167, %1008 : vector<8x128xf32>
    %cst_328 = arith.constant 5.000000e-01 : f32
    %1169 = vector.broadcast %cst_328 : f32 to vector<8x128xf32>
    %1170 = arith.mulf %1168, %1169 : vector<8x128xf32>
    %1171 = math.tanh %1170 : vector<8x128xf32>
    %cst_329 = arith.constant 5.000000e-01 : f32
    %1172 = vector.broadcast %cst_329 : f32 to vector<8x128xf32>
    %1173 = arith.mulf %1171, %1172 : vector<8x128xf32>
    %cst_330 = arith.constant 5.000000e-01 : f32
    %1174 = vector.broadcast %cst_330 : f32 to vector<8x128xf32>
    %1175 = arith.addf %1173, %1174 : vector<8x128xf32>
    %1176 = math.tanh %1168 : vector<8x128xf32>
    %1177 = vector.extract_strided_slice %1175 {offsets = [0, 0], sizes = [8, 32], strides = [1, 1]} : vector<8x128xf32> to vector<8x32xf32>
    %1178 = vector.extract_strided_slice %1175 {offsets = [0, 32], sizes = [8, 32], strides = [1, 1]} : vector<8x128xf32> to vector<8x32xf32>
    %1179 = vector.extract_strided_slice %1176 {offsets = [0, 64], sizes = [8, 32], strides = [1, 1]} : vector<8x128xf32> to vector<8x32xf32>
    %1180 = vector.extract_strided_slice %1175 {offsets = [0, 96], sizes = [8, 32], strides = [1, 1]} : vector<8x128xf32> to vector<8x32xf32>
    %1181 = arith.mulf %1178, %1138 : vector<8x32xf32>
    %1182 = arith.mulf %1177, %1179 : vector<8x32xf32>
    %1183 = arith.addf %1181, %1182 : vector<8x32xf32>
    %1184 = math.tanh %1183 : vector<8x32xf32>
    %1185 = arith.mulf %1180, %1184 : vector<8x32xf32>
    %c17 = arith.constant 17 : index
    %c0_331 = arith.constant 0 : index
    %c0_332 = arith.constant 0 : index
    %1186 = vector.load %arg23[%c17, %c0_331, %c0_332] : memref<20x8x32xf32, #tpu.memory_space<vmem>>, vector<1x8x32xf32>
    %1187 = vector.shape_cast %1186 : vector<1x8x32xf32> to vector<8x32xf32>
    %1188 = vector.shape_cast %1185 : vector<8x32xf32> to vector<1x8x32xf32>
    tpu.vector_store %arg23[%c17, %c0_331, %c0_332], %1188 {strides = array<i32>} : memref<20x8x32xf32, #tpu.memory_space<vmem>>, vector<1x8x32xf32>,
    %c32_333 = arith.constant 32 : index
    %c0_334 = arith.constant 0 : index
    %1189 = vector.load %arg22[%c32_333, %c0_334] : memref<112x128xf32, #tpu.memory_space<vmem>>, vector<8x128xf32>
    %1190 = arith.truncf %1164 : vector<8x32xf32> to vector<8x32xbf16>
    %cst_335 = arith.constant dense<0.000000e+00> : vector<8x128xf32>
    %1191 = tpu.matmul %1190, %997, %cst_335 {dimension_numbers = #tpu.dot_dimension_numbers<[1], [0], [0], [1], [0, 0, 1, 1], [], []>} : vector<8x32xbf16>, vector<32x128xbf16>, vector<8x128xf32> -> vector<8x128xf32>
    %1192 = arith.addf %1189, %1191 : vector<8x128xf32>
    %cst_336 = arith.constant 5.000000e-01 : f32
    %1193 = vector.broadcast %cst_336 : f32 to vector<8x128xf32>
    %1194 = arith.mulf %1192, %1193 : vector<8x128xf32>
    %1195 = math.tanh %1194 : vector<8x128xf32>
    %cst_337 = arith.constant 5.000000e-01 : f32
    %1196 = vector.broadcast %cst_337 : f32 to vector<8x128xf32>
    %1197 = arith.mulf %1195, %1196 : vector<8x128xf32>
    %cst_338 = arith.constant 5.000000e-01 : f32
    %1198 = vector.broadcast %cst_338 : f32 to vector<8x128xf32>
    %1199 = arith.addf %1197, %1198 : vector<8x128xf32>
    %1200 = math.tanh %1192 : vector<8x128xf32>
    %1201 = vector.extract_strided_slice %1199 {offsets = [0, 0], sizes = [8, 32], strides = [1, 1]} : vector<8x128xf32> to vector<8x32xf32>
    %1202 = vector.extract_strided_slice %1199 {offsets = [0, 32], sizes = [8, 32], strides = [1, 1]} : vector<8x128xf32> to vector<8x32xf32>
    %1203 = vector.extract_strided_slice %1200 {offsets = [0, 64], sizes = [8, 32], strides = [1, 1]} : vector<8x128xf32> to vector<8x32xf32>
    %1204 = vector.extract_strided_slice %1199 {offsets = [0, 96], sizes = [8, 32], strides = [1, 1]} : vector<8x128xf32> to vector<8x32xf32>
    %1205 = arith.mulf %1202, %1162 : vector<8x32xf32>
    %1206 = arith.mulf %1201, %1203 : vector<8x32xf32>
    %1207 = arith.addf %1205, %1206 : vector<8x32xf32>
    %1208 = math.tanh %1207 : vector<8x32xf32>
    %1209 = arith.mulf %1204, %1208 : vector<8x32xf32>
    %1210 = tpu.concatenate %1209, %1185 in 1 : vector<8x32xf32>, vector<8x32xf32> -> vector<8x64xf32>
    %1211 = arith.truncf %1210 : vector<8x64xf32> to vector<8x64xbf16>
    %cst_339 = arith.constant dense<0.000000e+00> : vector<8x128xf32>
    %1212 = tpu.matmul %1211, %1005, %cst_339 {dimension_numbers = #tpu.dot_dimension_numbers<[1], [0], [0], [1], [0, 0, 1, 1], [], []>} : vector<8x64xbf16>, vector<64x128xbf16>, vector<8x128xf32> -> vector<8x128xf32>
    %1213 = arith.addf %1212, %1008 : vector<8x128xf32>
    %cst_340 = arith.constant 5.000000e-01 : f32
    %1214 = vector.broadcast %cst_340 : f32 to vector<8x128xf32>
    %1215 = arith.mulf %1213, %1214 : vector<8x128xf32>
    %1216 = math.tanh %1215 : vector<8x128xf32>
    %cst_341 = arith.constant 5.000000e-01 : f32
    %1217 = vector.broadcast %cst_341 : f32 to vector<8x128xf32>
    %1218 = arith.mulf %1216, %1217 : vector<8x128xf32>
    %cst_342 = arith.constant 5.000000e-01 : f32
    %1219 = vector.broadcast %cst_342 : f32 to vector<8x128xf32>
    %1220 = arith.addf %1218, %1219 : vector<8x128xf32>
    %1221 = math.tanh %1213 : vector<8x128xf32>
    %1222 = vector.extract_strided_slice %1220 {offsets = [0, 0], sizes = [8, 32], strides = [1, 1]} : vector<8x128xf32> to vector<8x32xf32>
    %1223 = vector.extract_strided_slice %1220 {offsets = [0, 32], sizes = [8, 32], strides = [1, 1]} : vector<8x128xf32> to vector<8x32xf32>
    %1224 = vector.extract_strided_slice %1221 {offsets = [0, 64], sizes = [8, 32], strides = [1, 1]} : vector<8x128xf32> to vector<8x32xf32>
    %1225 = vector.extract_strided_slice %1220 {offsets = [0, 96], sizes = [8, 32], strides = [1, 1]} : vector<8x128xf32> to vector<8x32xf32>
    %1226 = arith.mulf %1223, %1183 : vector<8x32xf32>
    %1227 = arith.mulf %1222, %1224 : vector<8x32xf32>
    %1228 = arith.addf %1226, %1227 : vector<8x32xf32>
    %1229 = math.tanh %1228 : vector<8x32xf32>
    %1230 = arith.mulf %1225, %1229 : vector<8x32xf32>
    %c18 = arith.constant 18 : index
    %c0_343 = arith.constant 0 : index
    %c0_344 = arith.constant 0 : index
    %1231 = vector.load %arg23[%c18, %c0_343, %c0_344] : memref<20x8x32xf32, #tpu.memory_space<vmem>>, vector<1x8x32xf32>
    %1232 = vector.shape_cast %1231 : vector<1x8x32xf32> to vector<8x32xf32>
    %1233 = vector.shape_cast %1230 : vector<8x32xf32> to vector<1x8x32xf32>
    tpu.vector_store %arg23[%c18, %c0_343, %c0_344], %1233 {strides = array<i32>} : memref<20x8x32xf32, #tpu.memory_space<vmem>>, vector<1x8x32xf32>,
    %c40_345 = arith.constant 40 : index
    %c0_346 = arith.constant 0 : index
    %1234 = vector.load %arg22[%c40_345, %c0_346] : memref<112x128xf32, #tpu.memory_space<vmem>>, vector<8x128xf32>
    %1235 = arith.truncf %1209 : vector<8x32xf32> to vector<8x32xbf16>
    %cst_347 = arith.constant dense<0.000000e+00> : vector<8x128xf32>
    %1236 = tpu.matmul %1235, %997, %cst_347 {dimension_numbers = #tpu.dot_dimension_numbers<[1], [0], [0], [1], [0, 0, 1, 1], [], []>} : vector<8x32xbf16>, vector<32x128xbf16>, vector<8x128xf32> -> vector<8x128xf32>
    %1237 = arith.addf %1234, %1236 : vector<8x128xf32>
    %cst_348 = arith.constant 5.000000e-01 : f32
    %1238 = vector.broadcast %cst_348 : f32 to vector<8x128xf32>
    %1239 = arith.mulf %1237, %1238 : vector<8x128xf32>
    %1240 = math.tanh %1239 : vector<8x128xf32>
    %cst_349 = arith.constant 5.000000e-01 : f32
    %1241 = vector.broadcast %cst_349 : f32 to vector<8x128xf32>
    %1242 = arith.mulf %1240, %1241 : vector<8x128xf32>
    %cst_350 = arith.constant 5.000000e-01 : f32
    %1243 = vector.broadcast %cst_350 : f32 to vector<8x128xf32>
    %1244 = arith.addf %1242, %1243 : vector<8x128xf32>
    %1245 = math.tanh %1237 : vector<8x128xf32>
    %1246 = vector.extract_strided_slice %1244 {offsets = [0, 0], sizes = [8, 32], strides = [1, 1]} : vector<8x128xf32> to vector<8x32xf32>
    %1247 = vector.extract_strided_slice %1244 {offsets = [0, 32], sizes = [8, 32], strides = [1, 1]} : vector<8x128xf32> to vector<8x32xf32>
    %1248 = vector.extract_strided_slice %1245 {offsets = [0, 64], sizes = [8, 32], strides = [1, 1]} : vector<8x128xf32> to vector<8x32xf32>
    %1249 = vector.extract_strided_slice %1244 {offsets = [0, 96], sizes = [8, 32], strides = [1, 1]} : vector<8x128xf32> to vector<8x32xf32>
    %1250 = arith.mulf %1247, %1207 : vector<8x32xf32>
    %1251 = arith.mulf %1246, %1248 : vector<8x32xf32>
    %1252 = arith.addf %1250, %1251 : vector<8x32xf32>
    %1253 = math.tanh %1252 : vector<8x32xf32>
    %1254 = arith.mulf %1249, %1253 : vector<8x32xf32>
    %1255 = tpu.concatenate %1254, %1230 in 1 : vector<8x32xf32>, vector<8x32xf32> -> vector<8x64xf32>
    %1256 = arith.truncf %1255 : vector<8x64xf32> to vector<8x64xbf16>
    %cst_351 = arith.constant dense<0.000000e+00> : vector<8x128xf32>
    %1257 = tpu.matmul %1256, %1005, %cst_351 {dimension_numbers = #tpu.dot_dimension_numbers<[1], [0], [0], [1], [0, 0, 1, 1], [], []>} : vector<8x64xbf16>, vector<64x128xbf16>, vector<8x128xf32> -> vector<8x128xf32>
    %1258 = arith.addf %1257, %1008 : vector<8x128xf32>
    %cst_352 = arith.constant 5.000000e-01 : f32
    %1259 = vector.broadcast %cst_352 : f32 to vector<8x128xf32>
    %1260 = arith.mulf %1258, %1259 : vector<8x128xf32>
    %1261 = math.tanh %1260 : vector<8x128xf32>
    %cst_353 = arith.constant 5.000000e-01 : f32
    %1262 = vector.broadcast %cst_353 : f32 to vector<8x128xf32>
    %1263 = arith.mulf %1261, %1262 : vector<8x128xf32>
    %cst_354 = arith.constant 5.000000e-01 : f32
    %1264 = vector.broadcast %cst_354 : f32 to vector<8x128xf32>
    %1265 = arith.addf %1263, %1264 : vector<8x128xf32>
    %1266 = math.tanh %1258 : vector<8x128xf32>
    %1267 = vector.extract_strided_slice %1265 {offsets = [0, 0], sizes = [8, 32], strides = [1, 1]} : vector<8x128xf32> to vector<8x32xf32>
    %1268 = vector.extract_strided_slice %1265 {offsets = [0, 32], sizes = [8, 32], strides = [1, 1]} : vector<8x128xf32> to vector<8x32xf32>
    %1269 = vector.extract_strided_slice %1266 {offsets = [0, 64], sizes = [8, 32], strides = [1, 1]} : vector<8x128xf32> to vector<8x32xf32>
    %1270 = vector.extract_strided_slice %1265 {offsets = [0, 96], sizes = [8, 32], strides = [1, 1]} : vector<8x128xf32> to vector<8x32xf32>
    %1271 = arith.mulf %1268, %1228 : vector<8x32xf32>
    %1272 = arith.mulf %1267, %1269 : vector<8x32xf32>
    %1273 = arith.addf %1271, %1272 : vector<8x32xf32>
    %1274 = math.tanh %1273 : vector<8x32xf32>
    %1275 = arith.mulf %1270, %1274 : vector<8x32xf32>
    %c19 = arith.constant 19 : index
    %c0_355 = arith.constant 0 : index
    %c0_356 = arith.constant 0 : index
    %1276 = vector.load %arg23[%c19, %c0_355, %c0_356] : memref<20x8x32xf32, #tpu.memory_space<vmem>>, vector<1x8x32xf32>
    %1277 = vector.shape_cast %1276 : vector<1x8x32xf32> to vector<8x32xf32>
    %1278 = vector.shape_cast %1275 : vector<8x32xf32> to vector<1x8x32xf32>
    tpu.vector_store %arg23[%c19, %c0_355, %c0_356], %1278 {strides = array<i32>} : memref<20x8x32xf32, #tpu.memory_space<vmem>>, vector<1x8x32xf32>,
    %c0_357 = arith.constant 0 : index
    %c0_358 = arith.constant 0 : index
    %c0_359 = arith.constant 0 : index
    %1279 = vector.load %arg23[%c0_357, %c0_358, %c0_359] : memref<20x8x32xf32, #tpu.memory_space<vmem>>, vector<20x8x32xf32>
    %c0_360 = arith.constant 0 : index
    %c0_361 = arith.constant 0 : index
    %c0_362 = arith.constant 0 : index
    %1280 = vector.load %arg19[%c0_360, %c0_361, %c0_362] : memref<1x1x32xf32, #tpu.memory_space<vmem>>, vector<1x1x32xf32>
    %1281 = vector.broadcast %1280 : vector<1x1x32xf32> to vector<20x8x32xf32>
    %1282 = arith.mulf %1279, %1281 : vector<20x8x32xf32>
    %cst_363 = arith.constant dense<0.000000e+00> : vector<20x8xf32>
    %1283 = vector.multi_reduction <add>, %1282, %cst_363 [2] : vector<20x8x32xf32> to vector<20x8xf32>
    %c0_364 = arith.constant 0 : index
    %c0_365 = arith.constant 0 : index
    %1284 = vector.load %arg20[%c0_364, %c0_365] : memref<1x1xf32, #tpu.memory_space<vmem>>, vector<1x1xf32>
    %1285 = vector.broadcast %1284 : vector<1x1xf32> to vector<20x8xf32>
    %1286 = arith.addf %1283, %1285 : vector<20x8xf32>
    %c0_366 = arith.constant 0 : index
    %c0_367 = arith.constant 0 : index
    %1287 = vector.load %arg21[%c0_366, %c0_367] : memref<20x8xf32, #tpu.memory_space<vmem>>, vector<20x8xf32>
    tpu.vector_store %arg21[%c0_366, %c0_367], %1286 {strides = array<i32>} : memref<20x8xf32, #tpu.memory_space<vmem>>, vector<20x8xf32>,
    return
  }
  func.func @transform_0(%arg0: i32) -> (i32, i32) {
    %c0_i32 = arith.constant 0 : i32
    %c0_i32_0 = arith.constant 0 : i32
    %c0_i32_1 = arith.constant 0 : i32
    return %c0_i32, %c0_i32_0 : i32, i32
  }
  func.func @transform_1(%arg0: i32) -> (i32, i32) {
    %c0_i32 = arith.constant 0 : i32
    %c0_i32_0 = arith.constant 0 : i32
    %c0_i32_1 = arith.constant 0 : i32
    return %c0_i32, %c0_i32_0 : i32, i32
  }
  func.func @transform_2(%arg0: i32) -> (i32, i32) {
    %c0_i32 = arith.constant 0 : i32
    %c0_i32_0 = arith.constant 0 : i32
    %c0_i32_1 = arith.constant 0 : i32
    return %c0_i32, %c0_i32_0 : i32, i32
  }
  func.func @transform_3(%arg0: i32) -> (i32, i32) {
    %c0_i32 = arith.constant 0 : i32
    %c0_i32_0 = arith.constant 0 : i32
    %c0_i32_1 = arith.constant 0 : i32
    return %c0_i32, %c0_i32_0 : i32, i32
  }
  func.func @transform_4(%arg0: i32) -> (i32, i32) {
    %c0_i32 = arith.constant 0 : i32
    %c0_i32_0 = arith.constant 0 : i32
    %c0_i32_1 = arith.constant 0 : i32
    return %c0_i32, %c0_i32_0 : i32, i32
  }
  func.func @transform_5(%arg0: i32) -> (i32, i32) {
    %c0_i32 = arith.constant 0 : i32
    %c0_i32_0 = arith.constant 0 : i32
    %c0_i32_1 = arith.constant 0 : i32
    return %c0_i32, %c0_i32_0 : i32, i32
  }
  func.func @transform_6(%arg0: i32) -> (i32, i32) {
    %c0_i32 = arith.constant 0 : i32
    %c0_i32_0 = arith.constant 0 : i32
    %c0_i32_1 = arith.constant 0 : i32
    return %c0_i32, %c0_i32_0 : i32, i32
  }
  func.func @transform_7(%arg0: i32) -> (i32, i32) {
    %c0_i32 = arith.constant 0 : i32
    %c0_i32_0 = arith.constant 0 : i32
    %c0_i32_1 = arith.constant 0 : i32
    return %c0_i32, %c0_i32_0 : i32, i32
  }
  func.func @transform_8(%arg0: i32) -> (i32, i32) {
    %c0_i32 = arith.constant 0 : i32
    %c0_i32_0 = arith.constant 0 : i32
    %c0_i32_1 = arith.constant 0 : i32
    return %c0_i32, %c0_i32_0 : i32, i32
  }
  func.func @transform_9(%arg0: i32) -> (i32, i32) {
    %c0_i32 = arith.constant 0 : i32
    %c0_i32_0 = arith.constant 0 : i32
    %c0_i32_1 = arith.constant 0 : i32
    return %c0_i32, %c0_i32_0 : i32, i32
  }
  func.func @transform_10(%arg0: i32) -> (i32, i32) {
    %c0_i32 = arith.constant 0 : i32
    %c0_i32_0 = arith.constant 0 : i32
    %c0_i32_1 = arith.constant 0 : i32
    return %c0_i32, %c0_i32_0 : i32, i32
  }
  func.func @transform_11(%arg0: i32) -> (i32, i32) {
    %c0_i32 = arith.constant 0 : i32
    %c0_i32_0 = arith.constant 0 : i32
    %c0_i32_1 = arith.constant 0 : i32
    return %c0_i32, %c0_i32_0 : i32, i32
  }
  func.func @transform_12(%arg0: i32) -> (i32, i32) {
    %c0_i32 = arith.constant 0 : i32
    %c0_i32_0 = arith.constant 0 : i32
    %c0_i32_1 = arith.constant 0 : i32
    return %c0_i32, %c0_i32_0 : i32, i32
  }
  func.func @transform_13(%arg0: i32) -> (i32, i32) {
    %c0_i32 = arith.constant 0 : i32
    %c0_i32_0 = arith.constant 0 : i32
    %c0_i32_1 = arith.constant 0 : i32
    return %c0_i32, %c0_i32_0 : i32, i32
  }
  func.func @transform_14(%arg0: i32) -> (i32, i32) {
    %c0_i32 = arith.constant 0 : i32
    %c0_i32_0 = arith.constant 0 : i32
    %c0_i32_1 = arith.constant 0 : i32
    return %c0_i32, %c0_i32_0 : i32, i32
  }
  func.func @transform_15(%arg0: i32) -> (i32, i32) {
    %c0_i32 = arith.constant 0 : i32
    %c0_i32_0 = arith.constant 0 : i32
    %c0_i32_1 = arith.constant 0 : i32
    return %c0_i32, %c0_i32_0 : i32, i32
  }
  func.func @transform_16(%arg0: i32) -> (i32, i32) {
    %c0_i32 = arith.constant 0 : i32
    %c0_i32_0 = arith.constant 0 : i32
    %c0_i32_1 = arith.constant 0 : i32
    return %c0_i32, %c0_i32_0 : i32, i32
  }
  func.func @transform_17(%arg0: i32) -> (i32, i32) {
    %c0_i32 = arith.constant 0 : i32
    %c0_i32_0 = arith.constant 0 : i32
    %c0_i32_1 = arith.constant 0 : i32
    return %c0_i32, %c0_i32_0 : i32, i32
  }
  func.func @transform_18(%arg0: i32) -> (i32, i32, i32) {
    %c0_i32 = arith.constant 0 : i32
    %c0_i32_0 = arith.constant 0 : i32
    %c0_i32_1 = arith.constant 0 : i32
    %c0_i32_2 = arith.constant 0 : i32
    return %c0_i32, %c0_i32_0, %c0_i32_1 : i32, i32, i32
  }
  func.func @transform_19(%arg0: i32) -> (i32, i32) {
    %c0_i32 = arith.constant 0 : i32
    %c0_i32_0 = arith.constant 0 : i32
    %c0_i32_1 = arith.constant 0 : i32
    return %c0_i32, %c0_i32_0 : i32, i32
  }
  func.func @transform_20(%arg0: i32) -> (i32, i32) {
    %c0_i32 = arith.constant 0 : i32
    %c0_i32_0 = arith.constant 0 : i32
    %c0_i32_1 = arith.constant 0 : i32
    return %c0_i32, %c0_i32_0 : i32, i32
  }
}

</mosaic_0001>

<llo_original>
// kernel: tpu_custom_call.1
$region0: #{tpu_custom_call.1}
  #allocation0 [shape = 'u32[]', space=smem, size = 0x4, offset = 0x4, fixed_abs, tag = 'smem constant byte address 0x4 - core index']
  #allocation1 [shape = 'u32[144,128]{1,0:T(1,128)}', space=vmem, size = 0x12000, scoped, tag = 'internal scratch']
  #allocation2 [shape = 'f32[112,128]{1,0:T(8,128)}', space=vmem, size = 0xe000, scoped, tag = 'scratch operand']
  #allocation3 [shape = 'f32[20,8,32]{2,1,0:T(8,128)}', space=vmem, size = 0x14000, scoped, tag = 'scratch operand']
  #allocation4 [shape = 'f32[1,1]{1,0:T(1,128)S(1)}', space=vmem, size = 0x200, scoped, tag = 'scoped memory for tpu_custom_call.1']
  %s0 = inlined_call_operand.vmem [shape: f32[64,8], index: 0, kind: input, shape index: {}]
  %s1 = inlined_call_operand.vmem [shape: f32[112,8], index: 1, kind: input, shape index: {}]
  %s2 = inlined_call_operand.vmem [shape: f32[48,8], index: 2, kind: input, shape index: {}]
  %s3 = inlined_call_operand.vmem [shape: bf16[8,128], index: 3, kind: input, shape index: {}]
  %s4 = inlined_call_operand.vmem [shape: bf16[32,128], index: 4, kind: input, shape index: {}]
  %s5 = inlined_call_operand.vmem [shape: f32[1,128], index: 5, kind: input, shape index: {}]
  %s6 = inlined_call_operand.vmem [shape: bf16[64,128], index: 6, kind: input, shape index: {}]
  %s7 = inlined_call_operand.vmem [shape: f32[1,128], index: 7, kind: input, shape index: {}]
  %s8 = inlined_call_operand.vmem [shape: bf16[8,128], index: 8, kind: input, shape index: {}]
  %s9 = inlined_call_operand.vmem [shape: bf16[32,128], index: 9, kind: input, shape index: {}]
  %s10 = inlined_call_operand.vmem [shape: f32[1,128], index: 10, kind: input, shape index: {}]
  %s11 = inlined_call_operand.vmem [shape: bf16[64,128], index: 11, kind: input, shape index: {}]
  %s12 = inlined_call_operand.vmem [shape: f32[1,128], index: 12, kind: input, shape index: {}]
  %s13 = inlined_call_operand.vmem [shape: bf16[8,128], index: 13, kind: input, shape index: {}]
  %s14 = inlined_call_operand.vmem [shape: bf16[32,128], index: 14, kind: input, shape index: {}]
  %s15 = inlined_call_operand.vmem [shape: f32[1,128], index: 15, kind: input, shape index: {}]
  %s16 = inlined_call_operand.vmem [shape: bf16[64,128], index: 16, kind: input, shape index: {}]
  %s17 = inlined_call_operand.vmem [shape: f32[1,128], index: 17, kind: input, shape index: {}]
  %s18 = inlined_call_operand.vmem [shape: f32[1,1,32], index: 18, kind: input, shape index: {}]
  %s19 = inlined_call_operand.<no memory space> [shape: f32[1,1], index: 19, kind: input, shape index: {}]
  %s20 = inlined_call_operand.vmem [shape: f32[20,8], index: 20, kind: output, shape index: {}]
  %s21 = sld [smem:[#allocation0]]
  $region90: #{tpu_custom_call.1} parent=0
    _
  %s23 = ssub.s32 1, %s21
  %s24 = scalar_select 0, %s23, %s21
  %v25 = vstv %s19
  %26 = vst [vmem:[#allocation4] sm:$0x1] %v25
  // Predicated region
  $region2: #{tpu_custom_call.1} parent=0 // pred_check
    _
  $region3: #{tpu_custom_call.1} parent=0 // pred_check_branch
    %28 = sbr.rel (0) target = $region5
  $region4: #{tpu_custom_call.1} parent=0 // pred_region
    _
  $region5: #{tpu_custom_call.1} parent=0 // pred_fallthru
    _
  // Predicated region
  $region6: #{tpu_custom_call.1} parent=0 // pred_check
    _
  $region7: #{tpu_custom_call.1} parent=0 // pred_check_branch
    %30 = sbr.rel (0) target = $region9
  $region8: #{tpu_custom_call.1} parent=0 // pred_region
    _
  $region9: #{tpu_custom_call.1} parent=0 // pred_fallthru
    _
  // Predicated region
  $region10: #{tpu_custom_call.1} parent=0 // pred_check
    _
  $region11: #{tpu_custom_call.1} parent=0 // pred_check_branch
    %32 = sbr.rel (0) target = $region13
  $region12: #{tpu_custom_call.1} parent=0 // pred_region
    _
  $region13: #{tpu_custom_call.1} parent=0 // pred_fallthru
    _
  // Predicated region
  $region14: #{tpu_custom_call.1} parent=0 // pred_check
    _
  $region15: #{tpu_custom_call.1} parent=0 // pred_check_branch
    %34 = sbr.rel (0) target = $region17
  $region16: #{tpu_custom_call.1} parent=0 // pred_region
    _
  $region17: #{tpu_custom_call.1} parent=0 // pred_fallthru
    _
  // Predicated region
  $region18: #{tpu_custom_call.1} parent=0 // pred_check
    _
  $region19: #{tpu_custom_call.1} parent=0 // pred_check_branch
    %36 = sbr.rel (0) target = $region21
  $region20: #{tpu_custom_call.1} parent=0 // pred_region
    _
  $region21: #{tpu_custom_call.1} parent=0 // pred_fallthru
    _
  // Predicated region
  $region22: #{tpu_custom_call.1} parent=0 // pred_check
    _
  $region23: #{tpu_custom_call.1} parent=0 // pred_check_branch
    %38 = sbr.rel (0) target = $region25
  $region24: #{tpu_custom_call.1} parent=0 // pred_region
    _
  $region25: #{tpu_custom_call.1} parent=0 // pred_fallthru
    _
  // Predicated region
  $region26: #{tpu_custom_call.1} parent=0 // pred_check
    _
  $region27: #{tpu_custom_call.1} parent=0 // pred_check_branch
    %40 = sbr.rel (0) target = $region29
  $region28: #{tpu_custom_call.1} parent=0 // pred_region
    _
  $region29: #{tpu_custom_call.1} parent=0 // pred_fallthru
    _
  // Predicated region
  $region30: #{tpu_custom_call.1} parent=0 // pred_check
    _
  $region31: #{tpu_custom_call.1} parent=0 // pred_check_branch
    %42 = sbr.rel (0) target = $region33
  $region32: #{tpu_custom_call.1} parent=0 // pred_region
    _
  $region33: #{tpu_custom_call.1} parent=0 // pred_fallthru
    _
  // Predicated region
  $region34: #{tpu_custom_call.1} parent=0 // pred_check
    _
  $region35: #{tpu_custom_call.1} parent=0 // pred_check_branch
    %44 = sbr.rel (0) target = $region37
  $region36: #{tpu_custom_call.1} parent=0 // pred_region
    _
  $region37: #{tpu_custom_call.1} parent=0 // pred_fallthru
    _
  // Predicated region
  $region38: #{tpu_custom_call.1} parent=0 // pred_check
    _
  $region39: #{tpu_custom_call.1} parent=0 // pred_check_branch
    %46 = sbr.rel (0) target = $region41
  $region40: #{tpu_custom_call.1} parent=0 // pred_region
    _
  $region41: #{tpu_custom_call.1} parent=0 // pred_fallthru
    _
  // Predicated region
  $region42: #{tpu_custom_call.1} parent=0 // pred_check
    _
  $region43: #{tpu_custom_call.1} parent=0 // pred_check_branch
    %48 = sbr.rel (0) target = $region45
  $region44: #{tpu_custom_call.1} parent=0 // pred_region
    _
  $region45: #{tpu_custom_call.1} parent=0 // pred_fallthru
    _
  // Predicated region
  $region46: #{tpu_custom_call.1} parent=0 // pred_check
    _
  $region47: #{tpu_custom_call.1} parent=0 // pred_check_branch
    %50 = sbr.rel (0) target = $region49
  $region48: #{tpu_custom_call.1} parent=0 // pred_region
    _
  $region49: #{tpu_custom_call.1} parent=0 // pred_fallthru
    _
  // Predicated region
  $region50: #{tpu_custom_call.1} parent=0 // pred_check
    _
  $region51: #{tpu_custom_call.1} parent=0 // pred_check_branch
    %52 = sbr.rel (0) target = $region53
  $region52: #{tpu_custom_call.1} parent=0 // pred_region
    _
  $region53: #{tpu_custom_call.1} parent=0 // pred_fallthru
    _
  // Predicated region
  $region54: #{tpu_custom_call.1} parent=0 // pred_check
    _
  $region55: #{tpu_custom_call.1} parent=0 // pred_check_branch
    %54 = sbr.rel (0) target = $region57
  $region56: #{tpu_custom_call.1} parent=0 // pred_region
    _
  $region57: #{tpu_custom_call.1} parent=0 // pred_fallthru
    _
  // Predicated region
  $region58: #{tpu_custom_call.1} parent=0 // pred_check
    _
  $region59: #{tpu_custom_call.1} parent=0 // pred_check_branch
    %56 = sbr.rel (0) target = $region61
  $region60: #{tpu_custom_call.1} parent=0 // pred_region
    _
  $region61: #{tpu_custom_call.1} parent=0 // pred_fallthru
    _
  // Predicated region
  $region62: #{tpu_custom_call.1} parent=0 // pred_check
    _
  $region63: #{tpu_custom_call.1} parent=0 // pred_check_branch
    %58 = sbr.rel (0) target = $region65
  $region64: #{tpu_custom_call.1} parent=0 // pred_region
    _
  $region65: #{tpu_custom_call.1} parent=0 // pred_fallthru
    _
  // Predicated region
  $region66: #{tpu_custom_call.1} parent=0 // pred_check
    _
  $region67: #{tpu_custom_call.1} parent=0 // pred_check_branch
    %60 = sbr.rel (0) target = $region69
  $region68: #{tpu_custom_call.1} parent=0 // pred_region
    _
  $region69: #{tpu_custom_call.1} parent=0 // pred_fallthru
    _
  // Predicated region
  $region70: #{tpu_custom_call.1} parent=0 // pred_check
    _
  $region71: #{tpu_custom_call.1} parent=0 // pred_check_branch
    %62 = sbr.rel (0) target = $region73
  $region72: #{tpu_custom_call.1} parent=0 // pred_region
    _
  $region73: #{tpu_custom_call.1} parent=0 // pred_fallthru
    _
  // Predicated region
  $region74: #{tpu_custom_call.1} parent=0 // pred_check
    _
  $region75: #{tpu_custom_call.1} parent=0 // pred_check_branch
    %64 = sbr.rel (0) target = $region77
  $region76: #{tpu_custom_call.1} parent=0 // pred_region
    _
  $region77: #{tpu_custom_call.1} parent=0 // pred_fallthru
    _
  // Predicated region
  $region78: #{tpu_custom_call.1} parent=0 // pred_check
    _
  $region79: #{tpu_custom_call.1} parent=0 // pred_check_branch
    %66 = sbr.rel (0) target = $region81
  $region80: #{tpu_custom_call.1} parent=0 // pred_region
    _
  $region81: #{tpu_custom_call.1} parent=0 // pred_fallthru
    _
  %v68 = vld [vmem:[%s3] sm:$0xf]
  %v69 = vld [vmem:[%s4] sm:$0xf]
  %v70 = vld [vmem:[%s4 + $0x4] sm:$0xf]
  %v71 = vld [vmem:[%s4 + $0x8] sm:$0xf]
  %v72 = vld [vmem:[%s4 + $0xc] sm:$0xf]
  %v73 = vld [vmem:[%s0] sm:$0xff]
  %v74 = vld [vmem:[%s0 + $0x8] sm:$0xff]
  %v75 = vld [vmem:[%s0 + $0x10] sm:$0xff]
  %v76 = vld [vmem:[%s0 + $0x18] sm:$0xff]
  %v77 = vld [vmem:[%s0 + $0x20] sm:$0xff]
  %v78 = vld [vmem:[%s0 + $0x28] sm:$0xff]
  %v79 = vld [vmem:[%s0 + $0x30] sm:$0xff]
  %v80 = vld [vmem:[%s0 + $0x38] sm:$0xff]
  %v81 = vpack.c.bf16 %v74, %v73
  %v82 = vpack.c.bf16 %v76, %v75
  %v83 = vpack.c.bf16 %v78, %v77
  %v84 = vpack.c.bf16 %v80, %v79
  %v85 = vld [vmem:[%s5] sm:$0x1]
  %v87 = vlaneseq
  %v88 = vshrl.u32 %v87, 7
  %v89 = vsub.s32 0, %v88
  %v90 = vrot.slane %v85, %v89
  %vm92 = vcmask 64512
  %v94 = vsel %vm92, %v81, 0
  %v97 = vsel %vm92, %v82, 0
  %v100 = vsel %vm92, %v83, 0
  %v103 = vsel %vm92, %v84, 0
  %vm105 = vcmask 1043456
  %v107 = vsel %vm105, %v68, 0
  %109 = vmatprep.subr.bf16.mxu0 0
  %110 = vmatpush1.bf16.msra.mxu0 0
  %111 = vmatprep.subr.bf16.mxu0 0
  %112 = vmatpush1.bf16.msra.mxu0 0
  %113 = vmatprep.subr.bf16.mxu0 0
  %114 = vmatpush1.bf16.msra.mxu0 0
  %115 = vmatprep.subr.bf16.mxu0 0
  %116 = vmatpush1.bf16.msra.mxu0 0
  %117 = vmatprep.subr.bf16.mxu0 0
  %118 = vmatpush1.bf16.msra.mxu0 0
  %119 = vmatprep.subr.bf16.mxu0 0
  %120 = vmatpush1.bf16.msra.mxu0 0
  %121 = vmatprep.subr.bf16.mxu0 0
  %122 = vmatpush1.bf16.msra.mxu0 0
  %123 = vmatprep.subr.bf16.mxu0 0
  %124 = vmatpush1.bf16.msra.mxu0 %v107
  %125 = vmatprep.subr.bf16.mxu0 0
  %126 = vmatpush2.bf16.msra.mxu0 0
  %127 = vmatprep.subr.bf16.mxu0 0
  %128 = vmatpush2.bf16.msra.mxu0 0
  %129 = vmatprep.subr.bf16.mxu0 0
  %130 = vmatpush2.bf16.msra.mxu0 0
  %131 = vmatprep.subr.bf16.mxu0 0
  %132 = vmatpush2.bf16.msra.mxu0 0
  %133 = vmatprep.subr.bf16.mxu0 0
  %134 = vmatpush2.bf16.msra.mxu0 0
  %135 = vmatprep.subr.bf16.mxu0 0
  %136 = vmatpush2.bf16.msra.mxu0 0
  %137 = vmatprep.subr.bf16.mxu0 0
  %138 = vmatpush2.bf16.msra.mxu0 0
  %139 = vmatprep.subr.bf16.mxu0 0
  %140 = vmatpush2.bf16.msra.mxu0 0
  %141 = vmatprep.mubr.bf16.mxu0 0
  %142 = vmatmul.mubr.bf16.gmra.mxu0 %v94
  %v143 = vpop.f32.mrf.mxu0
  %v144 = vadd.f32 %v90, %v143
  %v145 = vpop.f32.mrf.mxu0
  %v146 = vpop.f32.mrf.mxu0
  %v147 = vadd.f32 %v90, %v146
  %v148 = vpop.f32.mrf.mxu0
  %149 = vmatprep.mubr.bf16.mxu0 0
  %150 = vmatmul.mubr.bf16.gmra.mxu0 %v97
  %v151 = vpop.f32.mrf.mxu0
  %v152 = vadd.f32 %v90, %v151
  %v153 = vpop.f32.mrf.mxu0
  %v154 = vpop.f32.mrf.mxu0
  %v155 = vadd.f32 %v90, %v154
  %v156 = vpop.f32.mrf.mxu0
  %157 = vmatprep.mubr.bf16.mxu0 0
  %158 = vmatmul.mubr.bf16.gmra.mxu0 %v100
  %v159 = vpop.f32.mrf.mxu0
  %v160 = vadd.f32 %v90, %v159
  %v161 = vpop.f32.mrf.mxu0
  %v162 = vpop.f32.mrf.mxu0
  %v163 = vadd.f32 %v90, %v162
  %v164 = vpop.f32.mrf.mxu0
  %165 = vmatprep.mubr.bf16.mxu0 0
  %166 = vmatmul.mubr.bf16.gmra.mxu0 %v103
  %v167 = vpop.f32.mrf.mxu0
  %v168 = vadd.f32 %v90, %v167
  %v169 = vpop.f32.mrf.mxu0
  %v170 = vpop.f32.mrf.mxu0
  %v171 = vadd.f32 %v90, %v170
  %v172 = vpop.f32.mrf.mxu0
  %173 = vdwg.mxu0
  %174 = vst [vmem:[#allocation2] sm:$0xff] %v144
  %175 = vst [vmem:[#allocation2 + $0x8] sm:$0xff] %v147
  %176 = vst [vmem:[#allocation2 + $0x10] sm:$0xff] %v152
  %177 = vst [vmem:[#allocation2 + $0x18] sm:$0xff] %v155
  %178 = vst [vmem:[#allocation2 + $0x20] sm:$0xff] %v160
  %179 = vst [vmem:[#allocation2 + $0x28] sm:$0xff] %v163
  %180 = vst [vmem:[#allocation2 + $0x30] sm:$0xff] %v168
  %181 = vst [vmem:[#allocation2 + $0x38] sm:$0xff] %v171
  %v182 = vld [vmem:[%s6] sm:$0xf]
  %v183 = vld [vmem:[%s6 + $0x4] sm:$0xf]
  %v184 = vld [vmem:[%s6 + $0x8] sm:$0xf]
  %v185 = vld [vmem:[%s6 + $0xc] sm:$0xf]
  %v186 = vld [vmem:[%s6 + $0x10] sm:$0xf]
  %v187 = vld [vmem:[%s6 + $0x14] sm:$0xf]
  %v188 = vld [vmem:[%s6 + $0x18] sm:$0xf]
  %v189 = vld [vmem:[%s6 + $0x1c] sm:$0xf]
  %v190 = vld [vmem:[%s7] sm:$0x1]
  %v192 = vlaneseq
  %v193 = vshrl.u32 %v192, 7
  %v194 = vsub.s32 0, %v193
  %v195 = vrot.slane %v190, %v194
  %v197 = vld [vmem:[#allocation2] sm:$0xff]
  %v202 = vunpack.c.l.b16 %v69
  %v203 = vunpack.c.l.b16 %v70
  %v204 = vunpack.c.l.b16 %v71
  %v205 = vunpack.c.l.b16 %v72
  %v206 = vpack.c.b16 %v203, %v202
  %v207 = vpack.c.b16 %v205, %v204
  %vm210 = vcmask 261120
  %v212 = vsel %vm210, 0, 0
  %214 = vmatprep.subr.bf16.mxu0 0
  %215 = vmatpush1.bf16.msra.mxu0 0
  %216 = vmatprep.subr.bf16.mxu0 0
  %217 = vmatpush1.bf16.msra.mxu0 0
  %218 = vmatprep.subr.bf16.mxu0 0
  %219 = vmatpush1.bf16.msra.mxu0 0
  %220 = vmatprep.subr.bf16.mxu0 0
  %221 = vmatpush1.bf16.msra.mxu0 0
  %222 = vmatprep.subr.bf16.mxu0 0
  %223 = vmatpush1.bf16.msra.mxu0 0
  %224 = vmatprep.subr.bf16.mxu0 0
  %225 = vmatpush1.bf16.msra.mxu0 0
  %226 = vmatprep.subr.bf16.mxu0 0
  %227 = vmatpush1.bf16.msra.mxu0 %v207
  %228 = vmatprep.subr.bf16.mxu0 0
  %229 = vmatpush1.bf16.msra.mxu0 %v206
  %230 = vmatprep.subr.bf16.mxu0 0
  %231 = vmatpush2.bf16.msra.mxu0 0
  %232 = vmatprep.subr.bf16.mxu0 0
  %233 = vmatpush2.bf16.msra.mxu0 0
  %234 = vmatprep.subr.bf16.mxu0 0
  %235 = vmatpush2.bf16.msra.mxu0 0
  %236 = vmatprep.subr.bf16.mxu0 0
  %237 = vmatpush2.bf16.msra.mxu0 0
  %238 = vmatprep.subr.bf16.mxu0 0
  %239 = vmatpush2.bf16.msra.mxu0 0
  %240 = vmatprep.subr.bf16.mxu0 0
  %241 = vmatpush2.bf16.msra.mxu0 0
  %242 = vmatprep.subr.bf16.mxu0 0
  %243 = vmatpush2.bf16.msra.mxu0 0
  %244 = vmatprep.subr.bf16.mxu0 0
  %245 = vmatpush2.bf16.msra.mxu0 0
  %246 = vmatprep.mubr.bf16.mxu0 0
  %247 = vmatmul.mubr.bf16.gmra.mxu0 %v212
  %v248 = vpop.f32.mrf.mxu0
  %v249 = vadd.f32 0.0, %v248
  %v250 = vpop.f32.mrf.mxu0
  %v251 = vpop.f32.mrf.mxu0
  %v252 = vpop.f32.mrf.mxu0
  %253 = vdwg.mxu0
  %v254 = vadd.f32 %v197, %v249
  %v255 = vmul.f32 %v254, 0.5
  %v256 = vtanh.pop %v255
  %v257 = vmul.f32 %v256, 0.5
  %v258 = vadd.f32 %v257, 0.5
  %v259 = vtanh.pop %v254
  %v260 = vmul.f32 %v258, 0.0
  %262 = vrot.lane.b32.xlu0 %v259, 64
  %v263 = vpop.permute.xlu0 %262
  %v265 = vmul.f32 %v258, %v263
  %267 = vrot.lane.b32.xlu0 %v265, 32
  %v268 = vpop.permute.xlu0 %267
  %v270 = vadd.f32 %v260, %v268
  %v271 = vtanh.pop %v270
  %273 = vrot.lane.b32.xlu0 %v271, 64
  %v274 = vpop.permute.xlu0 %273
  %v276 = vmul.f32 %v258, %v274
  %278 = vrot.lane.b32.xlu0 %v276, 32
  %v279 = vpop.permute.xlu0 %278
  %v281 = vsel %vm210, %v279, 0.0
  %v282 = vpack.c.bf16 %v281, %v281
  %v291 = vunpack.c.l.b16 %v182
  %v292 = vunpack.c.l.b16 %v183
  %v293 = vunpack.c.l.b16 %v184
  %v294 = vunpack.c.l.b16 %v185
  %v295 = vunpack.c.l.b16 %v186
  %v296 = vunpack.c.l.b16 %v187
  %v297 = vunpack.c.l.b16 %v188
  %v298 = vunpack.c.l.b16 %v189
  %v299 = vpack.c.b16 %v292, %v291
  %v300 = vpack.c.b16 %v294, %v293
  %v301 = vpack.c.b16 %v296, %v295
  %v302 = vpack.c.b16 %v298, %v297
  %vm307 = vcmask 523264
  %v309 = vsel %vm307, %v282, 0
  %311 = vmatprep.subr.bf16.mxu0 0
  %312 = vmatpush1.bf16.msra.mxu0 0
  %313 = vmatprep.subr.bf16.mxu0 0
  %314 = vmatpush1.bf16.msra.mxu0 0
  %315 = vmatprep.subr.bf16.mxu0 0
  %316 = vmatpush1.bf16.msra.mxu0 0
  %317 = vmatprep.subr.bf16.mxu0 0
  %318 = vmatpush1.bf16.msra.mxu0 0
  %319 = vmatprep.subr.bf16.mxu0 0
  %320 = vmatpush1.bf16.msra.mxu0 %v302
  %321 = vmatprep.subr.bf16.mxu0 0
  %322 = vmatpush1.bf16.msra.mxu0 %v301
  %323 = vmatprep.subr.bf16.mxu0 0
  %324 = vmatpush1.bf16.msra.mxu0 %v300
  %325 = vmatprep.subr.bf16.mxu0 0
  %326 = vmatpush1.bf16.msra.mxu0 %v299
  %327 = vmatprep.subr.bf16.mxu0 0
  %328 = vmatpush2.bf16.msra.mxu0 0
  %329 = vmatprep.subr.bf16.mxu0 0
  %330 = vmatpush2.bf16.msra.mxu0 0
  %331 = vmatprep.subr.bf16.mxu0 0
  %332 = vmatpush2.bf16.msra.mxu0 0
  %333 = vmatprep.subr.bf16.mxu0 0
  %334 = vmatpush2.bf16.msra.mxu0 0
  %335 = vmatprep.subr.bf16.mxu0 0
  %336 = vmatpush2.bf16.msra.mxu0 0
  %337 = vmatprep.subr.bf16.mxu0 0
  %338 = vmatpush2.bf16.msra.mxu0 0
  %339 = vmatprep.subr.bf16.mxu0 0
  %340 = vmatpush2.bf16.msra.mxu0 0
  %341 = vmatprep.subr.bf16.mxu0 0
  %342 = vmatpush2.bf16.msra.mxu0 0
  %343 = vmatprep.mubr.bf16.mxu0 0
  %344 = vmatmul.mubr.bf16.gmra.mxu0 %v309
  %v345 = vpop.f32.mrf.mxu0
  %v346 = vadd.f32 %v195, %v345
  %v347 = vpop.f32.mrf.mxu0
  %v348 = vpop.f32.mrf.mxu0
  %v349 = vpop.f32.mrf.mxu0
  %350 = vdwg.mxu0
  %v351 = vmul.f32 %v346, 0.5
  %v352 = vtanh.pop %v351
  %v353 = vmul.f32 %v352, 0.5
  %v354 = vadd.f32 %v353, 0.5
  %v355 = vtanh.pop %v346
  %v356 = vmul.f32 %v354, 0.0
  %358 = vrot.lane.b32.xlu0 %v355, 64
  %v359 = vpop.permute.xlu0 %358
  %v361 = vmul.f32 %v354, %v359
  %363 = vrot.lane.b32.xlu0 %v361, 32
  %v364 = vpop.permute.xlu0 %363
  %v366 = vadd.f32 %v356, %v364
  %v367 = vtanh.pop %v366
  %369 = vrot.lane.b32.xlu0 %v367, 64
  %v370 = vpop.permute.xlu0 %369
  %v372 = vmul.f32 %v354, %v370
  %v373 = vld [vmem:[#allocation2 + $0x8] sm:$0xff]
  %v374 = vpack.c.bf16 %v276, %v276
  %376 = vrot.lane.b32.xlu0 %v374, 32
  %v377 = vpop.permute.xlu0 %376
  %v379 = vsel %vm210, %v377, 0
  %381 = vmatprep.subr.bf16.mxu0 0
  %382 = vmatpush1.bf16.msra.mxu0 0
  %383 = vmatprep.subr.bf16.mxu0 0
  %384 = vmatpush1.bf16.msra.mxu0 0
  %385 = vmatprep.subr.bf16.mxu0 0
  %386 = vmatpush1.bf16.msra.mxu0 0
  %387 = vmatprep.subr.bf16.mxu0 0
  %388 = vmatpush1.bf16.msra.mxu0 0
  %389 = vmatprep.subr.bf16.mxu0 0
  %390 = vmatpush1.bf16.msra.mxu0 0
  %391 = vmatprep.subr.bf16.mxu0 0
  %392 = vmatpush1.bf16.msra.mxu0 0
  %393 = vmatprep.subr.bf16.mxu0 0
  %394 = vmatpush1.bf16.msra.mxu0 %v207
  %395 = vmatprep.subr.bf16.mxu0 0
  %396 = vmatpush1.bf16.msra.mxu0 %v206
  %397 = vmatprep.subr.bf16.mxu0 0
  %398 = vmatpush2.bf16.msra.mxu0 0
  %399 = vmatprep.subr.bf16.mxu0 0
  %400 = vmatpush2.bf16.msra.mxu0 0
  %401 = vmatprep.subr.bf16.mxu0 0
  %402 = vmatpush2.bf16.msra.mxu0 0
  %403 = vmatprep.subr.bf16.mxu0 0
  %404 = vmatpush2.bf16.msra.mxu0 0
  %405 = vmatprep.subr.bf16.mxu0 0
  %406 = vmatpush2.bf16.msra.mxu0 0
  %407 = vmatprep.subr.bf16.mxu0 0
  %408 = vmatpush2.bf16.msra.mxu0 0
  %409 = vmatprep.subr.bf16.mxu0 0
  %410 = vmatpush2.bf16.msra.mxu0 0
  %411 = vmatprep.subr.bf16.mxu0 0
  %412 = vmatpush2.bf16.msra.mxu0 0
  %413 = vmatprep.mubr.bf16.mxu0 0
  %414 = vmatmul.mubr.bf16.gmra.mxu0 %v379
  %v415 = vpop.f32.mrf.mxu0
  %v416 = vadd.f32 0.0, %v415
  %v417 = vpop.f32.mrf.mxu0
  %v418 = vpop.f32.mrf.mxu0
  %v419 = vpop.f32.mrf.mxu0
  %420 = vdwg.mxu0
  %v421 = vadd.f32 %v373, %v416
  %v422 = vmul.f32 %v421, 0.5
  %v423 = vtanh.pop %v422
  %v424 = vmul.f32 %v423, 0.5
  %v425 = vadd.f32 %v424, 0.5
  %v426 = vtanh.pop %v421
  %v427 = vmul.f32 %v425, %v270
  %429 = vrot.lane.b32.xlu0 %v426, 64
  %v430 = vpop.permute.xlu0 %429
  %v432 = vmul.f32 %v425, %v430
  %434 = vrot.lane.b32.xlu0 %v432, 32
  %v435 = vpop.permute.xlu0 %434
  %v437 = vadd.f32 %v427, %v435
  %v438 = vtanh.pop %v437
  %440 = vrot.lane.b32.xlu0 %v438, 64
  %v441 = vpop.permute.xlu0 %440
  %v443 = vmul.f32 %v425, %v441
  %445 = vrot.lane.b32.xlu0 %v443, 32
  %v446 = vpop.permute.xlu0 %445
  %449 = vrot.lane.b32.xlu0 %v372, 64
  %v450 = vpop.permute.xlu0 %449
  %v452 = vsel %vm210, %v446, %v450
  %v453 = vpack.c.bf16 %v452, %v452
  %v455 = vsel %vm307, %v453, 0
  %457 = vmatprep.subr.bf16.mxu0 0
  %458 = vmatpush1.bf16.msra.mxu0 0
  %459 = vmatprep.subr.bf16.mxu0 0
  %460 = vmatpush1.bf16.msra.mxu0 0
  %461 = vmatprep.subr.bf16.mxu0 0
  %462 = vmatpush1.bf16.msra.mxu0 0
  %463 = vmatprep.subr.bf16.mxu0 0
  %464 = vmatpush1.bf16.msra.mxu0 0
  %465 = vmatprep.subr.bf16.mxu0 0
  %466 = vmatpush1.bf16.msra.mxu0 %v302
  %467 = vmatprep.subr.bf16.mxu0 0
  %468 = vmatpush1.bf16.msra.mxu0 %v301
  %469 = vmatprep.subr.bf16.mxu0 0
  %470 = vmatpush1.bf16.msra.mxu0 %v300
  %471 = vmatprep.subr.bf16.mxu0 0
  %472 = vmatpush1.bf16.msra.mxu0 %v299
  %473 = vmatprep.subr.bf16.mxu0 0
  %474 = vmatpush2.bf16.msra.mxu0 0
  %475 = vmatprep.subr.bf16.mxu0 0
  %476 = vmatpush2.bf16.msra.mxu0 0
  %477 = vmatprep.subr.bf16.mxu0 0
  %478 = vmatpush2.bf16.msra.mxu0 0
  %479 = vmatprep.subr.bf16.mxu0 0
  %480 = vmatpush2.bf16.msra.mxu0 0
  %481 = vmatprep.subr.bf16.mxu0 0
  %482 = vmatpush2.bf16.msra.mxu0 0
  %483 = vmatprep.subr.bf16.mxu0 0
  %484 = vmatpush2.bf16.msra.mxu0 0
  %485 = vmatprep.subr.bf16.mxu0 0
  %486 = vmatpush2.bf16.msra.mxu0 0
  %487 = vmatprep.subr.bf16.mxu0 0
  %488 = vmatpush2.bf16.msra.mxu0 0
  %489 = vmatprep.mubr.bf16.mxu0 0
  %490 = vmatmul.mubr.bf16.gmra.mxu0 %v455
  %v491 = vpop.f32.mrf.mxu0
  %v492 = vadd.f32 %v195, %v491
  %v493 = vpop.f32.mrf.mxu0
  %v494 = vpop.f32.mrf.mxu0
  %v495 = vpop.f32.mrf.mxu0
  %496 = vdwg.mxu0
  %v497 = vmul.f32 %v492, 0.5
  %v498 = vtanh.pop %v497
  %v499 = vmul.f32 %v498, 0.5
  %v500 = vadd.f32 %v499, 0.5
  %v501 = vtanh.pop %v492
  %v502 = vmul.f32 %v500, %v366
  %504 = vrot.lane.b32.xlu0 %v501, 64
  %v505 = vpop.permute.xlu0 %504
  %v507 = vmul.f32 %v500, %v505
  %509 = vrot.lane.b32.xlu0 %v507, 32
  %v510 = vpop.permute.xlu0 %509
  %v512 = vadd.f32 %v502, %v510
  %v513 = vtanh.pop %v512
  %515 = vrot.lane.b32.xlu0 %v513, 64
  %v516 = vpop.permute.xlu0 %515
  %v518 = vmul.f32 %v500, %v516
  %v519 = vld [vmem:[#allocation2 + $0x10] sm:$0xff]
  %v520 = vpack.c.bf16 %v443, %v443
  %522 = vrot.lane.b32.xlu0 %v520, 32
  %v523 = vpop.permute.xlu0 %522
  %v525 = vsel %vm210, %v523, 0
  %527 = vmatprep.subr.bf16.mxu0 0
  %528 = vmatpush1.bf16.msra.mxu0 0
  %529 = vmatprep.subr.bf16.mxu0 0
  %530 = vmatpush1.bf16.msra.mxu0 0
  %531 = vmatprep.subr.bf16.mxu0 0
  %532 = vmatpush1.bf16.msra.mxu0 0
  %533 = vmatprep.subr.bf16.mxu0 0
  %534 = vmatpush1.bf16.msra.mxu0 0
  %535 = vmatprep.subr.bf16.mxu0 0
  %536 = vmatpush1.bf16.msra.mxu0 0
  %537 = vmatprep.subr.bf16.mxu0 0
  %538 = vmatpush1.bf16.msra.mxu0 0
  %539 = vmatprep.subr.bf16.mxu0 0
  %540 = vmatpush1.bf16.msra.mxu0 %v207
  %541 = vmatprep.subr.bf16.mxu0 0
  %542 = vmatpush1.bf16.msra.mxu0 %v206
  %543 = vmatprep.subr.bf16.mxu0 0
  %544 = vmatpush2.bf16.msra.mxu0 0
  %545 = vmatprep.subr.bf16.mxu0 0
  %546 = vmatpush2.bf16.msra.mxu0 0
  %547 = vmatprep.subr.bf16.mxu0 0
  %548 = vmatpush2.bf16.msra.mxu0 0
  %549 = vmatprep.subr.bf16.mxu0 0
  %550 = vmatpush2.bf16.msra.mxu0 0
  %551 = vmatprep.subr.bf16.mxu0 0
  %552 = vmatpush2.bf16.msra.mxu0 0
  %553 = vmatprep.subr.bf16.mxu0 0
  %554 = vmatpush2.bf16.msra.mxu0 0
  %555 = vmatprep.subr.bf16.mxu0 0
  %556 = vmatpush2.bf16.msra.mxu0 0
  %557 = vmatprep.subr.bf16.mxu0 0
  %558 = vmatpush2.bf16.msra.mxu0 0
  %559 = vmatprep.mubr.bf16.mxu0 0
  %560 = vmatmul.mubr.bf16.gmra.mxu0 %v525
  %v561 = vpop.f32.mrf.mxu0
  %v562 = vadd.f32 0.0, %v561
  %v563 = vpop.f32.mrf.mxu0
  %v564 = vpop.f32.mrf.mxu0
  %v565 = vpop.f32.mrf.mxu0
  %566 = vdwg.mxu0
  %v567 = vadd.f32 %v519, %v562
  %v568 = vmul.f32 %v567, 0.5
  %v569 = vtanh.pop %v568
  %v570 = vmul.f32 %v569, 0.5
  %v571 = vadd.f32 %v570, 0.5
  %v572 = vtanh.pop %v567
  %v573 = vmul.f32 %v571, %v437
  %575 = vrot.lane.b32.xlu0 %v572, 64
  %v576 = vpop.permute.xlu0 %575
  %v578 = vmul.f32 %v571, %v576
  %580 = vrot.lane.b32.xlu0 %v578, 32
  %v581 = vpop.permute.xlu0 %580
  %v583 = vadd.f32 %v573, %v581
  %v584 = vtanh.pop %v583
  %586 = vrot.lane.b32.xlu0 %v584, 64
  %v587 = vpop.permute.xlu0 %586
  %v589 = vmul.f32 %v571, %v587
  %591 = vrot.lane.b32.xlu0 %v589, 32
  %v592 = vpop.permute.xlu0 %591
  %595 = vrot.lane.b32.xlu0 %v518, 64
  %v596 = vpop.permute.xlu0 %595
  %v598 = vsel %vm210, %v592, %v596
  %v599 = vpack.c.bf16 %v598, %v598
  %v601 = vsel %vm307, %v599, 0
  %603 = vmatprep.subr.bf16.mxu0 0
  %604 = vmatpush1.bf16.msra.mxu0 0
  %605 = vmatprep.subr.bf16.mxu0 0
  %606 = vmatpush1.bf16.msra.mxu0 0
  %607 = vmatprep.subr.bf16.mxu0 0
  %608 = vmatpush1.bf16.msra.mxu0 0
  %609 = vmatprep.subr.bf16.mxu0 0
  %610 = vmatpush1.bf16.msra.mxu0 0
  %611 = vmatprep.subr.bf16.mxu0 0
  %612 = vmatpush1.bf16.msra.mxu0 %v302
  %613 = vmatprep.subr.bf16.mxu0 0
  %614 = vmatpush1.bf16.msra.mxu0 %v301
  %615 = vmatprep.subr.bf16.mxu0 0
  %616 = vmatpush1.bf16.msra.mxu0 %v300
  %617 = vmatprep.subr.bf16.mxu0 0
  %618 = vmatpush1.bf16.msra.mxu0 %v299
  %619 = vmatprep.subr.bf16.mxu0 0
  %620 = vmatpush2.bf16.msra.mxu0 0
  %621 = vmatprep.subr.bf16.mxu0 0
  %622 = vmatpush2.bf16.msra.mxu0 0
  %623 = vmatprep.subr.bf16.mxu0 0
  %624 = vmatpush2.bf16.msra.mxu0 0
  %625 = vmatprep.subr.bf16.mxu0 0
  %626 = vmatpush2.bf16.msra.mxu0 0
  %627 = vmatprep.subr.bf16.mxu0 0
  %628 = vmatpush2.bf16.msra.mxu0 0
  %629 = vmatprep.subr.bf16.mxu0 0
  %630 = vmatpush2.bf16.msra.mxu0 0
  %631 = vmatprep.subr.bf16.mxu0 0
  %632 = vmatpush2.bf16.msra.mxu0 0
  %633 = vmatprep.subr.bf16.mxu0 0
  %634 = vmatpush2.bf16.msra.mxu0 0
  %635 = vmatprep.mubr.bf16.mxu0 0
  %636 = vmatmul.mubr.bf16.gmra.mxu0 %v601
  %v637 = vpop.f32.mrf.mxu0
  %v638 = vadd.f32 %v195, %v637
  %v639 = vpop.f32.mrf.mxu0
  %v640 = vpop.f32.mrf.mxu0
  %v641 = vpop.f32.mrf.mxu0
  %642 = vdwg.mxu0
  %v643 = vmul.f32 %v638, 0.5
  %v644 = vtanh.pop %v643
  %v645 = vmul.f32 %v644, 0.5
  %v646 = vadd.f32 %v645, 0.5
  %v647 = vtanh.pop %v638
  %v648 = vmul.f32 %v646, %v512
  %650 = vrot.lane.b32.xlu0 %v647, 64
  %v651 = vpop.permute.xlu0 %650
  %v653 = vmul.f32 %v646, %v651
  %655 = vrot.lane.b32.xlu0 %v653, 32
  %v656 = vpop.permute.xlu0 %655
  %v658 = vadd.f32 %v648, %v656
  %v659 = vtanh.pop %v658
  %661 = vrot.lane.b32.xlu0 %v659, 64
  %v662 = vpop.permute.xlu0 %661
  %v664 = vmul.f32 %v646, %v662
  %v665 = vld [vmem:[#allocation2 + $0x18] sm:$0xff]
  %v666 = vpack.c.bf16 %v589, %v589
  %668 = vrot.lane.b32.xlu0 %v666, 32
  %v669 = vpop.permute.xlu0 %668
  %v671 = vsel %vm210, %v669, 0
  %673 = vmatprep.subr.bf16.mxu0 0
  %674 = vmatpush1.bf16.msra.mxu0 0
  %675 = vmatprep.subr.bf16.mxu0 0
  %676 = vmatpush1.bf16.msra.mxu0 0
  %677 = vmatprep.subr.bf16.mxu0 0
  %678 = vmatpush1.bf16.msra.mxu0 0
  %679 = vmatprep.subr.bf16.mxu0 0
  %680 = vmatpush1.bf16.msra.mxu0 0
  %681 = vmatprep.subr.bf16.mxu0 0
  %682 = vmatpush1.bf16.msra.mxu0 0
  %683 = vmatprep.subr.bf16.mxu0 0
  %684 = vmatpush1.bf16.msra.mxu0 0
  %685 = vmatprep.subr.bf16.mxu0 0
  %686 = vmatpush1.bf16.msra.mxu0 %v207
  %687 = vmatprep.subr.bf16.mxu0 0
  %688 = vmatpush1.bf16.msra.mxu0 %v206
  %689 = vmatprep.subr.bf16.mxu0 0
  %690 = vmatpush2.bf16.msra.mxu0 0
  %691 = vmatprep.subr.bf16.mxu0 0
  %692 = vmatpush2.bf16.msra.mxu0 0
  %693 = vmatprep.subr.bf16.mxu0 0
  %694 = vmatpush2.bf16.msra.mxu0 0
  %695 = vmatprep.subr.bf16.mxu0 0
  %696 = vmatpush2.bf16.msra.mxu0 0
  %697 = vmatprep.subr.bf16.mxu0 0
  %698 = vmatpush2.bf16.msra.mxu0 0
  %699 = vmatprep.subr.bf16.mxu0 0
  %700 = vmatpush2.bf16.msra.mxu0 0
  %701 = vmatprep.subr.bf16.mxu0 0
  %702 = vmatpush2.bf16.msra.mxu0 0
  %703 = vmatprep.subr.bf16.mxu0 0
  %704 = vmatpush2.bf16.msra.mxu0 0
  %705 = vmatprep.mubr.bf16.mxu0 0
  %706 = vmatmul.mubr.bf16.gmra.mxu0 %v671
  %v707 = vpop.f32.mrf.mxu0
  %v708 = vadd.f32 0.0, %v707
  %v709 = vpop.f32.mrf.mxu0
  %v710 = vpop.f32.mrf.mxu0
  %v711 = vpop.f32.mrf.mxu0
  %712 = vdwg.mxu0
  %v713 = vadd.f32 %v665, %v708
  %v714 = vmul.f32 %v713, 0.5
  %v715 = vtanh.pop %v714
  %v716 = vmul.f32 %v715, 0.5
  %v717 = vadd.f32 %v716, 0.5
  %v718 = vtanh.pop %v713
  %v719 = vmul.f32 %v717, %v583
  %721 = vrot.lane.b32.xlu0 %v718, 64
  %v722 = vpop.permute.xlu0 %721
  %v724 = vmul.f32 %v717, %v722
  %726 = vrot.lane.b32.xlu0 %v724, 32
  %v727 = vpop.permute.xlu0 %726
  %v729 = vadd.f32 %v719, %v727
  %v730 = vtanh.pop %v729
  %732 = vrot.lane.b32.xlu0 %v730, 64
  %v733 = vpop.permute.xlu0 %732
  %v735 = vmul.f32 %v717, %v733
  %737 = vrot.lane.b32.xlu0 %v735, 32
  %v738 = vpop.permute.xlu0 %737
  %741 = vrot.lane.b32.xlu0 %v664, 64
  %v742 = vpop.permute.xlu0 %741
  %v744 = vsel %vm210, %v738, %v742
  %v745 = vpack.c.bf16 %v744, %v744
  %v747 = vsel %vm307, %v745, 0
  %749 = vmatprep.subr.bf16.mxu0 0
  %750 = vmatpush1.bf16.msra.mxu0 0
  %751 = vmatprep.subr.bf16.mxu0 0
  %752 = vmatpush1.bf16.msra.mxu0 0
  %753 = vmatprep.subr.bf16.mxu0 0
  %754 = vmatpush1.bf16.msra.mxu0 0
  %755 = vmatprep.subr.bf16.mxu0 0
  %756 = vmatpush1.bf16.msra.mxu0 0
  %757 = vmatprep.subr.bf16.mxu0 0
  %758 = vmatpush1.bf16.msra.mxu0 %v302
  %759 = vmatprep.subr.bf16.mxu0 0
  %760 = vmatpush1.bf16.msra.mxu0 %v301
  %761 = vmatprep.subr.bf16.mxu0 0
  %762 = vmatpush1.bf16.msra.mxu0 %v300
  %763 = vmatprep.subr.bf16.mxu0 0
  %764 = vmatpush1.bf16.msra.mxu0 %v299
  %765 = vmatprep.subr.bf16.mxu0 0
  %766 = vmatpush2.bf16.msra.mxu0 0
  %767 = vmatprep.subr.bf16.mxu0 0
  %768 = vmatpush2.bf16.msra.mxu0 0
  %769 = vmatprep.subr.bf16.mxu0 0
  %770 = vmatpush2.bf16.msra.mxu0 0
  %771 = vmatprep.subr.bf16.mxu0 0
  %772 = vmatpush2.bf16.msra.mxu0 0
  %773 = vmatprep.subr.bf16.mxu0 0
  %774 = vmatpush2.bf16.msra.mxu0 0
  %775 = vmatprep.subr.bf16.mxu0 0
  %776 = vmatpush2.bf16.msra.mxu0 0
  %777 = vmatprep.subr.bf16.mxu0 0
  %778 = vmatpush2.bf16.msra.mxu0 0
  %779 = vmatprep.subr.bf16.mxu0 0
  %780 = vmatpush2.bf16.msra.mxu0 0
  %781 = vmatprep.mubr.bf16.mxu0 0
  %782 = vmatmul.mubr.bf16.gmra.mxu0 %v747
  %v783 = vpop.f32.mrf.mxu0
  %v784 = vadd.f32 %v195, %v783
  %v785 = vpop.f32.mrf.mxu0
  %v786 = vpop.f32.mrf.mxu0
  %v787 = vpop.f32.mrf.mxu0
  %788 = vdwg.mxu0
  %v789 = vmul.f32 %v784, 0.5
  %v790 = vtanh.pop %v789
  %v791 = vmul.f32 %v790, 0.5
  %v792 = vadd.f32 %v791, 0.5
  %v793 = vtanh.pop %v784
  %v794 = vmul.f32 %v792, %v658
  %796 = vrot.lane.b32.xlu0 %v793, 64
  %v797 = vpop.permute.xlu0 %796
  %v799 = vmul.f32 %v792, %v797
  %801 = vrot.lane.b32.xlu0 %v799, 32
  %v802 = vpop.permute.xlu0 %801
  %v804 = vadd.f32 %v794, %v802
  %v805 = vtanh.pop %v804
  %807 = vrot.lane.b32.xlu0 %v805, 64
  %v808 = vpop.permute.xlu0 %807
  %v810 = vmul.f32 %v792, %v808
  %v811 = vld [vmem:[#allocation2 + $0x20] sm:$0xff]
  %v812 = vpack.c.bf16 %v735, %v735
  %814 = vrot.lane.b32.xlu0 %v812, 32
  %v815 = vpop.permute.xlu0 %814
  %v817 = vsel %vm210, %v815, 0
  %819 = vmatprep.subr.bf16.mxu0 0
  %820 = vmatpush1.bf16.msra.mxu0 0
  %821 = vmatprep.subr.bf16.mxu0 0
  %822 = vmatpush1.bf16.msra.mxu0 0
  %823 = vmatprep.subr.bf16.mxu0 0
  %824 = vmatpush1.bf16.msra.mxu0 0
  %825 = vmatprep.subr.bf16.mxu0 0
  %826 = vmatpush1.bf16.msra.mxu0 0
  %827 = vmatprep.subr.bf16.mxu0 0
  %828 = vmatpush1.bf16.msra.mxu0 0
  %829 = vmatprep.subr.bf16.mxu0 0
  %830 = vmatpush1.bf16.msra.mxu0 0
  %831 = vmatprep.subr.bf16.mxu0 0
  %832 = vmatpush1.bf16.msra.mxu0 %v207
  %833 = vmatprep.subr.bf16.mxu0 0
  %834 = vmatpush1.bf16.msra.mxu0 %v206
  %835 = vmatprep.subr.bf16.mxu0 0
  %836 = vmatpush2.bf16.msra.mxu0 0
  %837 = vmatprep.subr.bf16.mxu0 0
  %838 = vmatpush2.bf16.msra.mxu0 0
  %839 = vmatprep.subr.bf16.mxu0 0
  %840 = vmatpush2.bf16.msra.mxu0 0
  %841 = vmatprep.subr.bf16.mxu0 0
  %842 = vmatpush2.bf16.msra.mxu0 0
  %843 = vmatprep.subr.bf16.mxu0 0
  %844 = vmatpush2.bf16.msra.mxu0 0
  %845 = vmatprep.subr.bf16.mxu0 0
  %846 = vmatpush2.bf16.msra.mxu0 0
  %847 = vmatprep.subr.bf16.mxu0 0
  %848 = vmatpush2.bf16.msra.mxu0 0
  %849 = vmatprep.subr.bf16.mxu0 0
  %850 = vmatpush2.bf16.msra.mxu0 0
  %851 = vmatprep.mubr.bf16.mxu0 0
  %852 = vmatmul.mubr.bf16.gmra.mxu0 %v817
  %v853 = vpop.f32.mrf.mxu0
  %v854 = vadd.f32 0.0, %v853
  %v855 = vpop.f32.mrf.mxu0
  %v856 = vpop.f32.mrf.mxu0
  %v857 = vpop.f32.mrf.mxu0
  %858 = vdwg.mxu0
  %v859 = vadd.f32 %v811, %v854
  %v860 = vmul.f32 %v859, 0.5
  %v861 = vtanh.pop %v860
  %v862 = vmul.f32 %v861, 0.5
  %v863 = vadd.f32 %v862, 0.5
  %v864 = vtanh.pop %v859
  %v865 = vmul.f32 %v863, %v729
  %867 = vrot.lane.b32.xlu0 %v864, 64
  %v868 = vpop.permute.xlu0 %867
  %v870 = vmul.f32 %v863, %v868
  %872 = vrot.lane.b32.xlu0 %v870, 32
  %v873 = vpop.permute.xlu0 %872
  %v875 = vadd.f32 %v865, %v873
  %v876 = vtanh.pop %v875
  %878 = vrot.lane.b32.xlu0 %v876, 64
  %v879 = vpop.permute.xlu0 %878
  %v881 = vmul.f32 %v863, %v879
  %883 = vrot.lane.b32.xlu0 %v881, 32
  %v884 = vpop.permute.xlu0 %883
  %887 = vrot.lane.b32.xlu0 %v810, 64
  %v888 = vpop.permute.xlu0 %887
  %v890 = vsel %vm210, %v884, %v888
  %v891 = vpack.c.bf16 %v890, %v890
  %v893 = vsel %vm307, %v891, 0
  %895 = vmatprep.subr.bf16.mxu0 0
  %896 = vmatpush1.bf16.msra.mxu0 0
  %897 = vmatprep.subr.bf16.mxu0 0
  %898 = vmatpush1.bf16.msra.mxu0 0
  %899 = vmatprep.subr.bf16.mxu0 0
  %900 = vmatpush1.bf16.msra.mxu0 0
  %901 = vmatprep.subr.bf16.mxu0 0
  %902 = vmatpush1.bf16.msra.mxu0 0
  %903 = vmatprep.subr.bf16.mxu0 0
  %904 = vmatpush1.bf16.msra.mxu0 %v302
  %905 = vmatprep.subr.bf16.mxu0 0
  %906 = vmatpush1.bf16.msra.mxu0 %v301
  %907 = vmatprep.subr.bf16.mxu0 0
  %908 = vmatpush1.bf16.msra.mxu0 %v300
  %909 = vmatprep.subr.bf16.mxu0 0
  %910 = vmatpush1.bf16.msra.mxu0 %v299
  %911 = vmatprep.subr.bf16.mxu0 0
  %912 = vmatpush2.bf16.msra.mxu0 0
  %913 = vmatprep.subr.bf16.mxu0 0
  %914 = vmatpush2.bf16.msra.mxu0 0
  %915 = vmatprep.subr.bf16.mxu0 0
  %916 = vmatpush2.bf16.msra.mxu0 0
  %917 = vmatprep.subr.bf16.mxu0 0
  %918 = vmatpush2.bf16.msra.mxu0 0
  %919 = vmatprep.subr.bf16.mxu0 0
  %920 = vmatpush2.bf16.msra.mxu0 0
  %921 = vmatprep.subr.bf16.mxu0 0
  %922 = vmatpush2.bf16.msra.mxu0 0
  %923 = vmatprep.subr.bf16.mxu0 0
  %924 = vmatpush2.bf16.msra.mxu0 0
  %925 = vmatprep.subr.bf16.mxu0 0
  %926 = vmatpush2.bf16.msra.mxu0 0
  %927 = vmatprep.mubr.bf16.mxu0 0
  %928 = vmatmul.mubr.bf16.gmra.mxu0 %v893
  %v929 = vpop.f32.mrf.mxu0
  %v930 = vadd.f32 %v195, %v929
  %v931 = vpop.f32.mrf.mxu0
  %v932 = vpop.f32.mrf.mxu0
  %v933 = vpop.f32.mrf.mxu0
  %934 = vdwg.mxu0
  %v935 = vmul.f32 %v930, 0.5
  %v936 = vtanh.pop %v935
  %v937 = vmul.f32 %v936, 0.5
  %v938 = vadd.f32 %v937, 0.5
  %v939 = vtanh.pop %v930
  %v940 = vmul.f32 %v938, %v804
  %942 = vrot.lane.b32.xlu0 %v939, 64
  %v943 = vpop.permute.xlu0 %942
  %v945 = vmul.f32 %v938, %v943
  %947 = vrot.lane.b32.xlu0 %v945, 32
  %v948 = vpop.permute.xlu0 %947
  %v950 = vadd.f32 %v940, %v948
  %v951 = vtanh.pop %v950
  %953 = vrot.lane.b32.xlu0 %v951, 64
  %v954 = vpop.permute.xlu0 %953
  %v956 = vmul.f32 %v938, %v954
  %v957 = vld [vmem:[#allocation2 + $0x28] sm:$0xff]
  %v958 = vpack.c.bf16 %v881, %v881
  %960 = vrot.lane.b32.xlu0 %v958, 32
  %v961 = vpop.permute.xlu0 %960
  %v963 = vsel %vm210, %v961, 0
  %965 = vmatprep.subr.bf16.mxu0 0
  %966 = vmatpush1.bf16.msra.mxu0 0
  %967 = vmatprep.subr.bf16.mxu0 0
  %968 = vmatpush1.bf16.msra.mxu0 0
  %969 = vmatprep.subr.bf16.mxu0 0
  %970 = vmatpush1.bf16.msra.mxu0 0
  %971 = vmatprep.subr.bf16.mxu0 0
  %972 = vmatpush1.bf16.msra.mxu0 0
  %973 = vmatprep.subr.bf16.mxu0 0
  %974 = vmatpush1.bf16.msra.mxu0 0
  %975 = vmatprep.subr.bf16.mxu0 0
  %976 = vmatpush1.bf16.msra.mxu0 0
  %977 = vmatprep.subr.bf16.mxu0 0
  %978 = vmatpush1.bf16.msra.mxu0 %v207
  %979 = vmatprep.subr.bf16.mxu0 0
  %980 = vmatpush1.bf16.msra.mxu0 %v206
  %981 = vmatprep.subr.bf16.mxu0 0
  %982 = vmatpush2.bf16.msra.mxu0 0
  %983 = vmatprep.subr.bf16.mxu0 0
  %984 = vmatpush2.bf16.msra.mxu0 0
  %985 = vmatprep.subr.bf16.mxu0 0
  %986 = vmatpush2.bf16.msra.mxu0 0
  %987 = vmatprep.subr.bf16.mxu0 0
  %988 = vmatpush2.bf16.msra.mxu0 0
  %989 = vmatprep.subr.bf16.mxu0 0
  %990 = vmatpush2.bf16.msra.mxu0 0
  %991 = vmatprep.subr.bf16.mxu0 0
  %992 = vmatpush2.bf16.msra.mxu0 0
  %993 = vmatprep.subr.bf16.mxu0 0
  %994 = vmatpush2.bf16.msra.mxu0 0
  %995 = vmatprep.subr.bf16.mxu0 0
  %996 = vmatpush2.bf16.msra.mxu0 0
  %997 = vmatprep.mubr.bf16.mxu0 0
  %998 = vmatmul.mubr.bf16.gmra.mxu0 %v963
  %v999 = vpop.f32.mrf.mxu0
  %v1000 = vadd.f32 0.0, %v999
  %v1001 = vpop.f32.mrf.mxu0
  %v1002 = vpop.f32.mrf.mxu0
  %v1003 = vpop.f32.mrf.mxu0
  %1004 = vdwg.mxu0
  %v1005 = vadd.f32 %v957, %v1000
  %v1006 = vmul.f32 %v1005, 0.5
  %v1007 = vtanh.pop %v1006
  %v1008 = vmul.f32 %v1007, 0.5
  %v1009 = vadd.f32 %v1008, 0.5
  %v1010 = vtanh.pop %v1005
  %v1011 = vmul.f32 %v1009, %v875
  %1013 = vrot.lane.b32.xlu0 %v1010, 64
  %v1014 = vpop.permute.xlu0 %1013
  %v1016 = vmul.f32 %v1009, %v1014
  %1018 = vrot.lane.b32.xlu0 %v1016, 32
  %v1019 = vpop.permute.xlu0 %1018
  %v1021 = vadd.f32 %v1011, %v1019
  %v1022 = vtanh.pop %v1021
  %1024 = vrot.lane.b32.xlu0 %v1022, 64
  %v1025 = vpop.permute.xlu0 %1024
  %v1027 = vmul.f32 %v1009, %v1025
  %1029 = vrot.lane.b32.xlu0 %v1027, 32
  %v1030 = vpop.permute.xlu0 %1029
  %1033 = vrot.lane.b32.xlu0 %v956, 64
  %v1034 = vpop.permute.xlu0 %1033
  %v1036 = vsel %vm210, %v1030, %v1034
  %v1037 = vpack.c.bf16 %v1036, %v1036
  %v1039 = vsel %vm307, %v1037, 0
  %1041 = vmatprep.subr.bf16.mxu0 0
  %1042 = vmatpush1.bf16.msra.mxu0 0
  %1043 = vmatprep.subr.bf16.mxu0 0
  %1044 = vmatpush1.bf16.msra.mxu0 0
  %1045 = vmatprep.subr.bf16.mxu0 0
  %1046 = vmatpush1.bf16.msra.mxu0 0
  %1047 = vmatprep.subr.bf16.mxu0 0
  %1048 = vmatpush1.bf16.msra.mxu0 0
  %1049 = vmatprep.subr.bf16.mxu0 0
  %1050 = vmatpush1.bf16.msra.mxu0 %v302
  %1051 = vmatprep.subr.bf16.mxu0 0
  %1052 = vmatpush1.bf16.msra.mxu0 %v301
  %1053 = vmatprep.subr.bf16.mxu0 0
  %1054 = vmatpush1.bf16.msra.mxu0 %v300
  %1055 = vmatprep.subr.bf16.mxu0 0
  %1056 = vmatpush1.bf16.msra.mxu0 %v299
  %1057 = vmatprep.subr.bf16.mxu0 0
  %1058 = vmatpush2.bf16.msra.mxu0 0
  %1059 = vmatprep.subr.bf16.mxu0 0
  %1060 = vmatpush2.bf16.msra.mxu0 0
  %1061 = vmatprep.subr.bf16.mxu0 0
  %1062 = vmatpush2.bf16.msra.mxu0 0
  %1063 = vmatprep.subr.bf16.mxu0 0
  %1064 = vmatpush2.bf16.msra.mxu0 0
  %1065 = vmatprep.subr.bf16.mxu0 0
  %1066 = vmatpush2.bf16.msra.mxu0 0
  %1067 = vmatprep.subr.bf16.mxu0 0
  %1068 = vmatpush2.bf16.msra.mxu0 0
  %1069 = vmatprep.subr.bf16.mxu0 0
  %1070 = vmatpush2.bf16.msra.mxu0 0
  %1071 = vmatprep.subr.bf16.mxu0 0
  %1072 = vmatpush2.bf16.msra.mxu0 0
  %1073 = vmatprep.mubr.bf16.mxu0 0
  %1074 = vmatmul.mubr.bf16.gmra.mxu0 %v1039
  %v1075 = vpop.f32.mrf.mxu0
  %v1076 = vadd.f32 %v195, %v1075
  %v1077 = vpop.f32.mrf.mxu0
  %v1078 = vpop.f32.mrf.mxu0
  %v1079 = vpop.f32.mrf.mxu0
  %1080 = vdwg.mxu0
  %v1081 = vmul.f32 %v1076, 0.5
  %v1082 = vtanh.pop %v1081
  %v1083 = vmul.f32 %v1082, 0.5
  %v1084 = vadd.f32 %v1083, 0.5
  %v1085 = vtanh.pop %v1076
  %v1086 = vmul.f32 %v1084, %v950
  %1088 = vrot.lane.b32.xlu0 %v1085, 64
  %v1089 = vpop.permute.xlu0 %1088
  %v1091 = vmul.f32 %v1084, %v1089
  %1093 = vrot.lane.b32.xlu0 %v1091, 32
  %v1094 = vpop.permute.xlu0 %1093
  %v1096 = vadd.f32 %v1086, %v1094
  %v1097 = vtanh.pop %v1096
  %1099 = vrot.lane.b32.xlu0 %v1097, 64
  %v1100 = vpop.permute.xlu0 %1099
  %v1102 = vmul.f32 %v1084, %v1100
  %v1103 = vld [vmem:[#allocation2 + $0x30] sm:$0xff]
  %v1104 = vpack.c.bf16 %v1027, %v1027
  %1106 = vrot.lane.b32.xlu0 %v1104, 32
  %v1107 = vpop.permute.xlu0 %1106
  %v1109 = vsel %vm210, %v1107, 0
  %1111 = vmatprep.subr.bf16.mxu0 0
  %1112 = vmatpush1.bf16.msra.mxu0 0
  %1113 = vmatprep.subr.bf16.mxu0 0
  %1114 = vmatpush1.bf16.msra.mxu0 0
  %1115 = vmatprep.subr.bf16.mxu0 0
  %1116 = vmatpush1.bf16.msra.mxu0 0
  %1117 = vmatprep.subr.bf16.mxu0 0
  %1118 = vmatpush1.bf16.msra.mxu0 0
  %1119 = vmatprep.subr.bf16.mxu0 0
  %1120 = vmatpush1.bf16.msra.mxu0 0
  %1121 = vmatprep.subr.bf16.mxu0 0
  %1122 = vmatpush1.bf16.msra.mxu0 0
  %1123 = vmatprep.subr.bf16.mxu0 0
  %1124 = vmatpush1.bf16.msra.mxu0 %v207
  %1125 = vmatprep.subr.bf16.mxu0 0
  %1126 = vmatpush1.bf16.msra.mxu0 %v206
  %1127 = vmatprep.subr.bf16.mxu0 0
  %1128 = vmatpush2.bf16.msra.mxu0 0
  %1129 = vmatprep.subr.bf16.mxu0 0
  %1130 = vmatpush2.bf16.msra.mxu0 0
  %1131 = vmatprep.subr.bf16.mxu0 0
  %1132 = vmatpush2.bf16.msra.mxu0 0
  %1133 = vmatprep.subr.bf16.mxu0 0
  %1134 = vmatpush2.bf16.msra.mxu0 0
  %1135 = vmatprep.subr.bf16.mxu0 0
  %1136 = vmatpush2.bf16.msra.mxu0 0
  %1137 = vmatprep.subr.bf16.mxu0 0
  %1138 = vmatpush2.bf16.msra.mxu0 0
  %1139 = vmatprep.subr.bf16.mxu0 0
  %1140 = vmatpush2.bf16.msra.mxu0 0
  %1141 = vmatprep.subr.bf16.mxu0 0
  %1142 = vmatpush2.bf16.msra.mxu0 0
  %1143 = vmatprep.mubr.bf16.mxu0 0
  %1144 = vmatmul.mubr.bf16.gmra.mxu0 %v1109
  %v1145 = vpop.f32.mrf.mxu0
  %v1146 = vadd.f32 0.0, %v1145
  %v1147 = vpop.f32.mrf.mxu0
  %v1148 = vpop.f32.mrf.mxu0
  %v1149 = vpop.f32.mrf.mxu0
  %1150 = vdwg.mxu0
  %v1151 = vadd.f32 %v1103, %v1146
  %v1152 = vmul.f32 %v1151, 0.5
  %v1153 = vtanh.pop %v1152
  %v1154 = vmul.f32 %v1153, 0.5
  %v1155 = vadd.f32 %v1154, 0.5
  %v1156 = vtanh.pop %v1151
  %v1157 = vmul.f32 %v1155, %v1021
  %1159 = vrot.lane.b32.xlu0 %v1156, 64
  %v1160 = vpop.permute.xlu0 %1159
  %v1162 = vmul.f32 %v1155, %v1160
  %1164 = vrot.lane.b32.xlu0 %v1162, 32
  %v1165 = vpop.permute.xlu0 %1164
  %v1167 = vadd.f32 %v1157, %v1165
  %v1168 = vtanh.pop %v1167
  %1170 = vrot.lane.b32.xlu0 %v1168, 64
  %v1171 = vpop.permute.xlu0 %1170
  %v1173 = vmul.f32 %v1155, %v1171
  %1175 = vrot.lane.b32.xlu0 %v1173, 32
  %v1176 = vpop.permute.xlu0 %1175
  %1179 = vrot.lane.b32.xlu0 %v1102, 64
  %v1180 = vpop.permute.xlu0 %1179
  %v1182 = vsel %vm210, %v1176, %v1180
  %v1183 = vpack.c.bf16 %v1182, %v1182
  %v1185 = vsel %vm307, %v1183, 0
  %1187 = vmatprep.subr.bf16.mxu0 0
  %1188 = vmatpush1.bf16.msra.mxu0 0
  %1189 = vmatprep.subr.bf16.mxu0 0
  %1190 = vmatpush1.bf16.msra.mxu0 0
  %1191 = vmatprep.subr.bf16.mxu0 0
  %1192 = vmatpush1.bf16.msra.mxu0 0
  %1193 = vmatprep.subr.bf16.mxu0 0
  %1194 = vmatpush1.bf16.msra.mxu0 0
  %1195 = vmatprep.subr.bf16.mxu0 0
  %1196 = vmatpush1.bf16.msra.mxu0 %v302
  %1197 = vmatprep.subr.bf16.mxu0 0
  %1198 = vmatpush1.bf16.msra.mxu0 %v301
  %1199 = vmatprep.subr.bf16.mxu0 0
  %1200 = vmatpush1.bf16.msra.mxu0 %v300
  %1201 = vmatprep.subr.bf16.mxu0 0
  %1202 = vmatpush1.bf16.msra.mxu0 %v299
  %1203 = vmatprep.subr.bf16.mxu0 0
  %1204 = vmatpush2.bf16.msra.mxu0 0
  %1205 = vmatprep.subr.bf16.mxu0 0
  %1206 = vmatpush2.bf16.msra.mxu0 0
  %1207 = vmatprep.subr.bf16.mxu0 0
  %1208 = vmatpush2.bf16.msra.mxu0 0
  %1209 = vmatprep.subr.bf16.mxu0 0
  %1210 = vmatpush2.bf16.msra.mxu0 0
  %1211 = vmatprep.subr.bf16.mxu0 0
  %1212 = vmatpush2.bf16.msra.mxu0 0
  %1213 = vmatprep.subr.bf16.mxu0 0
  %1214 = vmatpush2.bf16.msra.mxu0 0
  %1215 = vmatprep.subr.bf16.mxu0 0
  %1216 = vmatpush2.bf16.msra.mxu0 0
  %1217 = vmatprep.subr.bf16.mxu0 0
  %1218 = vmatpush2.bf16.msra.mxu0 0
  %1219 = vmatprep.mubr.bf16.mxu0 0
  %1220 = vmatmul.mubr.bf16.gmra.mxu0 %v1185
  %v1221 = vpop.f32.mrf.mxu0
  %v1222 = vadd.f32 %v195, %v1221
  %v1223 = vpop.f32.mrf.mxu0
  %v1224 = vpop.f32.mrf.mxu0
  %v1225 = vpop.f32.mrf.mxu0
  %1226 = vdwg.mxu0
  %v1227 = vmul.f32 %v1222, 0.5
  %v1228 = vtanh.pop %v1227
  %v1229 = vmul.f32 %v1228, 0.5
  %v1230 = vadd.f32 %v1229, 0.5
  %v1231 = vtanh.pop %v1222
  %v1232 = vmul.f32 %v1230, %v1096
  %1234 = vrot.lane.b32.xlu0 %v1231, 64
  %v1235 = vpop.permute.xlu0 %1234
  %v1237 = vmul.f32 %v1230, %v1235
  %1239 = vrot.lane.b32.xlu0 %v1237, 32
  %v1240 = vpop.permute.xlu0 %1239
  %v1242 = vadd.f32 %v1232, %v1240
  %v1243 = vtanh.pop %v1242
  %1245 = vrot.lane.b32.xlu0 %v1243, 64
  %v1246 = vpop.permute.xlu0 %1245
  %v1248 = vmul.f32 %v1230, %v1246
  %v1249 = vld [vmem:[#allocation2 + $0x38] sm:$0xff]
  %v1250 = vpack.c.bf16 %v1173, %v1173
  %1252 = vrot.lane.b32.xlu0 %v1250, 32
  %v1253 = vpop.permute.xlu0 %1252
  %v1255 = vsel %vm210, %v1253, 0
  %1257 = vmatprep.subr.bf16.mxu0 0
  %1258 = vmatpush1.bf16.msra.mxu0 0
  %1259 = vmatprep.subr.bf16.mxu0 0
  %1260 = vmatpush1.bf16.msra.mxu0 0
  %1261 = vmatprep.subr.bf16.mxu0 0
  %1262 = vmatpush1.bf16.msra.mxu0 0
  %1263 = vmatprep.subr.bf16.mxu0 0
  %1264 = vmatpush1.bf16.msra.mxu0 0
  %1265 = vmatprep.subr.bf16.mxu0 0
  %1266 = vmatpush1.bf16.msra.mxu0 0
  %1267 = vmatprep.subr.bf16.mxu0 0
  %1268 = vmatpush1.bf16.msra.mxu0 0
  %1269 = vmatprep.subr.bf16.mxu0 0
  %1270 = vmatpush1.bf16.msra.mxu0 %v207
  %1271 = vmatprep.subr.bf16.mxu0 0
  %1272 = vmatpush1.bf16.msra.mxu0 %v206
  %1273 = vmatprep.subr.bf16.mxu0 0
  %1274 = vmatpush2.bf16.msra.mxu0 0
  %1275 = vmatprep.subr.bf16.mxu0 0
  %1276 = vmatpush2.bf16.msra.mxu0 0
  %1277 = vmatprep.subr.bf16.mxu0 0
  %1278 = vmatpush2.bf16.msra.mxu0 0
  %1279 = vmatprep.subr.bf16.mxu0 0
  %1280 = vmatpush2.bf16.msra.mxu0 0
  %1281 = vmatprep.subr.bf16.mxu0 0
  %1282 = vmatpush2.bf16.msra.mxu0 0
  %1283 = vmatprep.subr.bf16.mxu0 0
  %1284 = vmatpush2.bf16.msra.mxu0 0
  %1285 = vmatprep.subr.bf16.mxu0 0
  %1286 = vmatpush2.bf16.msra.mxu0 0
  %1287 = vmatprep.subr.bf16.mxu0 0
  %1288 = vmatpush2.bf16.msra.mxu0 0
  %1289 = vmatprep.mubr.bf16.mxu0 0
  %1290 = vmatmul.mubr.bf16.gmra.mxu0 %v1255
  %v1291 = vpop.f32.mrf.mxu0
  %v1292 = vadd.f32 0.0, %v1291
  %v1293 = vpop.f32.mrf.mxu0
  %v1294 = vpop.f32.mrf.mxu0
  %v1295 = vpop.f32.mrf.mxu0
  %1296 = vdwg.mxu0
  %v1297 = vadd.f32 %v1249, %v1292
  %v1298 = vmul.f32 %v1297, 0.5
  %v1299 = vtanh.pop %v1298
  %v1300 = vmul.f32 %v1299, 0.5
  %v1301 = vadd.f32 %v1300, 0.5
  %v1302 = vtanh.pop %v1297
  %v1303 = vmul.f32 %v1301, %v1167
  %1305 = vrot.lane.b32.xlu0 %v1302, 64
  %v1306 = vpop.permute.xlu0 %1305
  %v1308 = vmul.f32 %v1301, %v1306
  %1310 = vrot.lane.b32.xlu0 %v1308, 32
  %v1311 = vpop.permute.xlu0 %1310
  %v1313 = vadd.f32 %v1303, %v1311
  %v1314 = vtanh.pop %v1313
  %1316 = vrot.lane.b32.xlu0 %v1314, 64
  %v1317 = vpop.permute.xlu0 %1316
  %v1319 = vmul.f32 %v1301, %v1317
  %1321 = vrot.lane.b32.xlu0 %v1319, 32
  %v1322 = vpop.permute.xlu0 %1321
  %1325 = vrot.lane.b32.xlu0 %v1248, 64
  %v1326 = vpop.permute.xlu0 %1325
  %v1328 = vsel %vm210, %v1322, %v1326
  %v1329 = vpack.c.bf16 %v1328, %v1328
  %v1331 = vsel %vm307, %v1329, 0
  %1333 = vmatprep.subr.bf16.mxu0 0
  %1334 = vmatpush1.bf16.msra.mxu0 0
  %1335 = vmatprep.subr.bf16.mxu0 0
  %1336 = vmatpush1.bf16.msra.mxu0 0
  %1337 = vmatprep.subr.bf16.mxu0 0
  %1338 = vmatpush1.bf16.msra.mxu0 0
  %1339 = vmatprep.subr.bf16.mxu0 0
  %1340 = vmatpush1.bf16.msra.mxu0 0
  %1341 = vmatprep.subr.bf16.mxu0 0
  %1342 = vmatpush1.bf16.msra.mxu0 %v302
  %1343 = vmatprep.subr.bf16.mxu0 0
  %1344 = vmatpush1.bf16.msra.mxu0 %v301
  %1345 = vmatprep.subr.bf16.mxu0 0
  %1346 = vmatpush1.bf16.msra.mxu0 %v300
  %1347 = vmatprep.subr.bf16.mxu0 0
  %1348 = vmatpush1.bf16.msra.mxu0 %v299
  %1349 = vmatprep.subr.bf16.mxu0 0
  %1350 = vmatpush2.bf16.msra.mxu0 0
  %1351 = vmatprep.subr.bf16.mxu0 0
  %1352 = vmatpush2.bf16.msra.mxu0 0
  %1353 = vmatprep.subr.bf16.mxu0 0
  %1354 = vmatpush2.bf16.msra.mxu0 0
  %1355 = vmatprep.subr.bf16.mxu0 0
  %1356 = vmatpush2.bf16.msra.mxu0 0
  %1357 = vmatprep.subr.bf16.mxu0 0
  %1358 = vmatpush2.bf16.msra.mxu0 0
  %1359 = vmatprep.subr.bf16.mxu0 0
  %1360 = vmatpush2.bf16.msra.mxu0 0
  %1361 = vmatprep.subr.bf16.mxu0 0
  %1362 = vmatpush2.bf16.msra.mxu0 0
  %1363 = vmatprep.subr.bf16.mxu0 0
  %1364 = vmatpush2.bf16.msra.mxu0 0
  %1365 = vmatprep.mubr.bf16.mxu0 0
  %1366 = vmatmul.mubr.bf16.gmra.mxu0 %v1331
  %v1367 = vpop.f32.mrf.mxu0
  %v1368 = vadd.f32 %v195, %v1367
  %v1369 = vpop.f32.mrf.mxu0
  %v1370 = vpop.f32.mrf.mxu0
  %v1371 = vpop.f32.mrf.mxu0
  %1372 = vdwg.mxu0
  %v1373 = vmul.f32 %v1368, 0.5
  %v1374 = vtanh.pop %v1373
  %v1375 = vmul.f32 %v1374, 0.5
  %v1376 = vadd.f32 %v1375, 0.5
  %v1377 = vtanh.pop %v1368
  %v1378 = vmul.f32 %v1376, %v1242
  %1380 = vrot.lane.b32.xlu0 %v1377, 64
  %v1381 = vpop.permute.xlu0 %1380
  %v1383 = vmul.f32 %v1376, %v1381
  %1385 = vrot.lane.b32.xlu0 %v1383, 32
  %v1386 = vpop.permute.xlu0 %1385
  %v1388 = vadd.f32 %v1378, %v1386
  %v1389 = vtanh.pop %v1388
  %1391 = vrot.lane.b32.xlu0 %v1389, 64
  %v1392 = vpop.permute.xlu0 %1391
  %v1394 = vmul.f32 %v1376, %v1392
  %v1395 = vld [vmem:[%s8] sm:$0xf]
  %v1396 = vld [vmem:[%s9] sm:$0xf]
  %v1397 = vld [vmem:[%s9 + $0x4] sm:$0xf]
  %v1398 = vld [vmem:[%s9 + $0x8] sm:$0xf]
  %v1399 = vld [vmem:[%s9 + $0xc] sm:$0xf]
  %v1400 = vld [vmem:[%s1] sm:$0xff]
  %v1401 = vld [vmem:[%s1 + $0x8] sm:$0xff]
  %v1402 = vld [vmem:[%s1 + $0x10] sm:$0xff]
  %v1403 = vld [vmem:[%s1 + $0x18] sm:$0xff]
  %v1404 = vld [vmem:[%s1 + $0x20] sm:$0xff]
  %v1405 = vld [vmem:[%s1 + $0x28] sm:$0xff]
  %v1406 = vld [vmem:[%s1 + $0x30] sm:$0xff]
  %v1407 = vld [vmem:[%s1 + $0x38] sm:$0xff]
  %v1408 = vld [vmem:[%s1 + $0x40] sm:$0xff]
  %v1409 = vld [vmem:[%s1 + $0x48] sm:$0xff]
  %v1410 = vld [vmem:[%s1 + $0x50] sm:$0xff]
  %v1411 = vld [vmem:[%s1 + $0x58] sm:$0xff]
  %v1412 = vld [vmem:[%s1 + $0x60] sm:$0xff]
  %v1413 = vld [vmem:[%s1 + $0x68] sm:$0xff]
  %v1414 = vpack.c.bf16 %v1401, %v1400
  %v1415 = vpack.c.bf16 %v1403, %v1402
  %v1416 = vpack.c.bf16 %v1405, %v1404
  %v1417 = vpack.c.bf16 %v1407, %v1406
  %v1418 = vpack.c.bf16 %v1409, %v1408
  %v1419 = vpack.c.bf16 %v1411, %v1410
  %v1420 = vpack.c.bf16 %v1413, %v1412
  %v1421 = vld [vmem:[%s10] sm:$0x1]
  %v1423 = vlaneseq
  %v1424 = vshrl.u32 %v1423, 7
  %v1425 = vsub.s32 0, %v1424
  %v1426 = vrot.slane %v1421, %v1425
  %v1429 = vsel %vm92, %v1414, 0
  %v1432 = vsel %vm92, %v1415, 0
  %v1435 = vsel %vm92, %v1416, 0
  %v1438 = vsel %vm92, %v1417, 0
  %v1441 = vsel %vm92, %v1418, 0
  %v1444 = vsel %vm92, %v1419, 0
  %v1447 = vsel %vm92, %v1420, 0
  %v1450 = vsel %vm105, %v1395, 0
  %1452 = vmatprep.subr.bf16.mxu0 0
  %1453 = vmatpush1.bf16.msra.mxu0 0
  %1454 = vmatprep.subr.bf16.mxu0 0
  %1455 = vmatpush1.bf16.msra.mxu0 0
  %1456 = vmatprep.subr.bf16.mxu0 0
  %1457 = vmatpush1.bf16.msra.mxu0 0
  %1458 = vmatprep.subr.bf16.mxu0 0
  %1459 = vmatpush1.bf16.msra.mxu0 0
  %1460 = vmatprep.subr.bf16.mxu0 0
  %1461 = vmatpush1.bf16.msra.mxu0 0
  %1462 = vmatprep.subr.bf16.mxu0 0
  %1463 = vmatpush1.bf16.msra.mxu0 0
  %1464 = vmatprep.subr.bf16.mxu0 0
  %1465 = vmatpush1.bf16.msra.mxu0 0
  %1466 = vmatprep.subr.bf16.mxu0 0
  %1467 = vmatpush1.bf16.msra.mxu0 %v1450
  %1468 = vmatprep.subr.bf16.mxu0 0
  %1469 = vmatpush2.bf16.msra.mxu0 0
  %1470 = vmatprep.subr.bf16.mxu0 0
  %1471 = vmatpush2.bf16.msra.mxu0 0
  %1472 = vmatprep.subr.bf16.mxu0 0
  %1473 = vmatpush2.bf16.msra.mxu0 0
  %1474 = vmatprep.subr.bf16.mxu0 0
  %1475 = vmatpush2.bf16.msra.mxu0 0
  %1476 = vmatprep.subr.bf16.mxu0 0
  %1477 = vmatpush2.bf16.msra.mxu0 0
  %1478 = vmatprep.subr.bf16.mxu0 0
  %1479 = vmatpush2.bf16.msra.mxu0 0
  %1480 = vmatprep.subr.bf16.mxu0 0
  %1481 = vmatpush2.bf16.msra.mxu0 0
  %1482 = vmatprep.subr.bf16.mxu0 0
  %1483 = vmatpush2.bf16.msra.mxu0 0
  %1484 = vmatprep.mubr.bf16.mxu0 0
  %1485 = vmatmul.mubr.bf16.gmra.mxu0 %v1429
  %v1486 = vpop.f32.mrf.mxu0
  %v1487 = vadd.f32 %v1426, %v1486
  %v1488 = vpop.f32.mrf.mxu0
  %v1489 = vpop.f32.mrf.mxu0
  %v1490 = vadd.f32 %v1426, %v1489
  %v1491 = vpop.f32.mrf.mxu0
  %1492 = vmatprep.mubr.bf16.mxu0 0
  %1493 = vmatmul.mubr.bf16.gmra.mxu0 %v1432
  %v1494 = vpop.f32.mrf.mxu0
  %v1495 = vadd.f32 %v1426, %v1494
  %v1496 = vpop.f32.mrf.mxu0
  %v1497 = vpop.f32.mrf.mxu0
  %v1498 = vadd.f32 %v1426, %v1497
  %v1499 = vpop.f32.mrf.mxu0
  %1500 = vmatprep.mubr.bf16.mxu0 0
  %1501 = vmatmul.mubr.bf16.gmra.mxu0 %v1435
  %v1502 = vpop.f32.mrf.mxu0
  %v1503 = vadd.f32 %v1426, %v1502
  %v1504 = vpop.f32.mrf.mxu0
  %v1505 = vpop.f32.mrf.mxu0
  %v1506 = vadd.f32 %v1426, %v1505
  %v1507 = vpop.f32.mrf.mxu0
  %1508 = vmatprep.mubr.bf16.mxu0 0
  %1509 = vmatmul.mubr.bf16.gmra.mxu0 %v1438
  %v1510 = vpop.f32.mrf.mxu0
  %v1511 = vadd.f32 %v1426, %v1510
  %v1512 = vpop.f32.mrf.mxu0
  %v1513 = vpop.f32.mrf.mxu0
  %v1514 = vadd.f32 %v1426, %v1513
  %v1515 = vpop.f32.mrf.mxu0
  %1516 = vmatprep.mubr.bf16.mxu0 0
  %1517 = vmatmul.mubr.bf16.gmra.mxu0 %v1441
  %v1518 = vpop.f32.mrf.mxu0
  %v1519 = vadd.f32 %v1426, %v1518
  %v1520 = vpop.f32.mrf.mxu0
  %v1521 = vpop.f32.mrf.mxu0
  %v1522 = vadd.f32 %v1426, %v1521
  %v1523 = vpop.f32.mrf.mxu0
  %1524 = vmatprep.mubr.bf16.mxu0 0
  %1525 = vmatmul.mubr.bf16.gmra.mxu0 %v1444
  %v1526 = vpop.f32.mrf.mxu0
  %v1527 = vadd.f32 %v1426, %v1526
  %v1528 = vpop.f32.mrf.mxu0
  %v1529 = vpop.f32.mrf.mxu0
  %v1530 = vadd.f32 %v1426, %v1529
  %v1531 = vpop.f32.mrf.mxu0
  %1532 = vmatprep.mubr.bf16.mxu0 0
  %1533 = vmatmul.mubr.bf16.gmra.mxu0 %v1447
  %v1534 = vpop.f32.mrf.mxu0
  %v1535 = vadd.f32 %v1426, %v1534
  %v1536 = vpop.f32.mrf.mxu0
  %v1537 = vpop.f32.mrf.mxu0
  %v1538 = vadd.f32 %v1426, %v1537
  %v1539 = vpop.f32.mrf.mxu0
  %1540 = vdwg.mxu0
  %1541 = vst [vmem:[#allocation2] sm:$0xff] %v1487
  %1542 = vst [vmem:[#allocation2 + $0x8] sm:$0xff] %v1490
  %1543 = vst [vmem:[#allocation2 + $0x10] sm:$0xff] %v1495
  %1544 = vst [vmem:[#allocation2 + $0x18] sm:$0xff] %v1498
  %1545 = vst [vmem:[#allocation2 + $0x20] sm:$0xff] %v1503
  %1546 = vst [vmem:[#allocation2 + $0x28] sm:$0xff] %v1506
  %1547 = vst [vmem:[#allocation2 + $0x30] sm:$0xff] %v1511
  %1548 = vst [vmem:[#allocation2 + $0x38] sm:$0xff] %v1514
  %1549 = vst [vmem:[#allocation2 + $0x40] sm:$0xff] %v1519
  %1550 = vst [vmem:[#allocation2 + $0x48] sm:$0xff] %v1522
  %1551 = vst [vmem:[#allocation2 + $0x50] sm:$0xff] %v1527
  %1552 = vst [vmem:[#allocation2 + $0x58] sm:$0xff] %v1530
  %1553 = vst [vmem:[#allocation2 + $0x60] sm:$0xff] %v1535
  %1554 = vst [vmem:[#allocation2 + $0x68] sm:$0xff] %v1538
  %v1555 = vld [vmem:[%s11] sm:$0xf]
  %v1556 = vld [vmem:[%s11 + $0x4] sm:$0xf]
  %v1557 = vld [vmem:[%s11 + $0x8] sm:$0xf]
  %v1558 = vld [vmem:[%s11 + $0xc] sm:$0xf]
  %v1559 = vld [vmem:[%s11 + $0x10] sm:$0xf]
  %v1560 = vld [vmem:[%s11 + $0x14] sm:$0xf]
  %v1561 = vld [vmem:[%s11 + $0x18] sm:$0xf]
  %v1562 = vld [vmem:[%s11 + $0x1c] sm:$0xf]
  %v1563 = vld [vmem:[%s12] sm:$0x1]
  %v1565 = vlaneseq
  %v1566 = vshrl.u32 %v1565, 7
  %v1567 = vsub.s32 0, %v1566
  %v1568 = vrot.slane %v1563, %v1567
  %v1570 = vld [vmem:[#allocation2] sm:$0xff]
  %v1571 = vpack.c.bf16 %v1319, %v1319
  %1573 = vrot.lane.b32.xlu0 %v1571, 32
  %v1574 = vpop.permute.xlu0 %1573
  %v1579 = vunpack.c.l.b16 %v1396
  %v1580 = vunpack.c.l.b16 %v1397
  %v1581 = vunpack.c.l.b16 %v1398
  %v1582 = vunpack.c.l.b16 %v1399
  %v1583 = vpack.c.b16 %v1580, %v1579
  %v1584 = vpack.c.b16 %v1582, %v1581
  %v1588 = vsel %vm210, %v1574, 0
  %1590 = vmatprep.subr.bf16.mxu0 0
  %1591 = vmatpush1.bf16.msra.mxu0 0
  %1592 = vmatprep.subr.bf16.mxu0 0
  %1593 = vmatpush1.bf16.msra.mxu0 0
  %1594 = vmatprep.subr.bf16.mxu0 0
  %1595 = vmatpush1.bf16.msra.mxu0 0
  %1596 = vmatprep.subr.bf16.mxu0 0
  %1597 = vmatpush1.bf16.msra.mxu0 0
  %1598 = vmatprep.subr.bf16.mxu0 0
  %1599 = vmatpush1.bf16.msra.mxu0 0
  %1600 = vmatprep.subr.bf16.mxu0 0
  %1601 = vmatpush1.bf16.msra.mxu0 0
  %1602 = vmatprep.subr.bf16.mxu0 0
  %1603 = vmatpush1.bf16.msra.mxu0 %v1584
  %1604 = vmatprep.subr.bf16.mxu0 0
  %1605 = vmatpush1.bf16.msra.mxu0 %v1583
  %1606 = vmatprep.subr.bf16.mxu0 0
  %1607 = vmatpush2.bf16.msra.mxu0 0
  %1608 = vmatprep.subr.bf16.mxu0 0
  %1609 = vmatpush2.bf16.msra.mxu0 0
  %1610 = vmatprep.subr.bf16.mxu0 0
  %1611 = vmatpush2.bf16.msra.mxu0 0
  %1612 = vmatprep.subr.bf16.mxu0 0
  %1613 = vmatpush2.bf16.msra.mxu0 0
  %1614 = vmatprep.subr.bf16.mxu0 0
  %1615 = vmatpush2.bf16.msra.mxu0 0
  %1616 = vmatprep.subr.bf16.mxu0 0
  %1617 = vmatpush2.bf16.msra.mxu0 0
  %1618 = vmatprep.subr.bf16.mxu0 0
  %1619 = vmatpush2.bf16.msra.mxu0 0
  %1620 = vmatprep.subr.bf16.mxu0 0
  %1621 = vmatpush2.bf16.msra.mxu0 0
  %1622 = vmatprep.mubr.bf16.mxu0 0
  %1623 = vmatmul.mubr.bf16.gmra.mxu0 %v1588
  %v1624 = vpop.f32.mrf.mxu0
  %v1625 = vadd.f32 0.0, %v1624
  %v1626 = vpop.f32.mrf.mxu0
  %v1627 = vpop.f32.mrf.mxu0
  %v1628 = vpop.f32.mrf.mxu0
  %1629 = vdwg.mxu0
  %v1630 = vadd.f32 %v1570, %v1625
  %v1631 = vmul.f32 %v1630, 0.5
  %v1632 = vtanh.pop %v1631
  %v1633 = vmul.f32 %v1632, 0.5
  %v1634 = vadd.f32 %v1633, 0.5
  %v1635 = vtanh.pop %v1630
  %v1636 = vmul.f32 %v1634, %v1313
  %1638 = vrot.lane.b32.xlu0 %v1635, 64
  %v1639 = vpop.permute.xlu0 %1638
  %v1641 = vmul.f32 %v1634, %v1639
  %1643 = vrot.lane.b32.xlu0 %v1641, 32
  %v1644 = vpop.permute.xlu0 %1643
  %v1646 = vadd.f32 %v1636, %v1644
  %v1647 = vtanh.pop %v1646
  %1649 = vrot.lane.b32.xlu0 %v1647, 64
  %v1650 = vpop.permute.xlu0 %1649
  %v1652 = vmul.f32 %v1634, %v1650
  %1654 = vrot.lane.b32.xlu0 %v1652, 32
  %v1655 = vpop.permute.xlu0 %1654
  %1658 = vrot.lane.b32.xlu0 %v1394, 64
  %v1659 = vpop.permute.xlu0 %1658
  %v1661 = vsel %vm210, %v1655, %v1659
  %v1662 = vpack.c.bf16 %v1661, %v1661
  %v1671 = vunpack.c.l.b16 %v1555
  %v1672 = vunpack.c.l.b16 %v1556
  %v1673 = vunpack.c.l.b16 %v1557
  %v1674 = vunpack.c.l.b16 %v1558
  %v1675 = vunpack.c.l.b16 %v1559
  %v1676 = vunpack.c.l.b16 %v1560
  %v1677 = vunpack.c.l.b16 %v1561
  %v1678 = vunpack.c.l.b16 %v1562
  %v1679 = vpack.c.b16 %v1672, %v1671
  %v1680 = vpack.c.b16 %v1674, %v1673
  %v1681 = vpack.c.b16 %v1676, %v1675
  %v1682 = vpack.c.b16 %v1678, %v1677
  %v1688 = vsel %vm307, %v1662, 0
  %1690 = vmatprep.subr.bf16.mxu0 0
  %1691 = vmatpush1.bf16.msra.mxu0 0
  %1692 = vmatprep.subr.bf16.mxu0 0
  %1693 = vmatpush1.bf16.msra.mxu0 0
  %1694 = vmatprep.subr.bf16.mxu0 0
  %1695 = vmatpush1.bf16.msra.mxu0 0
  %1696 = vmatprep.subr.bf16.mxu0 0
  %1697 = vmatpush1.bf16.msra.mxu0 0
  %1698 = vmatprep.subr.bf16.mxu0 0
  %1699 = vmatpush1.bf16.msra.mxu0 %v1682
  %1700 = vmatprep.subr.bf16.mxu0 0
  %1701 = vmatpush1.bf16.msra.mxu0 %v1681
  %1702 = vmatprep.subr.bf16.mxu0 0
  %1703 = vmatpush1.bf16.msra.mxu0 %v1680
  %1704 = vmatprep.subr.bf16.mxu0 0
  %1705 = vmatpush1.bf16.msra.mxu0 %v1679
  %1706 = vmatprep.subr.bf16.mxu0 0
  %1707 = vmatpush2.bf16.msra.mxu0 0
  %1708 = vmatprep.subr.bf16.mxu0 0
  %1709 = vmatpush2.bf16.msra.mxu0 0
  %1710 = vmatprep.subr.bf16.mxu0 0
  %1711 = vmatpush2.bf16.msra.mxu0 0
  %1712 = vmatprep.subr.bf16.mxu0 0
  %1713 = vmatpush2.bf16.msra.mxu0 0
  %1714 = vmatprep.subr.bf16.mxu0 0
  %1715 = vmatpush2.bf16.msra.mxu0 0
  %1716 = vmatprep.subr.bf16.mxu0 0
  %1717 = vmatpush2.bf16.msra.mxu0 0
  %1718 = vmatprep.subr.bf16.mxu0 0
  %1719 = vmatpush2.bf16.msra.mxu0 0
  %1720 = vmatprep.subr.bf16.mxu0 0
  %1721 = vmatpush2.bf16.msra.mxu0 0
  %1722 = vmatprep.mubr.bf16.mxu0 0
  %1723 = vmatmul.mubr.bf16.gmra.mxu0 %v1688
  %v1724 = vpop.f32.mrf.mxu0
  %v1725 = vadd.f32 %v1568, %v1724
  %v1726 = vpop.f32.mrf.mxu0
  %v1727 = vpop.f32.mrf.mxu0
  %v1728 = vpop.f32.mrf.mxu0
  %1729 = vdwg.mxu0
  %v1730 = vmul.f32 %v1725, 0.5
  %v1731 = vtanh.pop %v1730
  %v1732 = vmul.f32 %v1731, 0.5
  %v1733 = vadd.f32 %v1732, 0.5
  %v1734 = vtanh.pop %v1725
  %v1735 = vmul.f32 %v1733, %v1388
  %1737 = vrot.lane.b32.xlu0 %v1734, 64
  %v1738 = vpop.permute.xlu0 %1737
  %v1740 = vmul.f32 %v1733, %v1738
  %1742 = vrot.lane.b32.xlu0 %v1740, 32
  %v1743 = vpop.permute.xlu0 %1742
  %v1745 = vadd.f32 %v1735, %v1743
  %v1746 = vtanh.pop %v1745
  %1748 = vrot.lane.b32.xlu0 %v1746, 64
  %v1749 = vpop.permute.xlu0 %1748
  %v1751 = vmul.f32 %v1733, %v1749
  %1753 = vrot.lane.b32.xlu0 %v1751, 32
  %v1754 = vpop.permute.xlu0 %1753
  %1756 = vst.msk [vmem:[#allocation3] sm:$0xff] %vm210, %v1754
  %v1757 = vld [vmem:[#allocation2 + $0x8] sm:$0xff]
  %v1758 = vpack.c.bf16 %v1652, %v1652
  %1760 = vrot.lane.b32.xlu0 %v1758, 32
  %v1761 = vpop.permute.xlu0 %1760
  %v1763 = vsel %vm210, %v1761, 0
  %1765 = vmatprep.subr.bf16.mxu0 0
  %1766 = vmatpush1.bf16.msra.mxu0 0
  %1767 = vmatprep.subr.bf16.mxu0 0
  %1768 = vmatpush1.bf16.msra.mxu0 0
  %1769 = vmatprep.subr.bf16.mxu0 0
  %1770 = vmatpush1.bf16.msra.mxu0 0
  %1771 = vmatprep.subr.bf16.mxu0 0
  %1772 = vmatpush1.bf16.msra.mxu0 0
  %1773 = vmatprep.subr.bf16.mxu0 0
  %1774 = vmatpush1.bf16.msra.mxu0 0
  %1775 = vmatprep.subr.bf16.mxu0 0
  %1776 = vmatpush1.bf16.msra.mxu0 0
  %1777 = vmatprep.subr.bf16.mxu0 0
  %1778 = vmatpush1.bf16.msra.mxu0 %v1584
  %1779 = vmatprep.subr.bf16.mxu0 0
  %1780 = vmatpush1.bf16.msra.mxu0 %v1583
  %1781 = vmatprep.subr.bf16.mxu0 0
  %1782 = vmatpush2.bf16.msra.mxu0 0
  %1783 = vmatprep.subr.bf16.mxu0 0
  %1784 = vmatpush2.bf16.msra.mxu0 0
  %1785 = vmatprep.subr.bf16.mxu0 0
  %1786 = vmatpush2.bf16.msra.mxu0 0
  %1787 = vmatprep.subr.bf16.mxu0 0
  %1788 = vmatpush2.bf16.msra.mxu0 0
  %1789 = vmatprep.subr.bf16.mxu0 0
  %1790 = vmatpush2.bf16.msra.mxu0 0
  %1791 = vmatprep.subr.bf16.mxu0 0
  %1792 = vmatpush2.bf16.msra.mxu0 0
  %1793 = vmatprep.subr.bf16.mxu0 0
  %1794 = vmatpush2.bf16.msra.mxu0 0
  %1795 = vmatprep.subr.bf16.mxu0 0
  %1796 = vmatpush2.bf16.msra.mxu0 0
  %1797 = vmatprep.mubr.bf16.mxu0 0
  %1798 = vmatmul.mubr.bf16.gmra.mxu0 %v1763
  %v1799 = vpop.f32.mrf.mxu0
  %v1800 = vadd.f32 0.0, %v1799
  %v1801 = vpop.f32.mrf.mxu0
  %v1802 = vpop.f32.mrf.mxu0
  %v1803 = vpop.f32.mrf.mxu0
  %1804 = vdwg.mxu0
  %v1805 = vadd.f32 %v1757, %v1800
  %v1806 = vmul.f32 %v1805, 0.5
  %v1807 = vtanh.pop %v1806
  %v1808 = vmul.f32 %v1807, 0.5
  %v1809 = vadd.f32 %v1808, 0.5
  %v1810 = vtanh.pop %v1805
  %v1811 = vmul.f32 %v1809, %v1646
  %1813 = vrot.lane.b32.xlu0 %v1810, 64
  %v1814 = vpop.permute.xlu0 %1813
  %v1816 = vmul.f32 %v1809, %v1814
  %1818 = vrot.lane.b32.xlu0 %v1816, 32
  %v1819 = vpop.permute.xlu0 %1818
  %v1821 = vadd.f32 %v1811, %v1819
  %v1822 = vtanh.pop %v1821
  %1824 = vrot.lane.b32.xlu0 %v1822, 64
  %v1825 = vpop.permute.xlu0 %1824
  %v1827 = vmul.f32 %v1809, %v1825
  %1829 = vrot.lane.b32.xlu0 %v1827, 32
  %v1830 = vpop.permute.xlu0 %1829
  %1832 = vrot.lane.b32.xlu0 %v1751, 64
  %v1833 = vpop.permute.xlu0 %1832
  %v1835 = vsel %vm210, %v1830, %v1833
  %v1836 = vpack.c.bf16 %v1835, %v1835
  %v1838 = vsel %vm307, %v1836, 0
  %1840 = vmatprep.subr.bf16.mxu0 0
  %1841 = vmatpush1.bf16.msra.mxu0 0
  %1842 = vmatprep.subr.bf16.mxu0 0
  %1843 = vmatpush1.bf16.msra.mxu0 0
  %1844 = vmatprep.subr.bf16.mxu0 0
  %1845 = vmatpush1.bf16.msra.mxu0 0
  %1846 = vmatprep.subr.bf16.mxu0 0
  %1847 = vmatpush1.bf16.msra.mxu0 0
  %1848 = vmatprep.subr.bf16.mxu0 0
  %1849 = vmatpush1.bf16.msra.mxu0 %v1682
  %1850 = vmatprep.subr.bf16.mxu0 0
  %1851 = vmatpush1.bf16.msra.mxu0 %v1681
  %1852 = vmatprep.subr.bf16.mxu0 0
  %1853 = vmatpush1.bf16.msra.mxu0 %v1680
  %1854 = vmatprep.subr.bf16.mxu0 0
  %1855 = vmatpush1.bf16.msra.mxu0 %v1679
  %1856 = vmatprep.subr.bf16.mxu0 0
  %1857 = vmatpush2.bf16.msra.mxu0 0
  %1858 = vmatprep.subr.bf16.mxu0 0
  %1859 = vmatpush2.bf16.msra.mxu0 0
  %1860 = vmatprep.subr.bf16.mxu0 0
  %1861 = vmatpush2.bf16.msra.mxu0 0
  %1862 = vmatprep.subr.bf16.mxu0 0
  %1863 = vmatpush2.bf16.msra.mxu0 0
  %1864 = vmatprep.subr.bf16.mxu0 0
  %1865 = vmatpush2.bf16.msra.mxu0 0
  %1866 = vmatprep.subr.bf16.mxu0 0
  %1867 = vmatpush2.bf16.msra.mxu0 0
  %1868 = vmatprep.subr.bf16.mxu0 0
  %1869 = vmatpush2.bf16.msra.mxu0 0
  %1870 = vmatprep.subr.bf16.mxu0 0
  %1871 = vmatpush2.bf16.msra.mxu0 0
  %1872 = vmatprep.mubr.bf16.mxu0 0
  %1873 = vmatmul.mubr.bf16.gmra.mxu0 %v1838
  %v1874 = vpop.f32.mrf.mxu0
  %v1875 = vadd.f32 %v1568, %v1874
  %v1876 = vpop.f32.mrf.mxu0
  %v1877 = vpop.f32.mrf.mxu0
  %v1878 = vpop.f32.mrf.mxu0
  %1879 = vdwg.mxu0
  %v1880 = vmul.f32 %v1875, 0.5
  %v1881 = vtanh.pop %v1880
  %v1882 = vmul.f32 %v1881, 0.5
  %v1883 = vadd.f32 %v1882, 0.5
  %v1884 = vtanh.pop %v1875
  %v1885 = vmul.f32 %v1883, %v1745
  %1887 = vrot.lane.b32.xlu0 %v1884, 64
  %v1888 = vpop.permute.xlu0 %1887
  %v1890 = vmul.f32 %v1883, %v1888
  %1892 = vrot.lane.b32.xlu0 %v1890, 32
  %v1893 = vpop.permute.xlu0 %1892
  %v1895 = vadd.f32 %v1885, %v1893
  %v1896 = vtanh.pop %v1895
  %1898 = vrot.lane.b32.xlu0 %v1896, 64
  %v1899 = vpop.permute.xlu0 %1898
  %v1901 = vmul.f32 %v1883, %v1899
  %1903 = vrot.lane.b32.xlu0 %v1901, 32
  %v1904 = vpop.permute.xlu0 %1903
  %s1906 = scalar_lea.vmem [#allocation3], 8
  %1907 = vst.msk [vmem:[%s1906] sm:$0xff] %vm210, %v1904
  %v1908 = vld [vmem:[#allocation2 + $0x10] sm:$0xff]
  %v1909 = vpack.c.bf16 %v1827, %v1827
  %1911 = vrot.lane.b32.xlu0 %v1909, 32
  %v1912 = vpop.permute.xlu0 %1911
  %v1914 = vsel %vm210, %v1912, 0
  %1916 = vmatprep.subr.bf16.mxu0 0
  %1917 = vmatpush1.bf16.msra.mxu0 0
  %1918 = vmatprep.subr.bf16.mxu0 0
  %1919 = vmatpush1.bf16.msra.mxu0 0
  %1920 = vmatprep.subr.bf16.mxu0 0
  %1921 = vmatpush1.bf16.msra.mxu0 0
  %1922 = vmatprep.subr.bf16.mxu0 0
  %1923 = vmatpush1.bf16.msra.mxu0 0
  %1924 = vmatprep.subr.bf16.mxu0 0
  %1925 = vmatpush1.bf16.msra.mxu0 0
  %1926 = vmatprep.subr.bf16.mxu0 0
  %1927 = vmatpush1.bf16.msra.mxu0 0
  %1928 = vmatprep.subr.bf16.mxu0 0
  %1929 = vmatpush1.bf16.msra.mxu0 %v1584
  %1930 = vmatprep.subr.bf16.mxu0 0
  %1931 = vmatpush1.bf16.msra.mxu0 %v1583
  %1932 = vmatprep.subr.bf16.mxu0 0
  %1933 = vmatpush2.bf16.msra.mxu0 0
  %1934 = vmatprep.subr.bf16.mxu0 0
  %1935 = vmatpush2.bf16.msra.mxu0 0
  %1936 = vmatprep.subr.bf16.mxu0 0
  %1937 = vmatpush2.bf16.msra.mxu0 0
  %1938 = vmatprep.subr.bf16.mxu0 0
  %1939 = vmatpush2.bf16.msra.mxu0 0
  %1940 = vmatprep.subr.bf16.mxu0 0
  %1941 = vmatpush2.bf16.msra.mxu0 0
  %1942 = vmatprep.subr.bf16.mxu0 0
  %1943 = vmatpush2.bf16.msra.mxu0 0
  %1944 = vmatprep.subr.bf16.mxu0 0
  %1945 = vmatpush2.bf16.msra.mxu0 0
  %1946 = vmatprep.subr.bf16.mxu0 0
  %1947 = vmatpush2.bf16.msra.mxu0 0
  %1948 = vmatprep.mubr.bf16.mxu0 0
  %1949 = vmatmul.mubr.bf16.gmra.mxu0 %v1914
  %v1950 = vpop.f32.mrf.mxu0
  %v1951 = vadd.f32 0.0, %v1950
  %v1952 = vpop.f32.mrf.mxu0
  %v1953 = vpop.f32.mrf.mxu0
  %v1954 = vpop.f32.mrf.mxu0
  %1955 = vdwg.mxu0
  %v1956 = vadd.f32 %v1908, %v1951
  %v1957 = vmul.f32 %v1956, 0.5
  %v1958 = vtanh.pop %v1957
  %v1959 = vmul.f32 %v1958, 0.5
  %v1960 = vadd.f32 %v1959, 0.5
  %v1961 = vtanh.pop %v1956
  %v1962 = vmul.f32 %v1960, %v1821
  %1964 = vrot.lane.b32.xlu0 %v1961, 64
  %v1965 = vpop.permute.xlu0 %1964
  %v1967 = vmul.f32 %v1960, %v1965
  %1969 = vrot.lane.b32.xlu0 %v1967, 32
  %v1970 = vpop.permute.xlu0 %1969
  %v1972 = vadd.f32 %v1962, %v1970
  %v1973 = vtanh.pop %v1972
  %1975 = vrot.lane.b32.xlu0 %v1973, 64
  %v1976 = vpop.permute.xlu0 %1975
  %v1978 = vmul.f32 %v1960, %v1976
  %1980 = vrot.lane.b32.xlu0 %v1978, 32
  %v1981 = vpop.permute.xlu0 %1980
  %1983 = vrot.lane.b32.xlu0 %v1901, 64
  %v1984 = vpop.permute.xlu0 %1983
  %v1986 = vsel %vm210, %v1981, %v1984
  %v1987 = vpack.c.bf16 %v1986, %v1986
  %v1989 = vsel %vm307, %v1987, 0
  %1991 = vmatprep.subr.bf16.mxu0 0
  %1992 = vmatpush1.bf16.msra.mxu0 0
  %1993 = vmatprep.subr.bf16.mxu0 0
  %1994 = vmatpush1.bf16.msra.mxu0 0
  %1995 = vmatprep.subr.bf16.mxu0 0
  %1996 = vmatpush1.bf16.msra.mxu0 0
  %1997 = vmatprep.subr.bf16.mxu0 0
  %1998 = vmatpush1.bf16.msra.mxu0 0
  %1999 = vmatprep.subr.bf16.mxu0 0
  %2000 = vmatpush1.bf16.msra.mxu0 %v1682
  %2001 = vmatprep.subr.bf16.mxu0 0
  %2002 = vmatpush1.bf16.msra.mxu0 %v1681
  %2003 = vmatprep.subr.bf16.mxu0 0
  %2004 = vmatpush1.bf16.msra.mxu0 %v1680
  %2005 = vmatprep.subr.bf16.mxu0 0
  %2006 = vmatpush1.bf16.msra.mxu0 %v1679
  %2007 = vmatprep.subr.bf16.mxu0 0
  %2008 = vmatpush2.bf16.msra.mxu0 0
  %2009 = vmatprep.subr.bf16.mxu0 0
  %2010 = vmatpush2.bf16.msra.mxu0 0
  %2011 = vmatprep.subr.bf16.mxu0 0
  %2012 = vmatpush2.bf16.msra.mxu0 0
  %2013 = vmatprep.subr.bf16.mxu0 0
  %2014 = vmatpush2.bf16.msra.mxu0 0
  %2015 = vmatprep.subr.bf16.mxu0 0
  %2016 = vmatpush2.bf16.msra.mxu0 0
  %2017 = vmatprep.subr.bf16.mxu0 0
  %2018 = vmatpush2.bf16.msra.mxu0 0
  %2019 = vmatprep.subr.bf16.mxu0 0
  %2020 = vmatpush2.bf16.msra.mxu0 0
  %2021 = vmatprep.subr.bf16.mxu0 0
  %2022 = vmatpush2.bf16.msra.mxu0 0
  %2023 = vmatprep.mubr.bf16.mxu0 0
  %2024 = vmatmul.mubr.bf16.gmra.mxu0 %v1989
  %v2025 = vpop.f32.mrf.mxu0
  %v2026 = vadd.f32 %v1568, %v2025
  %v2027 = vpop.f32.mrf.mxu0
  %v2028 = vpop.f32.mrf.mxu0
  %v2029 = vpop.f32.mrf.mxu0
  %2030 = vdwg.mxu0
  %v2031 = vmul.f32 %v2026, 0.5
  %v2032 = vtanh.pop %v2031
  %v2033 = vmul.f32 %v2032, 0.5
  %v2034 = vadd.f32 %v2033, 0.5
  %v2035 = vtanh.pop %v2026
  %v2036 = vmul.f32 %v2034, %v1895
  %2038 = vrot.lane.b32.xlu0 %v2035, 64
  %v2039 = vpop.permute.xlu0 %2038
  %v2041 = vmul.f32 %v2034, %v2039
  %2043 = vrot.lane.b32.xlu0 %v2041, 32
  %v2044 = vpop.permute.xlu0 %2043
  %v2046 = vadd.f32 %v2036, %v2044
  %v2047 = vtanh.pop %v2046
  %2049 = vrot.lane.b32.xlu0 %v2047, 64
  %v2050 = vpop.permute.xlu0 %2049
  %v2052 = vmul.f32 %v2034, %v2050
  %2054 = vrot.lane.b32.xlu0 %v2052, 32
  %v2055 = vpop.permute.xlu0 %2054
  %s2057 = scalar_lea.vmem [#allocation3], 16
  %2058 = vst.msk [vmem:[%s2057] sm:$0xff] %vm210, %v2055
  %v2059 = vld [vmem:[#allocation2 + $0x18] sm:$0xff]
  %v2060 = vpack.c.bf16 %v1978, %v1978
  %2062 = vrot.lane.b32.xlu0 %v2060, 32
  %v2063 = vpop.permute.xlu0 %2062
  %v2065 = vsel %vm210, %v2063, 0
  %2067 = vmatprep.subr.bf16.mxu0 0
  %2068 = vmatpush1.bf16.msra.mxu0 0
  %2069 = vmatprep.subr.bf16.mxu0 0
  %2070 = vmatpush1.bf16.msra.mxu0 0
  %2071 = vmatprep.subr.bf16.mxu0 0
  %2072 = vmatpush1.bf16.msra.mxu0 0
  %2073 = vmatprep.subr.bf16.mxu0 0
  %2074 = vmatpush1.bf16.msra.mxu0 0
  %2075 = vmatprep.subr.bf16.mxu0 0
  %2076 = vmatpush1.bf16.msra.mxu0 0
  %2077 = vmatprep.subr.bf16.mxu0 0
  %2078 = vmatpush1.bf16.msra.mxu0 0
  %2079 = vmatprep.subr.bf16.mxu0 0
  %2080 = vmatpush1.bf16.msra.mxu0 %v1584
  %2081 = vmatprep.subr.bf16.mxu0 0
  %2082 = vmatpush1.bf16.msra.mxu0 %v1583
  %2083 = vmatprep.subr.bf16.mxu0 0
  %2084 = vmatpush2.bf16.msra.mxu0 0
  %2085 = vmatprep.subr.bf16.mxu0 0
  %2086 = vmatpush2.bf16.msra.mxu0 0
  %2087 = vmatprep.subr.bf16.mxu0 0
  %2088 = vmatpush2.bf16.msra.mxu0 0
  %2089 = vmatprep.subr.bf16.mxu0 0
  %2090 = vmatpush2.bf16.msra.mxu0 0
  %2091 = vmatprep.subr.bf16.mxu0 0
  %2092 = vmatpush2.bf16.msra.mxu0 0
  %2093 = vmatprep.subr.bf16.mxu0 0
  %2094 = vmatpush2.bf16.msra.mxu0 0
  %2095 = vmatprep.subr.bf16.mxu0 0
  %2096 = vmatpush2.bf16.msra.mxu0 0
  %2097 = vmatprep.subr.bf16.mxu0 0
  %2098 = vmatpush2.bf16.msra.mxu0 0
  %2099 = vmatprep.mubr.bf16.mxu0 0
  %2100 = vmatmul.mubr.bf16.gmra.mxu0 %v2065
  %v2101 = vpop.f32.mrf.mxu0
  %v2102 = vadd.f32 0.0, %v2101
  %v2103 = vpop.f32.mrf.mxu0
  %v2104 = vpop.f32.mrf.mxu0
  %v2105 = vpop.f32.mrf.mxu0
  %2106 = vdwg.mxu0
  %v2107 = vadd.f32 %v2059, %v2102
  %v2108 = vmul.f32 %v2107, 0.5
  %v2109 = vtanh.pop %v2108
  %v2110 = vmul.f32 %v2109, 0.5
  %v2111 = vadd.f32 %v2110, 0.5
  %v2112 = vtanh.pop %v2107
  %v2113 = vmul.f32 %v2111, %v1972
  %2115 = vrot.lane.b32.xlu0 %v2112, 64
  %v2116 = vpop.permute.xlu0 %2115
  %v2118 = vmul.f32 %v2111, %v2116
  %2120 = vrot.lane.b32.xlu0 %v2118, 32
  %v2121 = vpop.permute.xlu0 %2120
  %v2123 = vadd.f32 %v2113, %v2121
  %v2124 = vtanh.pop %v2123
  %2126 = vrot.lane.b32.xlu0 %v2124, 64
  %v2127 = vpop.permute.xlu0 %2126
  %v2129 = vmul.f32 %v2111, %v2127
  %2131 = vrot.lane.b32.xlu0 %v2129, 32
  %v2132 = vpop.permute.xlu0 %2131
  %2134 = vrot.lane.b32.xlu0 %v2052, 64
  %v2135 = vpop.permute.xlu0 %2134
  %v2137 = vsel %vm210, %v2132, %v2135
  %v2138 = vpack.c.bf16 %v2137, %v2137
  %v2140 = vsel %vm307, %v2138, 0
  %2142 = vmatprep.subr.bf16.mxu0 0
  %2143 = vmatpush1.bf16.msra.mxu0 0
  %2144 = vmatprep.subr.bf16.mxu0 0
  %2145 = vmatpush1.bf16.msra.mxu0 0
  %2146 = vmatprep.subr.bf16.mxu0 0
  %2147 = vmatpush1.bf16.msra.mxu0 0
  %2148 = vmatprep.subr.bf16.mxu0 0
  %2149 = vmatpush1.bf16.msra.mxu0 0
  %2150 = vmatprep.subr.bf16.mxu0 0
  %2151 = vmatpush1.bf16.msra.mxu0 %v1682
  %2152 = vmatprep.subr.bf16.mxu0 0
  %2153 = vmatpush1.bf16.msra.mxu0 %v1681
  %2154 = vmatprep.subr.bf16.mxu0 0
  %2155 = vmatpush1.bf16.msra.mxu0 %v1680
  %2156 = vmatprep.subr.bf16.mxu0 0
  %2157 = vmatpush1.bf16.msra.mxu0 %v1679
  %2158 = vmatprep.subr.bf16.mxu0 0
  %2159 = vmatpush2.bf16.msra.mxu0 0
  %2160 = vmatprep.subr.bf16.mxu0 0
  %2161 = vmatpush2.bf16.msra.mxu0 0
  %2162 = vmatprep.subr.bf16.mxu0 0
  %2163 = vmatpush2.bf16.msra.mxu0 0
  %2164 = vmatprep.subr.bf16.mxu0 0
  %2165 = vmatpush2.bf16.msra.mxu0 0
  %2166 = vmatprep.subr.bf16.mxu0 0
  %2167 = vmatpush2.bf16.msra.mxu0 0
  %2168 = vmatprep.subr.bf16.mxu0 0
  %2169 = vmatpush2.bf16.msra.mxu0 0
  %2170 = vmatprep.subr.bf16.mxu0 0
  %2171 = vmatpush2.bf16.msra.mxu0 0
  %2172 = vmatprep.subr.bf16.mxu0 0
  %2173 = vmatpush2.bf16.msra.mxu0 0
  %2174 = vmatprep.mubr.bf16.mxu0 0
  %2175 = vmatmul.mubr.bf16.gmra.mxu0 %v2140
  %v2176 = vpop.f32.mrf.mxu0
  %v2177 = vadd.f32 %v1568, %v2176
  %v2178 = vpop.f32.mrf.mxu0
  %v2179 = vpop.f32.mrf.mxu0
  %v2180 = vpop.f32.mrf.mxu0
  %2181 = vdwg.mxu0
  %v2182 = vmul.f32 %v2177, 0.5
  %v2183 = vtanh.pop %v2182
  %v2184 = vmul.f32 %v2183, 0.5
  %v2185 = vadd.f32 %v2184, 0.5
  %v2186 = vtanh.pop %v2177
  %v2187 = vmul.f32 %v2185, %v2046
  %2189 = vrot.lane.b32.xlu0 %v2186, 64
  %v2190 = vpop.permute.xlu0 %2189
  %v2192 = vmul.f32 %v2185, %v2190
  %2194 = vrot.lane.b32.xlu0 %v2192, 32
  %v2195 = vpop.permute.xlu0 %2194
  %v2197 = vadd.f32 %v2187, %v2195
  %v2198 = vtanh.pop %v2197
  %2200 = vrot.lane.b32.xlu0 %v2198, 64
  %v2201 = vpop.permute.xlu0 %2200
  %v2203 = vmul.f32 %v2185, %v2201
  %2205 = vrot.lane.b32.xlu0 %v2203, 32
  %v2206 = vpop.permute.xlu0 %2205
  %s2208 = scalar_lea.vmem [#allocation3], 24
  %2209 = vst.msk [vmem:[%s2208] sm:$0xff] %vm210, %v2206
  %v2210 = vld [vmem:[#allocation2 + $0x20] sm:$0xff]
  %v2211 = vpack.c.bf16 %v2129, %v2129
  %2213 = vrot.lane.b32.xlu0 %v2211, 32
  %v2214 = vpop.permute.xlu0 %2213
  %v2216 = vsel %vm210, %v2214, 0
  %2218 = vmatprep.subr.bf16.mxu0 0
  %2219 = vmatpush1.bf16.msra.mxu0 0
  %2220 = vmatprep.subr.bf16.mxu0 0
  %2221 = vmatpush1.bf16.msra.mxu0 0
  %2222 = vmatprep.subr.bf16.mxu0 0
  %2223 = vmatpush1.bf16.msra.mxu0 0
  %2224 = vmatprep.subr.bf16.mxu0 0
  %2225 = vmatpush1.bf16.msra.mxu0 0
  %2226 = vmatprep.subr.bf16.mxu0 0
  %2227 = vmatpush1.bf16.msra.mxu0 0
  %2228 = vmatprep.subr.bf16.mxu0 0
  %2229 = vmatpush1.bf16.msra.mxu0 0
  %2230 = vmatprep.subr.bf16.mxu0 0
  %2231 = vmatpush1.bf16.msra.mxu0 %v1584
  %2232 = vmatprep.subr.bf16.mxu0 0
  %2233 = vmatpush1.bf16.msra.mxu0 %v1583
  %2234 = vmatprep.subr.bf16.mxu0 0
  %2235 = vmatpush2.bf16.msra.mxu0 0
  %2236 = vmatprep.subr.bf16.mxu0 0
  %2237 = vmatpush2.bf16.msra.mxu0 0
  %2238 = vmatprep.subr.bf16.mxu0 0
  %2239 = vmatpush2.bf16.msra.mxu0 0
  %2240 = vmatprep.subr.bf16.mxu0 0
  %2241 = vmatpush2.bf16.msra.mxu0 0
  %2242 = vmatprep.subr.bf16.mxu0 0
  %2243 = vmatpush2.bf16.msra.mxu0 0
  %2244 = vmatprep.subr.bf16.mxu0 0
  %2245 = vmatpush2.bf16.msra.mxu0 0
  %2246 = vmatprep.subr.bf16.mxu0 0
  %2247 = vmatpush2.bf16.msra.mxu0 0
  %2248 = vmatprep.subr.bf16.mxu0 0
  %2249 = vmatpush2.bf16.msra.mxu0 0
  %2250 = vmatprep.mubr.bf16.mxu0 0
  %2251 = vmatmul.mubr.bf16.gmra.mxu0 %v2216
  %v2252 = vpop.f32.mrf.mxu0
  %v2253 = vadd.f32 0.0, %v2252
  %v2254 = vpop.f32.mrf.mxu0
  %v2255 = vpop.f32.mrf.mxu0
  %v2256 = vpop.f32.mrf.mxu0
  %2257 = vdwg.mxu0
  %v2258 = vadd.f32 %v2210, %v2253
  %v2259 = vmul.f32 %v2258, 0.5
  %v2260 = vtanh.pop %v2259
  %v2261 = vmul.f32 %v2260, 0.5
  %v2262 = vadd.f32 %v2261, 0.5
  %v2263 = vtanh.pop %v2258
  %v2264 = vmul.f32 %v2262, %v2123
  %2266 = vrot.lane.b32.xlu0 %v2263, 64
  %v2267 = vpop.permute.xlu0 %2266
  %v2269 = vmul.f32 %v2262, %v2267
  %2271 = vrot.lane.b32.xlu0 %v2269, 32
  %v2272 = vpop.permute.xlu0 %2271
  %v2274 = vadd.f32 %v2264, %v2272
  %v2275 = vtanh.pop %v2274
  %2277 = vrot.lane.b32.xlu0 %v2275, 64
  %v2278 = vpop.permute.xlu0 %2277
  %v2280 = vmul.f32 %v2262, %v2278
  %2282 = vrot.lane.b32.xlu0 %v2280, 32
  %v2283 = vpop.permute.xlu0 %2282
  %2285 = vrot.lane.b32.xlu0 %v2203, 64
  %v2286 = vpop.permute.xlu0 %2285
  %v2288 = vsel %vm210, %v2283, %v2286
  %v2289 = vpack.c.bf16 %v2288, %v2288
  %v2291 = vsel %vm307, %v2289, 0
  %2293 = vmatprep.subr.bf16.mxu0 0
  %2294 = vmatpush1.bf16.msra.mxu0 0
  %2295 = vmatprep.subr.bf16.mxu0 0
  %2296 = vmatpush1.bf16.msra.mxu0 0
  %2297 = vmatprep.subr.bf16.mxu0 0
  %2298 = vmatpush1.bf16.msra.mxu0 0
  %2299 = vmatprep.subr.bf16.mxu0 0
  %2300 = vmatpush1.bf16.msra.mxu0 0
  %2301 = vmatprep.subr.bf16.mxu0 0
  %2302 = vmatpush1.bf16.msra.mxu0 %v1682
  %2303 = vmatprep.subr.bf16.mxu0 0
  %2304 = vmatpush1.bf16.msra.mxu0 %v1681
  %2305 = vmatprep.subr.bf16.mxu0 0
  %2306 = vmatpush1.bf16.msra.mxu0 %v1680
  %2307 = vmatprep.subr.bf16.mxu0 0
  %2308 = vmatpush1.bf16.msra.mxu0 %v1679
  %2309 = vmatprep.subr.bf16.mxu0 0
  %2310 = vmatpush2.bf16.msra.mxu0 0
  %2311 = vmatprep.subr.bf16.mxu0 0
  %2312 = vmatpush2.bf16.msra.mxu0 0
  %2313 = vmatprep.subr.bf16.mxu0 0
  %2314 = vmatpush2.bf16.msra.mxu0 0
  %2315 = vmatprep.subr.bf16.mxu0 0
  %2316 = vmatpush2.bf16.msra.mxu0 0
  %2317 = vmatprep.subr.bf16.mxu0 0
  %2318 = vmatpush2.bf16.msra.mxu0 0
  %2319 = vmatprep.subr.bf16.mxu0 0
  %2320 = vmatpush2.bf16.msra.mxu0 0
  %2321 = vmatprep.subr.bf16.mxu0 0
  %2322 = vmatpush2.bf16.msra.mxu0 0
  %2323 = vmatprep.subr.bf16.mxu0 0
  %2324 = vmatpush2.bf16.msra.mxu0 0
  %2325 = vmatprep.mubr.bf16.mxu0 0
  %2326 = vmatmul.mubr.bf16.gmra.mxu0 %v2291
  %v2327 = vpop.f32.mrf.mxu0
  %v2328 = vadd.f32 %v1568, %v2327
  %v2329 = vpop.f32.mrf.mxu0
  %v2330 = vpop.f32.mrf.mxu0
  %v2331 = vpop.f32.mrf.mxu0
  %2332 = vdwg.mxu0
  %v2333 = vmul.f32 %v2328, 0.5
  %v2334 = vtanh.pop %v2333
  %v2335 = vmul.f32 %v2334, 0.5
  %v2336 = vadd.f32 %v2335, 0.5
  %v2337 = vtanh.pop %v2328
  %v2338 = vmul.f32 %v2336, %v2197
  %2340 = vrot.lane.b32.xlu0 %v2337, 64
  %v2341 = vpop.permute.xlu0 %2340
  %v2343 = vmul.f32 %v2336, %v2341
  %2345 = vrot.lane.b32.xlu0 %v2343, 32
  %v2346 = vpop.permute.xlu0 %2345
  %v2348 = vadd.f32 %v2338, %v2346
  %v2349 = vtanh.pop %v2348
  %2351 = vrot.lane.b32.xlu0 %v2349, 64
  %v2352 = vpop.permute.xlu0 %2351
  %v2354 = vmul.f32 %v2336, %v2352
  %2356 = vrot.lane.b32.xlu0 %v2354, 32
  %v2357 = vpop.permute.xlu0 %2356
  %s2359 = scalar_lea.vmem [#allocation3], 32
  %2360 = vst.msk [vmem:[%s2359] sm:$0xff] %vm210, %v2357
  %v2361 = vld [vmem:[#allocation2 + $0x28] sm:$0xff]
  %v2362 = vpack.c.bf16 %v2280, %v2280
  %2364 = vrot.lane.b32.xlu0 %v2362, 32
  %v2365 = vpop.permute.xlu0 %2364
  %v2367 = vsel %vm210, %v2365, 0
  %2369 = vmatprep.subr.bf16.mxu0 0
  %2370 = vmatpush1.bf16.msra.mxu0 0
  %2371 = vmatprep.subr.bf16.mxu0 0
  %2372 = vmatpush1.bf16.msra.mxu0 0
  %2373 = vmatprep.subr.bf16.mxu0 0
  %2374 = vmatpush1.bf16.msra.mxu0 0
  %2375 = vmatprep.subr.bf16.mxu0 0
  %2376 = vmatpush1.bf16.msra.mxu0 0
  %2377 = vmatprep.subr.bf16.mxu0 0
  %2378 = vmatpush1.bf16.msra.mxu0 0
  %2379 = vmatprep.subr.bf16.mxu0 0
  %2380 = vmatpush1.bf16.msra.mxu0 0
  %2381 = vmatprep.subr.bf16.mxu0 0
  %2382 = vmatpush1.bf16.msra.mxu0 %v1584
  %2383 = vmatprep.subr.bf16.mxu0 0
  %2384 = vmatpush1.bf16.msra.mxu0 %v1583
  %2385 = vmatprep.subr.bf16.mxu0 0
  %2386 = vmatpush2.bf16.msra.mxu0 0
  %2387 = vmatprep.subr.bf16.mxu0 0
  %2388 = vmatpush2.bf16.msra.mxu0 0
  %2389 = vmatprep.subr.bf16.mxu0 0
  %2390 = vmatpush2.bf16.msra.mxu0 0
  %2391 = vmatprep.subr.bf16.mxu0 0
  %2392 = vmatpush2.bf16.msra.mxu0 0
  %2393 = vmatprep.subr.bf16.mxu0 0
  %2394 = vmatpush2.bf16.msra.mxu0 0
  %2395 = vmatprep.subr.bf16.mxu0 0
  %2396 = vmatpush2.bf16.msra.mxu0 0
  %2397 = vmatprep.subr.bf16.mxu0 0
  %2398 = vmatpush2.bf16.msra.mxu0 0
  %2399 = vmatprep.subr.bf16.mxu0 0
  %2400 = vmatpush2.bf16.msra.mxu0 0
  %2401 = vmatprep.mubr.bf16.mxu0 0
  %2402 = vmatmul.mubr.bf16.gmra.mxu0 %v2367
  %v2403 = vpop.f32.mrf.mxu0
  %v2404 = vadd.f32 0.0, %v2403
  %v2405 = vpop.f32.mrf.mxu0
  %v2406 = vpop.f32.mrf.mxu0
  %v2407 = vpop.f32.mrf.mxu0
  %2408 = vdwg.mxu0
  %v2409 = vadd.f32 %v2361, %v2404
  %v2410 = vmul.f32 %v2409, 0.5
  %v2411 = vtanh.pop %v2410
  %v2412 = vmul.f32 %v2411, 0.5
  %v2413 = vadd.f32 %v2412, 0.5
  %v2414 = vtanh.pop %v2409
  %v2415 = vmul.f32 %v2413, %v2274
  %2417 = vrot.lane.b32.xlu0 %v2414, 64
  %v2418 = vpop.permute.xlu0 %2417
  %v2420 = vmul.f32 %v2413, %v2418
  %2422 = vrot.lane.b32.xlu0 %v2420, 32
  %v2423 = vpop.permute.xlu0 %2422
  %v2425 = vadd.f32 %v2415, %v2423
  %v2426 = vtanh.pop %v2425
  %2428 = vrot.lane.b32.xlu0 %v2426, 64
  %v2429 = vpop.permute.xlu0 %2428
  %v2431 = vmul.f32 %v2413, %v2429
  %2433 = vrot.lane.b32.xlu0 %v2431, 32
  %v2434 = vpop.permute.xlu0 %2433
  %2436 = vrot.lane.b32.xlu0 %v2354, 64
  %v2437 = vpop.permute.xlu0 %2436
  %v2439 = vsel %vm210, %v2434, %v2437
  %v2440 = vpack.c.bf16 %v2439, %v2439
  %v2442 = vsel %vm307, %v2440, 0
  %2444 = vmatprep.subr.bf16.mxu0 0
  %2445 = vmatpush1.bf16.msra.mxu0 0
  %2446 = vmatprep.subr.bf16.mxu0 0
  %2447 = vmatpush1.bf16.msra.mxu0 0
  %2448 = vmatprep.subr.bf16.mxu0 0
  %2449 = vmatpush1.bf16.msra.mxu0 0
  %2450 = vmatprep.subr.bf16.mxu0 0
  %2451 = vmatpush1.bf16.msra.mxu0 0
  %2452 = vmatprep.subr.bf16.mxu0 0
  %2453 = vmatpush1.bf16.msra.mxu0 %v1682
  %2454 = vmatprep.subr.bf16.mxu0 0
  %2455 = vmatpush1.bf16.msra.mxu0 %v1681
  %2456 = vmatprep.subr.bf16.mxu0 0
  %2457 = vmatpush1.bf16.msra.mxu0 %v1680
  %2458 = vmatprep.subr.bf16.mxu0 0
  %2459 = vmatpush1.bf16.msra.mxu0 %v1679
  %2460 = vmatprep.subr.bf16.mxu0 0
  %2461 = vmatpush2.bf16.msra.mxu0 0
  %2462 = vmatprep.subr.bf16.mxu0 0
  %2463 = vmatpush2.bf16.msra.mxu0 0
  %2464 = vmatprep.subr.bf16.mxu0 0
  %2465 = vmatpush2.bf16.msra.mxu0 0
  %2466 = vmatprep.subr.bf16.mxu0 0
  %2467 = vmatpush2.bf16.msra.mxu0 0
  %2468 = vmatprep.subr.bf16.mxu0 0
  %2469 = vmatpush2.bf16.msra.mxu0 0
  %2470 = vmatprep.subr.bf16.mxu0 0
  %2471 = vmatpush2.bf16.msra.mxu0 0
  %2472 = vmatprep.subr.bf16.mxu0 0
  %2473 = vmatpush2.bf16.msra.mxu0 0
  %2474 = vmatprep.subr.bf16.mxu0 0
  %2475 = vmatpush2.bf16.msra.mxu0 0
  %2476 = vmatprep.mubr.bf16.mxu0 0
  %2477 = vmatmul.mubr.bf16.gmra.mxu0 %v2442
  %v2478 = vpop.f32.mrf.mxu0
  %v2479 = vadd.f32 %v1568, %v2478
  %v2480 = vpop.f32.mrf.mxu0
  %v2481 = vpop.f32.mrf.mxu0
  %v2482 = vpop.f32.mrf.mxu0
  %2483 = vdwg.mxu0
  %v2484 = vmul.f32 %v2479, 0.5
  %v2485 = vtanh.pop %v2484
  %v2486 = vmul.f32 %v2485, 0.5
  %v2487 = vadd.f32 %v2486, 0.5
  %v2488 = vtanh.pop %v2479
  %v2489 = vmul.f32 %v2487, %v2348
  %2491 = vrot.lane.b32.xlu0 %v2488, 64
  %v2492 = vpop.permute.xlu0 %2491
  %v2494 = vmul.f32 %v2487, %v2492
  %2496 = vrot.lane.b32.xlu0 %v2494, 32
  %v2497 = vpop.permute.xlu0 %2496
  %v2499 = vadd.f32 %v2489, %v2497
  %v2500 = vtanh.pop %v2499
  %2502 = vrot.lane.b32.xlu0 %v2500, 64
  %v2503 = vpop.permute.xlu0 %2502
  %v2505 = vmul.f32 %v2487, %v2503
  %2507 = vrot.lane.b32.xlu0 %v2505, 32
  %v2508 = vpop.permute.xlu0 %2507
  %s2510 = scalar_lea.vmem [#allocation3], 40
  %2511 = vst.msk [vmem:[%s2510] sm:$0xff] %vm210, %v2508
  %v2512 = vld [vmem:[#allocation2 + $0x30] sm:$0xff]
  %v2513 = vpack.c.bf16 %v2431, %v2431
  %2515 = vrot.lane.b32.xlu0 %v2513, 32
  %v2516 = vpop.permute.xlu0 %2515
  %v2518 = vsel %vm210, %v2516, 0
  %2520 = vmatprep.subr.bf16.mxu0 0
  %2521 = vmatpush1.bf16.msra.mxu0 0
  %2522 = vmatprep.subr.bf16.mxu0 0
  %2523 = vmatpush1.bf16.msra.mxu0 0
  %2524 = vmatprep.subr.bf16.mxu0 0
  %2525 = vmatpush1.bf16.msra.mxu0 0
  %2526 = vmatprep.subr.bf16.mxu0 0
  %2527 = vmatpush1.bf16.msra.mxu0 0
  %2528 = vmatprep.subr.bf16.mxu0 0
  %2529 = vmatpush1.bf16.msra.mxu0 0
  %2530 = vmatprep.subr.bf16.mxu0 0
  %2531 = vmatpush1.bf16.msra.mxu0 0
  %2532 = vmatprep.subr.bf16.mxu0 0
  %2533 = vmatpush1.bf16.msra.mxu0 %v1584
  %2534 = vmatprep.subr.bf16.mxu0 0
  %2535 = vmatpush1.bf16.msra.mxu0 %v1583
  %2536 = vmatprep.subr.bf16.mxu0 0
  %2537 = vmatpush2.bf16.msra.mxu0 0
  %2538 = vmatprep.subr.bf16.mxu0 0
  %2539 = vmatpush2.bf16.msra.mxu0 0
  %2540 = vmatprep.subr.bf16.mxu0 0
  %2541 = vmatpush2.bf16.msra.mxu0 0
  %2542 = vmatprep.subr.bf16.mxu0 0
  %2543 = vmatpush2.bf16.msra.mxu0 0
  %2544 = vmatprep.subr.bf16.mxu0 0
  %2545 = vmatpush2.bf16.msra.mxu0 0
  %2546 = vmatprep.subr.bf16.mxu0 0
  %2547 = vmatpush2.bf16.msra.mxu0 0
  %2548 = vmatprep.subr.bf16.mxu0 0
  %2549 = vmatpush2.bf16.msra.mxu0 0
  %2550 = vmatprep.subr.bf16.mxu0 0
  %2551 = vmatpush2.bf16.msra.mxu0 0
  %2552 = vmatprep.mubr.bf16.mxu0 0
  %2553 = vmatmul.mubr.bf16.gmra.mxu0 %v2518
  %v2554 = vpop.f32.mrf.mxu0
  %v2555 = vadd.f32 0.0, %v2554
  %v2556 = vpop.f32.mrf.mxu0
  %v2557 = vpop.f32.mrf.mxu0
  %v2558 = vpop.f32.mrf.mxu0
  %2559 = vdwg.mxu0
  %v2560 = vadd.f32 %v2512, %v2555
  %v2561 = vmul.f32 %v2560, 0.5
  %v2562 = vtanh.pop %v2561
  %v2563 = vmul.f32 %v2562, 0.5
  %v2564 = vadd.f32 %v2563, 0.5
  %v2565 = vtanh.pop %v2560
  %v2566 = vmul.f32 %v2564, %v2425
  %2568 = vrot.lane.b32.xlu0 %v2565, 64
  %v2569 = vpop.permute.xlu0 %2568
  %v2571 = vmul.f32 %v2564, %v2569
  %2573 = vrot.lane.b32.xlu0 %v2571, 32
  %v2574 = vpop.permute.xlu0 %2573
  %v2576 = vadd.f32 %v2566, %v2574
  %v2577 = vtanh.pop %v2576
  %2579 = vrot.lane.b32.xlu0 %v2577, 64
  %v2580 = vpop.permute.xlu0 %2579
  %v2582 = vmul.f32 %v2564, %v2580
  %2584 = vrot.lane.b32.xlu0 %v2582, 32
  %v2585 = vpop.permute.xlu0 %2584
  %2587 = vrot.lane.b32.xlu0 %v2505, 64
  %v2588 = vpop.permute.xlu0 %2587
  %v2590 = vsel %vm210, %v2585, %v2588
  %v2591 = vpack.c.bf16 %v2590, %v2590
  %v2593 = vsel %vm307, %v2591, 0
  %2595 = vmatprep.subr.bf16.mxu0 0
  %2596 = vmatpush1.bf16.msra.mxu0 0
  %2597 = vmatprep.subr.bf16.mxu0 0
  %2598 = vmatpush1.bf16.msra.mxu0 0
  %2599 = vmatprep.subr.bf16.mxu0 0
  %2600 = vmatpush1.bf16.msra.mxu0 0
  %2601 = vmatprep.subr.bf16.mxu0 0
  %2602 = vmatpush1.bf16.msra.mxu0 0
  %2603 = vmatprep.subr.bf16.mxu0 0
  %2604 = vmatpush1.bf16.msra.mxu0 %v1682
  %2605 = vmatprep.subr.bf16.mxu0 0
  %2606 = vmatpush1.bf16.msra.mxu0 %v1681
  %2607 = vmatprep.subr.bf16.mxu0 0
  %2608 = vmatpush1.bf16.msra.mxu0 %v1680
  %2609 = vmatprep.subr.bf16.mxu0 0
  %2610 = vmatpush1.bf16.msra.mxu0 %v1679
  %2611 = vmatprep.subr.bf16.mxu0 0
  %2612 = vmatpush2.bf16.msra.mxu0 0
  %2613 = vmatprep.subr.bf16.mxu0 0
  %2614 = vmatpush2.bf16.msra.mxu0 0
  %2615 = vmatprep.subr.bf16.mxu0 0
  %2616 = vmatpush2.bf16.msra.mxu0 0
  %2617 = vmatprep.subr.bf16.mxu0 0
  %2618 = vmatpush2.bf16.msra.mxu0 0
  %2619 = vmatprep.subr.bf16.mxu0 0
  %2620 = vmatpush2.bf16.msra.mxu0 0
  %2621 = vmatprep.subr.bf16.mxu0 0
  %2622 = vmatpush2.bf16.msra.mxu0 0
  %2623 = vmatprep.subr.bf16.mxu0 0
  %2624 = vmatpush2.bf16.msra.mxu0 0
  %2625 = vmatprep.subr.bf16.mxu0 0
  %2626 = vmatpush2.bf16.msra.mxu0 0
  %2627 = vmatprep.mubr.bf16.mxu0 0
  %2628 = vmatmul.mubr.bf16.gmra.mxu0 %v2593
  %v2629 = vpop.f32.mrf.mxu0
  %v2630 = vadd.f32 %v1568, %v2629
  %v2631 = vpop.f32.mrf.mxu0
  %v2632 = vpop.f32.mrf.mxu0
  %v2633 = vpop.f32.mrf.mxu0
  %2634 = vdwg.mxu0
  %v2635 = vmul.f32 %v2630, 0.5
  %v2636 = vtanh.pop %v2635
  %v2637 = vmul.f32 %v2636, 0.5
  %v2638 = vadd.f32 %v2637, 0.5
  %v2639 = vtanh.pop %v2630
  %v2640 = vmul.f32 %v2638, %v2499
  %2642 = vrot.lane.b32.xlu0 %v2639, 64
  %v2643 = vpop.permute.xlu0 %2642
  %v2645 = vmul.f32 %v2638, %v2643
  %2647 = vrot.lane.b32.xlu0 %v2645, 32
  %v2648 = vpop.permute.xlu0 %2647
  %v2650 = vadd.f32 %v2640, %v2648
  %v2651 = vtanh.pop %v2650
  %2653 = vrot.lane.b32.xlu0 %v2651, 64
  %v2654 = vpop.permute.xlu0 %2653
  %v2656 = vmul.f32 %v2638, %v2654
  %2658 = vrot.lane.b32.xlu0 %v2656, 32
  %v2659 = vpop.permute.xlu0 %2658
  %s2661 = scalar_lea.vmem [#allocation3], 48
  %2662 = vst.msk [vmem:[%s2661] sm:$0xff] %vm210, %v2659
  %v2663 = vld [vmem:[#allocation2 + $0x38] sm:$0xff]
  %v2664 = vpack.c.bf16 %v2582, %v2582
  %2666 = vrot.lane.b32.xlu0 %v2664, 32
  %v2667 = vpop.permute.xlu0 %2666
  %v2669 = vsel %vm210, %v2667, 0
  %2671 = vmatprep.subr.bf16.mxu0 0
  %2672 = vmatpush1.bf16.msra.mxu0 0
  %2673 = vmatprep.subr.bf16.mxu0 0
  %2674 = vmatpush1.bf16.msra.mxu0 0
  %2675 = vmatprep.subr.bf16.mxu0 0
  %2676 = vmatpush1.bf16.msra.mxu0 0
  %2677 = vmatprep.subr.bf16.mxu0 0
  %2678 = vmatpush1.bf16.msra.mxu0 0
  %2679 = vmatprep.subr.bf16.mxu0 0
  %2680 = vmatpush1.bf16.msra.mxu0 0
  %2681 = vmatprep.subr.bf16.mxu0 0
  %2682 = vmatpush1.bf16.msra.mxu0 0
  %2683 = vmatprep.subr.bf16.mxu0 0
  %2684 = vmatpush1.bf16.msra.mxu0 %v1584
  %2685 = vmatprep.subr.bf16.mxu0 0
  %2686 = vmatpush1.bf16.msra.mxu0 %v1583
  %2687 = vmatprep.subr.bf16.mxu0 0
  %2688 = vmatpush2.bf16.msra.mxu0 0
  %2689 = vmatprep.subr.bf16.mxu0 0
  %2690 = vmatpush2.bf16.msra.mxu0 0
  %2691 = vmatprep.subr.bf16.mxu0 0
  %2692 = vmatpush2.bf16.msra.mxu0 0
  %2693 = vmatprep.subr.bf16.mxu0 0
  %2694 = vmatpush2.bf16.msra.mxu0 0
  %2695 = vmatprep.subr.bf16.mxu0 0
  %2696 = vmatpush2.bf16.msra.mxu0 0
  %2697 = vmatprep.subr.bf16.mxu0 0
  %2698 = vmatpush2.bf16.msra.mxu0 0
  %2699 = vmatprep.subr.bf16.mxu0 0
  %2700 = vmatpush2.bf16.msra.mxu0 0
  %2701 = vmatprep.subr.bf16.mxu0 0
  %2702 = vmatpush2.bf16.msra.mxu0 0
  %2703 = vmatprep.mubr.bf16.mxu0 0
  %2704 = vmatmul.mubr.bf16.gmra.mxu0 %v2669
  %v2705 = vpop.f32.mrf.mxu0
  %v2706 = vadd.f32 0.0, %v2705
  %v2707 = vpop.f32.mrf.mxu0
  %v2708 = vpop.f32.mrf.mxu0
  %v2709 = vpop.f32.mrf.mxu0
  %2710 = vdwg.mxu0
  %v2711 = vadd.f32 %v2663, %v2706
  %v2712 = vmul.f32 %v2711, 0.5
  %v2713 = vtanh.pop %v2712
  %v2714 = vmul.f32 %v2713, 0.5
  %v2715 = vadd.f32 %v2714, 0.5
  %v2716 = vtanh.pop %v2711
  %v2717 = vmul.f32 %v2715, %v2576
  %2719 = vrot.lane.b32.xlu0 %v2716, 64
  %v2720 = vpop.permute.xlu0 %2719
  %v2722 = vmul.f32 %v2715, %v2720
  %2724 = vrot.lane.b32.xlu0 %v2722, 32
  %v2725 = vpop.permute.xlu0 %2724
  %v2727 = vadd.f32 %v2717, %v2725
  %v2728 = vtanh.pop %v2727
  %2730 = vrot.lane.b32.xlu0 %v2728, 64
  %v2731 = vpop.permute.xlu0 %2730
  %v2733 = vmul.f32 %v2715, %v2731
  %2735 = vrot.lane.b32.xlu0 %v2733, 32
  %v2736 = vpop.permute.xlu0 %2735
  %2738 = vrot.lane.b32.xlu0 %v2656, 64
  %v2739 = vpop.permute.xlu0 %2738
  %v2741 = vsel %vm210, %v2736, %v2739
  %v2742 = vpack.c.bf16 %v2741, %v2741
  %v2744 = vsel %vm307, %v2742, 0
  %2746 = vmatprep.subr.bf16.mxu0 0
  %2747 = vmatpush1.bf16.msra.mxu0 0
  %2748 = vmatprep.subr.bf16.mxu0 0
  %2749 = vmatpush1.bf16.msra.mxu0 0
  %2750 = vmatprep.subr.bf16.mxu0 0
  %2751 = vmatpush1.bf16.msra.mxu0 0
  %2752 = vmatprep.subr.bf16.mxu0 0
  %2753 = vmatpush1.bf16.msra.mxu0 0
  %2754 = vmatprep.subr.bf16.mxu0 0
  %2755 = vmatpush1.bf16.msra.mxu0 %v1682
  %2756 = vmatprep.subr.bf16.mxu0 0
  %2757 = vmatpush1.bf16.msra.mxu0 %v1681
  %2758 = vmatprep.subr.bf16.mxu0 0
  %2759 = vmatpush1.bf16.msra.mxu0 %v1680
  %2760 = vmatprep.subr.bf16.mxu0 0
  %2761 = vmatpush1.bf16.msra.mxu0 %v1679
  %2762 = vmatprep.subr.bf16.mxu0 0
  %2763 = vmatpush2.bf16.msra.mxu0 0
  %2764 = vmatprep.subr.bf16.mxu0 0
  %2765 = vmatpush2.bf16.msra.mxu0 0
  %2766 = vmatprep.subr.bf16.mxu0 0
  %2767 = vmatpush2.bf16.msra.mxu0 0
  %2768 = vmatprep.subr.bf16.mxu0 0
  %2769 = vmatpush2.bf16.msra.mxu0 0
  %2770 = vmatprep.subr.bf16.mxu0 0
  %2771 = vmatpush2.bf16.msra.mxu0 0
  %2772 = vmatprep.subr.bf16.mxu0 0
  %2773 = vmatpush2.bf16.msra.mxu0 0
  %2774 = vmatprep.subr.bf16.mxu0 0
  %2775 = vmatpush2.bf16.msra.mxu0 0
  %2776 = vmatprep.subr.bf16.mxu0 0
  %2777 = vmatpush2.bf16.msra.mxu0 0
  %2778 = vmatprep.mubr.bf16.mxu0 0
  %2779 = vmatmul.mubr.bf16.gmra.mxu0 %v2744
  %v2780 = vpop.f32.mrf.mxu0
  %v2781 = vadd.f32 %v1568, %v2780
  %v2782 = vpop.f32.mrf.mxu0
  %v2783 = vpop.f32.mrf.mxu0
  %v2784 = vpop.f32.mrf.mxu0
  %2785 = vdwg.mxu0
  %v2786 = vmul.f32 %v2781, 0.5
  %v2787 = vtanh.pop %v2786
  %v2788 = vmul.f32 %v2787, 0.5
  %v2789 = vadd.f32 %v2788, 0.5
  %v2790 = vtanh.pop %v2781
  %v2791 = vmul.f32 %v2789, %v2650
  %2793 = vrot.lane.b32.xlu0 %v2790, 64
  %v2794 = vpop.permute.xlu0 %2793
  %v2796 = vmul.f32 %v2789, %v2794
  %2798 = vrot.lane.b32.xlu0 %v2796, 32
  %v2799 = vpop.permute.xlu0 %2798
  %v2801 = vadd.f32 %v2791, %v2799
  %v2802 = vtanh.pop %v2801
  %2804 = vrot.lane.b32.xlu0 %v2802, 64
  %v2805 = vpop.permute.xlu0 %2804
  %v2807 = vmul.f32 %v2789, %v2805
  %2809 = vrot.lane.b32.xlu0 %v2807, 32
  %v2810 = vpop.permute.xlu0 %2809
  %s2812 = scalar_lea.vmem [#allocation3], 56
  %2813 = vst.msk [vmem:[%s2812] sm:$0xff] %vm210, %v2810
  %v2814 = vld [vmem:[#allocation2 + $0x40] sm:$0xff]
  %v2815 = vpack.c.bf16 %v2733, %v2733
  %2817 = vrot.lane.b32.xlu0 %v2815, 32
  %v2818 = vpop.permute.xlu0 %2817
  %v2820 = vsel %vm210, %v2818, 0
  %2822 = vmatprep.subr.bf16.mxu0 0
  %2823 = vmatpush1.bf16.msra.mxu0 0
  %2824 = vmatprep.subr.bf16.mxu0 0
  %2825 = vmatpush1.bf16.msra.mxu0 0
  %2826 = vmatprep.subr.bf16.mxu0 0
  %2827 = vmatpush1.bf16.msra.mxu0 0
  %2828 = vmatprep.subr.bf16.mxu0 0
  %2829 = vmatpush1.bf16.msra.mxu0 0
  %2830 = vmatprep.subr.bf16.mxu0 0
  %2831 = vmatpush1.bf16.msra.mxu0 0
  %2832 = vmatprep.subr.bf16.mxu0 0
  %2833 = vmatpush1.bf16.msra.mxu0 0
  %2834 = vmatprep.subr.bf16.mxu0 0
  %2835 = vmatpush1.bf16.msra.mxu0 %v1584
  %2836 = vmatprep.subr.bf16.mxu0 0
  %2837 = vmatpush1.bf16.msra.mxu0 %v1583
  %2838 = vmatprep.subr.bf16.mxu0 0
  %2839 = vmatpush2.bf16.msra.mxu0 0
  %2840 = vmatprep.subr.bf16.mxu0 0
  %2841 = vmatpush2.bf16.msra.mxu0 0
  %2842 = vmatprep.subr.bf16.mxu0 0
  %2843 = vmatpush2.bf16.msra.mxu0 0
  %2844 = vmatprep.subr.bf16.mxu0 0
  %2845 = vmatpush2.bf16.msra.mxu0 0
  %2846 = vmatprep.subr.bf16.mxu0 0
  %2847 = vmatpush2.bf16.msra.mxu0 0
  %2848 = vmatprep.subr.bf16.mxu0 0
  %2849 = vmatpush2.bf16.msra.mxu0 0
  %2850 = vmatprep.subr.bf16.mxu0 0
  %2851 = vmatpush2.bf16.msra.mxu0 0
  %2852 = vmatprep.subr.bf16.mxu0 0
  %2853 = vmatpush2.bf16.msra.mxu0 0
  %2854 = vmatprep.mubr.bf16.mxu0 0
  %2855 = vmatmul.mubr.bf16.gmra.mxu0 %v2820
  %v2856 = vpop.f32.mrf.mxu0
  %v2857 = vadd.f32 0.0, %v2856
  %v2858 = vpop.f32.mrf.mxu0
  %v2859 = vpop.f32.mrf.mxu0
  %v2860 = vpop.f32.mrf.mxu0
  %2861 = vdwg.mxu0
  %v2862 = vadd.f32 %v2814, %v2857
  %v2863 = vmul.f32 %v2862, 0.5
  %v2864 = vtanh.pop %v2863
  %v2865 = vmul.f32 %v2864, 0.5
  %v2866 = vadd.f32 %v2865, 0.5
  %v2867 = vtanh.pop %v2862
  %v2868 = vmul.f32 %v2866, %v2727
  %2870 = vrot.lane.b32.xlu0 %v2867, 64
  %v2871 = vpop.permute.xlu0 %2870
  %v2873 = vmul.f32 %v2866, %v2871
  %2875 = vrot.lane.b32.xlu0 %v2873, 32
  %v2876 = vpop.permute.xlu0 %2875
  %v2878 = vadd.f32 %v2868, %v2876
  %v2879 = vtanh.pop %v2878
  %2881 = vrot.lane.b32.xlu0 %v2879, 64
  %v2882 = vpop.permute.xlu0 %2881
  %v2884 = vmul.f32 %v2866, %v2882
  %2886 = vrot.lane.b32.xlu0 %v2884, 32
  %v2887 = vpop.permute.xlu0 %2886
  %2889 = vrot.lane.b32.xlu0 %v2807, 64
  %v2890 = vpop.permute.xlu0 %2889
  %v2892 = vsel %vm210, %v2887, %v2890
  %v2893 = vpack.c.bf16 %v2892, %v2892
  %v2895 = vsel %vm307, %v2893, 0
  %2897 = vmatprep.subr.bf16.mxu0 0
  %2898 = vmatpush1.bf16.msra.mxu0 0
  %2899 = vmatprep.subr.bf16.mxu0 0
  %2900 = vmatpush1.bf16.msra.mxu0 0
  %2901 = vmatprep.subr.bf16.mxu0 0
  %2902 = vmatpush1.bf16.msra.mxu0 0
  %2903 = vmatprep.subr.bf16.mxu0 0
  %2904 = vmatpush1.bf16.msra.mxu0 0
  %2905 = vmatprep.subr.bf16.mxu0 0
  %2906 = vmatpush1.bf16.msra.mxu0 %v1682
  %2907 = vmatprep.subr.bf16.mxu0 0
  %2908 = vmatpush1.bf16.msra.mxu0 %v1681
  %2909 = vmatprep.subr.bf16.mxu0 0
  %2910 = vmatpush1.bf16.msra.mxu0 %v1680
  %2911 = vmatprep.subr.bf16.mxu0 0
  %2912 = vmatpush1.bf16.msra.mxu0 %v1679
  %2913 = vmatprep.subr.bf16.mxu0 0
  %2914 = vmatpush2.bf16.msra.mxu0 0
  %2915 = vmatprep.subr.bf16.mxu0 0
  %2916 = vmatpush2.bf16.msra.mxu0 0
  %2917 = vmatprep.subr.bf16.mxu0 0
  %2918 = vmatpush2.bf16.msra.mxu0 0
  %2919 = vmatprep.subr.bf16.mxu0 0
  %2920 = vmatpush2.bf16.msra.mxu0 0
  %2921 = vmatprep.subr.bf16.mxu0 0
  %2922 = vmatpush2.bf16.msra.mxu0 0
  %2923 = vmatprep.subr.bf16.mxu0 0
  %2924 = vmatpush2.bf16.msra.mxu0 0
  %2925 = vmatprep.subr.bf16.mxu0 0
  %2926 = vmatpush2.bf16.msra.mxu0 0
  %2927 = vmatprep.subr.bf16.mxu0 0
  %2928 = vmatpush2.bf16.msra.mxu0 0
  %2929 = vmatprep.mubr.bf16.mxu0 0
  %2930 = vmatmul.mubr.bf16.gmra.mxu0 %v2895
  %v2931 = vpop.f32.mrf.mxu0
  %v2932 = vadd.f32 %v1568, %v2931
  %v2933 = vpop.f32.mrf.mxu0
  %v2934 = vpop.f32.mrf.mxu0
  %v2935 = vpop.f32.mrf.mxu0
  %2936 = vdwg.mxu0
  %v2937 = vmul.f32 %v2932, 0.5
  %v2938 = vtanh.pop %v2937
  %v2939 = vmul.f32 %v2938, 0.5
  %v2940 = vadd.f32 %v2939, 0.5
  %v2941 = vtanh.pop %v2932
  %v2942 = vmul.f32 %v2940, %v2801
  %2944 = vrot.lane.b32.xlu0 %v2941, 64
  %v2945 = vpop.permute.xlu0 %2944
  %v2947 = vmul.f32 %v2940, %v2945
  %2949 = vrot.lane.b32.xlu0 %v2947, 32
  %v2950 = vpop.permute.xlu0 %2949
  %v2952 = vadd.f32 %v2942, %v2950
  %v2953 = vtanh.pop %v2952
  %2955 = vrot.lane.b32.xlu0 %v2953, 64
  %v2956 = vpop.permute.xlu0 %2955
  %v2958 = vmul.f32 %v2940, %v2956
  %2960 = vrot.lane.b32.xlu0 %v2958, 32
  %v2961 = vpop.permute.xlu0 %2960
  %s2963 = scalar_lea.vmem [#allocation3], 64
  %2964 = vst.msk [vmem:[%s2963] sm:$0xff] %vm210, %v2961
  %v2965 = vld [vmem:[#allocation2 + $0x48] sm:$0xff]
  %v2966 = vpack.c.bf16 %v2884, %v2884
  %2968 = vrot.lane.b32.xlu0 %v2966, 32
  %v2969 = vpop.permute.xlu0 %2968
  %v2971 = vsel %vm210, %v2969, 0
  %2973 = vmatprep.subr.bf16.mxu0 0
  %2974 = vmatpush1.bf16.msra.mxu0 0
  %2975 = vmatprep.subr.bf16.mxu0 0
  %2976 = vmatpush1.bf16.msra.mxu0 0
  %2977 = vmatprep.subr.bf16.mxu0 0
  %2978 = vmatpush1.bf16.msra.mxu0 0
  %2979 = vmatprep.subr.bf16.mxu0 0
  %2980 = vmatpush1.bf16.msra.mxu0 0
  %2981 = vmatprep.subr.bf16.mxu0 0
  %2982 = vmatpush1.bf16.msra.mxu0 0
  %2983 = vmatprep.subr.bf16.mxu0 0
  %2984 = vmatpush1.bf16.msra.mxu0 0
  %2985 = vmatprep.subr.bf16.mxu0 0
  %2986 = vmatpush1.bf16.msra.mxu0 %v1584
  %2987 = vmatprep.subr.bf16.mxu0 0
  %2988 = vmatpush1.bf16.msra.mxu0 %v1583
  %2989 = vmatprep.subr.bf16.mxu0 0
  %2990 = vmatpush2.bf16.msra.mxu0 0
  %2991 = vmatprep.subr.bf16.mxu0 0
  %2992 = vmatpush2.bf16.msra.mxu0 0
  %2993 = vmatprep.subr.bf16.mxu0 0
  %2994 = vmatpush2.bf16.msra.mxu0 0
  %2995 = vmatprep.subr.bf16.mxu0 0
  %2996 = vmatpush2.bf16.msra.mxu0 0
  %2997 = vmatprep.subr.bf16.mxu0 0
  %2998 = vmatpush2.bf16.msra.mxu0 0
  %2999 = vmatprep.subr.bf16.mxu0 0
  %3000 = vmatpush2.bf16.msra.mxu0 0
  %3001 = vmatprep.subr.bf16.mxu0 0
  %3002 = vmatpush2.bf16.msra.mxu0 0
  %3003 = vmatprep.subr.bf16.mxu0 0
  %3004 = vmatpush2.bf16.msra.mxu0 0
  %3005 = vmatprep.mubr.bf16.mxu0 0
  %3006 = vmatmul.mubr.bf16.gmra.mxu0 %v2971
  %v3007 = vpop.f32.mrf.mxu0
  %v3008 = vadd.f32 0.0, %v3007
  %v3009 = vpop.f32.mrf.mxu0
  %v3010 = vpop.f32.mrf.mxu0
  %v3011 = vpop.f32.mrf.mxu0
  %3012 = vdwg.mxu0
  %v3013 = vadd.f32 %v2965, %v3008
  %v3014 = vmul.f32 %v3013, 0.5
  %v3015 = vtanh.pop %v3014
  %v3016 = vmul.f32 %v3015, 0.5
  %v3017 = vadd.f32 %v3016, 0.5
  %v3018 = vtanh.pop %v3013
  %v3019 = vmul.f32 %v3017, %v2878
  %3021 = vrot.lane.b32.xlu0 %v3018, 64
  %v3022 = vpop.permute.xlu0 %3021
  %v3024 = vmul.f32 %v3017, %v3022
  %3026 = vrot.lane.b32.xlu0 %v3024, 32
  %v3027 = vpop.permute.xlu0 %3026
  %v3029 = vadd.f32 %v3019, %v3027
  %v3030 = vtanh.pop %v3029
  %3032 = vrot.lane.b32.xlu0 %v3030, 64
  %v3033 = vpop.permute.xlu0 %3032
  %v3035 = vmul.f32 %v3017, %v3033
  %3037 = vrot.lane.b32.xlu0 %v3035, 32
  %v3038 = vpop.permute.xlu0 %3037
  %3040 = vrot.lane.b32.xlu0 %v2958, 64
  %v3041 = vpop.permute.xlu0 %3040
  %v3043 = vsel %vm210, %v3038, %v3041
  %v3044 = vpack.c.bf16 %v3043, %v3043
  %v3046 = vsel %vm307, %v3044, 0
  %3048 = vmatprep.subr.bf16.mxu0 0
  %3049 = vmatpush1.bf16.msra.mxu0 0
  %3050 = vmatprep.subr.bf16.mxu0 0
  %3051 = vmatpush1.bf16.msra.mxu0 0
  %3052 = vmatprep.subr.bf16.mxu0 0
  %3053 = vmatpush1.bf16.msra.mxu0 0
  %3054 = vmatprep.subr.bf16.mxu0 0
  %3055 = vmatpush1.bf16.msra.mxu0 0
  %3056 = vmatprep.subr.bf16.mxu0 0
  %3057 = vmatpush1.bf16.msra.mxu0 %v1682
  %3058 = vmatprep.subr.bf16.mxu0 0
  %3059 = vmatpush1.bf16.msra.mxu0 %v1681
  %3060 = vmatprep.subr.bf16.mxu0 0
  %3061 = vmatpush1.bf16.msra.mxu0 %v1680
  %3062 = vmatprep.subr.bf16.mxu0 0
  %3063 = vmatpush1.bf16.msra.mxu0 %v1679
  %3064 = vmatprep.subr.bf16.mxu0 0
  %3065 = vmatpush2.bf16.msra.mxu0 0
  %3066 = vmatprep.subr.bf16.mxu0 0
  %3067 = vmatpush2.bf16.msra.mxu0 0
  %3068 = vmatprep.subr.bf16.mxu0 0
  %3069 = vmatpush2.bf16.msra.mxu0 0
  %3070 = vmatprep.subr.bf16.mxu0 0
  %3071 = vmatpush2.bf16.msra.mxu0 0
  %3072 = vmatprep.subr.bf16.mxu0 0
  %3073 = vmatpush2.bf16.msra.mxu0 0
  %3074 = vmatprep.subr.bf16.mxu0 0
  %3075 = vmatpush2.bf16.msra.mxu0 0
  %3076 = vmatprep.subr.bf16.mxu0 0
  %3077 = vmatpush2.bf16.msra.mxu0 0
  %3078 = vmatprep.subr.bf16.mxu0 0
  %3079 = vmatpush2.bf16.msra.mxu0 0
  %3080 = vmatprep.mubr.bf16.mxu0 0
  %3081 = vmatmul.mubr.bf16.gmra.mxu0 %v3046
  %v3082 = vpop.f32.mrf.mxu0
  %v3083 = vadd.f32 %v1568, %v3082
  %v3084 = vpop.f32.mrf.mxu0
  %v3085 = vpop.f32.mrf.mxu0
  %v3086 = vpop.f32.mrf.mxu0
  %3087 = vdwg.mxu0
  %v3088 = vmul.f32 %v3083, 0.5
  %v3089 = vtanh.pop %v3088
  %v3090 = vmul.f32 %v3089, 0.5
  %v3091 = vadd.f32 %v3090, 0.5
  %v3092 = vtanh.pop %v3083
  %v3093 = vmul.f32 %v3091, %v2952
  %3095 = vrot.lane.b32.xlu0 %v3092, 64
  %v3096 = vpop.permute.xlu0 %3095
  %v3098 = vmul.f32 %v3091, %v3096
  %3100 = vrot.lane.b32.xlu0 %v3098, 32
  %v3101 = vpop.permute.xlu0 %3100
  %v3103 = vadd.f32 %v3093, %v3101
  %v3104 = vtanh.pop %v3103
  %3106 = vrot.lane.b32.xlu0 %v3104, 64
  %v3107 = vpop.permute.xlu0 %3106
  %v3109 = vmul.f32 %v3091, %v3107
  %3111 = vrot.lane.b32.xlu0 %v3109, 32
  %v3112 = vpop.permute.xlu0 %3111
  %s3114 = scalar_lea.vmem [#allocation3], 72
  %3115 = vst.msk [vmem:[%s3114] sm:$0xff] %vm210, %v3112
  %v3116 = vld [vmem:[#allocation2 + $0x50] sm:$0xff]
  %v3117 = vpack.c.bf16 %v3035, %v3035
  %3119 = vrot.lane.b32.xlu0 %v3117, 32
  %v3120 = vpop.permute.xlu0 %3119
  %v3122 = vsel %vm210, %v3120, 0
  %3124 = vmatprep.subr.bf16.mxu0 0
  %3125 = vmatpush1.bf16.msra.mxu0 0
  %3126 = vmatprep.subr.bf16.mxu0 0
  %3127 = vmatpush1.bf16.msra.mxu0 0
  %3128 = vmatprep.subr.bf16.mxu0 0
  %3129 = vmatpush1.bf16.msra.mxu0 0
  %3130 = vmatprep.subr.bf16.mxu0 0
  %3131 = vmatpush1.bf16.msra.mxu0 0
  %3132 = vmatprep.subr.bf16.mxu0 0
  %3133 = vmatpush1.bf16.msra.mxu0 0
  %3134 = vmatprep.subr.bf16.mxu0 0
  %3135 = vmatpush1.bf16.msra.mxu0 0
  %3136 = vmatprep.subr.bf16.mxu0 0
  %3137 = vmatpush1.bf16.msra.mxu0 %v1584
  %3138 = vmatprep.subr.bf16.mxu0 0
  %3139 = vmatpush1.bf16.msra.mxu0 %v1583
  %3140 = vmatprep.subr.bf16.mxu0 0
  %3141 = vmatpush2.bf16.msra.mxu0 0
  %3142 = vmatprep.subr.bf16.mxu0 0
  %3143 = vmatpush2.bf16.msra.mxu0 0
  %3144 = vmatprep.subr.bf16.mxu0 0
  %3145 = vmatpush2.bf16.msra.mxu0 0
  %3146 = vmatprep.subr.bf16.mxu0 0
  %3147 = vmatpush2.bf16.msra.mxu0 0
  %3148 = vmatprep.subr.bf16.mxu0 0
  %3149 = vmatpush2.bf16.msra.mxu0 0
  %3150 = vmatprep.subr.bf16.mxu0 0
  %3151 = vmatpush2.bf16.msra.mxu0 0
  %3152 = vmatprep.subr.bf16.mxu0 0
  %3153 = vmatpush2.bf16.msra.mxu0 0
  %3154 = vmatprep.subr.bf16.mxu0 0
  %3155 = vmatpush2.bf16.msra.mxu0 0
  %3156 = vmatprep.mubr.bf16.mxu0 0
  %3157 = vmatmul.mubr.bf16.gmra.mxu0 %v3122
  %v3158 = vpop.f32.mrf.mxu0
  %v3159 = vadd.f32 0.0, %v3158
  %v3160 = vpop.f32.mrf.mxu0
  %v3161 = vpop.f32.mrf.mxu0
  %v3162 = vpop.f32.mrf.mxu0
  %3163 = vdwg.mxu0
  %v3164 = vadd.f32 %v3116, %v3159
  %v3165 = vmul.f32 %v3164, 0.5
  %v3166 = vtanh.pop %v3165
  %v3167 = vmul.f32 %v3166, 0.5
  %v3168 = vadd.f32 %v3167, 0.5
  %v3169 = vtanh.pop %v3164
  %v3170 = vmul.f32 %v3168, %v3029
  %3172 = vrot.lane.b32.xlu0 %v3169, 64
  %v3173 = vpop.permute.xlu0 %3172
  %v3175 = vmul.f32 %v3168, %v3173
  %3177 = vrot.lane.b32.xlu0 %v3175, 32
  %v3178 = vpop.permute.xlu0 %3177
  %v3180 = vadd.f32 %v3170, %v3178
  %v3181 = vtanh.pop %v3180
  %3183 = vrot.lane.b32.xlu0 %v3181, 64
  %v3184 = vpop.permute.xlu0 %3183
  %v3186 = vmul.f32 %v3168, %v3184
  %3188 = vrot.lane.b32.xlu0 %v3186, 32
  %v3189 = vpop.permute.xlu0 %3188
  %3191 = vrot.lane.b32.xlu0 %v3109, 64
  %v3192 = vpop.permute.xlu0 %3191
  %v3194 = vsel %vm210, %v3189, %v3192
  %v3195 = vpack.c.bf16 %v3194, %v3194
  %v3197 = vsel %vm307, %v3195, 0
  %3199 = vmatprep.subr.bf16.mxu0 0
  %3200 = vmatpush1.bf16.msra.mxu0 0
  %3201 = vmatprep.subr.bf16.mxu0 0
  %3202 = vmatpush1.bf16.msra.mxu0 0
  %3203 = vmatprep.subr.bf16.mxu0 0
  %3204 = vmatpush1.bf16.msra.mxu0 0
  %3205 = vmatprep.subr.bf16.mxu0 0
  %3206 = vmatpush1.bf16.msra.mxu0 0
  %3207 = vmatprep.subr.bf16.mxu0 0
  %3208 = vmatpush1.bf16.msra.mxu0 %v1682
  %3209 = vmatprep.subr.bf16.mxu0 0
  %3210 = vmatpush1.bf16.msra.mxu0 %v1681
  %3211 = vmatprep.subr.bf16.mxu0 0
  %3212 = vmatpush1.bf16.msra.mxu0 %v1680
  %3213 = vmatprep.subr.bf16.mxu0 0
  %3214 = vmatpush1.bf16.msra.mxu0 %v1679
  %3215 = vmatprep.subr.bf16.mxu0 0
  %3216 = vmatpush2.bf16.msra.mxu0 0
  %3217 = vmatprep.subr.bf16.mxu0 0
  %3218 = vmatpush2.bf16.msra.mxu0 0
  %3219 = vmatprep.subr.bf16.mxu0 0
  %3220 = vmatpush2.bf16.msra.mxu0 0
  %3221 = vmatprep.subr.bf16.mxu0 0
  %3222 = vmatpush2.bf16.msra.mxu0 0
  %3223 = vmatprep.subr.bf16.mxu0 0
  %3224 = vmatpush2.bf16.msra.mxu0 0
  %3225 = vmatprep.subr.bf16.mxu0 0
  %3226 = vmatpush2.bf16.msra.mxu0 0
  %3227 = vmatprep.subr.bf16.mxu0 0
  %3228 = vmatpush2.bf16.msra.mxu0 0
  %3229 = vmatprep.subr.bf16.mxu0 0
  %3230 = vmatpush2.bf16.msra.mxu0 0
  %3231 = vmatprep.mubr.bf16.mxu0 0
  %3232 = vmatmul.mubr.bf16.gmra.mxu0 %v3197
  %v3233 = vpop.f32.mrf.mxu0
  %v3234 = vadd.f32 %v1568, %v3233
  %v3235 = vpop.f32.mrf.mxu0
  %v3236 = vpop.f32.mrf.mxu0
  %v3237 = vpop.f32.mrf.mxu0
  %3238 = vdwg.mxu0
  %v3239 = vmul.f32 %v3234, 0.5
  %v3240 = vtanh.pop %v3239
  %v3241 = vmul.f32 %v3240, 0.5
  %v3242 = vadd.f32 %v3241, 0.5
  %v3243 = vtanh.pop %v3234
  %v3244 = vmul.f32 %v3242, %v3103
  %3246 = vrot.lane.b32.xlu0 %v3243, 64
  %v3247 = vpop.permute.xlu0 %3246
  %v3249 = vmul.f32 %v3242, %v3247
  %3251 = vrot.lane.b32.xlu0 %v3249, 32
  %v3252 = vpop.permute.xlu0 %3251
  %v3254 = vadd.f32 %v3244, %v3252
  %v3255 = vtanh.pop %v3254
  %3257 = vrot.lane.b32.xlu0 %v3255, 64
  %v3258 = vpop.permute.xlu0 %3257
  %v3260 = vmul.f32 %v3242, %v3258
  %3262 = vrot.lane.b32.xlu0 %v3260, 32
  %v3263 = vpop.permute.xlu0 %3262
  %s3265 = scalar_lea.vmem [#allocation3], 80
  %3266 = vst.msk [vmem:[%s3265] sm:$0xff] %vm210, %v3263
  %v3267 = vld [vmem:[#allocation2 + $0x58] sm:$0xff]
  %v3268 = vpack.c.bf16 %v3186, %v3186
  %3270 = vrot.lane.b32.xlu0 %v3268, 32
  %v3271 = vpop.permute.xlu0 %3270
  %v3273 = vsel %vm210, %v3271, 0
  %3275 = vmatprep.subr.bf16.mxu0 0
  %3276 = vmatpush1.bf16.msra.mxu0 0
  %3277 = vmatprep.subr.bf16.mxu0 0
  %3278 = vmatpush1.bf16.msra.mxu0 0
  %3279 = vmatprep.subr.bf16.mxu0 0
  %3280 = vmatpush1.bf16.msra.mxu0 0
  %3281 = vmatprep.subr.bf16.mxu0 0
  %3282 = vmatpush1.bf16.msra.mxu0 0
  %3283 = vmatprep.subr.bf16.mxu0 0
  %3284 = vmatpush1.bf16.msra.mxu0 0
  %3285 = vmatprep.subr.bf16.mxu0 0
  %3286 = vmatpush1.bf16.msra.mxu0 0
  %3287 = vmatprep.subr.bf16.mxu0 0
  %3288 = vmatpush1.bf16.msra.mxu0 %v1584
  %3289 = vmatprep.subr.bf16.mxu0 0
  %3290 = vmatpush1.bf16.msra.mxu0 %v1583
  %3291 = vmatprep.subr.bf16.mxu0 0
  %3292 = vmatpush2.bf16.msra.mxu0 0
  %3293 = vmatprep.subr.bf16.mxu0 0
  %3294 = vmatpush2.bf16.msra.mxu0 0
  %3295 = vmatprep.subr.bf16.mxu0 0
  %3296 = vmatpush2.bf16.msra.mxu0 0
  %3297 = vmatprep.subr.bf16.mxu0 0
  %3298 = vmatpush2.bf16.msra.mxu0 0
  %3299 = vmatprep.subr.bf16.mxu0 0
  %3300 = vmatpush2.bf16.msra.mxu0 0
  %3301 = vmatprep.subr.bf16.mxu0 0
  %3302 = vmatpush2.bf16.msra.mxu0 0
  %3303 = vmatprep.subr.bf16.mxu0 0
  %3304 = vmatpush2.bf16.msra.mxu0 0
  %3305 = vmatprep.subr.bf16.mxu0 0
  %3306 = vmatpush2.bf16.msra.mxu0 0
  %3307 = vmatprep.mubr.bf16.mxu0 0
  %3308 = vmatmul.mubr.bf16.gmra.mxu0 %v3273
  %v3309 = vpop.f32.mrf.mxu0
  %v3310 = vadd.f32 0.0, %v3309
  %v3311 = vpop.f32.mrf.mxu0
  %v3312 = vpop.f32.mrf.mxu0
  %v3313 = vpop.f32.mrf.mxu0
  %3314 = vdwg.mxu0
  %v3315 = vadd.f32 %v3267, %v3310
  %v3316 = vmul.f32 %v3315, 0.5
  %v3317 = vtanh.pop %v3316
  %v3318 = vmul.f32 %v3317, 0.5
  %v3319 = vadd.f32 %v3318, 0.5
  %v3320 = vtanh.pop %v3315
  %v3321 = vmul.f32 %v3319, %v3180
  %3323 = vrot.lane.b32.xlu0 %v3320, 64
  %v3324 = vpop.permute.xlu0 %3323
  %v3326 = vmul.f32 %v3319, %v3324
  %3328 = vrot.lane.b32.xlu0 %v3326, 32
  %v3329 = vpop.permute.xlu0 %3328
  %v3331 = vadd.f32 %v3321, %v3329
  %v3332 = vtanh.pop %v3331
  %3334 = vrot.lane.b32.xlu0 %v3332, 64
  %v3335 = vpop.permute.xlu0 %3334
  %v3337 = vmul.f32 %v3319, %v3335
  %3339 = vrot.lane.b32.xlu0 %v3337, 32
  %v3340 = vpop.permute.xlu0 %3339
  %3342 = vrot.lane.b32.xlu0 %v3260, 64
  %v3343 = vpop.permute.xlu0 %3342
  %v3345 = vsel %vm210, %v3340, %v3343
  %v3346 = vpack.c.bf16 %v3345, %v3345
  %v3348 = vsel %vm307, %v3346, 0
  %3350 = vmatprep.subr.bf16.mxu0 0
  %3351 = vmatpush1.bf16.msra.mxu0 0
  %3352 = vmatprep.subr.bf16.mxu0 0
  %3353 = vmatpush1.bf16.msra.mxu0 0
  %3354 = vmatprep.subr.bf16.mxu0 0
  %3355 = vmatpush1.bf16.msra.mxu0 0
  %3356 = vmatprep.subr.bf16.mxu0 0
  %3357 = vmatpush1.bf16.msra.mxu0 0
  %3358 = vmatprep.subr.bf16.mxu0 0
  %3359 = vmatpush1.bf16.msra.mxu0 %v1682
  %3360 = vmatprep.subr.bf16.mxu0 0
  %3361 = vmatpush1.bf16.msra.mxu0 %v1681
  %3362 = vmatprep.subr.bf16.mxu0 0
  %3363 = vmatpush1.bf16.msra.mxu0 %v1680
  %3364 = vmatprep.subr.bf16.mxu0 0
  %3365 = vmatpush1.bf16.msra.mxu0 %v1679
  %3366 = vmatprep.subr.bf16.mxu0 0
  %3367 = vmatpush2.bf16.msra.mxu0 0
  %3368 = vmatprep.subr.bf16.mxu0 0
  %3369 = vmatpush2.bf16.msra.mxu0 0
  %3370 = vmatprep.subr.bf16.mxu0 0
  %3371 = vmatpush2.bf16.msra.mxu0 0
  %3372 = vmatprep.subr.bf16.mxu0 0
  %3373 = vmatpush2.bf16.msra.mxu0 0
  %3374 = vmatprep.subr.bf16.mxu0 0
  %3375 = vmatpush2.bf16.msra.mxu0 0
  %3376 = vmatprep.subr.bf16.mxu0 0
  %3377 = vmatpush2.bf16.msra.mxu0 0
  %3378 = vmatprep.subr.bf16.mxu0 0
  %3379 = vmatpush2.bf16.msra.mxu0 0
  %3380 = vmatprep.subr.bf16.mxu0 0
  %3381 = vmatpush2.bf16.msra.mxu0 0
  %3382 = vmatprep.mubr.bf16.mxu0 0
  %3383 = vmatmul.mubr.bf16.gmra.mxu0 %v3348
  %v3384 = vpop.f32.mrf.mxu0
  %v3385 = vadd.f32 %v1568, %v3384
  %v3386 = vpop.f32.mrf.mxu0
  %v3387 = vpop.f32.mrf.mxu0
  %v3388 = vpop.f32.mrf.mxu0
  %3389 = vdwg.mxu0
  %v3390 = vmul.f32 %v3385, 0.5
  %v3391 = vtanh.pop %v3390
  %v3392 = vmul.f32 %v3391, 0.5
  %v3393 = vadd.f32 %v3392, 0.5
  %v3394 = vtanh.pop %v3385
  %v3395 = vmul.f32 %v3393, %v3254
  %3397 = vrot.lane.b32.xlu0 %v3394, 64
  %v3398 = vpop.permute.xlu0 %3397
  %v3400 = vmul.f32 %v3393, %v3398
  %3402 = vrot.lane.b32.xlu0 %v3400, 32
  %v3403 = vpop.permute.xlu0 %3402
  %v3405 = vadd.f32 %v3395, %v3403
  %v3406 = vtanh.pop %v3405
  %3408 = vrot.lane.b32.xlu0 %v3406, 64
  %v3409 = vpop.permute.xlu0 %3408
  %v3411 = vmul.f32 %v3393, %v3409
  %3413 = vrot.lane.b32.xlu0 %v3411, 32
  %v3414 = vpop.permute.xlu0 %3413
  %s3416 = scalar_lea.vmem [#allocation3], 88
  %3417 = vst.msk [vmem:[%s3416] sm:$0xff] %vm210, %v3414
  %v3418 = vld [vmem:[#allocation2 + $0x60] sm:$0xff]
  %v3419 = vpack.c.bf16 %v3337, %v3337
  %3421 = vrot.lane.b32.xlu0 %v3419, 32
  %v3422 = vpop.permute.xlu0 %3421
  %v3424 = vsel %vm210, %v3422, 0
  %3426 = vmatprep.subr.bf16.mxu0 0
  %3427 = vmatpush1.bf16.msra.mxu0 0
  %3428 = vmatprep.subr.bf16.mxu0 0
  %3429 = vmatpush1.bf16.msra.mxu0 0
  %3430 = vmatprep.subr.bf16.mxu0 0
  %3431 = vmatpush1.bf16.msra.mxu0 0
  %3432 = vmatprep.subr.bf16.mxu0 0
  %3433 = vmatpush1.bf16.msra.mxu0 0
  %3434 = vmatprep.subr.bf16.mxu0 0
  %3435 = vmatpush1.bf16.msra.mxu0 0
  %3436 = vmatprep.subr.bf16.mxu0 0
  %3437 = vmatpush1.bf16.msra.mxu0 0
  %3438 = vmatprep.subr.bf16.mxu0 0
  %3439 = vmatpush1.bf16.msra.mxu0 %v1584
  %3440 = vmatprep.subr.bf16.mxu0 0
  %3441 = vmatpush1.bf16.msra.mxu0 %v1583
  %3442 = vmatprep.subr.bf16.mxu0 0
  %3443 = vmatpush2.bf16.msra.mxu0 0
  %3444 = vmatprep.subr.bf16.mxu0 0
  %3445 = vmatpush2.bf16.msra.mxu0 0
  %3446 = vmatprep.subr.bf16.mxu0 0
  %3447 = vmatpush2.bf16.msra.mxu0 0
  %3448 = vmatprep.subr.bf16.mxu0 0
  %3449 = vmatpush2.bf16.msra.mxu0 0
  %3450 = vmatprep.subr.bf16.mxu0 0
  %3451 = vmatpush2.bf16.msra.mxu0 0
  %3452 = vmatprep.subr.bf16.mxu0 0
  %3453 = vmatpush2.bf16.msra.mxu0 0
  %3454 = vmatprep.subr.bf16.mxu0 0
  %3455 = vmatpush2.bf16.msra.mxu0 0
  %3456 = vmatprep.subr.bf16.mxu0 0
  %3457 = vmatpush2.bf16.msra.mxu0 0
  %3458 = vmatprep.mubr.bf16.mxu0 0
  %3459 = vmatmul.mubr.bf16.gmra.mxu0 %v3424
  %v3460 = vpop.f32.mrf.mxu0
  %v3461 = vadd.f32 0.0, %v3460
  %v3462 = vpop.f32.mrf.mxu0
  %v3463 = vpop.f32.mrf.mxu0
  %v3464 = vpop.f32.mrf.mxu0
  %3465 = vdwg.mxu0
  %v3466 = vadd.f32 %v3418, %v3461
  %v3467 = vmul.f32 %v3466, 0.5
  %v3468 = vtanh.pop %v3467
  %v3469 = vmul.f32 %v3468, 0.5
  %v3470 = vadd.f32 %v3469, 0.5
  %v3471 = vtanh.pop %v3466
  %v3472 = vmul.f32 %v3470, %v3331
  %3474 = vrot.lane.b32.xlu0 %v3471, 64
  %v3475 = vpop.permute.xlu0 %3474
  %v3477 = vmul.f32 %v3470, %v3475
  %3479 = vrot.lane.b32.xlu0 %v3477, 32
  %v3480 = vpop.permute.xlu0 %3479
  %v3482 = vadd.f32 %v3472, %v3480
  %v3483 = vtanh.pop %v3482
  %3485 = vrot.lane.b32.xlu0 %v3483, 64
  %v3486 = vpop.permute.xlu0 %3485
  %v3488 = vmul.f32 %v3470, %v3486
  %3490 = vrot.lane.b32.xlu0 %v3488, 32
  %v3491 = vpop.permute.xlu0 %3490
  %3493 = vrot.lane.b32.xlu0 %v3411, 64
  %v3494 = vpop.permute.xlu0 %3493
  %v3496 = vsel %vm210, %v3491, %v3494
  %v3497 = vpack.c.bf16 %v3496, %v3496
  %v3499 = vsel %vm307, %v3497, 0
  %3501 = vmatprep.subr.bf16.mxu0 0
  %3502 = vmatpush1.bf16.msra.mxu0 0
  %3503 = vmatprep.subr.bf16.mxu0 0
  %3504 = vmatpush1.bf16.msra.mxu0 0
  %3505 = vmatprep.subr.bf16.mxu0 0
  %3506 = vmatpush1.bf16.msra.mxu0 0
  %3507 = vmatprep.subr.bf16.mxu0 0
  %3508 = vmatpush1.bf16.msra.mxu0 0
  %3509 = vmatprep.subr.bf16.mxu0 0
  %3510 = vmatpush1.bf16.msra.mxu0 %v1682
  %3511 = vmatprep.subr.bf16.mxu0 0
  %3512 = vmatpush1.bf16.msra.mxu0 %v1681
  %3513 = vmatprep.subr.bf16.mxu0 0
  %3514 = vmatpush1.bf16.msra.mxu0 %v1680
  %3515 = vmatprep.subr.bf16.mxu0 0
  %3516 = vmatpush1.bf16.msra.mxu0 %v1679
  %3517 = vmatprep.subr.bf16.mxu0 0
  %3518 = vmatpush2.bf16.msra.mxu0 0
  %3519 = vmatprep.subr.bf16.mxu0 0
  %3520 = vmatpush2.bf16.msra.mxu0 0
  %3521 = vmatprep.subr.bf16.mxu0 0
  %3522 = vmatpush2.bf16.msra.mxu0 0
  %3523 = vmatprep.subr.bf16.mxu0 0
  %3524 = vmatpush2.bf16.msra.mxu0 0
  %3525 = vmatprep.subr.bf16.mxu0 0
  %3526 = vmatpush2.bf16.msra.mxu0 0
  %3527 = vmatprep.subr.bf16.mxu0 0
  %3528 = vmatpush2.bf16.msra.mxu0 0
  %3529 = vmatprep.subr.bf16.mxu0 0
  %3530 = vmatpush2.bf16.msra.mxu0 0
  %3531 = vmatprep.subr.bf16.mxu0 0
  %3532 = vmatpush2.bf16.msra.mxu0 0
  %3533 = vmatprep.mubr.bf16.mxu0 0
  %3534 = vmatmul.mubr.bf16.gmra.mxu0 %v3499
  %v3535 = vpop.f32.mrf.mxu0
  %v3536 = vadd.f32 %v1568, %v3535
  %v3537 = vpop.f32.mrf.mxu0
  %v3538 = vpop.f32.mrf.mxu0
  %v3539 = vpop.f32.mrf.mxu0
  %3540 = vdwg.mxu0
  %v3541 = vmul.f32 %v3536, 0.5
  %v3542 = vtanh.pop %v3541
  %v3543 = vmul.f32 %v3542, 0.5
  %v3544 = vadd.f32 %v3543, 0.5
  %v3545 = vtanh.pop %v3536
  %v3546 = vmul.f32 %v3544, %v3405
  %3548 = vrot.lane.b32.xlu0 %v3545, 64
  %v3549 = vpop.permute.xlu0 %3548
  %v3551 = vmul.f32 %v3544, %v3549
  %3553 = vrot.lane.b32.xlu0 %v3551, 32
  %v3554 = vpop.permute.xlu0 %3553
  %v3556 = vadd.f32 %v3546, %v3554
  %v3557 = vtanh.pop %v3556
  %3559 = vrot.lane.b32.xlu0 %v3557, 64
  %v3560 = vpop.permute.xlu0 %3559
  %v3562 = vmul.f32 %v3544, %v3560
  %3564 = vrot.lane.b32.xlu0 %v3562, 32
  %v3565 = vpop.permute.xlu0 %3564
  %s3567 = scalar_lea.vmem [#allocation3], 96
  %3568 = vst.msk [vmem:[%s3567] sm:$0xff] %vm210, %v3565
  %v3569 = vld [vmem:[#allocation2 + $0x68] sm:$0xff]
  %v3570 = vpack.c.bf16 %v3488, %v3488
  %3572 = vrot.lane.b32.xlu0 %v3570, 32
  %v3573 = vpop.permute.xlu0 %3572
  %v3575 = vsel %vm210, %v3573, 0
  %3577 = vmatprep.subr.bf16.mxu0 0
  %3578 = vmatpush1.bf16.msra.mxu0 0
  %3579 = vmatprep.subr.bf16.mxu0 0
  %3580 = vmatpush1.bf16.msra.mxu0 0
  %3581 = vmatprep.subr.bf16.mxu0 0
  %3582 = vmatpush1.bf16.msra.mxu0 0
  %3583 = vmatprep.subr.bf16.mxu0 0
  %3584 = vmatpush1.bf16.msra.mxu0 0
  %3585 = vmatprep.subr.bf16.mxu0 0
  %3586 = vmatpush1.bf16.msra.mxu0 0
  %3587 = vmatprep.subr.bf16.mxu0 0
  %3588 = vmatpush1.bf16.msra.mxu0 0
  %3589 = vmatprep.subr.bf16.mxu0 0
  %3590 = vmatpush1.bf16.msra.mxu0 %v1584
  %3591 = vmatprep.subr.bf16.mxu0 0
  %3592 = vmatpush1.bf16.msra.mxu0 %v1583
  %3593 = vmatprep.subr.bf16.mxu0 0
  %3594 = vmatpush2.bf16.msra.mxu0 0
  %3595 = vmatprep.subr.bf16.mxu0 0
  %3596 = vmatpush2.bf16.msra.mxu0 0
  %3597 = vmatprep.subr.bf16.mxu0 0
  %3598 = vmatpush2.bf16.msra.mxu0 0
  %3599 = vmatprep.subr.bf16.mxu0 0
  %3600 = vmatpush2.bf16.msra.mxu0 0
  %3601 = vmatprep.subr.bf16.mxu0 0
  %3602 = vmatpush2.bf16.msra.mxu0 0
  %3603 = vmatprep.subr.bf16.mxu0 0
  %3604 = vmatpush2.bf16.msra.mxu0 0
  %3605 = vmatprep.subr.bf16.mxu0 0
  %3606 = vmatpush2.bf16.msra.mxu0 0
  %3607 = vmatprep.subr.bf16.mxu0 0
  %3608 = vmatpush2.bf16.msra.mxu0 0
  %3609 = vmatprep.mubr.bf16.mxu0 0
  %3610 = vmatmul.mubr.bf16.gmra.mxu0 %v3575
  %v3611 = vpop.f32.mrf.mxu0
  %v3612 = vadd.f32 0.0, %v3611
  %v3613 = vpop.f32.mrf.mxu0
  %v3614 = vpop.f32.mrf.mxu0
  %v3615 = vpop.f32.mrf.mxu0
  %3616 = vdwg.mxu0
  %v3617 = vadd.f32 %v3569, %v3612
  %v3618 = vmul.f32 %v3617, 0.5
  %v3619 = vtanh.pop %v3618
  %v3620 = vmul.f32 %v3619, 0.5
  %v3621 = vadd.f32 %v3620, 0.5
  %v3622 = vtanh.pop %v3617
  %v3623 = vmul.f32 %v3621, %v3482
  %3625 = vrot.lane.b32.xlu0 %v3622, 64
  %v3626 = vpop.permute.xlu0 %3625
  %v3628 = vmul.f32 %v3621, %v3626
  %3630 = vrot.lane.b32.xlu0 %v3628, 32
  %v3631 = vpop.permute.xlu0 %3630
  %v3633 = vadd.f32 %v3623, %v3631
  %v3634 = vtanh.pop %v3633
  %3636 = vrot.lane.b32.xlu0 %v3634, 64
  %v3637 = vpop.permute.xlu0 %3636
  %v3639 = vmul.f32 %v3621, %v3637
  %3641 = vrot.lane.b32.xlu0 %v3639, 32
  %v3642 = vpop.permute.xlu0 %3641
  %3644 = vrot.lane.b32.xlu0 %v3562, 64
  %v3645 = vpop.permute.xlu0 %3644
  %v3647 = vsel %vm210, %v3642, %v3645
  %v3648 = vpack.c.bf16 %v3647, %v3647
  %v3650 = vsel %vm307, %v3648, 0
  %3652 = vmatprep.subr.bf16.mxu0 0
  %3653 = vmatpush1.bf16.msra.mxu0 0
  %3654 = vmatprep.subr.bf16.mxu0 0
  %3655 = vmatpush1.bf16.msra.mxu0 0
  %3656 = vmatprep.subr.bf16.mxu0 0
  %3657 = vmatpush1.bf16.msra.mxu0 0
  %3658 = vmatprep.subr.bf16.mxu0 0
  %3659 = vmatpush1.bf16.msra.mxu0 0
  %3660 = vmatprep.subr.bf16.mxu0 0
  %3661 = vmatpush1.bf16.msra.mxu0 %v1682
  %3662 = vmatprep.subr.bf16.mxu0 0
  %3663 = vmatpush1.bf16.msra.mxu0 %v1681
  %3664 = vmatprep.subr.bf16.mxu0 0
  %3665 = vmatpush1.bf16.msra.mxu0 %v1680
  %3666 = vmatprep.subr.bf16.mxu0 0
  %3667 = vmatpush1.bf16.msra.mxu0 %v1679
  %3668 = vmatprep.subr.bf16.mxu0 0
  %3669 = vmatpush2.bf16.msra.mxu0 0
  %3670 = vmatprep.subr.bf16.mxu0 0
  %3671 = vmatpush2.bf16.msra.mxu0 0
  %3672 = vmatprep.subr.bf16.mxu0 0
  %3673 = vmatpush2.bf16.msra.mxu0 0
  %3674 = vmatprep.subr.bf16.mxu0 0
  %3675 = vmatpush2.bf16.msra.mxu0 0
  %3676 = vmatprep.subr.bf16.mxu0 0
  %3677 = vmatpush2.bf16.msra.mxu0 0
  %3678 = vmatprep.subr.bf16.mxu0 0
  %3679 = vmatpush2.bf16.msra.mxu0 0
  %3680 = vmatprep.subr.bf16.mxu0 0
  %3681 = vmatpush2.bf16.msra.mxu0 0
  %3682 = vmatprep.subr.bf16.mxu0 0
  %3683 = vmatpush2.bf16.msra.mxu0 0
  %3684 = vmatprep.mubr.bf16.mxu0 0
  %3685 = vmatmul.mubr.bf16.gmra.mxu0 %v3650
  %v3686 = vpop.f32.mrf.mxu0
  %v3687 = vadd.f32 %v1568, %v3686
  %v3688 = vpop.f32.mrf.mxu0
  %v3689 = vpop.f32.mrf.mxu0
  %v3690 = vpop.f32.mrf.mxu0
  %3691 = vdwg.mxu0
  %v3692 = vmul.f32 %v3687, 0.5
  %v3693 = vtanh.pop %v3692
  %v3694 = vmul.f32 %v3693, 0.5
  %v3695 = vadd.f32 %v3694, 0.5
  %v3696 = vtanh.pop %v3687
  %v3697 = vmul.f32 %v3695, %v3556
  %3699 = vrot.lane.b32.xlu0 %v3696, 64
  %v3700 = vpop.permute.xlu0 %3699
  %v3702 = vmul.f32 %v3695, %v3700
  %3704 = vrot.lane.b32.xlu0 %v3702, 32
  %v3705 = vpop.permute.xlu0 %3704
  %v3707 = vadd.f32 %v3697, %v3705
  %v3708 = vtanh.pop %v3707
  %3710 = vrot.lane.b32.xlu0 %v3708, 64
  %v3711 = vpop.permute.xlu0 %3710
  %v3713 = vmul.f32 %v3695, %v3711
  %3715 = vrot.lane.b32.xlu0 %v3713, 32
  %v3716 = vpop.permute.xlu0 %3715
  %s3718 = scalar_lea.vmem [#allocation3], 104
  %3719 = vst.msk [vmem:[%s3718] sm:$0xff] %vm210, %v3716
  %v3720 = vld [vmem:[%s13] sm:$0xf]
  %v3721 = vld [vmem:[%s14] sm:$0xf]
  %v3722 = vld [vmem:[%s14 + $0x4] sm:$0xf]
  %v3723 = vld [vmem:[%s14 + $0x8] sm:$0xf]
  %v3724 = vld [vmem:[%s14 + $0xc] sm:$0xf]
  %v3725 = vld [vmem:[%s2] sm:$0xff]
  %v3726 = vld [vmem:[%s2 + $0x8] sm:$0xff]
  %v3727 = vld [vmem:[%s2 + $0x10] sm:$0xff]
  %v3728 = vld [vmem:[%s2 + $0x18] sm:$0xff]
  %v3729 = vld [vmem:[%s2 + $0x20] sm:$0xff]
  %v3730 = vld [vmem:[%s2 + $0x28] sm:$0xff]
  %v3731 = vpack.c.bf16 %v3726, %v3725
  %v3732 = vpack.c.bf16 %v3728, %v3727
  %v3733 = vpack.c.bf16 %v3730, %v3729
  %v3734 = vld [vmem:[%s15] sm:$0x1]
  %v3736 = vlaneseq
  %v3737 = vshrl.u32 %v3736, 7
  %v3738 = vsub.s32 0, %v3737
  %v3739 = vrot.slane %v3734, %v3738
  %v3742 = vsel %vm92, %v3731, 0
  %v3745 = vsel %vm92, %v3732, 0
  %v3748 = vsel %vm92, %v3733, 0
  %v3751 = vsel %vm105, %v3720, 0
  %3753 = vmatprep.subr.bf16.mxu0 0
  %3754 = vmatpush1.bf16.msra.mxu0 0
  %3755 = vmatprep.subr.bf16.mxu0 0
  %3756 = vmatpush1.bf16.msra.mxu0 0
  %3757 = vmatprep.subr.bf16.mxu0 0
  %3758 = vmatpush1.bf16.msra.mxu0 0
  %3759 = vmatprep.subr.bf16.mxu0 0
  %3760 = vmatpush1.bf16.msra.mxu0 0
  %3761 = vmatprep.subr.bf16.mxu0 0
  %3762 = vmatpush1.bf16.msra.mxu0 0
  %3763 = vmatprep.subr.bf16.mxu0 0
  %3764 = vmatpush1.bf16.msra.mxu0 0
  %3765 = vmatprep.subr.bf16.mxu0 0
  %3766 = vmatpush1.bf16.msra.mxu0 0
  %3767 = vmatprep.subr.bf16.mxu0 0
  %3768 = vmatpush1.bf16.msra.mxu0 %v3751
  %3769 = vmatprep.subr.bf16.mxu0 0
  %3770 = vmatpush2.bf16.msra.mxu0 0
  %3771 = vmatprep.subr.bf16.mxu0 0
  %3772 = vmatpush2.bf16.msra.mxu0 0
  %3773 = vmatprep.subr.bf16.mxu0 0
  %3774 = vmatpush2.bf16.msra.mxu0 0
  %3775 = vmatprep.subr.bf16.mxu0 0
  %3776 = vmatpush2.bf16.msra.mxu0 0
  %3777 = vmatprep.subr.bf16.mxu0 0
  %3778 = vmatpush2.bf16.msra.mxu0 0
  %3779 = vmatprep.subr.bf16.mxu0 0
  %3780 = vmatpush2.bf16.msra.mxu0 0
  %3781 = vmatprep.subr.bf16.mxu0 0
  %3782 = vmatpush2.bf16.msra.mxu0 0
  %3783 = vmatprep.subr.bf16.mxu0 0
  %3784 = vmatpush2.bf16.msra.mxu0 0
  %3785 = vmatprep.mubr.bf16.mxu0 0
  %3786 = vmatmul.mubr.bf16.gmra.mxu0 %v3742
  %v3787 = vpop.f32.mrf.mxu0
  %v3788 = vadd.f32 %v3739, %v3787
  %v3789 = vpop.f32.mrf.mxu0
  %v3790 = vpop.f32.mrf.mxu0
  %v3791 = vadd.f32 %v3739, %v3790
  %v3792 = vpop.f32.mrf.mxu0
  %3793 = vmatprep.mubr.bf16.mxu0 0
  %3794 = vmatmul.mubr.bf16.gmra.mxu0 %v3745
  %v3795 = vpop.f32.mrf.mxu0
  %v3796 = vadd.f32 %v3739, %v3795
  %v3797 = vpop.f32.mrf.mxu0
  %v3798 = vpop.f32.mrf.mxu0
  %v3799 = vadd.f32 %v3739, %v3798
  %v3800 = vpop.f32.mrf.mxu0
  %3801 = vmatprep.mubr.bf16.mxu0 0
  %3802 = vmatmul.mubr.bf16.gmra.mxu0 %v3748
  %v3803 = vpop.f32.mrf.mxu0
  %v3804 = vadd.f32 %v3739, %v3803
  %v3805 = vpop.f32.mrf.mxu0
  %v3806 = vpop.f32.mrf.mxu0
  %v3807 = vadd.f32 %v3739, %v3806
  %v3808 = vpop.f32.mrf.mxu0
  %3809 = vdwg.mxu0
  %3810 = vst [vmem:[#allocation2] sm:$0xff] %v3788
  %3811 = vst [vmem:[#allocation2 + $0x8] sm:$0xff] %v3791
  %3812 = vst [vmem:[#allocation2 + $0x10] sm:$0xff] %v3796
  %3813 = vst [vmem:[#allocation2 + $0x18] sm:$0xff] %v3799
  %3814 = vst [vmem:[#allocation2 + $0x20] sm:$0xff] %v3804
  %3815 = vst [vmem:[#allocation2 + $0x28] sm:$0xff] %v3807
  %v3816 = vld [vmem:[%s16] sm:$0xf]
  %v3817 = vld [vmem:[%s16 + $0x4] sm:$0xf]
  %v3818 = vld [vmem:[%s16 + $0x8] sm:$0xf]
  %v3819 = vld [vmem:[%s16 + $0xc] sm:$0xf]
  %v3820 = vld [vmem:[%s16 + $0x10] sm:$0xf]
  %v3821 = vld [vmem:[%s16 + $0x14] sm:$0xf]
  %v3822 = vld [vmem:[%s16 + $0x18] sm:$0xf]
  %v3823 = vld [vmem:[%s16 + $0x1c] sm:$0xf]
  %v3824 = vld [vmem:[%s17] sm:$0x1]
  %v3826 = vlaneseq
  %v3827 = vshrl.u32 %v3826, 7
  %v3828 = vsub.s32 0, %v3827
  %v3829 = vrot.slane %v3824, %v3828
  %v3831 = vld [vmem:[#allocation2] sm:$0xff]
  %v3832 = vpack.c.bf16 %v3639, %v3639
  %3834 = vrot.lane.b32.xlu0 %v3832, 32
  %v3835 = vpop.permute.xlu0 %3834
  %v3840 = vunpack.c.l.b16 %v3721
  %v3841 = vunpack.c.l.b16 %v3722
  %v3842 = vunpack.c.l.b16 %v3723
  %v3843 = vunpack.c.l.b16 %v3724
  %v3844 = vpack.c.b16 %v3841, %v3840
  %v3845 = vpack.c.b16 %v3843, %v3842
  %v3849 = vsel %vm210, %v3835, 0
  %3851 = vmatprep.subr.bf16.mxu0 0
  %3852 = vmatpush1.bf16.msra.mxu0 0
  %3853 = vmatprep.subr.bf16.mxu0 0
  %3854 = vmatpush1.bf16.msra.mxu0 0
  %3855 = vmatprep.subr.bf16.mxu0 0
  %3856 = vmatpush1.bf16.msra.mxu0 0
  %3857 = vmatprep.subr.bf16.mxu0 0
  %3858 = vmatpush1.bf16.msra.mxu0 0
  %3859 = vmatprep.subr.bf16.mxu0 0
  %3860 = vmatpush1.bf16.msra.mxu0 0
  %3861 = vmatprep.subr.bf16.mxu0 0
  %3862 = vmatpush1.bf16.msra.mxu0 0
  %3863 = vmatprep.subr.bf16.mxu0 0
  %3864 = vmatpush1.bf16.msra.mxu0 %v3845
  %3865 = vmatprep.subr.bf16.mxu0 0
  %3866 = vmatpush1.bf16.msra.mxu0 %v3844
  %3867 = vmatprep.subr.bf16.mxu0 0
  %3868 = vmatpush2.bf16.msra.mxu0 0
  %3869 = vmatprep.subr.bf16.mxu0 0
  %3870 = vmatpush2.bf16.msra.mxu0 0
  %3871 = vmatprep.subr.bf16.mxu0 0
  %3872 = vmatpush2.bf16.msra.mxu0 0
  %3873 = vmatprep.subr.bf16.mxu0 0
  %3874 = vmatpush2.bf16.msra.mxu0 0
  %3875 = vmatprep.subr.bf16.mxu0 0
  %3876 = vmatpush2.bf16.msra.mxu0 0
  %3877 = vmatprep.subr.bf16.mxu0 0
  %3878 = vmatpush2.bf16.msra.mxu0 0
  %3879 = vmatprep.subr.bf16.mxu0 0
  %3880 = vmatpush2.bf16.msra.mxu0 0
  %3881 = vmatprep.subr.bf16.mxu0 0
  %3882 = vmatpush2.bf16.msra.mxu0 0
  %3883 = vmatprep.mubr.bf16.mxu0 0
  %3884 = vmatmul.mubr.bf16.gmra.mxu0 %v3849
  %v3885 = vpop.f32.mrf.mxu0
  %v3886 = vadd.f32 0.0, %v3885
  %v3887 = vpop.f32.mrf.mxu0
  %v3888 = vpop.f32.mrf.mxu0
  %v3889 = vpop.f32.mrf.mxu0
  %3890 = vdwg.mxu0
  %v3891 = vadd.f32 %v3831, %v3886
  %v3892 = vmul.f32 %v3891, 0.5
  %v3893 = vtanh.pop %v3892
  %v3894 = vmul.f32 %v3893, 0.5
  %v3895 = vadd.f32 %v3894, 0.5
  %v3896 = vtanh.pop %v3891
  %v3897 = vmul.f32 %v3895, %v3633
  %3899 = vrot.lane.b32.xlu0 %v3896, 64
  %v3900 = vpop.permute.xlu0 %3899
  %v3902 = vmul.f32 %v3895, %v3900
  %3904 = vrot.lane.b32.xlu0 %v3902, 32
  %v3905 = vpop.permute.xlu0 %3904
  %v3907 = vadd.f32 %v3897, %v3905
  %v3908 = vtanh.pop %v3907
  %3910 = vrot.lane.b32.xlu0 %v3908, 64
  %v3911 = vpop.permute.xlu0 %3910
  %v3913 = vmul.f32 %v3895, %v3911
  %3915 = vrot.lane.b32.xlu0 %v3913, 32
  %v3916 = vpop.permute.xlu0 %3915
  %3918 = vrot.lane.b32.xlu0 %v3713, 64
  %v3919 = vpop.permute.xlu0 %3918
  %v3921 = vsel %vm210, %v3916, %v3919
  %v3922 = vpack.c.bf16 %v3921, %v3921
  %v3931 = vunpack.c.l.b16 %v3816
  %v3932 = vunpack.c.l.b16 %v3817
  %v3933 = vunpack.c.l.b16 %v3818
  %v3934 = vunpack.c.l.b16 %v3819
  %v3935 = vunpack.c.l.b16 %v3820
  %v3936 = vunpack.c.l.b16 %v3821
  %v3937 = vunpack.c.l.b16 %v3822
  %v3938 = vunpack.c.l.b16 %v3823
  %v3939 = vpack.c.b16 %v3932, %v3931
  %v3940 = vpack.c.b16 %v3934, %v3933
  %v3941 = vpack.c.b16 %v3936, %v3935
  %v3942 = vpack.c.b16 %v3938, %v3937
  %v3948 = vsel %vm307, %v3922, 0
  %3950 = vmatprep.subr.bf16.mxu0 0
  %3951 = vmatpush1.bf16.msra.mxu0 0
  %3952 = vmatprep.subr.bf16.mxu0 0
  %3953 = vmatpush1.bf16.msra.mxu0 0
  %3954 = vmatprep.subr.bf16.mxu0 0
  %3955 = vmatpush1.bf16.msra.mxu0 0
  %3956 = vmatprep.subr.bf16.mxu0 0
  %3957 = vmatpush1.bf16.msra.mxu0 0
  %3958 = vmatprep.subr.bf16.mxu0 0
  %3959 = vmatpush1.bf16.msra.mxu0 %v3942
  %3960 = vmatprep.subr.bf16.mxu0 0
  %3961 = vmatpush1.bf16.msra.mxu0 %v3941
  %3962 = vmatprep.subr.bf16.mxu0 0
  %3963 = vmatpush1.bf16.msra.mxu0 %v3940
  %3964 = vmatprep.subr.bf16.mxu0 0
  %3965 = vmatpush1.bf16.msra.mxu0 %v3939
  %3966 = vmatprep.subr.bf16.mxu0 0
  %3967 = vmatpush2.bf16.msra.mxu0 0
  %3968 = vmatprep.subr.bf16.mxu0 0
  %3969 = vmatpush2.bf16.msra.mxu0 0
  %3970 = vmatprep.subr.bf16.mxu0 0
  %3971 = vmatpush2.bf16.msra.mxu0 0
  %3972 = vmatprep.subr.bf16.mxu0 0
  %3973 = vmatpush2.bf16.msra.mxu0 0
  %3974 = vmatprep.subr.bf16.mxu0 0
  %3975 = vmatpush2.bf16.msra.mxu0 0
  %3976 = vmatprep.subr.bf16.mxu0 0
  %3977 = vmatpush2.bf16.msra.mxu0 0
  %3978 = vmatprep.subr.bf16.mxu0 0
  %3979 = vmatpush2.bf16.msra.mxu0 0
  %3980 = vmatprep.subr.bf16.mxu0 0
  %3981 = vmatpush2.bf16.msra.mxu0 0
  %3982 = vmatprep.mubr.bf16.mxu0 0
  %3983 = vmatmul.mubr.bf16.gmra.mxu0 %v3948
  %v3984 = vpop.f32.mrf.mxu0
  %v3985 = vadd.f32 %v3829, %v3984
  %v3986 = vpop.f32.mrf.mxu0
  %v3987 = vpop.f32.mrf.mxu0
  %v3988 = vpop.f32.mrf.mxu0
  %3989 = vdwg.mxu0
  %v3990 = vmul.f32 %v3985, 0.5
  %v3991 = vtanh.pop %v3990
  %v3992 = vmul.f32 %v3991, 0.5
  %v3993 = vadd.f32 %v3992, 0.5
  %v3994 = vtanh.pop %v3985
  %v3995 = vmul.f32 %v3993, %v3707
  %3997 = vrot.lane.b32.xlu0 %v3994, 64
  %v3998 = vpop.permute.xlu0 %3997
  %v4000 = vmul.f32 %v3993, %v3998
  %4002 = vrot.lane.b32.xlu0 %v4000, 32
  %v4003 = vpop.permute.xlu0 %4002
  %v4005 = vadd.f32 %v3995, %v4003
  %v4006 = vtanh.pop %v4005
  %4008 = vrot.lane.b32.xlu0 %v4006, 64
  %v4009 = vpop.permute.xlu0 %4008
  %v4011 = vmul.f32 %v3993, %v4009
  %4013 = vrot.lane.b32.xlu0 %v4011, 32
  %v4014 = vpop.permute.xlu0 %4013
  %s4016 = scalar_lea.vmem [#allocation3], 112
  %4017 = vst.msk [vmem:[%s4016] sm:$0xff] %vm210, %v4014
  %v4018 = vld [vmem:[#allocation2 + $0x8] sm:$0xff]
  %v4019 = vpack.c.bf16 %v3913, %v3913
  %4021 = vrot.lane.b32.xlu0 %v4019, 32
  %v4022 = vpop.permute.xlu0 %4021
  %v4024 = vsel %vm210, %v4022, 0
  %4026 = vmatprep.subr.bf16.mxu0 0
  %4027 = vmatpush1.bf16.msra.mxu0 0
  %4028 = vmatprep.subr.bf16.mxu0 0
  %4029 = vmatpush1.bf16.msra.mxu0 0
  %4030 = vmatprep.subr.bf16.mxu0 0
  %4031 = vmatpush1.bf16.msra.mxu0 0
  %4032 = vmatprep.subr.bf16.mxu0 0
  %4033 = vmatpush1.bf16.msra.mxu0 0
  %4034 = vmatprep.subr.bf16.mxu0 0
  %4035 = vmatpush1.bf16.msra.mxu0 0
  %4036 = vmatprep.subr.bf16.mxu0 0
  %4037 = vmatpush1.bf16.msra.mxu0 0
  %4038 = vmatprep.subr.bf16.mxu0 0
  %4039 = vmatpush1.bf16.msra.mxu0 %v3845
  %4040 = vmatprep.subr.bf16.mxu0 0
  %4041 = vmatpush1.bf16.msra.mxu0 %v3844
  %4042 = vmatprep.subr.bf16.mxu0 0
  %4043 = vmatpush2.bf16.msra.mxu0 0
  %4044 = vmatprep.subr.bf16.mxu0 0
  %4045 = vmatpush2.bf16.msra.mxu0 0
  %4046 = vmatprep.subr.bf16.mxu0 0
  %4047 = vmatpush2.bf16.msra.mxu0 0
  %4048 = vmatprep.subr.bf16.mxu0 0
  %4049 = vmatpush2.bf16.msra.mxu0 0
  %4050 = vmatprep.subr.bf16.mxu0 0
  %4051 = vmatpush2.bf16.msra.mxu0 0
  %4052 = vmatprep.subr.bf16.mxu0 0
  %4053 = vmatpush2.bf16.msra.mxu0 0
  %4054 = vmatprep.subr.bf16.mxu0 0
  %4055 = vmatpush2.bf16.msra.mxu0 0
  %4056 = vmatprep.subr.bf16.mxu0 0
  %4057 = vmatpush2.bf16.msra.mxu0 0
  %4058 = vmatprep.mubr.bf16.mxu0 0
  %4059 = vmatmul.mubr.bf16.gmra.mxu0 %v4024
  %v4060 = vpop.f32.mrf.mxu0
  %v4061 = vadd.f32 0.0, %v4060
  %v4062 = vpop.f32.mrf.mxu0
  %v4063 = vpop.f32.mrf.mxu0
  %v4064 = vpop.f32.mrf.mxu0
  %4065 = vdwg.mxu0
  %v4066 = vadd.f32 %v4018, %v4061
  %v4067 = vmul.f32 %v4066, 0.5
  %v4068 = vtanh.pop %v4067
  %v4069 = vmul.f32 %v4068, 0.5
  %v4070 = vadd.f32 %v4069, 0.5
  %v4071 = vtanh.pop %v4066
  %v4072 = vmul.f32 %v4070, %v3907
  %4074 = vrot.lane.b32.xlu0 %v4071, 64
  %v4075 = vpop.permute.xlu0 %4074
  %v4077 = vmul.f32 %v4070, %v4075
  %4079 = vrot.lane.b32.xlu0 %v4077, 32
  %v4080 = vpop.permute.xlu0 %4079
  %v4082 = vadd.f32 %v4072, %v4080
  %v4083 = vtanh.pop %v4082
  %4085 = vrot.lane.b32.xlu0 %v4083, 64
  %v4086 = vpop.permute.xlu0 %4085
  %v4088 = vmul.f32 %v4070, %v4086
  %4090 = vrot.lane.b32.xlu0 %v4088, 32
  %v4091 = vpop.permute.xlu0 %4090
  %4093 = vrot.lane.b32.xlu0 %v4011, 64
  %v4094 = vpop.permute.xlu0 %4093
  %v4096 = vsel %vm210, %v4091, %v4094
  %v4097 = vpack.c.bf16 %v4096, %v4096
  %v4099 = vsel %vm307, %v4097, 0
  %4101 = vmatprep.subr.bf16.mxu0 0
  %4102 = vmatpush1.bf16.msra.mxu0 0
  %4103 = vmatprep.subr.bf16.mxu0 0
  %4104 = vmatpush1.bf16.msra.mxu0 0
  %4105 = vmatprep.subr.bf16.mxu0 0
  %4106 = vmatpush1.bf16.msra.mxu0 0
  %4107 = vmatprep.subr.bf16.mxu0 0
  %4108 = vmatpush1.bf16.msra.mxu0 0
  %4109 = vmatprep.subr.bf16.mxu0 0
  %4110 = vmatpush1.bf16.msra.mxu0 %v3942
  %4111 = vmatprep.subr.bf16.mxu0 0
  %4112 = vmatpush1.bf16.msra.mxu0 %v3941
  %4113 = vmatprep.subr.bf16.mxu0 0
  %4114 = vmatpush1.bf16.msra.mxu0 %v3940
  %4115 = vmatprep.subr.bf16.mxu0 0
  %4116 = vmatpush1.bf16.msra.mxu0 %v3939
  %4117 = vmatprep.subr.bf16.mxu0 0
  %4118 = vmatpush2.bf16.msra.mxu0 0
  %4119 = vmatprep.subr.bf16.mxu0 0
  %4120 = vmatpush2.bf16.msra.mxu0 0
  %4121 = vmatprep.subr.bf16.mxu0 0
  %4122 = vmatpush2.bf16.msra.mxu0 0
  %4123 = vmatprep.subr.bf16.mxu0 0
  %4124 = vmatpush2.bf16.msra.mxu0 0
  %4125 = vmatprep.subr.bf16.mxu0 0
  %4126 = vmatpush2.bf16.msra.mxu0 0
  %4127 = vmatprep.subr.bf16.mxu0 0
  %4128 = vmatpush2.bf16.msra.mxu0 0
  %4129 = vmatprep.subr.bf16.mxu0 0
  %4130 = vmatpush2.bf16.msra.mxu0 0
  %4131 = vmatprep.subr.bf16.mxu0 0
  %4132 = vmatpush2.bf16.msra.mxu0 0
  %4133 = vmatprep.mubr.bf16.mxu0 0
  %4134 = vmatmul.mubr.bf16.gmra.mxu0 %v4099
  %v4135 = vpop.f32.mrf.mxu0
  %v4136 = vadd.f32 %v3829, %v4135
  %v4137 = vpop.f32.mrf.mxu0
  %v4138 = vpop.f32.mrf.mxu0
  %v4139 = vpop.f32.mrf.mxu0
  %4140 = vdwg.mxu0
  %v4141 = vmul.f32 %v4136, 0.5
  %v4142 = vtanh.pop %v4141
  %v4143 = vmul.f32 %v4142, 0.5
  %v4144 = vadd.f32 %v4143, 0.5
  %v4145 = vtanh.pop %v4136
  %v4146 = vmul.f32 %v4144, %v4005
  %4148 = vrot.lane.b32.xlu0 %v4145, 64
  %v4149 = vpop.permute.xlu0 %4148
  %v4151 = vmul.f32 %v4144, %v4149
  %4153 = vrot.lane.b32.xlu0 %v4151, 32
  %v4154 = vpop.permute.xlu0 %4153
  %v4156 = vadd.f32 %v4146, %v4154
  %v4157 = vtanh.pop %v4156
  %4159 = vrot.lane.b32.xlu0 %v4157, 64
  %v4160 = vpop.permute.xlu0 %4159
  %v4162 = vmul.f32 %v4144, %v4160
  %4164 = vrot.lane.b32.xlu0 %v4162, 32
  %v4165 = vpop.permute.xlu0 %4164
  %s4167 = scalar_lea.vmem [#allocation3], 120
  %4168 = vst.msk [vmem:[%s4167] sm:$0xff] %vm210, %v4165
  %v4169 = vld [vmem:[#allocation2 + $0x10] sm:$0xff]
  %v4170 = vpack.c.bf16 %v4088, %v4088
  %4172 = vrot.lane.b32.xlu0 %v4170, 32
  %v4173 = vpop.permute.xlu0 %4172
  %v4175 = vsel %vm210, %v4173, 0
  %4177 = vmatprep.subr.bf16.mxu0 0
  %4178 = vmatpush1.bf16.msra.mxu0 0
  %4179 = vmatprep.subr.bf16.mxu0 0
  %4180 = vmatpush1.bf16.msra.mxu0 0
  %4181 = vmatprep.subr.bf16.mxu0 0
  %4182 = vmatpush1.bf16.msra.mxu0 0
  %4183 = vmatprep.subr.bf16.mxu0 0
  %4184 = vmatpush1.bf16.msra.mxu0 0
  %4185 = vmatprep.subr.bf16.mxu0 0
  %4186 = vmatpush1.bf16.msra.mxu0 0
  %4187 = vmatprep.subr.bf16.mxu0 0
  %4188 = vmatpush1.bf16.msra.mxu0 0
  %4189 = vmatprep.subr.bf16.mxu0 0
  %4190 = vmatpush1.bf16.msra.mxu0 %v3845
  %4191 = vmatprep.subr.bf16.mxu0 0
  %4192 = vmatpush1.bf16.msra.mxu0 %v3844
  %4193 = vmatprep.subr.bf16.mxu0 0
  %4194 = vmatpush2.bf16.msra.mxu0 0
  %4195 = vmatprep.subr.bf16.mxu0 0
  %4196 = vmatpush2.bf16.msra.mxu0 0
  %4197 = vmatprep.subr.bf16.mxu0 0
  %4198 = vmatpush2.bf16.msra.mxu0 0
  %4199 = vmatprep.subr.bf16.mxu0 0
  %4200 = vmatpush2.bf16.msra.mxu0 0
  %4201 = vmatprep.subr.bf16.mxu0 0
  %4202 = vmatpush2.bf16.msra.mxu0 0
  %4203 = vmatprep.subr.bf16.mxu0 0
  %4204 = vmatpush2.bf16.msra.mxu0 0
  %4205 = vmatprep.subr.bf16.mxu0 0
  %4206 = vmatpush2.bf16.msra.mxu0 0
  %4207 = vmatprep.subr.bf16.mxu0 0
  %4208 = vmatpush2.bf16.msra.mxu0 0
  %4209 = vmatprep.mubr.bf16.mxu0 0
  %4210 = vmatmul.mubr.bf16.gmra.mxu0 %v4175
  %v4211 = vpop.f32.mrf.mxu0
  %v4212 = vadd.f32 0.0, %v4211
  %v4213 = vpop.f32.mrf.mxu0
  %v4214 = vpop.f32.mrf.mxu0
  %v4215 = vpop.f32.mrf.mxu0
  %4216 = vdwg.mxu0
  %v4217 = vadd.f32 %v4169, %v4212
  %v4218 = vmul.f32 %v4217, 0.5
  %v4219 = vtanh.pop %v4218
  %v4220 = vmul.f32 %v4219, 0.5
  %v4221 = vadd.f32 %v4220, 0.5
  %v4222 = vtanh.pop %v4217
  %v4223 = vmul.f32 %v4221, %v4082
  %4225 = vrot.lane.b32.xlu0 %v4222, 64
  %v4226 = vpop.permute.xlu0 %4225
  %v4228 = vmul.f32 %v4221, %v4226
  %4230 = vrot.lane.b32.xlu0 %v4228, 32
  %v4231 = vpop.permute.xlu0 %4230
  %v4233 = vadd.f32 %v4223, %v4231
  %v4234 = vtanh.pop %v4233
  %4236 = vrot.lane.b32.xlu0 %v4234, 64
  %v4237 = vpop.permute.xlu0 %4236
  %v4239 = vmul.f32 %v4221, %v4237
  %4241 = vrot.lane.b32.xlu0 %v4239, 32
  %v4242 = vpop.permute.xlu0 %4241
  %4244 = vrot.lane.b32.xlu0 %v4162, 64
  %v4245 = vpop.permute.xlu0 %4244
  %v4247 = vsel %vm210, %v4242, %v4245
  %v4248 = vpack.c.bf16 %v4247, %v4247
  %v4250 = vsel %vm307, %v4248, 0
  %4252 = vmatprep.subr.bf16.mxu0 0
  %4253 = vmatpush1.bf16.msra.mxu0 0
  %4254 = vmatprep.subr.bf16.mxu0 0
  %4255 = vmatpush1.bf16.msra.mxu0 0
  %4256 = vmatprep.subr.bf16.mxu0 0
  %4257 = vmatpush1.bf16.msra.mxu0 0
  %4258 = vmatprep.subr.bf16.mxu0 0
  %4259 = vmatpush1.bf16.msra.mxu0 0
  %4260 = vmatprep.subr.bf16.mxu0 0
  %4261 = vmatpush1.bf16.msra.mxu0 %v3942
  %4262 = vmatprep.subr.bf16.mxu0 0
  %4263 = vmatpush1.bf16.msra.mxu0 %v3941
  %4264 = vmatprep.subr.bf16.mxu0 0
  %4265 = vmatpush1.bf16.msra.mxu0 %v3940
  %4266 = vmatprep.subr.bf16.mxu0 0
  %4267 = vmatpush1.bf16.msra.mxu0 %v3939
  %4268 = vmatprep.subr.bf16.mxu0 0
  %4269 = vmatpush2.bf16.msra.mxu0 0
  %4270 = vmatprep.subr.bf16.mxu0 0
  %4271 = vmatpush2.bf16.msra.mxu0 0
  %4272 = vmatprep.subr.bf16.mxu0 0
  %4273 = vmatpush2.bf16.msra.mxu0 0
  %4274 = vmatprep.subr.bf16.mxu0 0
  %4275 = vmatpush2.bf16.msra.mxu0 0
  %4276 = vmatprep.subr.bf16.mxu0 0
  %4277 = vmatpush2.bf16.msra.mxu0 0
  %4278 = vmatprep.subr.bf16.mxu0 0
  %4279 = vmatpush2.bf16.msra.mxu0 0
  %4280 = vmatprep.subr.bf16.mxu0 0
  %4281 = vmatpush2.bf16.msra.mxu0 0
  %4282 = vmatprep.subr.bf16.mxu0 0
  %4283 = vmatpush2.bf16.msra.mxu0 0
  %4284 = vmatprep.mubr.bf16.mxu0 0
  %4285 = vmatmul.mubr.bf16.gmra.mxu0 %v4250
  %v4286 = vpop.f32.mrf.mxu0
  %v4287 = vadd.f32 %v3829, %v4286
  %v4288 = vpop.f32.mrf.mxu0
  %v4289 = vpop.f32.mrf.mxu0
  %v4290 = vpop.f32.mrf.mxu0
  %4291 = vdwg.mxu0
  %v4292 = vmul.f32 %v4287, 0.5
  %v4293 = vtanh.pop %v4292
  %v4294 = vmul.f32 %v4293, 0.5
  %v4295 = vadd.f32 %v4294, 0.5
  %v4296 = vtanh.pop %v4287
  %v4297 = vmul.f32 %v4295, %v4156
  %4299 = vrot.lane.b32.xlu0 %v4296, 64
  %v4300 = vpop.permute.xlu0 %4299
  %v4302 = vmul.f32 %v4295, %v4300
  %4304 = vrot.lane.b32.xlu0 %v4302, 32
  %v4305 = vpop.permute.xlu0 %4304
  %v4307 = vadd.f32 %v4297, %v4305
  %v4308 = vtanh.pop %v4307
  %4310 = vrot.lane.b32.xlu0 %v4308, 64
  %v4311 = vpop.permute.xlu0 %4310
  %v4313 = vmul.f32 %v4295, %v4311
  %4315 = vrot.lane.b32.xlu0 %v4313, 32
  %v4316 = vpop.permute.xlu0 %4315
  %s4318 = scalar_lea.vmem [#allocation3], 128
  %4319 = vst.msk [vmem:[%s4318] sm:$0xff] %vm210, %v4316
  %v4320 = vld [vmem:[#allocation2 + $0x18] sm:$0xff]
  %v4321 = vpack.c.bf16 %v4239, %v4239
  %4323 = vrot.lane.b32.xlu0 %v4321, 32
  %v4324 = vpop.permute.xlu0 %4323
  %v4326 = vsel %vm210, %v4324, 0
  %4328 = vmatprep.subr.bf16.mxu0 0
  %4329 = vmatpush1.bf16.msra.mxu0 0
  %4330 = vmatprep.subr.bf16.mxu0 0
  %4331 = vmatpush1.bf16.msra.mxu0 0
  %4332 = vmatprep.subr.bf16.mxu0 0
  %4333 = vmatpush1.bf16.msra.mxu0 0
  %4334 = vmatprep.subr.bf16.mxu0 0
  %4335 = vmatpush1.bf16.msra.mxu0 0
  %4336 = vmatprep.subr.bf16.mxu0 0
  %4337 = vmatpush1.bf16.msra.mxu0 0
  %4338 = vmatprep.subr.bf16.mxu0 0
  %4339 = vmatpush1.bf16.msra.mxu0 0
  %4340 = vmatprep.subr.bf16.mxu0 0
  %4341 = vmatpush1.bf16.msra.mxu0 %v3845
  %4342 = vmatprep.subr.bf16.mxu0 0
  %4343 = vmatpush1.bf16.msra.mxu0 %v3844
  %4344 = vmatprep.subr.bf16.mxu0 0
  %4345 = vmatpush2.bf16.msra.mxu0 0
  %4346 = vmatprep.subr.bf16.mxu0 0
  %4347 = vmatpush2.bf16.msra.mxu0 0
  %4348 = vmatprep.subr.bf16.mxu0 0
  %4349 = vmatpush2.bf16.msra.mxu0 0
  %4350 = vmatprep.subr.bf16.mxu0 0
  %4351 = vmatpush2.bf16.msra.mxu0 0
  %4352 = vmatprep.subr.bf16.mxu0 0
  %4353 = vmatpush2.bf16.msra.mxu0 0
  %4354 = vmatprep.subr.bf16.mxu0 0
  %4355 = vmatpush2.bf16.msra.mxu0 0
  %4356 = vmatprep.subr.bf16.mxu0 0
  %4357 = vmatpush2.bf16.msra.mxu0 0
  %4358 = vmatprep.subr.bf16.mxu0 0
  %4359 = vmatpush2.bf16.msra.mxu0 0
  %4360 = vmatprep.mubr.bf16.mxu0 0
  %4361 = vmatmul.mubr.bf16.gmra.mxu0 %v4326
  %v4362 = vpop.f32.mrf.mxu0
  %v4363 = vadd.f32 0.0, %v4362
  %v4364 = vpop.f32.mrf.mxu0
  %v4365 = vpop.f32.mrf.mxu0
  %v4366 = vpop.f32.mrf.mxu0
  %4367 = vdwg.mxu0
  %v4368 = vadd.f32 %v4320, %v4363
  %v4369 = vmul.f32 %v4368, 0.5
  %v4370 = vtanh.pop %v4369
  %v4371 = vmul.f32 %v4370, 0.5
  %v4372 = vadd.f32 %v4371, 0.5
  %v4373 = vtanh.pop %v4368
  %v4374 = vmul.f32 %v4372, %v4233
  %4376 = vrot.lane.b32.xlu0 %v4373, 64
  %v4377 = vpop.permute.xlu0 %4376
  %v4379 = vmul.f32 %v4372, %v4377
  %4381 = vrot.lane.b32.xlu0 %v4379, 32
  %v4382 = vpop.permute.xlu0 %4381
  %v4384 = vadd.f32 %v4374, %v4382
  %v4385 = vtanh.pop %v4384
  %4387 = vrot.lane.b32.xlu0 %v4385, 64
  %v4388 = vpop.permute.xlu0 %4387
  %v4390 = vmul.f32 %v4372, %v4388
  %4392 = vrot.lane.b32.xlu0 %v4390, 32
  %v4393 = vpop.permute.xlu0 %4392
  %4395 = vrot.lane.b32.xlu0 %v4313, 64
  %v4396 = vpop.permute.xlu0 %4395
  %v4398 = vsel %vm210, %v4393, %v4396
  %v4399 = vpack.c.bf16 %v4398, %v4398
  %v4401 = vsel %vm307, %v4399, 0
  %4403 = vmatprep.subr.bf16.mxu0 0
  %4404 = vmatpush1.bf16.msra.mxu0 0
  %4405 = vmatprep.subr.bf16.mxu0 0
  %4406 = vmatpush1.bf16.msra.mxu0 0
  %4407 = vmatprep.subr.bf16.mxu0 0
  %4408 = vmatpush1.bf16.msra.mxu0 0
  %4409 = vmatprep.subr.bf16.mxu0 0
  %4410 = vmatpush1.bf16.msra.mxu0 0
  %4411 = vmatprep.subr.bf16.mxu0 0
  %4412 = vmatpush1.bf16.msra.mxu0 %v3942
  %4413 = vmatprep.subr.bf16.mxu0 0
  %4414 = vmatpush1.bf16.msra.mxu0 %v3941
  %4415 = vmatprep.subr.bf16.mxu0 0
  %4416 = vmatpush1.bf16.msra.mxu0 %v3940
  %4417 = vmatprep.subr.bf16.mxu0 0
  %4418 = vmatpush1.bf16.msra.mxu0 %v3939
  %4419 = vmatprep.subr.bf16.mxu0 0
  %4420 = vmatpush2.bf16.msra.mxu0 0
  %4421 = vmatprep.subr.bf16.mxu0 0
  %4422 = vmatpush2.bf16.msra.mxu0 0
  %4423 = vmatprep.subr.bf16.mxu0 0
  %4424 = vmatpush2.bf16.msra.mxu0 0
  %4425 = vmatprep.subr.bf16.mxu0 0
  %4426 = vmatpush2.bf16.msra.mxu0 0
  %4427 = vmatprep.subr.bf16.mxu0 0
  %4428 = vmatpush2.bf16.msra.mxu0 0
  %4429 = vmatprep.subr.bf16.mxu0 0
  %4430 = vmatpush2.bf16.msra.mxu0 0
  %4431 = vmatprep.subr.bf16.mxu0 0
  %4432 = vmatpush2.bf16.msra.mxu0 0
  %4433 = vmatprep.subr.bf16.mxu0 0
  %4434 = vmatpush2.bf16.msra.mxu0 0
  %4435 = vmatprep.mubr.bf16.mxu0 0
  %4436 = vmatmul.mubr.bf16.gmra.mxu0 %v4401
  %v4437 = vpop.f32.mrf.mxu0
  %v4438 = vadd.f32 %v3829, %v4437
  %v4439 = vpop.f32.mrf.mxu0
  %v4440 = vpop.f32.mrf.mxu0
  %v4441 = vpop.f32.mrf.mxu0
  %4442 = vdwg.mxu0
  %v4443 = vmul.f32 %v4438, 0.5
  %v4444 = vtanh.pop %v4443
  %v4445 = vmul.f32 %v4444, 0.5
  %v4446 = vadd.f32 %v4445, 0.5
  %v4447 = vtanh.pop %v4438
  %v4448 = vmul.f32 %v4446, %v4307
  %4450 = vrot.lane.b32.xlu0 %v4447, 64
  %v4451 = vpop.permute.xlu0 %4450
  %v4453 = vmul.f32 %v4446, %v4451
  %4455 = vrot.lane.b32.xlu0 %v4453, 32
  %v4456 = vpop.permute.xlu0 %4455
  %v4458 = vadd.f32 %v4448, %v4456
  %v4459 = vtanh.pop %v4458
  %4461 = vrot.lane.b32.xlu0 %v4459, 64
  %v4462 = vpop.permute.xlu0 %4461
  %v4464 = vmul.f32 %v4446, %v4462
  %4466 = vrot.lane.b32.xlu0 %v4464, 32
  %v4467 = vpop.permute.xlu0 %4466
  %s4469 = scalar_lea.vmem [#allocation3], 136
  %4470 = vst.msk [vmem:[%s4469] sm:$0xff] %vm210, %v4467
  %v4471 = vld [vmem:[#allocation2 + $0x20] sm:$0xff]
  %v4472 = vpack.c.bf16 %v4390, %v4390
  %4474 = vrot.lane.b32.xlu0 %v4472, 32
  %v4475 = vpop.permute.xlu0 %4474
  %v4477 = vsel %vm210, %v4475, 0
  %4479 = vmatprep.subr.bf16.mxu0 0
  %4480 = vmatpush1.bf16.msra.mxu0 0
  %4481 = vmatprep.subr.bf16.mxu0 0
  %4482 = vmatpush1.bf16.msra.mxu0 0
  %4483 = vmatprep.subr.bf16.mxu0 0
  %4484 = vmatpush1.bf16.msra.mxu0 0
  %4485 = vmatprep.subr.bf16.mxu0 0
  %4486 = vmatpush1.bf16.msra.mxu0 0
  %4487 = vmatprep.subr.bf16.mxu0 0
  %4488 = vmatpush1.bf16.msra.mxu0 0
  %4489 = vmatprep.subr.bf16.mxu0 0
  %4490 = vmatpush1.bf16.msra.mxu0 0
  %4491 = vmatprep.subr.bf16.mxu0 0
  %4492 = vmatpush1.bf16.msra.mxu0 %v3845
  %4493 = vmatprep.subr.bf16.mxu0 0
  %4494 = vmatpush1.bf16.msra.mxu0 %v3844
  %4495 = vmatprep.subr.bf16.mxu0 0
  %4496 = vmatpush2.bf16.msra.mxu0 0
  %4497 = vmatprep.subr.bf16.mxu0 0
  %4498 = vmatpush2.bf16.msra.mxu0 0
  %4499 = vmatprep.subr.bf16.mxu0 0
  %4500 = vmatpush2.bf16.msra.mxu0 0
  %4501 = vmatprep.subr.bf16.mxu0 0
  %4502 = vmatpush2.bf16.msra.mxu0 0
  %4503 = vmatprep.subr.bf16.mxu0 0
  %4504 = vmatpush2.bf16.msra.mxu0 0
  %4505 = vmatprep.subr.bf16.mxu0 0
  %4506 = vmatpush2.bf16.msra.mxu0 0
  %4507 = vmatprep.subr.bf16.mxu0 0
  %4508 = vmatpush2.bf16.msra.mxu0 0
  %4509 = vmatprep.subr.bf16.mxu0 0
  %4510 = vmatpush2.bf16.msra.mxu0 0
  %4511 = vmatprep.mubr.bf16.mxu0 0
  %4512 = vmatmul.mubr.bf16.gmra.mxu0 %v4477
  %v4513 = vpop.f32.mrf.mxu0
  %v4514 = vadd.f32 0.0, %v4513
  %v4515 = vpop.f32.mrf.mxu0
  %v4516 = vpop.f32.mrf.mxu0
  %v4517 = vpop.f32.mrf.mxu0
  %4518 = vdwg.mxu0
  %v4519 = vadd.f32 %v4471, %v4514
  %v4520 = vmul.f32 %v4519, 0.5
  %v4521 = vtanh.pop %v4520
  %v4522 = vmul.f32 %v4521, 0.5
  %v4523 = vadd.f32 %v4522, 0.5
  %v4524 = vtanh.pop %v4519
  %v4525 = vmul.f32 %v4523, %v4384
  %4527 = vrot.lane.b32.xlu0 %v4524, 64
  %v4528 = vpop.permute.xlu0 %4527
  %v4530 = vmul.f32 %v4523, %v4528
  %4532 = vrot.lane.b32.xlu0 %v4530, 32
  %v4533 = vpop.permute.xlu0 %4532
  %v4535 = vadd.f32 %v4525, %v4533
  %v4536 = vtanh.pop %v4535
  %4538 = vrot.lane.b32.xlu0 %v4536, 64
  %v4539 = vpop.permute.xlu0 %4538
  %v4541 = vmul.f32 %v4523, %v4539
  %4543 = vrot.lane.b32.xlu0 %v4541, 32
  %v4544 = vpop.permute.xlu0 %4543
  %4546 = vrot.lane.b32.xlu0 %v4464, 64
  %v4547 = vpop.permute.xlu0 %4546
  %v4549 = vsel %vm210, %v4544, %v4547
  %v4550 = vpack.c.bf16 %v4549, %v4549
  %v4552 = vsel %vm307, %v4550, 0
  %4554 = vmatprep.subr.bf16.mxu0 0
  %4555 = vmatpush1.bf16.msra.mxu0 0
  %4556 = vmatprep.subr.bf16.mxu0 0
  %4557 = vmatpush1.bf16.msra.mxu0 0
  %4558 = vmatprep.subr.bf16.mxu0 0
  %4559 = vmatpush1.bf16.msra.mxu0 0
  %4560 = vmatprep.subr.bf16.mxu0 0
  %4561 = vmatpush1.bf16.msra.mxu0 0
  %4562 = vmatprep.subr.bf16.mxu0 0
  %4563 = vmatpush1.bf16.msra.mxu0 %v3942
  %4564 = vmatprep.subr.bf16.mxu0 0
  %4565 = vmatpush1.bf16.msra.mxu0 %v3941
  %4566 = vmatprep.subr.bf16.mxu0 0
  %4567 = vmatpush1.bf16.msra.mxu0 %v3940
  %4568 = vmatprep.subr.bf16.mxu0 0
  %4569 = vmatpush1.bf16.msra.mxu0 %v3939
  %4570 = vmatprep.subr.bf16.mxu0 0
  %4571 = vmatpush2.bf16.msra.mxu0 0
  %4572 = vmatprep.subr.bf16.mxu0 0
  %4573 = vmatpush2.bf16.msra.mxu0 0
  %4574 = vmatprep.subr.bf16.mxu0 0
  %4575 = vmatpush2.bf16.msra.mxu0 0
  %4576 = vmatprep.subr.bf16.mxu0 0
  %4577 = vmatpush2.bf16.msra.mxu0 0
  %4578 = vmatprep.subr.bf16.mxu0 0
  %4579 = vmatpush2.bf16.msra.mxu0 0
  %4580 = vmatprep.subr.bf16.mxu0 0
  %4581 = vmatpush2.bf16.msra.mxu0 0
  %4582 = vmatprep.subr.bf16.mxu0 0
  %4583 = vmatpush2.bf16.msra.mxu0 0
  %4584 = vmatprep.subr.bf16.mxu0 0
  %4585 = vmatpush2.bf16.msra.mxu0 0
  %4586 = vmatprep.mubr.bf16.mxu0 0
  %4587 = vmatmul.mubr.bf16.gmra.mxu0 %v4552
  %v4588 = vpop.f32.mrf.mxu0
  %v4589 = vadd.f32 %v3829, %v4588
  %v4590 = vpop.f32.mrf.mxu0
  %v4591 = vpop.f32.mrf.mxu0
  %v4592 = vpop.f32.mrf.mxu0
  %4593 = vdwg.mxu0
  %v4594 = vmul.f32 %v4589, 0.5
  %v4595 = vtanh.pop %v4594
  %v4596 = vmul.f32 %v4595, 0.5
  %v4597 = vadd.f32 %v4596, 0.5
  %v4598 = vtanh.pop %v4589
  %v4599 = vmul.f32 %v4597, %v4458
  %4601 = vrot.lane.b32.xlu0 %v4598, 64
  %v4602 = vpop.permute.xlu0 %4601
  %v4604 = vmul.f32 %v4597, %v4602
  %4606 = vrot.lane.b32.xlu0 %v4604, 32
  %v4607 = vpop.permute.xlu0 %4606
  %v4609 = vadd.f32 %v4599, %v4607
  %v4610 = vtanh.pop %v4609
  %4612 = vrot.lane.b32.xlu0 %v4610, 64
  %v4613 = vpop.permute.xlu0 %4612
  %v4615 = vmul.f32 %v4597, %v4613
  %4617 = vrot.lane.b32.xlu0 %v4615, 32
  %v4618 = vpop.permute.xlu0 %4617
  %s4620 = scalar_lea.vmem [#allocation3], 144
  %4621 = vst.msk [vmem:[%s4620] sm:$0xff] %vm210, %v4618
  %v4622 = vld [vmem:[#allocation2 + $0x28] sm:$0xff]
  %v4623 = vpack.c.bf16 %v4541, %v4541
  %4625 = vrot.lane.b32.xlu0 %v4623, 32
  %v4626 = vpop.permute.xlu0 %4625
  %v4628 = vsel %vm210, %v4626, 0
  %4630 = vmatprep.subr.bf16.mxu0 0
  %4631 = vmatpush1.bf16.msra.mxu0 0
  %4632 = vmatprep.subr.bf16.mxu0 0
  %4633 = vmatpush1.bf16.msra.mxu0 0
  %4634 = vmatprep.subr.bf16.mxu0 0
  %4635 = vmatpush1.bf16.msra.mxu0 0
  %4636 = vmatprep.subr.bf16.mxu0 0
  %4637 = vmatpush1.bf16.msra.mxu0 0
  %4638 = vmatprep.subr.bf16.mxu0 0
  %4639 = vmatpush1.bf16.msra.mxu0 0
  %4640 = vmatprep.subr.bf16.mxu0 0
  %4641 = vmatpush1.bf16.msra.mxu0 0
  %4642 = vmatprep.subr.bf16.mxu0 0
  %4643 = vmatpush1.bf16.msra.mxu0 %v3845
  %4644 = vmatprep.subr.bf16.mxu0 0
  %4645 = vmatpush1.bf16.msra.mxu0 %v3844
  %4646 = vmatprep.subr.bf16.mxu0 0
  %4647 = vmatpush2.bf16.msra.mxu0 0
  %4648 = vmatprep.subr.bf16.mxu0 0
  %4649 = vmatpush2.bf16.msra.mxu0 0
  %4650 = vmatprep.subr.bf16.mxu0 0
  %4651 = vmatpush2.bf16.msra.mxu0 0
  %4652 = vmatprep.subr.bf16.mxu0 0
  %4653 = vmatpush2.bf16.msra.mxu0 0
  %4654 = vmatprep.subr.bf16.mxu0 0
  %4655 = vmatpush2.bf16.msra.mxu0 0
  %4656 = vmatprep.subr.bf16.mxu0 0
  %4657 = vmatpush2.bf16.msra.mxu0 0
  %4658 = vmatprep.subr.bf16.mxu0 0
  %4659 = vmatpush2.bf16.msra.mxu0 0
  %4660 = vmatprep.subr.bf16.mxu0 0
  %4661 = vmatpush2.bf16.msra.mxu0 0
  %4662 = vmatprep.mubr.bf16.mxu0 0
  %4663 = vmatmul.mubr.bf16.gmra.mxu0 %v4628
  %v4664 = vpop.f32.mrf.mxu0
  %v4665 = vadd.f32 0.0, %v4664
  %v4666 = vpop.f32.mrf.mxu0
  %v4667 = vpop.f32.mrf.mxu0
  %v4668 = vpop.f32.mrf.mxu0
  %4669 = vdwg.mxu0
  %v4670 = vadd.f32 %v4622, %v4665
  %v4671 = vmul.f32 %v4670, 0.5
  %v4672 = vtanh.pop %v4671
  %v4673 = vmul.f32 %v4672, 0.5
  %v4674 = vadd.f32 %v4673, 0.5
  %v4675 = vtanh.pop %v4670
  %v4676 = vmul.f32 %v4674, %v4535
  %4678 = vrot.lane.b32.xlu0 %v4675, 64
  %v4679 = vpop.permute.xlu0 %4678
  %v4681 = vmul.f32 %v4674, %v4679
  %4683 = vrot.lane.b32.xlu0 %v4681, 32
  %v4684 = vpop.permute.xlu0 %4683
  %v4686 = vadd.f32 %v4676, %v4684
  %v4687 = vtanh.pop %v4686
  %4689 = vrot.lane.b32.xlu0 %v4687, 64
  %v4690 = vpop.permute.xlu0 %4689
  %v4692 = vmul.f32 %v4674, %v4690
  %4694 = vrot.lane.b32.xlu0 %v4692, 32
  %v4695 = vpop.permute.xlu0 %4694
  %4697 = vrot.lane.b32.xlu0 %v4615, 64
  %v4698 = vpop.permute.xlu0 %4697
  %v4700 = vsel %vm210, %v4695, %v4698
  %v4701 = vpack.c.bf16 %v4700, %v4700
  %v4703 = vsel %vm307, %v4701, 0
  %4705 = vmatprep.subr.bf16.mxu0 0
  %4706 = vmatpush1.bf16.msra.mxu0 0
  %4707 = vmatprep.subr.bf16.mxu0 0
  %4708 = vmatpush1.bf16.msra.mxu0 0
  %4709 = vmatprep.subr.bf16.mxu0 0
  %4710 = vmatpush1.bf16.msra.mxu0 0
  %4711 = vmatprep.subr.bf16.mxu0 0
  %4712 = vmatpush1.bf16.msra.mxu0 0
  %4713 = vmatprep.subr.bf16.mxu0 0
  %4714 = vmatpush1.bf16.msra.mxu0 %v3942
  %4715 = vmatprep.subr.bf16.mxu0 0
  %4716 = vmatpush1.bf16.msra.mxu0 %v3941
  %4717 = vmatprep.subr.bf16.mxu0 0
  %4718 = vmatpush1.bf16.msra.mxu0 %v3940
  %4719 = vmatprep.subr.bf16.mxu0 0
  %4720 = vmatpush1.bf16.msra.mxu0 %v3939
  %4721 = vmatprep.subr.bf16.mxu0 0
  %4722 = vmatpush2.bf16.msra.mxu0 0
  %4723 = vmatprep.subr.bf16.mxu0 0
  %4724 = vmatpush2.bf16.msra.mxu0 0
  %4725 = vmatprep.subr.bf16.mxu0 0
  %4726 = vmatpush2.bf16.msra.mxu0 0
  %4727 = vmatprep.subr.bf16.mxu0 0
  %4728 = vmatpush2.bf16.msra.mxu0 0
  %4729 = vmatprep.subr.bf16.mxu0 0
  %4730 = vmatpush2.bf16.msra.mxu0 0
  %4731 = vmatprep.subr.bf16.mxu0 0
  %4732 = vmatpush2.bf16.msra.mxu0 0
  %4733 = vmatprep.subr.bf16.mxu0 0
  %4734 = vmatpush2.bf16.msra.mxu0 0
  %4735 = vmatprep.subr.bf16.mxu0 0
  %4736 = vmatpush2.bf16.msra.mxu0 0
  %4737 = vmatprep.mubr.bf16.mxu0 0
  %4738 = vmatmul.mubr.bf16.gmra.mxu0 %v4703
  %v4739 = vpop.f32.mrf.mxu0
  %v4740 = vadd.f32 %v3829, %v4739
  %v4741 = vpop.f32.mrf.mxu0
  %v4742 = vpop.f32.mrf.mxu0
  %v4743 = vpop.f32.mrf.mxu0
  %4744 = vdwg.mxu0
  %v4745 = vmul.f32 %v4740, 0.5
  %v4746 = vtanh.pop %v4745
  %v4747 = vmul.f32 %v4746, 0.5
  %v4748 = vadd.f32 %v4747, 0.5
  %v4749 = vtanh.pop %v4740
  %v4750 = vmul.f32 %v4748, %v4609
  %4752 = vrot.lane.b32.xlu0 %v4749, 64
  %v4753 = vpop.permute.xlu0 %4752
  %v4755 = vmul.f32 %v4748, %v4753
  %4757 = vrot.lane.b32.xlu0 %v4755, 32
  %v4758 = vpop.permute.xlu0 %4757
  %v4760 = vadd.f32 %v4750, %v4758
  %v4761 = vtanh.pop %v4760
  %4763 = vrot.lane.b32.xlu0 %v4761, 64
  %v4764 = vpop.permute.xlu0 %4763
  %v4766 = vmul.f32 %v4748, %v4764
  %4768 = vrot.lane.b32.xlu0 %v4766, 32
  %v4769 = vpop.permute.xlu0 %4768
  %s4771 = scalar_lea.vmem [#allocation3], 152
  %4772 = vst.msk [vmem:[%s4771] sm:$0xff] %vm210, %v4769
  %v4773 = vld [vmem:[#allocation3] sm:$0xff]
  %v4774 = vld [vmem:[#allocation3 + $0x8] sm:$0xff]
  %v4775 = vld [vmem:[#allocation3 + $0x10] sm:$0xff]
  %v4776 = vld [vmem:[#allocation3 + $0x18] sm:$0xff]
  %v4777 = vld [vmem:[#allocation3 + $0x20] sm:$0xff]
  %v4778 = vld [vmem:[#allocation3 + $0x28] sm:$0xff]
  %v4779 = vld [vmem:[#allocation3 + $0x30] sm:$0xff]
  %v4780 = vld [vmem:[#allocation3 + $0x38] sm:$0xff]
  %v4781 = vld [vmem:[#allocation3 + $0x40] sm:$0xff]
  %v4782 = vld [vmem:[#allocation3 + $0x48] sm:$0xff]
  %v4783 = vld [vmem:[#allocation3 + $0x50] sm:$0xff]
  %v4784 = vld [vmem:[#allocation3 + $0x58] sm:$0xff]
  %v4785 = vld [vmem:[#allocation3 + $0x60] sm:$0xff]
  %v4786 = vld [vmem:[#allocation3 + $0x68] sm:$0xff]
  %v4787 = vld [vmem:[#allocation3 + $0x70] sm:$0xff]
  %v4788 = vld [vmem:[#allocation3 + $0x78] sm:$0xff]
  %v4789 = vld [vmem:[#allocation3 + $0x80] sm:$0xff]
  %v4790 = vld [vmem:[#allocation3 + $0x88] sm:$0xff]
  %v4791 = vld [vmem:[#allocation3 + $0x90] sm:$0xff]
  %v4792 = vld [vmem:[#allocation3 + $0x98] sm:$0xff]
  %v4793 = vld [vmem:[%s18] sm:$0x1]
  %v4795 = vlaneseq
  %v4796 = vshrl.u32 %v4795, 7
  %v4797 = vsub.s32 0, %v4796
  %v4798 = vrot.slane %v4793, %v4797
  %v4800 = vmul.f32 %v4773, %v4798
  %v4801 = vmul.f32 %v4774, %v4798
  %v4802 = vmul.f32 %v4775, %v4798
  %v4803 = vmul.f32 %v4776, %v4798
  %v4804 = vmul.f32 %v4777, %v4798
  %v4805 = vmul.f32 %v4778, %v4798
  %v4806 = vmul.f32 %v4779, %v4798
  %v4807 = vmul.f32 %v4780, %v4798
  %v4808 = vmul.f32 %v4781, %v4798
  %v4809 = vmul.f32 %v4782, %v4798
  %v4810 = vmul.f32 %v4783, %v4798
  %v4811 = vmul.f32 %v4784, %v4798
  %v4812 = vmul.f32 %v4785, %v4798
  %v4813 = vmul.f32 %v4786, %v4798
  %v4814 = vmul.f32 %v4787, %v4798
  %v4815 = vmul.f32 %v4788, %v4798
  %v4816 = vmul.f32 %v4789, %v4798
  %v4817 = vmul.f32 %v4790, %v4798
  %v4818 = vmul.f32 %v4791, %v4798
  %v4819 = vmul.f32 %v4792, %v4798
  %v4820 = vsel %vm210, %v4800, 0.0
  %4821 = vadd.xlane.f32.xlu0 %v4820
  %v4822 = vpop.xlane.xlu0 %4821
  %v4823 = vsel %vm210, %v4801, 0.0
  %4824 = vadd.xlane.f32.xlu0 %v4823
  %v4825 = vpop.xlane.xlu0 %4824
  %v4826 = vsel %vm210, %v4802, 0.0
  %4827 = vadd.xlane.f32.xlu0 %v4826
  %v4828 = vpop.xlane.xlu0 %4827
  %v4829 = vsel %vm210, %v4803, 0.0
  %4830 = vadd.xlane.f32.xlu0 %v4829
  %v4831 = vpop.xlane.xlu0 %4830
  %v4832 = vsel %vm210, %v4804, 0.0
  %4833 = vadd.xlane.f32.xlu0 %v4832
  %v4834 = vpop.xlane.xlu0 %4833
  %v4835 = vsel %vm210, %v4805, 0.0
  %4836 = vadd.xlane.f32.xlu0 %v4835
  %v4837 = vpop.xlane.xlu0 %4836
  %v4838 = vsel %vm210, %v4806, 0.0
  %4839 = vadd.xlane.f32.xlu0 %v4838
  %v4840 = vpop.xlane.xlu0 %4839
  %v4841 = vsel %vm210, %v4807, 0.0
  %4842 = vadd.xlane.f32.xlu0 %v4841
  %v4843 = vpop.xlane.xlu0 %4842
  %v4844 = vsel %vm210, %v4808, 0.0
  %4845 = vadd.xlane.f32.xlu0 %v4844
  %v4846 = vpop.xlane.xlu0 %4845
  %v4847 = vsel %vm210, %v4809, 0.0
  %4848 = vadd.xlane.f32.xlu0 %v4847
  %v4849 = vpop.xlane.xlu0 %4848
  %v4850 = vsel %vm210, %v4810, 0.0
  %4851 = vadd.xlane.f32.xlu0 %v4850
  %v4852 = vpop.xlane.xlu0 %4851
  %v4853 = vsel %vm210, %v4811, 0.0
  %4854 = vadd.xlane.f32.xlu0 %v4853
  %v4855 = vpop.xlane.xlu0 %4854
  %v4856 = vsel %vm210, %v4812, 0.0
  %4857 = vadd.xlane.f32.xlu0 %v4856
  %v4858 = vpop.xlane.xlu0 %4857
  %v4859 = vsel %vm210, %v4813, 0.0
  %4860 = vadd.xlane.f32.xlu0 %v4859
  %v4861 = vpop.xlane.xlu0 %4860
  %v4862 = vsel %vm210, %v4814, 0.0
  %4863 = vadd.xlane.f32.xlu0 %v4862
  %v4864 = vpop.xlane.xlu0 %4863
  %v4865 = vsel %vm210, %v4815, 0.0
  %4866 = vadd.xlane.f32.xlu0 %v4865
  %v4867 = vpop.xlane.xlu0 %4866
  %v4868 = vsel %vm210, %v4816, 0.0
  %4869 = vadd.xlane.f32.xlu0 %v4868
  %v4870 = vpop.xlane.xlu0 %4869
  %v4871 = vsel %vm210, %v4817, 0.0
  %4872 = vadd.xlane.f32.xlu0 %v4871
  %v4873 = vpop.xlane.xlu0 %4872
  %v4874 = vsel %vm210, %v4818, 0.0
  %4875 = vadd.xlane.f32.xlu0 %v4874
  %v4876 = vpop.xlane.xlu0 %4875
  %v4877 = vsel %vm210, %v4819, 0.0
  %4878 = vadd.xlane.f32.xlu0 %v4877
  %v4879 = vpop.xlane.xlu0 %4878
  %v4880 = vld [vmem:[#allocation4] sm:$0x1]
  %v4882 = vlaneseq
  %v4883 = vshrl.u32 %v4882, 7
  %v4884 = vsub.s32 0, %v4883
  %v4885 = vrot.slane %v4880, %v4884
  %4886 = vset.pattern.permute.xlu0 0
  %4887 = vperm.xlu0 %4886, %v4885
  %v4888 = vpop.permute.xlu0 %4887
  %v4890 = vadd.f32 %v4822, %v4888
  %v4891 = vadd.f32 %v4825, %v4888
  %v4892 = vadd.f32 %v4828, %v4888
  %v4893 = vadd.f32 %v4831, %v4888
  %v4894 = vadd.f32 %v4834, %v4888
  %v4895 = vadd.f32 %v4837, %v4888
  %v4896 = vadd.f32 %v4840, %v4888
  %v4897 = vadd.f32 %v4843, %v4888
  %v4898 = vadd.f32 %v4846, %v4888
  %v4899 = vadd.f32 %v4849, %v4888
  %v4900 = vadd.f32 %v4852, %v4888
  %v4901 = vadd.f32 %v4855, %v4888
  %v4902 = vadd.f32 %v4858, %v4888
  %v4903 = vadd.f32 %v4861, %v4888
  %v4904 = vadd.f32 %v4864, %v4888
  %v4905 = vadd.f32 %v4867, %v4888
  %v4906 = vadd.f32 %v4870, %v4888
  %v4907 = vadd.f32 %v4873, %v4888
  %v4908 = vadd.f32 %v4876, %v4888
  %v4909 = vadd.f32 %v4879, %v4888
  %v4930 = vlaneseq
  %v4931 = vand.u32 %v4930, 127
  %v4932 = vlaneseq
  %v4933 = vshrl.u32 %v4932, 7
  %v4934 = vsub.s32 %v4931, %v4933
  %v4935 = vrot.slane %v4890, %v4934
  %v4936 = vlaneseq
  %v4937 = vshrl.u32 %v4936, 7
  %v4938 = vsub.s32 %v4931, %v4937
  %v4939 = vrot.slane %v4891, %v4938
  %v4940 = vlaneseq
  %v4941 = vshrl.u32 %v4940, 7
  %v4942 = vsub.s32 %v4931, %v4941
  %v4943 = vrot.slane %v4892, %v4942
  %v4944 = vlaneseq
  %v4945 = vshrl.u32 %v4944, 7
  %v4946 = vsub.s32 %v4931, %v4945
  %v4947 = vrot.slane %v4893, %v4946
  %v4948 = vlaneseq
  %v4949 = vshrl.u32 %v4948, 7
  %v4950 = vsub.s32 %v4931, %v4949
  %v4951 = vrot.slane %v4894, %v4950
  %v4952 = vlaneseq
  %v4953 = vshrl.u32 %v4952, 7
  %v4954 = vsub.s32 %v4931, %v4953
  %v4955 = vrot.slane %v4895, %v4954
  %v4956 = vlaneseq
  %v4957 = vshrl.u32 %v4956, 7
  %v4958 = vsub.s32 %v4931, %v4957
  %v4959 = vrot.slane %v4896, %v4958
  %v4960 = vlaneseq
  %v4961 = vshrl.u32 %v4960, 7
  %v4962 = vsub.s32 %v4931, %v4961
  %v4963 = vrot.slane %v4897, %v4962
  %v4964 = vlaneseq
  %v4965 = vshrl.u32 %v4964, 7
  %v4966 = vsub.s32 %v4931, %v4965
  %v4967 = vrot.slane %v4898, %v4966
  %v4968 = vlaneseq
  %v4969 = vshrl.u32 %v4968, 7
  %v4970 = vsub.s32 %v4931, %v4969
  %v4971 = vrot.slane %v4899, %v4970
  %v4972 = vlaneseq
  %v4973 = vshrl.u32 %v4972, 7
  %v4974 = vsub.s32 %v4931, %v4973
  %v4975 = vrot.slane %v4900, %v4974
  %v4976 = vlaneseq
  %v4977 = vshrl.u32 %v4976, 7
  %v4978 = vsub.s32 %v4931, %v4977
  %v4979 = vrot.slane %v4901, %v4978
  %v4980 = vlaneseq
  %v4981 = vshrl.u32 %v4980, 7
  %v4982 = vsub.s32 %v4931, %v4981
  %v4983 = vrot.slane %v4902, %v4982
  %v4984 = vlaneseq
  %v4985 = vshrl.u32 %v4984, 7
  %v4986 = vsub.s32 %v4931, %v4985
  %v4987 = vrot.slane %v4903, %v4986
  %v4988 = vlaneseq
  %v4989 = vshrl.u32 %v4988, 7
  %v4990 = vsub.s32 %v4931, %v4989
  %v4991 = vrot.slane %v4904, %v4990
  %v4992 = vlaneseq
  %v4993 = vshrl.u32 %v4992, 7
  %v4994 = vsub.s32 %v4931, %v4993
  %v4995 = vrot.slane %v4905, %v4994
  %v4996 = vlaneseq
  %v4997 = vshrl.u32 %v4996, 7
  %v4998 = vsub.s32 %v4931, %v4997
  %v4999 = vrot.slane %v4906, %v4998
  %v5000 = vlaneseq
  %v5001 = vshrl.u32 %v5000, 7
  %v5002 = vsub.s32 %v4931, %v5001
  %v5003 = vrot.slane %v4907, %v5002
  %v5004 = vlaneseq
  %v5005 = vshrl.u32 %v5004, 7
  %v5006 = vsub.s32 %v4931, %v5005
  %v5007 = vrot.slane %v4908, %v5006
  %v5008 = vlaneseq
  %v5009 = vshrl.u32 %v5008, 7
  %v5010 = vsub.s32 %v4931, %v5009
  %v5011 = vrot.slane %v4909, %v5010
  %vm5012 = vcmask 1041409
  %v5013 = vsel %vm5012, %v4939, %v4935
  %vm5014 = vcmask 1042434
  %v5015 = vsel %vm5014, %v4943, %v5013
  %vm5016 = vcmask 1043459
  %v5017 = vsel %vm5016, %v4947, %v5015
  %vm5018 = vcmask 1044484
  %v5019 = vsel %vm5018, %v4951, %v5017
  %vm5020 = vcmask 1045509
  %v5021 = vsel %vm5020, %v4955, %v5019
  %vm5022 = vcmask 1046534
  %v5023 = vsel %vm5022, %v4959, %v5021
  %vm5024 = vcmask 1047559
  %v5025 = vsel %vm5024, %v4963, %v5023
  %v5026 = vsel %vm5012, %v4971, %v4967
  %v5027 = vsel %vm5014, %v4975, %v5026
  %v5028 = vsel %vm5016, %v4979, %v5027
  %v5029 = vsel %vm5018, %v4983, %v5028
  %v5030 = vsel %vm5020, %v4987, %v5029
  %v5031 = vsel %vm5022, %v4991, %v5030
  %v5032 = vsel %vm5024, %v4995, %v5031
  %v5033 = vsel %vm5012, %v5003, %v4999
  %v5034 = vsel %vm5014, %v5007, %v5033
  %v5035 = vsel %vm5016, %v5011, %v5034
  %5039 = vst.msk [vmem:[%s20] sm:$0xff] %vm92, %v5025
  %5040 = vst.msk [vmem:[%s20 + $0x8] sm:$0xff] %vm92, %v5032
  %vm5041 = vcmask 60416
  %5042 = vst.msk [vmem:[%s20 + $0x10] sm:$0xf] %vm5041, %v5035
  // Predicated region
  $region82: #{tpu_custom_call.1} parent=0 // pred_check
    _
  $region83: #{tpu_custom_call.1} parent=0 // pred_check_branch
    %5044 = sbr.rel (0) target = $region85
  $region84: #{tpu_custom_call.1} parent=0 // pred_region
    _
  $region85: #{tpu_custom_call.1} parent=0 // pred_fallthru
    _
  // Predicated region
  $region86: #{tpu_custom_call.1} parent=0 // pred_check
    _
  $region87: #{tpu_custom_call.1} parent=0 // pred_check_branch
    %5046 = sbr.rel (0) target = $region89
  $region88: #{tpu_custom_call.1} parent=0 // pred_region
    _
  $region89: #{tpu_custom_call.1} parent=0 // pred_fallthru
    _

</llo_original>
